<compile_context>
chip_gen: v7x
topology: tpu7x:2x2x1
jax: 0.10.0
libtpu: 0.0.40
codegen_flags: <defaults>
</compile_context>

<pallas_src>
import functools

import jax
import jax.numpy as jnp
import numpy as np
from jax.experimental import pallas as pl
from jax.experimental.pallas import tpu as pltpu


_LOG4 = float(2.0 * np.log(2.0))   # the `2 * log(torch.ones(1) * 2)` constant
_SEPARABLE = ("wasserstein", "kl", "js")
_PAIRWISE = ("elk", "bhattacharyya")

# Contribution of one zero-padded D dim (mu=0, log_sigma=0) to `sims`; the wrapper
# adds `offset * n_padded_dims` back so padding D to a multiple of 128 is exact
# (up to the compute dtype of the kernel).
_PAD_OFFSET = {
    "wasserstein": 0.0,
    "bhattacharyya": 0.0,
    "kl": 1.0,
    "js": 2.0,
    "elk": 0.5 * float(np.log(2.0)),
}


def _round_up(n, m):
    return ((n + m - 1) // m) * m


def _cdiv(a, b):
    return (a + b - 1) // b


def _pad2(x, rows, cols):
    r, c = x.shape
    if r == rows and c == cols:
        return x
    return jnp.pad(x, ((0, rows - r), (0, cols - c)))


def _pick_tiles(name, Q, G, D, tq, tg, dc):
    """Tile selection + padded sizes.  TQ multiple of 8, TG/DC multiples of 128."""
    if name in _SEPARABLE:
        tq = tq or 256          # review: larger tiles for the HBM-bound separable path
        tg = tg or 512          # capped at 512 so it also fits v7x's 64 MiB VMEM
        dc_cap = dc or 512
    else:
        tq = tq or 128
        tg = tg or 128          # review: pairwise path is compute-bound; small tile
        dc_cap = dc or 128      #         cuts vreg pressure inside the deep unroll
    TQ = min(tq, _round_up(Q, 8))
    TG = min(tg, _round_up(G, 128))

    # v7x megacore: try to expose >=2 parallel grid tiles so both TCs get work.
    if _cdiv(Q, TQ) * _cdiv(G, TG) < 2:
        if TG >= 256:
            TG = max(128, (TG // 2 // 128) * 128)
        elif TQ >= 16:
            TQ = max(8, _round_up(TQ // 2, 8))

    Dp = _round_up(D, 128)
    DC = 128
    c = (min(dc_cap, Dp) // 128) * 128
    while c >= 128:
        if Dp % c == 0:
            DC = c
            break
        c -= 128

    Qp = _round_up(Q, TQ)
    Gp = _round_up(G, TG)
    return TQ, TG, DC, Qp, Gp, Dp


def _make_separable_kernel(name, use_bf16_mxu):
    """wasserstein / kl / js: D contraction on the MXU, accumulate into out_ref."""
    mxu_dt = jnp.bfloat16 if use_bf16_mxu else jnp.float32

    def mm(a, b):
        return jnp.dot(a.astype(mxu_dt), b.astype(mxu_dt),
                       preferred_element_type=jnp.float32)

    def kernel(qmu_ref, qls_ref, gmut_ref, glst_ref, out_ref):
        k = pl.program_id(2)

        @pl.when(k == 0)
        def _init():
            out_ref[...] = jnp.zeros_like(out_ref)

        qmu = qmu_ref[...]    # (TQ, DC) f32
        qls = qls_ref[...]    # (TQ, DC)
        gmu = gmut_ref[...]   # (DC, TG) gallery mu, transposed
        gls = glst_ref[...]   # (DC, TG) gallery log_sigma, transposed

        # NOTE: exp(+/-2*log_sigma) can over/underflow f32 for |log_sigma| >~ 44
        # (same caveat as the torch reference); inputs are assumed bounded.
        if name == "wasserstein":
            s1 = jnp.exp(qls)
            s2 = jnp.exp(gls)
            cross = mm(qmu, gmu) + mm(s1, s2)                            # (TQ, TG)
            qn = jnp.sum(qmu * qmu + s1 * s1, axis=1, keepdims=True)     # (TQ, 1)
            gn = jnp.sum(gmu * gmu + s2 * s2, axis=0, keepdims=True)     # (1, TG)
            partial = qn + gn - 2.0 * cross
        elif name == "kl":
            var1 = jnp.exp(2.0 * qls)
            w2 = jnp.exp(-2.0 * gls)      # hoisted 1/var2
            partial = (mm(qmu * qmu + var1, w2)
                       - 2.0 * mm(qmu, gmu * w2)
                       + jnp.sum(gmu * gmu * w2, axis=0, keepdims=True)
                       + 2.0 * jnp.sum(qls, axis=1, keepdims=True)
                       - 2.0 * jnp.sum(gls, axis=0, keepdims=True))
        elif name == "js":
            var1 = jnp.exp(2.0 * qls)
            w1 = jnp.exp(-2.0 * qls)
            var2 = jnp.exp(2.0 * gls)
            w2 = jnp.exp(-2.0 * gls)
            term1 = (mm(qmu * qmu + var1, w2)
                     - 2.0 * mm(qmu, gmu * w2)
                     + jnp.sum(gmu * gmu * w2, axis=0, keepdims=True))
            term2 = (jnp.sum(qmu * qmu * w1, axis=1, keepdims=True)
                     - 2.0 * mm(qmu * w1, gmu)
                     + mm(w1, gmu * gmu + var2))
            partial = term1 + term2
        else:
            raise ValueError(name)

        # TODO(synk): if the bundle dump shows XLU as a secondary limiter, fold the
        # row/col sums into the MXU by appending a ones column/row to the operands.
        out_ref[...] += partial

        @pl.when(k == pl.num_programs(2) - 1)
        def _finalize():
            out_ref[...] = -out_ref[...]

    return kernel


def _make_pairwise_kernel(name, dc, use_bf16_compute, approx_recip, unroll=8):
    """elk / bhattacharyya: per-(q, g, d) math, EUP-bound (log + reciprocal)."""
    cdt = jnp.bfloat16 if use_bf16_compute else jnp.float32
    final_scale = -0.5 if name == "elk" else -0.25

    def kernel(qmu_ref, qls_ref, gmut_ref, glst_ref, out_ref):
        k = pl.program_id(2)

        @pl.when(k == 0)
        def _init():
            out_ref[...] = jnp.zeros_like(out_ref)

        qls = qls_ref[...]                      # (TQ, DC) f32
        gls = glst_ref[...]                     # (DC, TG) f32
        qmu_c = qmu_ref[...].astype(cdt)        # (TQ, DC) compute dtype
        gmu_c = gmut_ref[...].astype(cdt)       # (DC, TG)
        qvar = jnp.exp(2.0 * qls)               # (TQ, DC) f32 (hoisted out of the loop)
        gvar = jnp.exp(2.0 * gls)               # (DC, TG) f32

        # Statically-unrolled loop over the D chunk, flushed into the resident
        # accumulator every `unroll` dims to bound live ranges / vreg pressure.
        for sb in range(dc // unroll):
            part = jnp.zeros(out_ref.shape, cdt)
            for u in range(unroll):
                r = sb * unroll + u
                a = qmu_c[:, r:r + 1]           # (TQ, 1)  q lane-column slice
                b = gmu_c[r:r + 1, :]           # (1, TG)  gallery sublane-row slice
                ssq = qvar[:, r:r + 1] + gvar[r:r + 1, :]       # (TQ, TG) f32
                # Mosaic approx reciprocal is f32-only; everything else runs in `cdt`
                # (bf16 on v6e/v7x halves the VPU/EUP element cost on the hot unit).
                inv = pl.reciprocal(ssq, approx=approx_recip).astype(cdt)
                diff = a - b
                lterm = jnp.log(ssq.astype(cdt))
                if name == "bhattacharyya":
                    lterm = lterm + lterm       # 2*log(var1+var2)
                part = part + diff * diff * inv + lterm
            out_ref[...] += part.astype(jnp.float32)

        if name == "bhattacharyya":
            # 2*log(s1/s2 + s2/s1) == 2*log(var1+var2) - 2*ls1 - 2*ls2; the separable
            # -2*ls pieces and the -2*log(2) constant are added once per chunk in f32.
            out_ref[...] += (-2.0 * jnp.sum(qls, axis=1, keepdims=True)
                             - 2.0 * jnp.sum(gls, axis=0, keepdims=True)
                             - dc * _LOG4)

        @pl.when(k == pl.num_programs(2) - 1)
        def _finalize():
            out_ref[...] = out_ref[...] * final_scale

    return kernel


@functools.partial(
    jax.jit,
    static_argnames=("name", "tq", "tg", "dc", "use_bf16_mxu", "pairwise_bf16",
                     "approx_recip"))
def _sims_padded(q_mu, q_ls, g_mu_t, g_ls_t, *, name, tq, tg, dc,
                 use_bf16_mxu, pairwise_bf16, approx_recip):
    Qp, Dp = q_mu.shape
    _, Gp = g_mu_t.shape
    grid = (Qp // tq, Gp // tg, Dp // dc)

    if name in _SEPARABLE:
        kernel = _make_separable_kernel(name, use_bf16_mxu)
        vmem = 40 * 1024 * 1024   # fits bigger separable tiles, headroom on v7x 64 MiB
    else:
        kernel = _make_pairwise_kernel(name, dc, pairwise_bf16, approx_recip)
        vmem = 32 * 1024 * 1024

    return pl.pallas_call(
        kernel,
        out_shape=jax.ShapeDtypeStruct((Qp, Gp), jnp.float32),
        grid=grid,
        in_specs=[
            pl.BlockSpec((tq, dc), lambda i, j, k: (i, k)),   # q_mu tile
            pl.BlockSpec((tq, dc), lambda i, j, k: (i, k)),   # q_log_sigma tile
            pl.BlockSpec((dc, tg), lambda i, j, k: (k, j)),   # gallery mu^T tile
            pl.BlockSpec((dc, tg), lambda i, j, k: (k, j)),   # gallery log_sigma^T tile
        ],
        out_specs=pl.BlockSpec((tq, tg), lambda i, j, k: (i, j)),
        compiler_params=pltpu.CompilerParams(
            dimension_semantics=("parallel", "parallel", "arbitrary"),
            vmem_limit_bytes=vmem,
        ),
    )(q_mu, q_ls, g_mu_t, g_ls_t)


def hybrid_distance_sims(q_mu, q_ls, g_mu, g_ls, dist_fn_name, *,
                         tq=None, tg=None, dc=None,
                         use_bf16_mxu=False,     # keep f32 MXU by default (wasserstein cancellation)
                         pairwise_bf16=True,     # set False on v5e (no bf16 VPU/EUP)
                         approx_recip=True):
    """Full pairwise sims[Q, G] (negative distances), computed in Pallas."""
    q_mu = jnp.asarray(q_mu, jnp.float32)
    q_ls = jnp.asarray(q_ls, jnp.float32)
    g_mu = jnp.asarray(g_mu, jnp.float32)
    g_ls = jnp.asarray(g_ls, jnp.float32)

    Q, D = q_mu.shape
    G, Dg = g_mu.shape
    assert D == Dg

    TQ, TG, DC, Qp, Gp, Dp = _pick_tiles(dist_fn_name, Q, G, D, tq, tg, dc)

    q_mu_p = _pad2(q_mu, Qp, Dp)
    q_ls_p = _pad2(q_ls, Qp, Dp)
    # Gallery goes in transposed (D, G): gallery items on the lane axis => lane-dense
    # output tile and an MXU-ready RHS.
    # TODO(synk): cache the padded+transposed gallery across calls (gallery is set
    # once per retrieval run) instead of re-padding/transposing every forward.
    g_mu_t = _pad2(g_mu, Gp, Dp).T
    g_ls_t = _pad2(g_ls, Gp, Dp).T

    sims = _sims_padded(q_mu_p, q_ls_p, g_mu_t, g_ls_t,
                        name=dist_fn_name, tq=TQ, tg=TG, dc=DC,
                        use_bf16_mxu=use_bf16_mxu, pairwise_bf16=pairwise_bf16,
                        approx_recip=approx_recip)
    sims = sims[:Q, :G]

    d_pad = Dp - D
    if d_pad:
        # Remove the (constant) contribution of the zero-padded embedding dims.
        sims = sims + _PAD_OFFSET[dist_fn_name] * d_pad
    return sims


def hybrid_distance_forward(q_mu, q_ls, g_mu, g_ls, dist_fn_name, **kw):
    """Mirrors HybridDistanceModule.forward: returns (sorted(-sims), pred_ranks)."""
    sims = hybrid_distance_sims(q_mu, q_ls, g_mu, g_ls, dist_fn_name, **kw)
    neg = -sims
    idx = jnp.broadcast_to(
        jnp.arange(neg.shape[-1], dtype=jnp.int32)[None, :], neg.shape)
    # Single combined sort returning both values and ranks (instead of sort+argsort).
    sorted_neg, pred_ranks = jax.lax.sort((neg, idx), dimension=-1,
                                          is_stable=True, num_keys=1)
    return sorted_neg, pred_ranks


def _ref_sims(q_mu, q_ls, g_mu, g_ls, name):
    """Plain-JAX reference (same math as the torch distance functions)."""
    diff2 = (q_mu[:, None, :] - g_mu[None, :, :]) ** 2
    ls1 = q_ls[:, None, :]
    ls2 = g_ls[None, :, :]
    if name == "elk":
        ssq = jnp.exp(2 * ls1) + jnp.exp(2 * ls2)
        return -0.5 * jnp.sum(diff2 / ssq + jnp.log(ssq), axis=-1)
    if name == "wasserstein":
        return -jnp.sum(diff2 + (jnp.exp(ls1) - jnp.exp(ls2)) ** 2, axis=-1)
    if name == "kl":
        var2 = jnp.exp(2 * ls2)
        return -jnp.sum(diff2 / var2 + 2 * (ls1 - ls2) + jnp.exp(2 * ls1) / var2, axis=-1)
    if name == "js":
        var1 = jnp.exp(2 * ls1)
        var2 = jnp.exp(2 * ls2)
        return -jnp.sum((diff2 + var1) / var2 + (diff2 + var2) / var1, axis=-1)
    if name == "bhattacharyya":
        s1, s2 = jnp.exp(ls1), jnp.exp(ls2)
        d = diff2 / (jnp.exp(2 * ls1) + jnp.exp(2 * ls2))
        d = d + 2 * jnp.log(s1 / s2 + s2 / s1)
        d = (d - _LOG4) / 4.0
        return -jnp.sum(d, axis=-1)
    raise ValueError(name)


if __name__ == "__main__":
    # Small deterministic shapes: Q queries, G gallery items, D embedding dim.
    Q, G, D = 8, 16, 32
    key = jax.random.PRNGKey(0)
    k1, k2, k3, k4 = jax.random.split(key, 4)

    q_features = jax.random.normal(k1, (Q, D), dtype=jnp.float32)
    q_log_sigmas = 0.1 * jax.random.normal(k2, (Q, D), dtype=jnp.float32)
    g_features = jax.random.normal(k3, (G, D), dtype=jnp.float32)     # set_g_features
    g_log_sigmas = 0.1 * jax.random.normal(k4, (G, D), dtype=jnp.float32)

    # elk / bhattacharyya use bf16 per-pair math + approx reciprocal => looser tol;
    # the MXU-decomposed f32 branches only reassociate sums.
    tols = {"elk": 4e-2, "bhattacharyya": 4e-2,
            "wasserstein": 1e-3, "kl": 1e-3, "js": 1e-3}

    for name in ("elk", "wasserstein", "kl", "js", "bhattacharyya"):
        tol = tols[name]

        sims = hybrid_distance_sims(q_features, q_log_sigmas,
                                    g_features, g_log_sigmas, name)
        sims = jax.block_until_ready(sims)
        ref = _ref_sims(q_features, q_log_sigmas, g_features, g_log_sigmas, name)
        np.testing.assert_allclose(np.asarray(sims), np.asarray(ref),
                                   rtol=tol, atol=tol)

        sorted_sims, pred_ranks = hybrid_distance_forward(
            q_features, q_log_sigmas, g_features, g_log_sigmas, name)
        sorted_sims = jax.block_until_ready(sorted_sims)
        pred_ranks = jax.block_until_ready(pred_ranks)

        # Sorted values match the reference (sorting is 1-Lipschitz in sup norm),
        # and pred_ranks reorder -sims into ascending order, exactly like
        # `(-sims).sort()` in the torch forward.
        ref_sorted = jnp.sort(-ref, axis=-1)
        np.testing.assert_allclose(np.asarray(sorted_sims), np.asarray(ref_sorted),
                                   rtol=tol, atol=tol)
        gathered = jnp.take_along_axis(-sims, pred_ranks, axis=-1)
        np.testing.assert_array_equal(np.asarray(gathered), np.asarray(sorted_sims))
        assert bool(jnp.all(jnp.diff(gathered, axis=-1) >= 0))

    print("KERNEL_OK")
</pallas_src>

<mosaic_0001>
module attributes {stable_mosaic.version = 11 : i64} {
  func.func @kernel(%arg0: i32, %arg1: i32, %arg2: i32, %arg3: memref<8x128xf32, #tpu.memory_space<vmem>>, %arg4: memref<8x128xf32, #tpu.memory_space<vmem>>, %arg5: memref<128x128xf32, #tpu.memory_space<vmem>>, %arg6: memref<128x128xf32, #tpu.memory_space<vmem>>, %arg7: memref<8x128xf32, #tpu.memory_space<vmem>>) attributes {dimension_semantics = [#tpu.dimension_semantics<parallel>, #tpu.dimension_semantics<parallel>, #tpu.dimension_semantics<arbitrary>], iteration_bounds = array<i64: 1, 1, 1>, scalar_prefetch = 0 : i64, scratch_operands = 0 : i64, tpu.core_type = #tpu.core_type<tc>, window_params = [{transform_indices = @transform_0, window_bounds = array<i64: 8, 128>}, {transform_indices = @transform_1, window_bounds = array<i64: 8, 128>}, {transform_indices = @transform_2, window_bounds = array<i64: 128, 128>}, {transform_indices = @transform_3, window_bounds = array<i64: 128, 128>}, {transform_indices = @transform_4, window_bounds = array<i64: 8, 128>}]} {
    %c0_i32 = arith.constant 0 : i32
    %0 = arith.cmpi eq, %arg2, %c0_i32 : i32
    %1 = arith.extui %0 : i1 to i32
    %c0_i32_0 = arith.constant 0 : i32
    %2 = arith.cmpi ne, %1, %c0_i32_0 : i32
    scf.if %2 {
      %cst_91 = arith.constant 0.000000e+00 : f32
      %2402 = vector.broadcast %cst_91 : f32 to vector<8x128xf32>
      %c0_92 = arith.constant 0 : index
      %c0_93 = arith.constant 0 : index
      %2403 = vector.load %arg7[%c0_92, %c0_93] : memref<8x128xf32, #tpu.memory_space<vmem>>, vector<8x128xf32>
      tpu.vector_store %arg7[%c0_92, %c0_93], %2402 {strides = array<i32>} : memref<8x128xf32, #tpu.memory_space<vmem>>, vector<8x128xf32>,
    } else {
    }
    %c0 = arith.constant 0 : index
    %c0_1 = arith.constant 0 : index
    %3 = vector.load %arg4[%c0, %c0_1] : memref<8x128xf32, #tpu.memory_space<vmem>>, vector<8x128xf32>
    %c0_2 = arith.constant 0 : index
    %c0_3 = arith.constant 0 : index
    %4 = vector.load %arg6[%c0_2, %c0_3] : memref<128x128xf32, #tpu.memory_space<vmem>>, vector<128x128xf32>
    %c0_4 = arith.constant 0 : index
    %c0_5 = arith.constant 0 : index
    %5 = vector.load %arg3[%c0_4, %c0_5] : memref<8x128xf32, #tpu.memory_space<vmem>>, vector<8x128xf32>
    %6 = arith.truncf %5 : vector<8x128xf32> to vector<8x128xbf16>
    %c0_6 = arith.constant 0 : index
    %c0_7 = arith.constant 0 : index
    %7 = vector.load %arg5[%c0_6, %c0_7] : memref<128x128xf32, #tpu.memory_space<vmem>>, vector<128x128xf32>
    %8 = arith.truncf %7 : vector<128x128xf32> to vector<128x128xbf16>
    %cst = arith.constant 2.000000e+00 : f32
    %9 = vector.broadcast %cst : f32 to vector<8x128xf32>
    %10 = arith.mulf %9, %3 : vector<8x128xf32>
    %11 = math.exp %10 : vector<8x128xf32>
    %cst_8 = arith.constant 2.000000e+00 : f32
    %12 = vector.broadcast %cst_8 : f32 to vector<128x128xf32>
    %13 = arith.mulf %12, %4 : vector<128x128xf32>
    %14 = math.exp %13 : vector<128x128xf32>
    %cst_9 = arith.constant 0.000000e+00 : bf16
    %15 = vector.broadcast %cst_9 : bf16 to vector<8x128xbf16>
    %16 = vector.extract_strided_slice %6 {offsets = [0, 0], sizes = [8, 1], strides = [1, 1]} : vector<8x128xbf16> to vector<8x1xbf16>
    %17 = vector.extract_strided_slice %8 {offsets = [0, 0], sizes = [1, 128], strides = [1, 1]} : vector<128x128xbf16> to vector<1x128xbf16>
    %18 = vector.extract_strided_slice %11 {offsets = [0, 0], sizes = [8, 1], strides = [1, 1]} : vector<8x128xf32> to vector<8x1xf32>
    %19 = vector.extract_strided_slice %14 {offsets = [0, 0], sizes = [1, 128], strides = [1, 1]} : vector<128x128xf32> to vector<1x128xf32>
    %20 = vector.broadcast %18 : vector<8x1xf32> to vector<8x128xf32>
    %21 = vector.broadcast %19 : vector<1x128xf32> to vector<8x128xf32>
    %22 = arith.addf %20, %21 : vector<8x128xf32>
    %23 = tpu.reciprocal %22 {approx = true} : vector<8x128xf32> -> vector<8x128xf32>
    %24 = arith.truncf %23 : vector<8x128xf32> to vector<8x128xbf16>
    %25 = vector.broadcast %16 : vector<8x1xbf16> to vector<8x128xbf16>
    %26 = vector.broadcast %17 : vector<1x128xbf16> to vector<8x128xbf16>
    %27 = arith.subf %25, %26 : vector<8x128xbf16>
    %28 = arith.truncf %22 : vector<8x128xf32> to vector<8x128xbf16>
    %29 = math.log %28 : vector<8x128xbf16>
    %30 = arith.mulf %27, %27 : vector<8x128xbf16>
    %31 = arith.mulf %30, %24 : vector<8x128xbf16>
    %32 = arith.addf %15, %31 : vector<8x128xbf16>
    %33 = arith.addf %32, %29 : vector<8x128xbf16>
    %34 = vector.extract_strided_slice %6 {offsets = [0, 1], sizes = [8, 1], strides = [1, 1]} : vector<8x128xbf16> to vector<8x1xbf16>
    %35 = vector.extract_strided_slice %8 {offsets = [1, 0], sizes = [1, 128], strides = [1, 1]} : vector<128x128xbf16> to vector<1x128xbf16>
    %36 = vector.extract_strided_slice %11 {offsets = [0, 1], sizes = [8, 1], strides = [1, 1]} : vector<8x128xf32> to vector<8x1xf32>
    %37 = vector.extract_strided_slice %14 {offsets = [1, 0], sizes = [1, 128], strides = [1, 1]} : vector<128x128xf32> to vector<1x128xf32>
    %38 = vector.broadcast %36 : vector<8x1xf32> to vector<8x128xf32>
    %39 = vector.broadcast %37 : vector<1x128xf32> to vector<8x128xf32>
    %40 = arith.addf %38, %39 : vector<8x128xf32>
    %41 = tpu.reciprocal %40 {approx = true} : vector<8x128xf32> -> vector<8x128xf32>
    %42 = arith.truncf %41 : vector<8x128xf32> to vector<8x128xbf16>
    %43 = vector.broadcast %34 : vector<8x1xbf16> to vector<8x128xbf16>
    %44 = vector.broadcast %35 : vector<1x128xbf16> to vector<8x128xbf16>
    %45 = arith.subf %43, %44 : vector<8x128xbf16>
    %46 = arith.truncf %40 : vector<8x128xf32> to vector<8x128xbf16>
    %47 = math.log %46 : vector<8x128xbf16>
    %48 = arith.mulf %45, %45 : vector<8x128xbf16>
    %49 = arith.mulf %48, %42 : vector<8x128xbf16>
    %50 = arith.addf %33, %49 : vector<8x128xbf16>
    %51 = arith.addf %50, %47 : vector<8x128xbf16>
    %52 = vector.extract_strided_slice %6 {offsets = [0, 2], sizes = [8, 1], strides = [1, 1]} : vector<8x128xbf16> to vector<8x1xbf16>
    %53 = vector.extract_strided_slice %8 {offsets = [2, 0], sizes = [1, 128], strides = [1, 1]} : vector<128x128xbf16> to vector<1x128xbf16>
    %54 = vector.extract_strided_slice %11 {offsets = [0, 2], sizes = [8, 1], strides = [1, 1]} : vector<8x128xf32> to vector<8x1xf32>
    %55 = vector.extract_strided_slice %14 {offsets = [2, 0], sizes = [1, 128], strides = [1, 1]} : vector<128x128xf32> to vector<1x128xf32>
    %56 = vector.broadcast %54 : vector<8x1xf32> to vector<8x128xf32>
    %57 = vector.broadcast %55 : vector<1x128xf32> to vector<8x128xf32>
    %58 = arith.addf %56, %57 : vector<8x128xf32>
    %59 = tpu.reciprocal %58 {approx = true} : vector<8x128xf32> -> vector<8x128xf32>
    %60 = arith.truncf %59 : vector<8x128xf32> to vector<8x128xbf16>
    %61 = vector.broadcast %52 : vector<8x1xbf16> to vector<8x128xbf16>
    %62 = vector.broadcast %53 : vector<1x128xbf16> to vector<8x128xbf16>
    %63 = arith.subf %61, %62 : vector<8x128xbf16>
    %64 = arith.truncf %58 : vector<8x128xf32> to vector<8x128xbf16>
    %65 = math.log %64 : vector<8x128xbf16>
    %66 = arith.mulf %63, %63 : vector<8x128xbf16>
    %67 = arith.mulf %66, %60 : vector<8x128xbf16>
    %68 = arith.addf %51, %67 : vector<8x128xbf16>
    %69 = arith.addf %68, %65 : vector<8x128xbf16>
    %70 = vector.extract_strided_slice %6 {offsets = [0, 3], sizes = [8, 1], strides = [1, 1]} : vector<8x128xbf16> to vector<8x1xbf16>
    %71 = vector.extract_strided_slice %8 {offsets = [3, 0], sizes = [1, 128], strides = [1, 1]} : vector<128x128xbf16> to vector<1x128xbf16>
    %72 = vector.extract_strided_slice %11 {offsets = [0, 3], sizes = [8, 1], strides = [1, 1]} : vector<8x128xf32> to vector<8x1xf32>
    %73 = vector.extract_strided_slice %14 {offsets = [3, 0], sizes = [1, 128], strides = [1, 1]} : vector<128x128xf32> to vector<1x128xf32>
    %74 = vector.broadcast %72 : vector<8x1xf32> to vector<8x128xf32>
    %75 = vector.broadcast %73 : vector<1x128xf32> to vector<8x128xf32>
    %76 = arith.addf %74, %75 : vector<8x128xf32>
    %77 = tpu.reciprocal %76 {approx = true} : vector<8x128xf32> -> vector<8x128xf32>
    %78 = arith.truncf %77 : vector<8x128xf32> to vector<8x128xbf16>
    %79 = vector.broadcast %70 : vector<8x1xbf16> to vector<8x128xbf16>
    %80 = vector.broadcast %71 : vector<1x128xbf16> to vector<8x128xbf16>
    %81 = arith.subf %79, %80 : vector<8x128xbf16>
    %82 = arith.truncf %76 : vector<8x128xf32> to vector<8x128xbf16>
    %83 = math.log %82 : vector<8x128xbf16>
    %84 = arith.mulf %81, %81 : vector<8x128xbf16>
    %85 = arith.mulf %84, %78 : vector<8x128xbf16>
    %86 = arith.addf %69, %85 : vector<8x128xbf16>
    %87 = arith.addf %86, %83 : vector<8x128xbf16>
    %88 = vector.extract_strided_slice %6 {offsets = [0, 4], sizes = [8, 1], strides = [1, 1]} : vector<8x128xbf16> to vector<8x1xbf16>
    %89 = vector.extract_strided_slice %8 {offsets = [4, 0], sizes = [1, 128], strides = [1, 1]} : vector<128x128xbf16> to vector<1x128xbf16>
    %90 = vector.extract_strided_slice %11 {offsets = [0, 4], sizes = [8, 1], strides = [1, 1]} : vector<8x128xf32> to vector<8x1xf32>
    %91 = vector.extract_strided_slice %14 {offsets = [4, 0], sizes = [1, 128], strides = [1, 1]} : vector<128x128xf32> to vector<1x128xf32>
    %92 = vector.broadcast %90 : vector<8x1xf32> to vector<8x128xf32>
    %93 = vector.broadcast %91 : vector<1x128xf32> to vector<8x128xf32>
    %94 = arith.addf %92, %93 : vector<8x128xf32>
    %95 = tpu.reciprocal %94 {approx = true} : vector<8x128xf32> -> vector<8x128xf32>
    %96 = arith.truncf %95 : vector<8x128xf32> to vector<8x128xbf16>
    %97 = vector.broadcast %88 : vector<8x1xbf16> to vector<8x128xbf16>
    %98 = vector.broadcast %89 : vector<1x128xbf16> to vector<8x128xbf16>
    %99 = arith.subf %97, %98 : vector<8x128xbf16>
    %100 = arith.truncf %94 : vector<8x128xf32> to vector<8x128xbf16>
    %101 = math.log %100 : vector<8x128xbf16>
    %102 = arith.mulf %99, %99 : vector<8x128xbf16>
    %103 = arith.mulf %102, %96 : vector<8x128xbf16>
    %104 = arith.addf %87, %103 : vector<8x128xbf16>
    %105 = arith.addf %104, %101 : vector<8x128xbf16>
    %106 = vector.extract_strided_slice %6 {offsets = [0, 5], sizes = [8, 1], strides = [1, 1]} : vector<8x128xbf16> to vector<8x1xbf16>
    %107 = vector.extract_strided_slice %8 {offsets = [5, 0], sizes = [1, 128], strides = [1, 1]} : vector<128x128xbf16> to vector<1x128xbf16>
    %108 = vector.extract_strided_slice %11 {offsets = [0, 5], sizes = [8, 1], strides = [1, 1]} : vector<8x128xf32> to vector<8x1xf32>
    %109 = vector.extract_strided_slice %14 {offsets = [5, 0], sizes = [1, 128], strides = [1, 1]} : vector<128x128xf32> to vector<1x128xf32>
    %110 = vector.broadcast %108 : vector<8x1xf32> to vector<8x128xf32>
    %111 = vector.broadcast %109 : vector<1x128xf32> to vector<8x128xf32>
    %112 = arith.addf %110, %111 : vector<8x128xf32>
    %113 = tpu.reciprocal %112 {approx = true} : vector<8x128xf32> -> vector<8x128xf32>
    %114 = arith.truncf %113 : vector<8x128xf32> to vector<8x128xbf16>
    %115 = vector.broadcast %106 : vector<8x1xbf16> to vector<8x128xbf16>
    %116 = vector.broadcast %107 : vector<1x128xbf16> to vector<8x128xbf16>
    %117 = arith.subf %115, %116 : vector<8x128xbf16>
    %118 = arith.truncf %112 : vector<8x128xf32> to vector<8x128xbf16>
    %119 = math.log %118 : vector<8x128xbf16>
    %120 = arith.mulf %117, %117 : vector<8x128xbf16>
    %121 = arith.mulf %120, %114 : vector<8x128xbf16>
    %122 = arith.addf %105, %121 : vector<8x128xbf16>
    %123 = arith.addf %122, %119 : vector<8x128xbf16>
    %124 = vector.extract_strided_slice %6 {offsets = [0, 6], sizes = [8, 1], strides = [1, 1]} : vector<8x128xbf16> to vector<8x1xbf16>
    %125 = vector.extract_strided_slice %8 {offsets = [6, 0], sizes = [1, 128], strides = [1, 1]} : vector<128x128xbf16> to vector<1x128xbf16>
    %126 = vector.extract_strided_slice %11 {offsets = [0, 6], sizes = [8, 1], strides = [1, 1]} : vector<8x128xf32> to vector<8x1xf32>
    %127 = vector.extract_strided_slice %14 {offsets = [6, 0], sizes = [1, 128], strides = [1, 1]} : vector<128x128xf32> to vector<1x128xf32>
    %128 = vector.broadcast %126 : vector<8x1xf32> to vector<8x128xf32>
    %129 = vector.broadcast %127 : vector<1x128xf32> to vector<8x128xf32>
    %130 = arith.addf %128, %129 : vector<8x128xf32>
    %131 = tpu.reciprocal %130 {approx = true} : vector<8x128xf32> -> vector<8x128xf32>
    %132 = arith.truncf %131 : vector<8x128xf32> to vector<8x128xbf16>
    %133 = vector.broadcast %124 : vector<8x1xbf16> to vector<8x128xbf16>
    %134 = vector.broadcast %125 : vector<1x128xbf16> to vector<8x128xbf16>
    %135 = arith.subf %133, %134 : vector<8x128xbf16>
    %136 = arith.truncf %130 : vector<8x128xf32> to vector<8x128xbf16>
    %137 = math.log %136 : vector<8x128xbf16>
    %138 = arith.mulf %135, %135 : vector<8x128xbf16>
    %139 = arith.mulf %138, %132 : vector<8x128xbf16>
    %140 = arith.addf %123, %139 : vector<8x128xbf16>
    %141 = arith.addf %140, %137 : vector<8x128xbf16>
    %142 = vector.extract_strided_slice %6 {offsets = [0, 7], sizes = [8, 1], strides = [1, 1]} : vector<8x128xbf16> to vector<8x1xbf16>
    %143 = vector.extract_strided_slice %8 {offsets = [7, 0], sizes = [1, 128], strides = [1, 1]} : vector<128x128xbf16> to vector<1x128xbf16>
    %144 = vector.extract_strided_slice %11 {offsets = [0, 7], sizes = [8, 1], strides = [1, 1]} : vector<8x128xf32> to vector<8x1xf32>
    %145 = vector.extract_strided_slice %14 {offsets = [7, 0], sizes = [1, 128], strides = [1, 1]} : vector<128x128xf32> to vector<1x128xf32>
    %146 = vector.broadcast %144 : vector<8x1xf32> to vector<8x128xf32>
    %147 = vector.broadcast %145 : vector<1x128xf32> to vector<8x128xf32>
    %148 = arith.addf %146, %147 : vector<8x128xf32>
    %149 = tpu.reciprocal %148 {approx = true} : vector<8x128xf32> -> vector<8x128xf32>
    %150 = arith.truncf %149 : vector<8x128xf32> to vector<8x128xbf16>
    %151 = vector.broadcast %142 : vector<8x1xbf16> to vector<8x128xbf16>
    %152 = vector.broadcast %143 : vector<1x128xbf16> to vector<8x128xbf16>
    %153 = arith.subf %151, %152 : vector<8x128xbf16>
    %154 = arith.truncf %148 : vector<8x128xf32> to vector<8x128xbf16>
    %155 = math.log %154 : vector<8x128xbf16>
    %156 = arith.mulf %153, %153 : vector<8x128xbf16>
    %157 = arith.mulf %156, %150 : vector<8x128xbf16>
    %158 = arith.addf %141, %157 : vector<8x128xbf16>
    %159 = arith.addf %158, %155 : vector<8x128xbf16>
    %c0_10 = arith.constant 0 : index
    %c0_11 = arith.constant 0 : index
    %160 = vector.load %arg7[%c0_10, %c0_11] : memref<8x128xf32, #tpu.memory_space<vmem>>, vector<8x128xf32>
    %161 = arith.extf %159 : vector<8x128xbf16> to vector<8x128xf32>
    %162 = arith.addf %160, %161 : vector<8x128xf32>
    %c0_12 = arith.constant 0 : index
    %c0_13 = arith.constant 0 : index
    %163 = vector.load %arg7[%c0_12, %c0_13] : memref<8x128xf32, #tpu.memory_space<vmem>>, vector<8x128xf32>
    tpu.vector_store %arg7[%c0_12, %c0_13], %162 {strides = array<i32>} : memref<8x128xf32, #tpu.memory_space<vmem>>, vector<8x128xf32>,
    %cst_14 = arith.constant 0.000000e+00 : bf16
    %164 = vector.broadcast %cst_14 : bf16 to vector<8x128xbf16>
    %165 = vector.extract_strided_slice %6 {offsets = [0, 8], sizes = [8, 1], strides = [1, 1]} : vector<8x128xbf16> to vector<8x1xbf16>
    %166 = vector.extract_strided_slice %8 {offsets = [8, 0], sizes = [1, 128], strides = [1, 1]} : vector<128x128xbf16> to vector<1x128xbf16>
    %167 = vector.extract_strided_slice %11 {offsets = [0, 8], sizes = [8, 1], strides = [1, 1]} : vector<8x128xf32> to vector<8x1xf32>
    %168 = vector.extract_strided_slice %14 {offsets = [8, 0], sizes = [1, 128], strides = [1, 1]} : vector<128x128xf32> to vector<1x128xf32>
    %169 = vector.broadcast %167 : vector<8x1xf32> to vector<8x128xf32>
    %170 = vector.broadcast %168 : vector<1x128xf32> to vector<8x128xf32>
    %171 = arith.addf %169, %170 : vector<8x128xf32>
    %172 = tpu.reciprocal %171 {approx = true} : vector<8x128xf32> -> vector<8x128xf32>
    %173 = arith.truncf %172 : vector<8x128xf32> to vector<8x128xbf16>
    %174 = vector.broadcast %165 : vector<8x1xbf16> to vector<8x128xbf16>
    %175 = vector.broadcast %166 : vector<1x128xbf16> to vector<8x128xbf16>
    %176 = arith.subf %174, %175 : vector<8x128xbf16>
    %177 = arith.truncf %171 : vector<8x128xf32> to vector<8x128xbf16>
    %178 = math.log %177 : vector<8x128xbf16>
    %179 = arith.mulf %176, %176 : vector<8x128xbf16>
    %180 = arith.mulf %179, %173 : vector<8x128xbf16>
    %181 = arith.addf %164, %180 : vector<8x128xbf16>
    %182 = arith.addf %181, %178 : vector<8x128xbf16>
    %183 = vector.extract_strided_slice %6 {offsets = [0, 9], sizes = [8, 1], strides = [1, 1]} : vector<8x128xbf16> to vector<8x1xbf16>
    %184 = vector.extract_strided_slice %8 {offsets = [9, 0], sizes = [1, 128], strides = [1, 1]} : vector<128x128xbf16> to vector<1x128xbf16>
    %185 = vector.extract_strided_slice %11 {offsets = [0, 9], sizes = [8, 1], strides = [1, 1]} : vector<8x128xf32> to vector<8x1xf32>
    %186 = vector.extract_strided_slice %14 {offsets = [9, 0], sizes = [1, 128], strides = [1, 1]} : vector<128x128xf32> to vector<1x128xf32>
    %187 = vector.broadcast %185 : vector<8x1xf32> to vector<8x128xf32>
    %188 = vector.broadcast %186 : vector<1x128xf32> to vector<8x128xf32>
    %189 = arith.addf %187, %188 : vector<8x128xf32>
    %190 = tpu.reciprocal %189 {approx = true} : vector<8x128xf32> -> vector<8x128xf32>
    %191 = arith.truncf %190 : vector<8x128xf32> to vector<8x128xbf16>
    %192 = vector.broadcast %183 : vector<8x1xbf16> to vector<8x128xbf16>
    %193 = vector.broadcast %184 : vector<1x128xbf16> to vector<8x128xbf16>
    %194 = arith.subf %192, %193 : vector<8x128xbf16>
    %195 = arith.truncf %189 : vector<8x128xf32> to vector<8x128xbf16>
    %196 = math.log %195 : vector<8x128xbf16>
    %197 = arith.mulf %194, %194 : vector<8x128xbf16>
    %198 = arith.mulf %197, %191 : vector<8x128xbf16>
    %199 = arith.addf %182, %198 : vector<8x128xbf16>
    %200 = arith.addf %199, %196 : vector<8x128xbf16>
    %201 = vector.extract_strided_slice %6 {offsets = [0, 10], sizes = [8, 1], strides = [1, 1]} : vector<8x128xbf16> to vector<8x1xbf16>
    %202 = vector.extract_strided_slice %8 {offsets = [10, 0], sizes = [1, 128], strides = [1, 1]} : vector<128x128xbf16> to vector<1x128xbf16>
    %203 = vector.extract_strided_slice %11 {offsets = [0, 10], sizes = [8, 1], strides = [1, 1]} : vector<8x128xf32> to vector<8x1xf32>
    %204 = vector.extract_strided_slice %14 {offsets = [10, 0], sizes = [1, 128], strides = [1, 1]} : vector<128x128xf32> to vector<1x128xf32>
    %205 = vector.broadcast %203 : vector<8x1xf32> to vector<8x128xf32>
    %206 = vector.broadcast %204 : vector<1x128xf32> to vector<8x128xf32>
    %207 = arith.addf %205, %206 : vector<8x128xf32>
    %208 = tpu.reciprocal %207 {approx = true} : vector<8x128xf32> -> vector<8x128xf32>
    %209 = arith.truncf %208 : vector<8x128xf32> to vector<8x128xbf16>
    %210 = vector.broadcast %201 : vector<8x1xbf16> to vector<8x128xbf16>
    %211 = vector.broadcast %202 : vector<1x128xbf16> to vector<8x128xbf16>
    %212 = arith.subf %210, %211 : vector<8x128xbf16>
    %213 = arith.truncf %207 : vector<8x128xf32> to vector<8x128xbf16>
    %214 = math.log %213 : vector<8x128xbf16>
    %215 = arith.mulf %212, %212 : vector<8x128xbf16>
    %216 = arith.mulf %215, %209 : vector<8x128xbf16>
    %217 = arith.addf %200, %216 : vector<8x128xbf16>
    %218 = arith.addf %217, %214 : vector<8x128xbf16>
    %219 = vector.extract_strided_slice %6 {offsets = [0, 11], sizes = [8, 1], strides = [1, 1]} : vector<8x128xbf16> to vector<8x1xbf16>
    %220 = vector.extract_strided_slice %8 {offsets = [11, 0], sizes = [1, 128], strides = [1, 1]} : vector<128x128xbf16> to vector<1x128xbf16>
    %221 = vector.extract_strided_slice %11 {offsets = [0, 11], sizes = [8, 1], strides = [1, 1]} : vector<8x128xf32> to vector<8x1xf32>
    %222 = vector.extract_strided_slice %14 {offsets = [11, 0], sizes = [1, 128], strides = [1, 1]} : vector<128x128xf32> to vector<1x128xf32>
    %223 = vector.broadcast %221 : vector<8x1xf32> to vector<8x128xf32>
    %224 = vector.broadcast %222 : vector<1x128xf32> to vector<8x128xf32>
    %225 = arith.addf %223, %224 : vector<8x128xf32>
    %226 = tpu.reciprocal %225 {approx = true} : vector<8x128xf32> -> vector<8x128xf32>
    %227 = arith.truncf %226 : vector<8x128xf32> to vector<8x128xbf16>
    %228 = vector.broadcast %219 : vector<8x1xbf16> to vector<8x128xbf16>
    %229 = vector.broadcast %220 : vector<1x128xbf16> to vector<8x128xbf16>
    %230 = arith.subf %228, %229 : vector<8x128xbf16>
    %231 = arith.truncf %225 : vector<8x128xf32> to vector<8x128xbf16>
    %232 = math.log %231 : vector<8x128xbf16>
    %233 = arith.mulf %230, %230 : vector<8x128xbf16>
    %234 = arith.mulf %233, %227 : vector<8x128xbf16>
    %235 = arith.addf %218, %234 : vector<8x128xbf16>
    %236 = arith.addf %235, %232 : vector<8x128xbf16>
    %237 = vector.extract_strided_slice %6 {offsets = [0, 12], sizes = [8, 1], strides = [1, 1]} : vector<8x128xbf16> to vector<8x1xbf16>
    %238 = vector.extract_strided_slice %8 {offsets = [12, 0], sizes = [1, 128], strides = [1, 1]} : vector<128x128xbf16> to vector<1x128xbf16>
    %239 = vector.extract_strided_slice %11 {offsets = [0, 12], sizes = [8, 1], strides = [1, 1]} : vector<8x128xf32> to vector<8x1xf32>
    %240 = vector.extract_strided_slice %14 {offsets = [12, 0], sizes = [1, 128], strides = [1, 1]} : vector<128x128xf32> to vector<1x128xf32>
    %241 = vector.broadcast %239 : vector<8x1xf32> to vector<8x128xf32>
    %242 = vector.broadcast %240 : vector<1x128xf32> to vector<8x128xf32>
    %243 = arith.addf %241, %242 : vector<8x128xf32>
    %244 = tpu.reciprocal %243 {approx = true} : vector<8x128xf32> -> vector<8x128xf32>
    %245 = arith.truncf %244 : vector<8x128xf32> to vector<8x128xbf16>
    %246 = vector.broadcast %237 : vector<8x1xbf16> to vector<8x128xbf16>
    %247 = vector.broadcast %238 : vector<1x128xbf16> to vector<8x128xbf16>
    %248 = arith.subf %246, %247 : vector<8x128xbf16>
    %249 = arith.truncf %243 : vector<8x128xf32> to vector<8x128xbf16>
    %250 = math.log %249 : vector<8x128xbf16>
    %251 = arith.mulf %248, %248 : vector<8x128xbf16>
    %252 = arith.mulf %251, %245 : vector<8x128xbf16>
    %253 = arith.addf %236, %252 : vector<8x128xbf16>
    %254 = arith.addf %253, %250 : vector<8x128xbf16>
    %255 = vector.extract_strided_slice %6 {offsets = [0, 13], sizes = [8, 1], strides = [1, 1]} : vector<8x128xbf16> to vector<8x1xbf16>
    %256 = vector.extract_strided_slice %8 {offsets = [13, 0], sizes = [1, 128], strides = [1, 1]} : vector<128x128xbf16> to vector<1x128xbf16>
    %257 = vector.extract_strided_slice %11 {offsets = [0, 13], sizes = [8, 1], strides = [1, 1]} : vector<8x128xf32> to vector<8x1xf32>
    %258 = vector.extract_strided_slice %14 {offsets = [13, 0], sizes = [1, 128], strides = [1, 1]} : vector<128x128xf32> to vector<1x128xf32>
    %259 = vector.broadcast %257 : vector<8x1xf32> to vector<8x128xf32>
    %260 = vector.broadcast %258 : vector<1x128xf32> to vector<8x128xf32>
    %261 = arith.addf %259, %260 : vector<8x128xf32>
    %262 = tpu.reciprocal %261 {approx = true} : vector<8x128xf32> -> vector<8x128xf32>
    %263 = arith.truncf %262 : vector<8x128xf32> to vector<8x128xbf16>
    %264 = vector.broadcast %255 : vector<8x1xbf16> to vector<8x128xbf16>
    %265 = vector.broadcast %256 : vector<1x128xbf16> to vector<8x128xbf16>
    %266 = arith.subf %264, %265 : vector<8x128xbf16>
    %267 = arith.truncf %261 : vector<8x128xf32> to vector<8x128xbf16>
    %268 = math.log %267 : vector<8x128xbf16>
    %269 = arith.mulf %266, %266 : vector<8x128xbf16>
    %270 = arith.mulf %269, %263 : vector<8x128xbf16>
    %271 = arith.addf %254, %270 : vector<8x128xbf16>
    %272 = arith.addf %271, %268 : vector<8x128xbf16>
    %273 = vector.extract_strided_slice %6 {offsets = [0, 14], sizes = [8, 1], strides = [1, 1]} : vector<8x128xbf16> to vector<8x1xbf16>
    %274 = vector.extract_strided_slice %8 {offsets = [14, 0], sizes = [1, 128], strides = [1, 1]} : vector<128x128xbf16> to vector<1x128xbf16>
    %275 = vector.extract_strided_slice %11 {offsets = [0, 14], sizes = [8, 1], strides = [1, 1]} : vector<8x128xf32> to vector<8x1xf32>
    %276 = vector.extract_strided_slice %14 {offsets = [14, 0], sizes = [1, 128], strides = [1, 1]} : vector<128x128xf32> to vector<1x128xf32>
    %277 = vector.broadcast %275 : vector<8x1xf32> to vector<8x128xf32>
    %278 = vector.broadcast %276 : vector<1x128xf32> to vector<8x128xf32>
    %279 = arith.addf %277, %278 : vector<8x128xf32>
    %280 = tpu.reciprocal %279 {approx = true} : vector<8x128xf32> -> vector<8x128xf32>
    %281 = arith.truncf %280 : vector<8x128xf32> to vector<8x128xbf16>
    %282 = vector.broadcast %273 : vector<8x1xbf16> to vector<8x128xbf16>
    %283 = vector.broadcast %274 : vector<1x128xbf16> to vector<8x128xbf16>
    %284 = arith.subf %282, %283 : vector<8x128xbf16>
    %285 = arith.truncf %279 : vector<8x128xf32> to vector<8x128xbf16>
    %286 = math.log %285 : vector<8x128xbf16>
    %287 = arith.mulf %284, %284 : vector<8x128xbf16>
    %288 = arith.mulf %287, %281 : vector<8x128xbf16>
    %289 = arith.addf %272, %288 : vector<8x128xbf16>
    %290 = arith.addf %289, %286 : vector<8x128xbf16>
    %291 = vector.extract_strided_slice %6 {offsets = [0, 15], sizes = [8, 1], strides = [1, 1]} : vector<8x128xbf16> to vector<8x1xbf16>
    %292 = vector.extract_strided_slice %8 {offsets = [15, 0], sizes = [1, 128], strides = [1, 1]} : vector<128x128xbf16> to vector<1x128xbf16>
    %293 = vector.extract_strided_slice %11 {offsets = [0, 15], sizes = [8, 1], strides = [1, 1]} : vector<8x128xf32> to vector<8x1xf32>
    %294 = vector.extract_strided_slice %14 {offsets = [15, 0], sizes = [1, 128], strides = [1, 1]} : vector<128x128xf32> to vector<1x128xf32>
    %295 = vector.broadcast %293 : vector<8x1xf32> to vector<8x128xf32>
    %296 = vector.broadcast %294 : vector<1x128xf32> to vector<8x128xf32>
    %297 = arith.addf %295, %296 : vector<8x128xf32>
    %298 = tpu.reciprocal %297 {approx = true} : vector<8x128xf32> -> vector<8x128xf32>
    %299 = arith.truncf %298 : vector<8x128xf32> to vector<8x128xbf16>
    %300 = vector.broadcast %291 : vector<8x1xbf16> to vector<8x128xbf16>
    %301 = vector.broadcast %292 : vector<1x128xbf16> to vector<8x128xbf16>
    %302 = arith.subf %300, %301 : vector<8x128xbf16>
    %303 = arith.truncf %297 : vector<8x128xf32> to vector<8x128xbf16>
    %304 = math.log %303 : vector<8x128xbf16>
    %305 = arith.mulf %302, %302 : vector<8x128xbf16>
    %306 = arith.mulf %305, %299 : vector<8x128xbf16>
    %307 = arith.addf %290, %306 : vector<8x128xbf16>
    %308 = arith.addf %307, %304 : vector<8x128xbf16>
    %c0_15 = arith.constant 0 : index
    %c0_16 = arith.constant 0 : index
    %309 = vector.load %arg7[%c0_15, %c0_16] : memref<8x128xf32, #tpu.memory_space<vmem>>, vector<8x128xf32>
    %310 = arith.extf %308 : vector<8x128xbf16> to vector<8x128xf32>
    %311 = arith.addf %309, %310 : vector<8x128xf32>
    %c0_17 = arith.constant 0 : index
    %c0_18 = arith.constant 0 : index
    %312 = vector.load %arg7[%c0_17, %c0_18] : memref<8x128xf32, #tpu.memory_space<vmem>>, vector<8x128xf32>
    tpu.vector_store %arg7[%c0_17, %c0_18], %311 {strides = array<i32>} : memref<8x128xf32, #tpu.memory_space<vmem>>, vector<8x128xf32>,
    %cst_19 = arith.constant 0.000000e+00 : bf16
    %313 = vector.broadcast %cst_19 : bf16 to vector<8x128xbf16>
    %314 = vector.extract_strided_slice %6 {offsets = [0, 16], sizes = [8, 1], strides = [1, 1]} : vector<8x128xbf16> to vector<8x1xbf16>
    %315 = vector.extract_strided_slice %8 {offsets = [16, 0], sizes = [1, 128], strides = [1, 1]} : vector<128x128xbf16> to vector<1x128xbf16>
    %316 = vector.extract_strided_slice %11 {offsets = [0, 16], sizes = [8, 1], strides = [1, 1]} : vector<8x128xf32> to vector<8x1xf32>
    %317 = vector.extract_strided_slice %14 {offsets = [16, 0], sizes = [1, 128], strides = [1, 1]} : vector<128x128xf32> to vector<1x128xf32>
    %318 = vector.broadcast %316 : vector<8x1xf32> to vector<8x128xf32>
    %319 = vector.broadcast %317 : vector<1x128xf32> to vector<8x128xf32>
    %320 = arith.addf %318, %319 : vector<8x128xf32>
    %321 = tpu.reciprocal %320 {approx = true} : vector<8x128xf32> -> vector<8x128xf32>
    %322 = arith.truncf %321 : vector<8x128xf32> to vector<8x128xbf16>
    %323 = vector.broadcast %314 : vector<8x1xbf16> to vector<8x128xbf16>
    %324 = vector.broadcast %315 : vector<1x128xbf16> to vector<8x128xbf16>
    %325 = arith.subf %323, %324 : vector<8x128xbf16>
    %326 = arith.truncf %320 : vector<8x128xf32> to vector<8x128xbf16>
    %327 = math.log %326 : vector<8x128xbf16>
    %328 = arith.mulf %325, %325 : vector<8x128xbf16>
    %329 = arith.mulf %328, %322 : vector<8x128xbf16>
    %330 = arith.addf %313, %329 : vector<8x128xbf16>
    %331 = arith.addf %330, %327 : vector<8x128xbf16>
    %332 = vector.extract_strided_slice %6 {offsets = [0, 17], sizes = [8, 1], strides = [1, 1]} : vector<8x128xbf16> to vector<8x1xbf16>
    %333 = vector.extract_strided_slice %8 {offsets = [17, 0], sizes = [1, 128], strides = [1, 1]} : vector<128x128xbf16> to vector<1x128xbf16>
    %334 = vector.extract_strided_slice %11 {offsets = [0, 17], sizes = [8, 1], strides = [1, 1]} : vector<8x128xf32> to vector<8x1xf32>
    %335 = vector.extract_strided_slice %14 {offsets = [17, 0], sizes = [1, 128], strides = [1, 1]} : vector<128x128xf32> to vector<1x128xf32>
    %336 = vector.broadcast %334 : vector<8x1xf32> to vector<8x128xf32>
    %337 = vector.broadcast %335 : vector<1x128xf32> to vector<8x128xf32>
    %338 = arith.addf %336, %337 : vector<8x128xf32>
    %339 = tpu.reciprocal %338 {approx = true} : vector<8x128xf32> -> vector<8x128xf32>
    %340 = arith.truncf %339 : vector<8x128xf32> to vector<8x128xbf16>
    %341 = vector.broadcast %332 : vector<8x1xbf16> to vector<8x128xbf16>
    %342 = vector.broadcast %333 : vector<1x128xbf16> to vector<8x128xbf16>
    %343 = arith.subf %341, %342 : vector<8x128xbf16>
    %344 = arith.truncf %338 : vector<8x128xf32> to vector<8x128xbf16>
    %345 = math.log %344 : vector<8x128xbf16>
    %346 = arith.mulf %343, %343 : vector<8x128xbf16>
    %347 = arith.mulf %346, %340 : vector<8x128xbf16>
    %348 = arith.addf %331, %347 : vector<8x128xbf16>
    %349 = arith.addf %348, %345 : vector<8x128xbf16>
    %350 = vector.extract_strided_slice %6 {offsets = [0, 18], sizes = [8, 1], strides = [1, 1]} : vector<8x128xbf16> to vector<8x1xbf16>
    %351 = vector.extract_strided_slice %8 {offsets = [18, 0], sizes = [1, 128], strides = [1, 1]} : vector<128x128xbf16> to vector<1x128xbf16>
    %352 = vector.extract_strided_slice %11 {offsets = [0, 18], sizes = [8, 1], strides = [1, 1]} : vector<8x128xf32> to vector<8x1xf32>
    %353 = vector.extract_strided_slice %14 {offsets = [18, 0], sizes = [1, 128], strides = [1, 1]} : vector<128x128xf32> to vector<1x128xf32>
    %354 = vector.broadcast %352 : vector<8x1xf32> to vector<8x128xf32>
    %355 = vector.broadcast %353 : vector<1x128xf32> to vector<8x128xf32>
    %356 = arith.addf %354, %355 : vector<8x128xf32>
    %357 = tpu.reciprocal %356 {approx = true} : vector<8x128xf32> -> vector<8x128xf32>
    %358 = arith.truncf %357 : vector<8x128xf32> to vector<8x128xbf16>
    %359 = vector.broadcast %350 : vector<8x1xbf16> to vector<8x128xbf16>
    %360 = vector.broadcast %351 : vector<1x128xbf16> to vector<8x128xbf16>
    %361 = arith.subf %359, %360 : vector<8x128xbf16>
    %362 = arith.truncf %356 : vector<8x128xf32> to vector<8x128xbf16>
    %363 = math.log %362 : vector<8x128xbf16>
    %364 = arith.mulf %361, %361 : vector<8x128xbf16>
    %365 = arith.mulf %364, %358 : vector<8x128xbf16>
    %366 = arith.addf %349, %365 : vector<8x128xbf16>
    %367 = arith.addf %366, %363 : vector<8x128xbf16>
    %368 = vector.extract_strided_slice %6 {offsets = [0, 19], sizes = [8, 1], strides = [1, 1]} : vector<8x128xbf16> to vector<8x1xbf16>
    %369 = vector.extract_strided_slice %8 {offsets = [19, 0], sizes = [1, 128], strides = [1, 1]} : vector<128x128xbf16> to vector<1x128xbf16>
    %370 = vector.extract_strided_slice %11 {offsets = [0, 19], sizes = [8, 1], strides = [1, 1]} : vector<8x128xf32> to vector<8x1xf32>
    %371 = vector.extract_strided_slice %14 {offsets = [19, 0], sizes = [1, 128], strides = [1, 1]} : vector<128x128xf32> to vector<1x128xf32>
    %372 = vector.broadcast %370 : vector<8x1xf32> to vector<8x128xf32>
    %373 = vector.broadcast %371 : vector<1x128xf32> to vector<8x128xf32>
    %374 = arith.addf %372, %373 : vector<8x128xf32>
    %375 = tpu.reciprocal %374 {approx = true} : vector<8x128xf32> -> vector<8x128xf32>
    %376 = arith.truncf %375 : vector<8x128xf32> to vector<8x128xbf16>
    %377 = vector.broadcast %368 : vector<8x1xbf16> to vector<8x128xbf16>
    %378 = vector.broadcast %369 : vector<1x128xbf16> to vector<8x128xbf16>
    %379 = arith.subf %377, %378 : vector<8x128xbf16>
    %380 = arith.truncf %374 : vector<8x128xf32> to vector<8x128xbf16>
    %381 = math.log %380 : vector<8x128xbf16>
    %382 = arith.mulf %379, %379 : vector<8x128xbf16>
    %383 = arith.mulf %382, %376 : vector<8x128xbf16>
    %384 = arith.addf %367, %383 : vector<8x128xbf16>
    %385 = arith.addf %384, %381 : vector<8x128xbf16>
    %386 = vector.extract_strided_slice %6 {offsets = [0, 20], sizes = [8, 1], strides = [1, 1]} : vector<8x128xbf16> to vector<8x1xbf16>
    %387 = vector.extract_strided_slice %8 {offsets = [20, 0], sizes = [1, 128], strides = [1, 1]} : vector<128x128xbf16> to vector<1x128xbf16>
    %388 = vector.extract_strided_slice %11 {offsets = [0, 20], sizes = [8, 1], strides = [1, 1]} : vector<8x128xf32> to vector<8x1xf32>
    %389 = vector.extract_strided_slice %14 {offsets = [20, 0], sizes = [1, 128], strides = [1, 1]} : vector<128x128xf32> to vector<1x128xf32>
    %390 = vector.broadcast %388 : vector<8x1xf32> to vector<8x128xf32>
    %391 = vector.broadcast %389 : vector<1x128xf32> to vector<8x128xf32>
    %392 = arith.addf %390, %391 : vector<8x128xf32>
    %393 = tpu.reciprocal %392 {approx = true} : vector<8x128xf32> -> vector<8x128xf32>
    %394 = arith.truncf %393 : vector<8x128xf32> to vector<8x128xbf16>
    %395 = vector.broadcast %386 : vector<8x1xbf16> to vector<8x128xbf16>
    %396 = vector.broadcast %387 : vector<1x128xbf16> to vector<8x128xbf16>
    %397 = arith.subf %395, %396 : vector<8x128xbf16>
    %398 = arith.truncf %392 : vector<8x128xf32> to vector<8x128xbf16>
    %399 = math.log %398 : vector<8x128xbf16>
    %400 = arith.mulf %397, %397 : vector<8x128xbf16>
    %401 = arith.mulf %400, %394 : vector<8x128xbf16>
    %402 = arith.addf %385, %401 : vector<8x128xbf16>
    %403 = arith.addf %402, %399 : vector<8x128xbf16>
    %404 = vector.extract_strided_slice %6 {offsets = [0, 21], sizes = [8, 1], strides = [1, 1]} : vector<8x128xbf16> to vector<8x1xbf16>
    %405 = vector.extract_strided_slice %8 {offsets = [21, 0], sizes = [1, 128], strides = [1, 1]} : vector<128x128xbf16> to vector<1x128xbf16>
    %406 = vector.extract_strided_slice %11 {offsets = [0, 21], sizes = [8, 1], strides = [1, 1]} : vector<8x128xf32> to vector<8x1xf32>
    %407 = vector.extract_strided_slice %14 {offsets = [21, 0], sizes = [1, 128], strides = [1, 1]} : vector<128x128xf32> to vector<1x128xf32>
    %408 = vector.broadcast %406 : vector<8x1xf32> to vector<8x128xf32>
    %409 = vector.broadcast %407 : vector<1x128xf32> to vector<8x128xf32>
    %410 = arith.addf %408, %409 : vector<8x128xf32>
    %411 = tpu.reciprocal %410 {approx = true} : vector<8x128xf32> -> vector<8x128xf32>
    %412 = arith.truncf %411 : vector<8x128xf32> to vector<8x128xbf16>
    %413 = vector.broadcast %404 : vector<8x1xbf16> to vector<8x128xbf16>
    %414 = vector.broadcast %405 : vector<1x128xbf16> to vector<8x128xbf16>
    %415 = arith.subf %413, %414 : vector<8x128xbf16>
    %416 = arith.truncf %410 : vector<8x128xf32> to vector<8x128xbf16>
    %417 = math.log %416 : vector<8x128xbf16>
    %418 = arith.mulf %415, %415 : vector<8x128xbf16>
    %419 = arith.mulf %418, %412 : vector<8x128xbf16>
    %420 = arith.addf %403, %419 : vector<8x128xbf16>
    %421 = arith.addf %420, %417 : vector<8x128xbf16>
    %422 = vector.extract_strided_slice %6 {offsets = [0, 22], sizes = [8, 1], strides = [1, 1]} : vector<8x128xbf16> to vector<8x1xbf16>
    %423 = vector.extract_strided_slice %8 {offsets = [22, 0], sizes = [1, 128], strides = [1, 1]} : vector<128x128xbf16> to vector<1x128xbf16>
    %424 = vector.extract_strided_slice %11 {offsets = [0, 22], sizes = [8, 1], strides = [1, 1]} : vector<8x128xf32> to vector<8x1xf32>
    %425 = vector.extract_strided_slice %14 {offsets = [22, 0], sizes = [1, 128], strides = [1, 1]} : vector<128x128xf32> to vector<1x128xf32>
    %426 = vector.broadcast %424 : vector<8x1xf32> to vector<8x128xf32>
    %427 = vector.broadcast %425 : vector<1x128xf32> to vector<8x128xf32>
    %428 = arith.addf %426, %427 : vector<8x128xf32>
    %429 = tpu.reciprocal %428 {approx = true} : vector<8x128xf32> -> vector<8x128xf32>
    %430 = arith.truncf %429 : vector<8x128xf32> to vector<8x128xbf16>
    %431 = vector.broadcast %422 : vector<8x1xbf16> to vector<8x128xbf16>
    %432 = vector.broadcast %423 : vector<1x128xbf16> to vector<8x128xbf16>
    %433 = arith.subf %431, %432 : vector<8x128xbf16>
    %434 = arith.truncf %428 : vector<8x128xf32> to vector<8x128xbf16>
    %435 = math.log %434 : vector<8x128xbf16>
    %436 = arith.mulf %433, %433 : vector<8x128xbf16>
    %437 = arith.mulf %436, %430 : vector<8x128xbf16>
    %438 = arith.addf %421, %437 : vector<8x128xbf16>
    %439 = arith.addf %438, %435 : vector<8x128xbf16>
    %440 = vector.extract_strided_slice %6 {offsets = [0, 23], sizes = [8, 1], strides = [1, 1]} : vector<8x128xbf16> to vector<8x1xbf16>
    %441 = vector.extract_strided_slice %8 {offsets = [23, 0], sizes = [1, 128], strides = [1, 1]} : vector<128x128xbf16> to vector<1x128xbf16>
    %442 = vector.extract_strided_slice %11 {offsets = [0, 23], sizes = [8, 1], strides = [1, 1]} : vector<8x128xf32> to vector<8x1xf32>
    %443 = vector.extract_strided_slice %14 {offsets = [23, 0], sizes = [1, 128], strides = [1, 1]} : vector<128x128xf32> to vector<1x128xf32>
    %444 = vector.broadcast %442 : vector<8x1xf32> to vector<8x128xf32>
    %445 = vector.broadcast %443 : vector<1x128xf32> to vector<8x128xf32>
    %446 = arith.addf %444, %445 : vector<8x128xf32>
    %447 = tpu.reciprocal %446 {approx = true} : vector<8x128xf32> -> vector<8x128xf32>
    %448 = arith.truncf %447 : vector<8x128xf32> to vector<8x128xbf16>
    %449 = vector.broadcast %440 : vector<8x1xbf16> to vector<8x128xbf16>
    %450 = vector.broadcast %441 : vector<1x128xbf16> to vector<8x128xbf16>
    %451 = arith.subf %449, %450 : vector<8x128xbf16>
    %452 = arith.truncf %446 : vector<8x128xf32> to vector<8x128xbf16>
    %453 = math.log %452 : vector<8x128xbf16>
    %454 = arith.mulf %451, %451 : vector<8x128xbf16>
    %455 = arith.mulf %454, %448 : vector<8x128xbf16>
    %456 = arith.addf %439, %455 : vector<8x128xbf16>
    %457 = arith.addf %456, %453 : vector<8x128xbf16>
    %c0_20 = arith.constant 0 : index
    %c0_21 = arith.constant 0 : index
    %458 = vector.load %arg7[%c0_20, %c0_21] : memref<8x128xf32, #tpu.memory_space<vmem>>, vector<8x128xf32>
    %459 = arith.extf %457 : vector<8x128xbf16> to vector<8x128xf32>
    %460 = arith.addf %458, %459 : vector<8x128xf32>
    %c0_22 = arith.constant 0 : index
    %c0_23 = arith.constant 0 : index
    %461 = vector.load %arg7[%c0_22, %c0_23] : memref<8x128xf32, #tpu.memory_space<vmem>>, vector<8x128xf32>
    tpu.vector_store %arg7[%c0_22, %c0_23], %460 {strides = array<i32>} : memref<8x128xf32, #tpu.memory_space<vmem>>, vector<8x128xf32>,
    %cst_24 = arith.constant 0.000000e+00 : bf16
    %462 = vector.broadcast %cst_24 : bf16 to vector<8x128xbf16>
    %463 = vector.extract_strided_slice %6 {offsets = [0, 24], sizes = [8, 1], strides = [1, 1]} : vector<8x128xbf16> to vector<8x1xbf16>
    %464 = vector.extract_strided_slice %8 {offsets = [24, 0], sizes = [1, 128], strides = [1, 1]} : vector<128x128xbf16> to vector<1x128xbf16>
    %465 = vector.extract_strided_slice %11 {offsets = [0, 24], sizes = [8, 1], strides = [1, 1]} : vector<8x128xf32> to vector<8x1xf32>
    %466 = vector.extract_strided_slice %14 {offsets = [24, 0], sizes = [1, 128], strides = [1, 1]} : vector<128x128xf32> to vector<1x128xf32>
    %467 = vector.broadcast %465 : vector<8x1xf32> to vector<8x128xf32>
    %468 = vector.broadcast %466 : vector<1x128xf32> to vector<8x128xf32>
    %469 = arith.addf %467, %468 : vector<8x128xf32>
    %470 = tpu.reciprocal %469 {approx = true} : vector<8x128xf32> -> vector<8x128xf32>
    %471 = arith.truncf %470 : vector<8x128xf32> to vector<8x128xbf16>
    %472 = vector.broadcast %463 : vector<8x1xbf16> to vector<8x128xbf16>
    %473 = vector.broadcast %464 : vector<1x128xbf16> to vector<8x128xbf16>
    %474 = arith.subf %472, %473 : vector<8x128xbf16>
    %475 = arith.truncf %469 : vector<8x128xf32> to vector<8x128xbf16>
    %476 = math.log %475 : vector<8x128xbf16>
    %477 = arith.mulf %474, %474 : vector<8x128xbf16>
    %478 = arith.mulf %477, %471 : vector<8x128xbf16>
    %479 = arith.addf %462, %478 : vector<8x128xbf16>
    %480 = arith.addf %479, %476 : vector<8x128xbf16>
    %481 = vector.extract_strided_slice %6 {offsets = [0, 25], sizes = [8, 1], strides = [1, 1]} : vector<8x128xbf16> to vector<8x1xbf16>
    %482 = vector.extract_strided_slice %8 {offsets = [25, 0], sizes = [1, 128], strides = [1, 1]} : vector<128x128xbf16> to vector<1x128xbf16>
    %483 = vector.extract_strided_slice %11 {offsets = [0, 25], sizes = [8, 1], strides = [1, 1]} : vector<8x128xf32> to vector<8x1xf32>
    %484 = vector.extract_strided_slice %14 {offsets = [25, 0], sizes = [1, 128], strides = [1, 1]} : vector<128x128xf32> to vector<1x128xf32>
    %485 = vector.broadcast %483 : vector<8x1xf32> to vector<8x128xf32>
    %486 = vector.broadcast %484 : vector<1x128xf32> to vector<8x128xf32>
    %487 = arith.addf %485, %486 : vector<8x128xf32>
    %488 = tpu.reciprocal %487 {approx = true} : vector<8x128xf32> -> vector<8x128xf32>
    %489 = arith.truncf %488 : vector<8x128xf32> to vector<8x128xbf16>
    %490 = vector.broadcast %481 : vector<8x1xbf16> to vector<8x128xbf16>
    %491 = vector.broadcast %482 : vector<1x128xbf16> to vector<8x128xbf16>
    %492 = arith.subf %490, %491 : vector<8x128xbf16>
    %493 = arith.truncf %487 : vector<8x128xf32> to vector<8x128xbf16>
    %494 = math.log %493 : vector<8x128xbf16>
    %495 = arith.mulf %492, %492 : vector<8x128xbf16>
    %496 = arith.mulf %495, %489 : vector<8x128xbf16>
    %497 = arith.addf %480, %496 : vector<8x128xbf16>
    %498 = arith.addf %497, %494 : vector<8x128xbf16>
    %499 = vector.extract_strided_slice %6 {offsets = [0, 26], sizes = [8, 1], strides = [1, 1]} : vector<8x128xbf16> to vector<8x1xbf16>
    %500 = vector.extract_strided_slice %8 {offsets = [26, 0], sizes = [1, 128], strides = [1, 1]} : vector<128x128xbf16> to vector<1x128xbf16>
    %501 = vector.extract_strided_slice %11 {offsets = [0, 26], sizes = [8, 1], strides = [1, 1]} : vector<8x128xf32> to vector<8x1xf32>
    %502 = vector.extract_strided_slice %14 {offsets = [26, 0], sizes = [1, 128], strides = [1, 1]} : vector<128x128xf32> to vector<1x128xf32>
    %503 = vector.broadcast %501 : vector<8x1xf32> to vector<8x128xf32>
    %504 = vector.broadcast %502 : vector<1x128xf32> to vector<8x128xf32>
    %505 = arith.addf %503, %504 : vector<8x128xf32>
    %506 = tpu.reciprocal %505 {approx = true} : vector<8x128xf32> -> vector<8x128xf32>
    %507 = arith.truncf %506 : vector<8x128xf32> to vector<8x128xbf16>
    %508 = vector.broadcast %499 : vector<8x1xbf16> to vector<8x128xbf16>
    %509 = vector.broadcast %500 : vector<1x128xbf16> to vector<8x128xbf16>
    %510 = arith.subf %508, %509 : vector<8x128xbf16>
    %511 = arith.truncf %505 : vector<8x128xf32> to vector<8x128xbf16>
    %512 = math.log %511 : vector<8x128xbf16>
    %513 = arith.mulf %510, %510 : vector<8x128xbf16>
    %514 = arith.mulf %513, %507 : vector<8x128xbf16>
    %515 = arith.addf %498, %514 : vector<8x128xbf16>
    %516 = arith.addf %515, %512 : vector<8x128xbf16>
    %517 = vector.extract_strided_slice %6 {offsets = [0, 27], sizes = [8, 1], strides = [1, 1]} : vector<8x128xbf16> to vector<8x1xbf16>
    %518 = vector.extract_strided_slice %8 {offsets = [27, 0], sizes = [1, 128], strides = [1, 1]} : vector<128x128xbf16> to vector<1x128xbf16>
    %519 = vector.extract_strided_slice %11 {offsets = [0, 27], sizes = [8, 1], strides = [1, 1]} : vector<8x128xf32> to vector<8x1xf32>
    %520 = vector.extract_strided_slice %14 {offsets = [27, 0], sizes = [1, 128], strides = [1, 1]} : vector<128x128xf32> to vector<1x128xf32>
    %521 = vector.broadcast %519 : vector<8x1xf32> to vector<8x128xf32>
    %522 = vector.broadcast %520 : vector<1x128xf32> to vector<8x128xf32>
    %523 = arith.addf %521, %522 : vector<8x128xf32>
    %524 = tpu.reciprocal %523 {approx = true} : vector<8x128xf32> -> vector<8x128xf32>
    %525 = arith.truncf %524 : vector<8x128xf32> to vector<8x128xbf16>
    %526 = vector.broadcast %517 : vector<8x1xbf16> to vector<8x128xbf16>
    %527 = vector.broadcast %518 : vector<1x128xbf16> to vector<8x128xbf16>
    %528 = arith.subf %526, %527 : vector<8x128xbf16>
    %529 = arith.truncf %523 : vector<8x128xf32> to vector<8x128xbf16>
    %530 = math.log %529 : vector<8x128xbf16>
    %531 = arith.mulf %528, %528 : vector<8x128xbf16>
    %532 = arith.mulf %531, %525 : vector<8x128xbf16>
    %533 = arith.addf %516, %532 : vector<8x128xbf16>
    %534 = arith.addf %533, %530 : vector<8x128xbf16>
    %535 = vector.extract_strided_slice %6 {offsets = [0, 28], sizes = [8, 1], strides = [1, 1]} : vector<8x128xbf16> to vector<8x1xbf16>
    %536 = vector.extract_strided_slice %8 {offsets = [28, 0], sizes = [1, 128], strides = [1, 1]} : vector<128x128xbf16> to vector<1x128xbf16>
    %537 = vector.extract_strided_slice %11 {offsets = [0, 28], sizes = [8, 1], strides = [1, 1]} : vector<8x128xf32> to vector<8x1xf32>
    %538 = vector.extract_strided_slice %14 {offsets = [28, 0], sizes = [1, 128], strides = [1, 1]} : vector<128x128xf32> to vector<1x128xf32>
    %539 = vector.broadcast %537 : vector<8x1xf32> to vector<8x128xf32>
    %540 = vector.broadcast %538 : vector<1x128xf32> to vector<8x128xf32>
    %541 = arith.addf %539, %540 : vector<8x128xf32>
    %542 = tpu.reciprocal %541 {approx = true} : vector<8x128xf32> -> vector<8x128xf32>
    %543 = arith.truncf %542 : vector<8x128xf32> to vector<8x128xbf16>
    %544 = vector.broadcast %535 : vector<8x1xbf16> to vector<8x128xbf16>
    %545 = vector.broadcast %536 : vector<1x128xbf16> to vector<8x128xbf16>
    %546 = arith.subf %544, %545 : vector<8x128xbf16>
    %547 = arith.truncf %541 : vector<8x128xf32> to vector<8x128xbf16>
    %548 = math.log %547 : vector<8x128xbf16>
    %549 = arith.mulf %546, %546 : vector<8x128xbf16>
    %550 = arith.mulf %549, %543 : vector<8x128xbf16>
    %551 = arith.addf %534, %550 : vector<8x128xbf16>
    %552 = arith.addf %551, %548 : vector<8x128xbf16>
    %553 = vector.extract_strided_slice %6 {offsets = [0, 29], sizes = [8, 1], strides = [1, 1]} : vector<8x128xbf16> to vector<8x1xbf16>
    %554 = vector.extract_strided_slice %8 {offsets = [29, 0], sizes = [1, 128], strides = [1, 1]} : vector<128x128xbf16> to vector<1x128xbf16>
    %555 = vector.extract_strided_slice %11 {offsets = [0, 29], sizes = [8, 1], strides = [1, 1]} : vector<8x128xf32> to vector<8x1xf32>
    %556 = vector.extract_strided_slice %14 {offsets = [29, 0], sizes = [1, 128], strides = [1, 1]} : vector<128x128xf32> to vector<1x128xf32>
    %557 = vector.broadcast %555 : vector<8x1xf32> to vector<8x128xf32>
    %558 = vector.broadcast %556 : vector<1x128xf32> to vector<8x128xf32>
    %559 = arith.addf %557, %558 : vector<8x128xf32>
    %560 = tpu.reciprocal %559 {approx = true} : vector<8x128xf32> -> vector<8x128xf32>
    %561 = arith.truncf %560 : vector<8x128xf32> to vector<8x128xbf16>
    %562 = vector.broadcast %553 : vector<8x1xbf16> to vector<8x128xbf16>
    %563 = vector.broadcast %554 : vector<1x128xbf16> to vector<8x128xbf16>
    %564 = arith.subf %562, %563 : vector<8x128xbf16>
    %565 = arith.truncf %559 : vector<8x128xf32> to vector<8x128xbf16>
    %566 = math.log %565 : vector<8x128xbf16>
    %567 = arith.mulf %564, %564 : vector<8x128xbf16>
    %568 = arith.mulf %567, %561 : vector<8x128xbf16>
    %569 = arith.addf %552, %568 : vector<8x128xbf16>
    %570 = arith.addf %569, %566 : vector<8x128xbf16>
    %571 = vector.extract_strided_slice %6 {offsets = [0, 30], sizes = [8, 1], strides = [1, 1]} : vector<8x128xbf16> to vector<8x1xbf16>
    %572 = vector.extract_strided_slice %8 {offsets = [30, 0], sizes = [1, 128], strides = [1, 1]} : vector<128x128xbf16> to vector<1x128xbf16>
    %573 = vector.extract_strided_slice %11 {offsets = [0, 30], sizes = [8, 1], strides = [1, 1]} : vector<8x128xf32> to vector<8x1xf32>
    %574 = vector.extract_strided_slice %14 {offsets = [30, 0], sizes = [1, 128], strides = [1, 1]} : vector<128x128xf32> to vector<1x128xf32>
    %575 = vector.broadcast %573 : vector<8x1xf32> to vector<8x128xf32>
    %576 = vector.broadcast %574 : vector<1x128xf32> to vector<8x128xf32>
    %577 = arith.addf %575, %576 : vector<8x128xf32>
    %578 = tpu.reciprocal %577 {approx = true} : vector<8x128xf32> -> vector<8x128xf32>
    %579 = arith.truncf %578 : vector<8x128xf32> to vector<8x128xbf16>
    %580 = vector.broadcast %571 : vector<8x1xbf16> to vector<8x128xbf16>
    %581 = vector.broadcast %572 : vector<1x128xbf16> to vector<8x128xbf16>
    %582 = arith.subf %580, %581 : vector<8x128xbf16>
    %583 = arith.truncf %577 : vector<8x128xf32> to vector<8x128xbf16>
    %584 = math.log %583 : vector<8x128xbf16>
    %585 = arith.mulf %582, %582 : vector<8x128xbf16>
    %586 = arith.mulf %585, %579 : vector<8x128xbf16>
    %587 = arith.addf %570, %586 : vector<8x128xbf16>
    %588 = arith.addf %587, %584 : vector<8x128xbf16>
    %589 = vector.extract_strided_slice %6 {offsets = [0, 31], sizes = [8, 1], strides = [1, 1]} : vector<8x128xbf16> to vector<8x1xbf16>
    %590 = vector.extract_strided_slice %8 {offsets = [31, 0], sizes = [1, 128], strides = [1, 1]} : vector<128x128xbf16> to vector<1x128xbf16>
    %591 = vector.extract_strided_slice %11 {offsets = [0, 31], sizes = [8, 1], strides = [1, 1]} : vector<8x128xf32> to vector<8x1xf32>
    %592 = vector.extract_strided_slice %14 {offsets = [31, 0], sizes = [1, 128], strides = [1, 1]} : vector<128x128xf32> to vector<1x128xf32>
    %593 = vector.broadcast %591 : vector<8x1xf32> to vector<8x128xf32>
    %594 = vector.broadcast %592 : vector<1x128xf32> to vector<8x128xf32>
    %595 = arith.addf %593, %594 : vector<8x128xf32>
    %596 = tpu.reciprocal %595 {approx = true} : vector<8x128xf32> -> vector<8x128xf32>
    %597 = arith.truncf %596 : vector<8x128xf32> to vector<8x128xbf16>
    %598 = vector.broadcast %589 : vector<8x1xbf16> to vector<8x128xbf16>
    %599 = vector.broadcast %590 : vector<1x128xbf16> to vector<8x128xbf16>
    %600 = arith.subf %598, %599 : vector<8x128xbf16>
    %601 = arith.truncf %595 : vector<8x128xf32> to vector<8x128xbf16>
    %602 = math.log %601 : vector<8x128xbf16>
    %603 = arith.mulf %600, %600 : vector<8x128xbf16>
    %604 = arith.mulf %603, %597 : vector<8x128xbf16>
    %605 = arith.addf %588, %604 : vector<8x128xbf16>
    %606 = arith.addf %605, %602 : vector<8x128xbf16>
    %c0_25 = arith.constant 0 : index
    %c0_26 = arith.constant 0 : index
    %607 = vector.load %arg7[%c0_25, %c0_26] : memref<8x128xf32, #tpu.memory_space<vmem>>, vector<8x128xf32>
    %608 = arith.extf %606 : vector<8x128xbf16> to vector<8x128xf32>
    %609 = arith.addf %607, %608 : vector<8x128xf32>
    %c0_27 = arith.constant 0 : index
    %c0_28 = arith.constant 0 : index
    %610 = vector.load %arg7[%c0_27, %c0_28] : memref<8x128xf32, #tpu.memory_space<vmem>>, vector<8x128xf32>
    tpu.vector_store %arg7[%c0_27, %c0_28], %609 {strides = array<i32>} : memref<8x128xf32, #tpu.memory_space<vmem>>, vector<8x128xf32>,
    %cst_29 = arith.constant 0.000000e+00 : bf16
    %611 = vector.broadcast %cst_29 : bf16 to vector<8x128xbf16>
    %612 = vector.extract_strided_slice %6 {offsets = [0, 32], sizes = [8, 1], strides = [1, 1]} : vector<8x128xbf16> to vector<8x1xbf16>
    %613 = vector.extract_strided_slice %8 {offsets = [32, 0], sizes = [1, 128], strides = [1, 1]} : vector<128x128xbf16> to vector<1x128xbf16>
    %614 = vector.extract_strided_slice %11 {offsets = [0, 32], sizes = [8, 1], strides = [1, 1]} : vector<8x128xf32> to vector<8x1xf32>
    %615 = vector.extract_strided_slice %14 {offsets = [32, 0], sizes = [1, 128], strides = [1, 1]} : vector<128x128xf32> to vector<1x128xf32>
    %616 = vector.broadcast %614 : vector<8x1xf32> to vector<8x128xf32>
    %617 = vector.broadcast %615 : vector<1x128xf32> to vector<8x128xf32>
    %618 = arith.addf %616, %617 : vector<8x128xf32>
    %619 = tpu.reciprocal %618 {approx = true} : vector<8x128xf32> -> vector<8x128xf32>
    %620 = arith.truncf %619 : vector<8x128xf32> to vector<8x128xbf16>
    %621 = vector.broadcast %612 : vector<8x1xbf16> to vector<8x128xbf16>
    %622 = vector.broadcast %613 : vector<1x128xbf16> to vector<8x128xbf16>
    %623 = arith.subf %621, %622 : vector<8x128xbf16>
    %624 = arith.truncf %618 : vector<8x128xf32> to vector<8x128xbf16>
    %625 = math.log %624 : vector<8x128xbf16>
    %626 = arith.mulf %623, %623 : vector<8x128xbf16>
    %627 = arith.mulf %626, %620 : vector<8x128xbf16>
    %628 = arith.addf %611, %627 : vector<8x128xbf16>
    %629 = arith.addf %628, %625 : vector<8x128xbf16>
    %630 = vector.extract_strided_slice %6 {offsets = [0, 33], sizes = [8, 1], strides = [1, 1]} : vector<8x128xbf16> to vector<8x1xbf16>
    %631 = vector.extract_strided_slice %8 {offsets = [33, 0], sizes = [1, 128], strides = [1, 1]} : vector<128x128xbf16> to vector<1x128xbf16>
    %632 = vector.extract_strided_slice %11 {offsets = [0, 33], sizes = [8, 1], strides = [1, 1]} : vector<8x128xf32> to vector<8x1xf32>
    %633 = vector.extract_strided_slice %14 {offsets = [33, 0], sizes = [1, 128], strides = [1, 1]} : vector<128x128xf32> to vector<1x128xf32>
    %634 = vector.broadcast %632 : vector<8x1xf32> to vector<8x128xf32>
    %635 = vector.broadcast %633 : vector<1x128xf32> to vector<8x128xf32>
    %636 = arith.addf %634, %635 : vector<8x128xf32>
    %637 = tpu.reciprocal %636 {approx = true} : vector<8x128xf32> -> vector<8x128xf32>
    %638 = arith.truncf %637 : vector<8x128xf32> to vector<8x128xbf16>
    %639 = vector.broadcast %630 : vector<8x1xbf16> to vector<8x128xbf16>
    %640 = vector.broadcast %631 : vector<1x128xbf16> to vector<8x128xbf16>
    %641 = arith.subf %639, %640 : vector<8x128xbf16>
    %642 = arith.truncf %636 : vector<8x128xf32> to vector<8x128xbf16>
    %643 = math.log %642 : vector<8x128xbf16>
    %644 = arith.mulf %641, %641 : vector<8x128xbf16>
    %645 = arith.mulf %644, %638 : vector<8x128xbf16>
    %646 = arith.addf %629, %645 : vector<8x128xbf16>
    %647 = arith.addf %646, %643 : vector<8x128xbf16>
    %648 = vector.extract_strided_slice %6 {offsets = [0, 34], sizes = [8, 1], strides = [1, 1]} : vector<8x128xbf16> to vector<8x1xbf16>
    %649 = vector.extract_strided_slice %8 {offsets = [34, 0], sizes = [1, 128], strides = [1, 1]} : vector<128x128xbf16> to vector<1x128xbf16>
    %650 = vector.extract_strided_slice %11 {offsets = [0, 34], sizes = [8, 1], strides = [1, 1]} : vector<8x128xf32> to vector<8x1xf32>
    %651 = vector.extract_strided_slice %14 {offsets = [34, 0], sizes = [1, 128], strides = [1, 1]} : vector<128x128xf32> to vector<1x128xf32>
    %652 = vector.broadcast %650 : vector<8x1xf32> to vector<8x128xf32>
    %653 = vector.broadcast %651 : vector<1x128xf32> to vector<8x128xf32>
    %654 = arith.addf %652, %653 : vector<8x128xf32>
    %655 = tpu.reciprocal %654 {approx = true} : vector<8x128xf32> -> vector<8x128xf32>
    %656 = arith.truncf %655 : vector<8x128xf32> to vector<8x128xbf16>
    %657 = vector.broadcast %648 : vector<8x1xbf16> to vector<8x128xbf16>
    %658 = vector.broadcast %649 : vector<1x128xbf16> to vector<8x128xbf16>
    %659 = arith.subf %657, %658 : vector<8x128xbf16>
    %660 = arith.truncf %654 : vector<8x128xf32> to vector<8x128xbf16>
    %661 = math.log %660 : vector<8x128xbf16>
    %662 = arith.mulf %659, %659 : vector<8x128xbf16>
    %663 = arith.mulf %662, %656 : vector<8x128xbf16>
    %664 = arith.addf %647, %663 : vector<8x128xbf16>
    %665 = arith.addf %664, %661 : vector<8x128xbf16>
    %666 = vector.extract_strided_slice %6 {offsets = [0, 35], sizes = [8, 1], strides = [1, 1]} : vector<8x128xbf16> to vector<8x1xbf16>
    %667 = vector.extract_strided_slice %8 {offsets = [35, 0], sizes = [1, 128], strides = [1, 1]} : vector<128x128xbf16> to vector<1x128xbf16>
    %668 = vector.extract_strided_slice %11 {offsets = [0, 35], sizes = [8, 1], strides = [1, 1]} : vector<8x128xf32> to vector<8x1xf32>
    %669 = vector.extract_strided_slice %14 {offsets = [35, 0], sizes = [1, 128], strides = [1, 1]} : vector<128x128xf32> to vector<1x128xf32>
    %670 = vector.broadcast %668 : vector<8x1xf32> to vector<8x128xf32>
    %671 = vector.broadcast %669 : vector<1x128xf32> to vector<8x128xf32>
    %672 = arith.addf %670, %671 : vector<8x128xf32>
    %673 = tpu.reciprocal %672 {approx = true} : vector<8x128xf32> -> vector<8x128xf32>
    %674 = arith.truncf %673 : vector<8x128xf32> to vector<8x128xbf16>
    %675 = vector.broadcast %666 : vector<8x1xbf16> to vector<8x128xbf16>
    %676 = vector.broadcast %667 : vector<1x128xbf16> to vector<8x128xbf16>
    %677 = arith.subf %675, %676 : vector<8x128xbf16>
    %678 = arith.truncf %672 : vector<8x128xf32> to vector<8x128xbf16>
    %679 = math.log %678 : vector<8x128xbf16>
    %680 = arith.mulf %677, %677 : vector<8x128xbf16>
    %681 = arith.mulf %680, %674 : vector<8x128xbf16>
    %682 = arith.addf %665, %681 : vector<8x128xbf16>
    %683 = arith.addf %682, %679 : vector<8x128xbf16>
    %684 = vector.extract_strided_slice %6 {offsets = [0, 36], sizes = [8, 1], strides = [1, 1]} : vector<8x128xbf16> to vector<8x1xbf16>
    %685 = vector.extract_strided_slice %8 {offsets = [36, 0], sizes = [1, 128], strides = [1, 1]} : vector<128x128xbf16> to vector<1x128xbf16>
    %686 = vector.extract_strided_slice %11 {offsets = [0, 36], sizes = [8, 1], strides = [1, 1]} : vector<8x128xf32> to vector<8x1xf32>
    %687 = vector.extract_strided_slice %14 {offsets = [36, 0], sizes = [1, 128], strides = [1, 1]} : vector<128x128xf32> to vector<1x128xf32>
    %688 = vector.broadcast %686 : vector<8x1xf32> to vector<8x128xf32>
    %689 = vector.broadcast %687 : vector<1x128xf32> to vector<8x128xf32>
    %690 = arith.addf %688, %689 : vector<8x128xf32>
    %691 = tpu.reciprocal %690 {approx = true} : vector<8x128xf32> -> vector<8x128xf32>
    %692 = arith.truncf %691 : vector<8x128xf32> to vector<8x128xbf16>
    %693 = vector.broadcast %684 : vector<8x1xbf16> to vector<8x128xbf16>
    %694 = vector.broadcast %685 : vector<1x128xbf16> to vector<8x128xbf16>
    %695 = arith.subf %693, %694 : vector<8x128xbf16>
    %696 = arith.truncf %690 : vector<8x128xf32> to vector<8x128xbf16>
    %697 = math.log %696 : vector<8x128xbf16>
    %698 = arith.mulf %695, %695 : vector<8x128xbf16>
    %699 = arith.mulf %698, %692 : vector<8x128xbf16>
    %700 = arith.addf %683, %699 : vector<8x128xbf16>
    %701 = arith.addf %700, %697 : vector<8x128xbf16>
    %702 = vector.extract_strided_slice %6 {offsets = [0, 37], sizes = [8, 1], strides = [1, 1]} : vector<8x128xbf16> to vector<8x1xbf16>
    %703 = vector.extract_strided_slice %8 {offsets = [37, 0], sizes = [1, 128], strides = [1, 1]} : vector<128x128xbf16> to vector<1x128xbf16>
    %704 = vector.extract_strided_slice %11 {offsets = [0, 37], sizes = [8, 1], strides = [1, 1]} : vector<8x128xf32> to vector<8x1xf32>
    %705 = vector.extract_strided_slice %14 {offsets = [37, 0], sizes = [1, 128], strides = [1, 1]} : vector<128x128xf32> to vector<1x128xf32>
    %706 = vector.broadcast %704 : vector<8x1xf32> to vector<8x128xf32>
    %707 = vector.broadcast %705 : vector<1x128xf32> to vector<8x128xf32>
    %708 = arith.addf %706, %707 : vector<8x128xf32>
    %709 = tpu.reciprocal %708 {approx = true} : vector<8x128xf32> -> vector<8x128xf32>
    %710 = arith.truncf %709 : vector<8x128xf32> to vector<8x128xbf16>
    %711 = vector.broadcast %702 : vector<8x1xbf16> to vector<8x128xbf16>
    %712 = vector.broadcast %703 : vector<1x128xbf16> to vector<8x128xbf16>
    %713 = arith.subf %711, %712 : vector<8x128xbf16>
    %714 = arith.truncf %708 : vector<8x128xf32> to vector<8x128xbf16>
    %715 = math.log %714 : vector<8x128xbf16>
    %716 = arith.mulf %713, %713 : vector<8x128xbf16>
    %717 = arith.mulf %716, %710 : vector<8x128xbf16>
    %718 = arith.addf %701, %717 : vector<8x128xbf16>
    %719 = arith.addf %718, %715 : vector<8x128xbf16>
    %720 = vector.extract_strided_slice %6 {offsets = [0, 38], sizes = [8, 1], strides = [1, 1]} : vector<8x128xbf16> to vector<8x1xbf16>
    %721 = vector.extract_strided_slice %8 {offsets = [38, 0], sizes = [1, 128], strides = [1, 1]} : vector<128x128xbf16> to vector<1x128xbf16>
    %722 = vector.extract_strided_slice %11 {offsets = [0, 38], sizes = [8, 1], strides = [1, 1]} : vector<8x128xf32> to vector<8x1xf32>
    %723 = vector.extract_strided_slice %14 {offsets = [38, 0], sizes = [1, 128], strides = [1, 1]} : vector<128x128xf32> to vector<1x128xf32>
    %724 = vector.broadcast %722 : vector<8x1xf32> to vector<8x128xf32>
    %725 = vector.broadcast %723 : vector<1x128xf32> to vector<8x128xf32>
    %726 = arith.addf %724, %725 : vector<8x128xf32>
    %727 = tpu.reciprocal %726 {approx = true} : vector<8x128xf32> -> vector<8x128xf32>
    %728 = arith.truncf %727 : vector<8x128xf32> to vector<8x128xbf16>
    %729 = vector.broadcast %720 : vector<8x1xbf16> to vector<8x128xbf16>
    %730 = vector.broadcast %721 : vector<1x128xbf16> to vector<8x128xbf16>
    %731 = arith.subf %729, %730 : vector<8x128xbf16>
    %732 = arith.truncf %726 : vector<8x128xf32> to vector<8x128xbf16>
    %733 = math.log %732 : vector<8x128xbf16>
    %734 = arith.mulf %731, %731 : vector<8x128xbf16>
    %735 = arith.mulf %734, %728 : vector<8x128xbf16>
    %736 = arith.addf %719, %735 : vector<8x128xbf16>
    %737 = arith.addf %736, %733 : vector<8x128xbf16>
    %738 = vector.extract_strided_slice %6 {offsets = [0, 39], sizes = [8, 1], strides = [1, 1]} : vector<8x128xbf16> to vector<8x1xbf16>
    %739 = vector.extract_strided_slice %8 {offsets = [39, 0], sizes = [1, 128], strides = [1, 1]} : vector<128x128xbf16> to vector<1x128xbf16>
    %740 = vector.extract_strided_slice %11 {offsets = [0, 39], sizes = [8, 1], strides = [1, 1]} : vector<8x128xf32> to vector<8x1xf32>
    %741 = vector.extract_strided_slice %14 {offsets = [39, 0], sizes = [1, 128], strides = [1, 1]} : vector<128x128xf32> to vector<1x128xf32>
    %742 = vector.broadcast %740 : vector<8x1xf32> to vector<8x128xf32>
    %743 = vector.broadcast %741 : vector<1x128xf32> to vector<8x128xf32>
    %744 = arith.addf %742, %743 : vector<8x128xf32>
    %745 = tpu.reciprocal %744 {approx = true} : vector<8x128xf32> -> vector<8x128xf32>
    %746 = arith.truncf %745 : vector<8x128xf32> to vector<8x128xbf16>
    %747 = vector.broadcast %738 : vector<8x1xbf16> to vector<8x128xbf16>
    %748 = vector.broadcast %739 : vector<1x128xbf16> to vector<8x128xbf16>
    %749 = arith.subf %747, %748 : vector<8x128xbf16>
    %750 = arith.truncf %744 : vector<8x128xf32> to vector<8x128xbf16>
    %751 = math.log %750 : vector<8x128xbf16>
    %752 = arith.mulf %749, %749 : vector<8x128xbf16>
    %753 = arith.mulf %752, %746 : vector<8x128xbf16>
    %754 = arith.addf %737, %753 : vector<8x128xbf16>
    %755 = arith.addf %754, %751 : vector<8x128xbf16>
    %c0_30 = arith.constant 0 : index
    %c0_31 = arith.constant 0 : index
    %756 = vector.load %arg7[%c0_30, %c0_31] : memref<8x128xf32, #tpu.memory_space<vmem>>, vector<8x128xf32>
    %757 = arith.extf %755 : vector<8x128xbf16> to vector<8x128xf32>
    %758 = arith.addf %756, %757 : vector<8x128xf32>
    %c0_32 = arith.constant 0 : index
    %c0_33 = arith.constant 0 : index
    %759 = vector.load %arg7[%c0_32, %c0_33] : memref<8x128xf32, #tpu.memory_space<vmem>>, vector<8x128xf32>
    tpu.vector_store %arg7[%c0_32, %c0_33], %758 {strides = array<i32>} : memref<8x128xf32, #tpu.memory_space<vmem>>, vector<8x128xf32>,
    %cst_34 = arith.constant 0.000000e+00 : bf16
    %760 = vector.broadcast %cst_34 : bf16 to vector<8x128xbf16>
    %761 = vector.extract_strided_slice %6 {offsets = [0, 40], sizes = [8, 1], strides = [1, 1]} : vector<8x128xbf16> to vector<8x1xbf16>
    %762 = vector.extract_strided_slice %8 {offsets = [40, 0], sizes = [1, 128], strides = [1, 1]} : vector<128x128xbf16> to vector<1x128xbf16>
    %763 = vector.extract_strided_slice %11 {offsets = [0, 40], sizes = [8, 1], strides = [1, 1]} : vector<8x128xf32> to vector<8x1xf32>
    %764 = vector.extract_strided_slice %14 {offsets = [40, 0], sizes = [1, 128], strides = [1, 1]} : vector<128x128xf32> to vector<1x128xf32>
    %765 = vector.broadcast %763 : vector<8x1xf32> to vector<8x128xf32>
    %766 = vector.broadcast %764 : vector<1x128xf32> to vector<8x128xf32>
    %767 = arith.addf %765, %766 : vector<8x128xf32>
    %768 = tpu.reciprocal %767 {approx = true} : vector<8x128xf32> -> vector<8x128xf32>
    %769 = arith.truncf %768 : vector<8x128xf32> to vector<8x128xbf16>
    %770 = vector.broadcast %761 : vector<8x1xbf16> to vector<8x128xbf16>
    %771 = vector.broadcast %762 : vector<1x128xbf16> to vector<8x128xbf16>
    %772 = arith.subf %770, %771 : vector<8x128xbf16>
    %773 = arith.truncf %767 : vector<8x128xf32> to vector<8x128xbf16>
    %774 = math.log %773 : vector<8x128xbf16>
    %775 = arith.mulf %772, %772 : vector<8x128xbf16>
    %776 = arith.mulf %775, %769 : vector<8x128xbf16>
    %777 = arith.addf %760, %776 : vector<8x128xbf16>
    %778 = arith.addf %777, %774 : vector<8x128xbf16>
    %779 = vector.extract_strided_slice %6 {offsets = [0, 41], sizes = [8, 1], strides = [1, 1]} : vector<8x128xbf16> to vector<8x1xbf16>
    %780 = vector.extract_strided_slice %8 {offsets = [41, 0], sizes = [1, 128], strides = [1, 1]} : vector<128x128xbf16> to vector<1x128xbf16>
    %781 = vector.extract_strided_slice %11 {offsets = [0, 41], sizes = [8, 1], strides = [1, 1]} : vector<8x128xf32> to vector<8x1xf32>
    %782 = vector.extract_strided_slice %14 {offsets = [41, 0], sizes = [1, 128], strides = [1, 1]} : vector<128x128xf32> to vector<1x128xf32>
    %783 = vector.broadcast %781 : vector<8x1xf32> to vector<8x128xf32>
    %784 = vector.broadcast %782 : vector<1x128xf32> to vector<8x128xf32>
    %785 = arith.addf %783, %784 : vector<8x128xf32>
    %786 = tpu.reciprocal %785 {approx = true} : vector<8x128xf32> -> vector<8x128xf32>
    %787 = arith.truncf %786 : vector<8x128xf32> to vector<8x128xbf16>
    %788 = vector.broadcast %779 : vector<8x1xbf16> to vector<8x128xbf16>
    %789 = vector.broadcast %780 : vector<1x128xbf16> to vector<8x128xbf16>
    %790 = arith.subf %788, %789 : vector<8x128xbf16>
    %791 = arith.truncf %785 : vector<8x128xf32> to vector<8x128xbf16>
    %792 = math.log %791 : vector<8x128xbf16>
    %793 = arith.mulf %790, %790 : vector<8x128xbf16>
    %794 = arith.mulf %793, %787 : vector<8x128xbf16>
    %795 = arith.addf %778, %794 : vector<8x128xbf16>
    %796 = arith.addf %795, %792 : vector<8x128xbf16>
    %797 = vector.extract_strided_slice %6 {offsets = [0, 42], sizes = [8, 1], strides = [1, 1]} : vector<8x128xbf16> to vector<8x1xbf16>
    %798 = vector.extract_strided_slice %8 {offsets = [42, 0], sizes = [1, 128], strides = [1, 1]} : vector<128x128xbf16> to vector<1x128xbf16>
    %799 = vector.extract_strided_slice %11 {offsets = [0, 42], sizes = [8, 1], strides = [1, 1]} : vector<8x128xf32> to vector<8x1xf32>
    %800 = vector.extract_strided_slice %14 {offsets = [42, 0], sizes = [1, 128], strides = [1, 1]} : vector<128x128xf32> to vector<1x128xf32>
    %801 = vector.broadcast %799 : vector<8x1xf32> to vector<8x128xf32>
    %802 = vector.broadcast %800 : vector<1x128xf32> to vector<8x128xf32>
    %803 = arith.addf %801, %802 : vector<8x128xf32>
    %804 = tpu.reciprocal %803 {approx = true} : vector<8x128xf32> -> vector<8x128xf32>
    %805 = arith.truncf %804 : vector<8x128xf32> to vector<8x128xbf16>
    %806 = vector.broadcast %797 : vector<8x1xbf16> to vector<8x128xbf16>
    %807 = vector.broadcast %798 : vector<1x128xbf16> to vector<8x128xbf16>
    %808 = arith.subf %806, %807 : vector<8x128xbf16>
    %809 = arith.truncf %803 : vector<8x128xf32> to vector<8x128xbf16>
    %810 = math.log %809 : vector<8x128xbf16>
    %811 = arith.mulf %808, %808 : vector<8x128xbf16>
    %812 = arith.mulf %811, %805 : vector<8x128xbf16>
    %813 = arith.addf %796, %812 : vector<8x128xbf16>
    %814 = arith.addf %813, %810 : vector<8x128xbf16>
    %815 = vector.extract_strided_slice %6 {offsets = [0, 43], sizes = [8, 1], strides = [1, 1]} : vector<8x128xbf16> to vector<8x1xbf16>
    %816 = vector.extract_strided_slice %8 {offsets = [43, 0], sizes = [1, 128], strides = [1, 1]} : vector<128x128xbf16> to vector<1x128xbf16>
    %817 = vector.extract_strided_slice %11 {offsets = [0, 43], sizes = [8, 1], strides = [1, 1]} : vector<8x128xf32> to vector<8x1xf32>
    %818 = vector.extract_strided_slice %14 {offsets = [43, 0], sizes = [1, 128], strides = [1, 1]} : vector<128x128xf32> to vector<1x128xf32>
    %819 = vector.broadcast %817 : vector<8x1xf32> to vector<8x128xf32>
    %820 = vector.broadcast %818 : vector<1x128xf32> to vector<8x128xf32>
    %821 = arith.addf %819, %820 : vector<8x128xf32>
    %822 = tpu.reciprocal %821 {approx = true} : vector<8x128xf32> -> vector<8x128xf32>
    %823 = arith.truncf %822 : vector<8x128xf32> to vector<8x128xbf16>
    %824 = vector.broadcast %815 : vector<8x1xbf16> to vector<8x128xbf16>
    %825 = vector.broadcast %816 : vector<1x128xbf16> to vector<8x128xbf16>
    %826 = arith.subf %824, %825 : vector<8x128xbf16>
    %827 = arith.truncf %821 : vector<8x128xf32> to vector<8x128xbf16>
    %828 = math.log %827 : vector<8x128xbf16>
    %829 = arith.mulf %826, %826 : vector<8x128xbf16>
    %830 = arith.mulf %829, %823 : vector<8x128xbf16>
    %831 = arith.addf %814, %830 : vector<8x128xbf16>
    %832 = arith.addf %831, %828 : vector<8x128xbf16>
    %833 = vector.extract_strided_slice %6 {offsets = [0, 44], sizes = [8, 1], strides = [1, 1]} : vector<8x128xbf16> to vector<8x1xbf16>
    %834 = vector.extract_strided_slice %8 {offsets = [44, 0], sizes = [1, 128], strides = [1, 1]} : vector<128x128xbf16> to vector<1x128xbf16>
    %835 = vector.extract_strided_slice %11 {offsets = [0, 44], sizes = [8, 1], strides = [1, 1]} : vector<8x128xf32> to vector<8x1xf32>
    %836 = vector.extract_strided_slice %14 {offsets = [44, 0], sizes = [1, 128], strides = [1, 1]} : vector<128x128xf32> to vector<1x128xf32>
    %837 = vector.broadcast %835 : vector<8x1xf32> to vector<8x128xf32>
    %838 = vector.broadcast %836 : vector<1x128xf32> to vector<8x128xf32>
    %839 = arith.addf %837, %838 : vector<8x128xf32>
    %840 = tpu.reciprocal %839 {approx = true} : vector<8x128xf32> -> vector<8x128xf32>
    %841 = arith.truncf %840 : vector<8x128xf32> to vector<8x128xbf16>
    %842 = vector.broadcast %833 : vector<8x1xbf16> to vector<8x128xbf16>
    %843 = vector.broadcast %834 : vector<1x128xbf16> to vector<8x128xbf16>
    %844 = arith.subf %842, %843 : vector<8x128xbf16>
    %845 = arith.truncf %839 : vector<8x128xf32> to vector<8x128xbf16>
    %846 = math.log %845 : vector<8x128xbf16>
    %847 = arith.mulf %844, %844 : vector<8x128xbf16>
    %848 = arith.mulf %847, %841 : vector<8x128xbf16>
    %849 = arith.addf %832, %848 : vector<8x128xbf16>
    %850 = arith.addf %849, %846 : vector<8x128xbf16>
    %851 = vector.extract_strided_slice %6 {offsets = [0, 45], sizes = [8, 1], strides = [1, 1]} : vector<8x128xbf16> to vector<8x1xbf16>
    %852 = vector.extract_strided_slice %8 {offsets = [45, 0], sizes = [1, 128], strides = [1, 1]} : vector<128x128xbf16> to vector<1x128xbf16>
    %853 = vector.extract_strided_slice %11 {offsets = [0, 45], sizes = [8, 1], strides = [1, 1]} : vector<8x128xf32> to vector<8x1xf32>
    %854 = vector.extract_strided_slice %14 {offsets = [45, 0], sizes = [1, 128], strides = [1, 1]} : vector<128x128xf32> to vector<1x128xf32>
    %855 = vector.broadcast %853 : vector<8x1xf32> to vector<8x128xf32>
    %856 = vector.broadcast %854 : vector<1x128xf32> to vector<8x128xf32>
    %857 = arith.addf %855, %856 : vector<8x128xf32>
    %858 = tpu.reciprocal %857 {approx = true} : vector<8x128xf32> -> vector<8x128xf32>
    %859 = arith.truncf %858 : vector<8x128xf32> to vector<8x128xbf16>
    %860 = vector.broadcast %851 : vector<8x1xbf16> to vector<8x128xbf16>
    %861 = vector.broadcast %852 : vector<1x128xbf16> to vector<8x128xbf16>
    %862 = arith.subf %860, %861 : vector<8x128xbf16>
    %863 = arith.truncf %857 : vector<8x128xf32> to vector<8x128xbf16>
    %864 = math.log %863 : vector<8x128xbf16>
    %865 = arith.mulf %862, %862 : vector<8x128xbf16>
    %866 = arith.mulf %865, %859 : vector<8x128xbf16>
    %867 = arith.addf %850, %866 : vector<8x128xbf16>
    %868 = arith.addf %867, %864 : vector<8x128xbf16>
    %869 = vector.extract_strided_slice %6 {offsets = [0, 46], sizes = [8, 1], strides = [1, 1]} : vector<8x128xbf16> to vector<8x1xbf16>
    %870 = vector.extract_strided_slice %8 {offsets = [46, 0], sizes = [1, 128], strides = [1, 1]} : vector<128x128xbf16> to vector<1x128xbf16>
    %871 = vector.extract_strided_slice %11 {offsets = [0, 46], sizes = [8, 1], strides = [1, 1]} : vector<8x128xf32> to vector<8x1xf32>
    %872 = vector.extract_strided_slice %14 {offsets = [46, 0], sizes = [1, 128], strides = [1, 1]} : vector<128x128xf32> to vector<1x128xf32>
    %873 = vector.broadcast %871 : vector<8x1xf32> to vector<8x128xf32>
    %874 = vector.broadcast %872 : vector<1x128xf32> to vector<8x128xf32>
    %875 = arith.addf %873, %874 : vector<8x128xf32>
    %876 = tpu.reciprocal %875 {approx = true} : vector<8x128xf32> -> vector<8x128xf32>
    %877 = arith.truncf %876 : vector<8x128xf32> to vector<8x128xbf16>
    %878 = vector.broadcast %869 : vector<8x1xbf16> to vector<8x128xbf16>
    %879 = vector.broadcast %870 : vector<1x128xbf16> to vector<8x128xbf16>
    %880 = arith.subf %878, %879 : vector<8x128xbf16>
    %881 = arith.truncf %875 : vector<8x128xf32> to vector<8x128xbf16>
    %882 = math.log %881 : vector<8x128xbf16>
    %883 = arith.mulf %880, %880 : vector<8x128xbf16>
    %884 = arith.mulf %883, %877 : vector<8x128xbf16>
    %885 = arith.addf %868, %884 : vector<8x128xbf16>
    %886 = arith.addf %885, %882 : vector<8x128xbf16>
    %887 = vector.extract_strided_slice %6 {offsets = [0, 47], sizes = [8, 1], strides = [1, 1]} : vector<8x128xbf16> to vector<8x1xbf16>
    %888 = vector.extract_strided_slice %8 {offsets = [47, 0], sizes = [1, 128], strides = [1, 1]} : vector<128x128xbf16> to vector<1x128xbf16>
    %889 = vector.extract_strided_slice %11 {offsets = [0, 47], sizes = [8, 1], strides = [1, 1]} : vector<8x128xf32> to vector<8x1xf32>
    %890 = vector.extract_strided_slice %14 {offsets = [47, 0], sizes = [1, 128], strides = [1, 1]} : vector<128x128xf32> to vector<1x128xf32>
    %891 = vector.broadcast %889 : vector<8x1xf32> to vector<8x128xf32>
    %892 = vector.broadcast %890 : vector<1x128xf32> to vector<8x128xf32>
    %893 = arith.addf %891, %892 : vector<8x128xf32>
    %894 = tpu.reciprocal %893 {approx = true} : vector<8x128xf32> -> vector<8x128xf32>
    %895 = arith.truncf %894 : vector<8x128xf32> to vector<8x128xbf16>
    %896 = vector.broadcast %887 : vector<8x1xbf16> to vector<8x128xbf16>
    %897 = vector.broadcast %888 : vector<1x128xbf16> to vector<8x128xbf16>
    %898 = arith.subf %896, %897 : vector<8x128xbf16>
    %899 = arith.truncf %893 : vector<8x128xf32> to vector<8x128xbf16>
    %900 = math.log %899 : vector<8x128xbf16>
    %901 = arith.mulf %898, %898 : vector<8x128xbf16>
    %902 = arith.mulf %901, %895 : vector<8x128xbf16>
    %903 = arith.addf %886, %902 : vector<8x128xbf16>
    %904 = arith.addf %903, %900 : vector<8x128xbf16>
    %c0_35 = arith.constant 0 : index
    %c0_36 = arith.constant 0 : index
    %905 = vector.load %arg7[%c0_35, %c0_36] : memref<8x128xf32, #tpu.memory_space<vmem>>, vector<8x128xf32>
    %906 = arith.extf %904 : vector<8x128xbf16> to vector<8x128xf32>
    %907 = arith.addf %905, %906 : vector<8x128xf32>
    %c0_37 = arith.constant 0 : index
    %c0_38 = arith.constant 0 : index
    %908 = vector.load %arg7[%c0_37, %c0_38] : memref<8x128xf32, #tpu.memory_space<vmem>>, vector<8x128xf32>
    tpu.vector_store %arg7[%c0_37, %c0_38], %907 {strides = array<i32>} : memref<8x128xf32, #tpu.memory_space<vmem>>, vector<8x128xf32>,
    %cst_39 = arith.constant 0.000000e+00 : bf16
    %909 = vector.broadcast %cst_39 : bf16 to vector<8x128xbf16>
    %910 = vector.extract_strided_slice %6 {offsets = [0, 48], sizes = [8, 1], strides = [1, 1]} : vector<8x128xbf16> to vector<8x1xbf16>
    %911 = vector.extract_strided_slice %8 {offsets = [48, 0], sizes = [1, 128], strides = [1, 1]} : vector<128x128xbf16> to vector<1x128xbf16>
    %912 = vector.extract_strided_slice %11 {offsets = [0, 48], sizes = [8, 1], strides = [1, 1]} : vector<8x128xf32> to vector<8x1xf32>
    %913 = vector.extract_strided_slice %14 {offsets = [48, 0], sizes = [1, 128], strides = [1, 1]} : vector<128x128xf32> to vector<1x128xf32>
    %914 = vector.broadcast %912 : vector<8x1xf32> to vector<8x128xf32>
    %915 = vector.broadcast %913 : vector<1x128xf32> to vector<8x128xf32>
    %916 = arith.addf %914, %915 : vector<8x128xf32>
    %917 = tpu.reciprocal %916 {approx = true} : vector<8x128xf32> -> vector<8x128xf32>
    %918 = arith.truncf %917 : vector<8x128xf32> to vector<8x128xbf16>
    %919 = vector.broadcast %910 : vector<8x1xbf16> to vector<8x128xbf16>
    %920 = vector.broadcast %911 : vector<1x128xbf16> to vector<8x128xbf16>
    %921 = arith.subf %919, %920 : vector<8x128xbf16>
    %922 = arith.truncf %916 : vector<8x128xf32> to vector<8x128xbf16>
    %923 = math.log %922 : vector<8x128xbf16>
    %924 = arith.mulf %921, %921 : vector<8x128xbf16>
    %925 = arith.mulf %924, %918 : vector<8x128xbf16>
    %926 = arith.addf %909, %925 : vector<8x128xbf16>
    %927 = arith.addf %926, %923 : vector<8x128xbf16>
    %928 = vector.extract_strided_slice %6 {offsets = [0, 49], sizes = [8, 1], strides = [1, 1]} : vector<8x128xbf16> to vector<8x1xbf16>
    %929 = vector.extract_strided_slice %8 {offsets = [49, 0], sizes = [1, 128], strides = [1, 1]} : vector<128x128xbf16> to vector<1x128xbf16>
    %930 = vector.extract_strided_slice %11 {offsets = [0, 49], sizes = [8, 1], strides = [1, 1]} : vector<8x128xf32> to vector<8x1xf32>
    %931 = vector.extract_strided_slice %14 {offsets = [49, 0], sizes = [1, 128], strides = [1, 1]} : vector<128x128xf32> to vector<1x128xf32>
    %932 = vector.broadcast %930 : vector<8x1xf32> to vector<8x128xf32>
    %933 = vector.broadcast %931 : vector<1x128xf32> to vector<8x128xf32>
    %934 = arith.addf %932, %933 : vector<8x128xf32>
    %935 = tpu.reciprocal %934 {approx = true} : vector<8x128xf32> -> vector<8x128xf32>
    %936 = arith.truncf %935 : vector<8x128xf32> to vector<8x128xbf16>
    %937 = vector.broadcast %928 : vector<8x1xbf16> to vector<8x128xbf16>
    %938 = vector.broadcast %929 : vector<1x128xbf16> to vector<8x128xbf16>
    %939 = arith.subf %937, %938 : vector<8x128xbf16>
    %940 = arith.truncf %934 : vector<8x128xf32> to vector<8x128xbf16>
    %941 = math.log %940 : vector<8x128xbf16>
    %942 = arith.mulf %939, %939 : vector<8x128xbf16>
    %943 = arith.mulf %942, %936 : vector<8x128xbf16>
    %944 = arith.addf %927, %943 : vector<8x128xbf16>
    %945 = arith.addf %944, %941 : vector<8x128xbf16>
    %946 = vector.extract_strided_slice %6 {offsets = [0, 50], sizes = [8, 1], strides = [1, 1]} : vector<8x128xbf16> to vector<8x1xbf16>
    %947 = vector.extract_strided_slice %8 {offsets = [50, 0], sizes = [1, 128], strides = [1, 1]} : vector<128x128xbf16> to vector<1x128xbf16>
    %948 = vector.extract_strided_slice %11 {offsets = [0, 50], sizes = [8, 1], strides = [1, 1]} : vector<8x128xf32> to vector<8x1xf32>
    %949 = vector.extract_strided_slice %14 {offsets = [50, 0], sizes = [1, 128], strides = [1, 1]} : vector<128x128xf32> to vector<1x128xf32>
    %950 = vector.broadcast %948 : vector<8x1xf32> to vector<8x128xf32>
    %951 = vector.broadcast %949 : vector<1x128xf32> to vector<8x128xf32>
    %952 = arith.addf %950, %951 : vector<8x128xf32>
    %953 = tpu.reciprocal %952 {approx = true} : vector<8x128xf32> -> vector<8x128xf32>
    %954 = arith.truncf %953 : vector<8x128xf32> to vector<8x128xbf16>
    %955 = vector.broadcast %946 : vector<8x1xbf16> to vector<8x128xbf16>
    %956 = vector.broadcast %947 : vector<1x128xbf16> to vector<8x128xbf16>
    %957 = arith.subf %955, %956 : vector<8x128xbf16>
    %958 = arith.truncf %952 : vector<8x128xf32> to vector<8x128xbf16>
    %959 = math.log %958 : vector<8x128xbf16>
    %960 = arith.mulf %957, %957 : vector<8x128xbf16>
    %961 = arith.mulf %960, %954 : vector<8x128xbf16>
    %962 = arith.addf %945, %961 : vector<8x128xbf16>
    %963 = arith.addf %962, %959 : vector<8x128xbf16>
    %964 = vector.extract_strided_slice %6 {offsets = [0, 51], sizes = [8, 1], strides = [1, 1]} : vector<8x128xbf16> to vector<8x1xbf16>
    %965 = vector.extract_strided_slice %8 {offsets = [51, 0], sizes = [1, 128], strides = [1, 1]} : vector<128x128xbf16> to vector<1x128xbf16>
    %966 = vector.extract_strided_slice %11 {offsets = [0, 51], sizes = [8, 1], strides = [1, 1]} : vector<8x128xf32> to vector<8x1xf32>
    %967 = vector.extract_strided_slice %14 {offsets = [51, 0], sizes = [1, 128], strides = [1, 1]} : vector<128x128xf32> to vector<1x128xf32>
    %968 = vector.broadcast %966 : vector<8x1xf32> to vector<8x128xf32>
    %969 = vector.broadcast %967 : vector<1x128xf32> to vector<8x128xf32>
    %970 = arith.addf %968, %969 : vector<8x128xf32>
    %971 = tpu.reciprocal %970 {approx = true} : vector<8x128xf32> -> vector<8x128xf32>
    %972 = arith.truncf %971 : vector<8x128xf32> to vector<8x128xbf16>
    %973 = vector.broadcast %964 : vector<8x1xbf16> to vector<8x128xbf16>
    %974 = vector.broadcast %965 : vector<1x128xbf16> to vector<8x128xbf16>
    %975 = arith.subf %973, %974 : vector<8x128xbf16>
    %976 = arith.truncf %970 : vector<8x128xf32> to vector<8x128xbf16>
    %977 = math.log %976 : vector<8x128xbf16>
    %978 = arith.mulf %975, %975 : vector<8x128xbf16>
    %979 = arith.mulf %978, %972 : vector<8x128xbf16>
    %980 = arith.addf %963, %979 : vector<8x128xbf16>
    %981 = arith.addf %980, %977 : vector<8x128xbf16>
    %982 = vector.extract_strided_slice %6 {offsets = [0, 52], sizes = [8, 1], strides = [1, 1]} : vector<8x128xbf16> to vector<8x1xbf16>
    %983 = vector.extract_strided_slice %8 {offsets = [52, 0], sizes = [1, 128], strides = [1, 1]} : vector<128x128xbf16> to vector<1x128xbf16>
    %984 = vector.extract_strided_slice %11 {offsets = [0, 52], sizes = [8, 1], strides = [1, 1]} : vector<8x128xf32> to vector<8x1xf32>
    %985 = vector.extract_strided_slice %14 {offsets = [52, 0], sizes = [1, 128], strides = [1, 1]} : vector<128x128xf32> to vector<1x128xf32>
    %986 = vector.broadcast %984 : vector<8x1xf32> to vector<8x128xf32>
    %987 = vector.broadcast %985 : vector<1x128xf32> to vector<8x128xf32>
    %988 = arith.addf %986, %987 : vector<8x128xf32>
    %989 = tpu.reciprocal %988 {approx = true} : vector<8x128xf32> -> vector<8x128xf32>
    %990 = arith.truncf %989 : vector<8x128xf32> to vector<8x128xbf16>
    %991 = vector.broadcast %982 : vector<8x1xbf16> to vector<8x128xbf16>
    %992 = vector.broadcast %983 : vector<1x128xbf16> to vector<8x128xbf16>
    %993 = arith.subf %991, %992 : vector<8x128xbf16>
    %994 = arith.truncf %988 : vector<8x128xf32> to vector<8x128xbf16>
    %995 = math.log %994 : vector<8x128xbf16>
    %996 = arith.mulf %993, %993 : vector<8x128xbf16>
    %997 = arith.mulf %996, %990 : vector<8x128xbf16>
    %998 = arith.addf %981, %997 : vector<8x128xbf16>
    %999 = arith.addf %998, %995 : vector<8x128xbf16>
    %1000 = vector.extract_strided_slice %6 {offsets = [0, 53], sizes = [8, 1], strides = [1, 1]} : vector<8x128xbf16> to vector<8x1xbf16>
    %1001 = vector.extract_strided_slice %8 {offsets = [53, 0], sizes = [1, 128], strides = [1, 1]} : vector<128x128xbf16> to vector<1x128xbf16>
    %1002 = vector.extract_strided_slice %11 {offsets = [0, 53], sizes = [8, 1], strides = [1, 1]} : vector<8x128xf32> to vector<8x1xf32>
    %1003 = vector.extract_strided_slice %14 {offsets = [53, 0], sizes = [1, 128], strides = [1, 1]} : vector<128x128xf32> to vector<1x128xf32>
    %1004 = vector.broadcast %1002 : vector<8x1xf32> to vector<8x128xf32>
    %1005 = vector.broadcast %1003 : vector<1x128xf32> to vector<8x128xf32>
    %1006 = arith.addf %1004, %1005 : vector<8x128xf32>
    %1007 = tpu.reciprocal %1006 {approx = true} : vector<8x128xf32> -> vector<8x128xf32>
    %1008 = arith.truncf %1007 : vector<8x128xf32> to vector<8x128xbf16>
    %1009 = vector.broadcast %1000 : vector<8x1xbf16> to vector<8x128xbf16>
    %1010 = vector.broadcast %1001 : vector<1x128xbf16> to vector<8x128xbf16>
    %1011 = arith.subf %1009, %1010 : vector<8x128xbf16>
    %1012 = arith.truncf %1006 : vector<8x128xf32> to vector<8x128xbf16>
    %1013 = math.log %1012 : vector<8x128xbf16>
    %1014 = arith.mulf %1011, %1011 : vector<8x128xbf16>
    %1015 = arith.mulf %1014, %1008 : vector<8x128xbf16>
    %1016 = arith.addf %999, %1015 : vector<8x128xbf16>
    %1017 = arith.addf %1016, %1013 : vector<8x128xbf16>
    %1018 = vector.extract_strided_slice %6 {offsets = [0, 54], sizes = [8, 1], strides = [1, 1]} : vector<8x128xbf16> to vector<8x1xbf16>
    %1019 = vector.extract_strided_slice %8 {offsets = [54, 0], sizes = [1, 128], strides = [1, 1]} : vector<128x128xbf16> to vector<1x128xbf16>
    %1020 = vector.extract_strided_slice %11 {offsets = [0, 54], sizes = [8, 1], strides = [1, 1]} : vector<8x128xf32> to vector<8x1xf32>
    %1021 = vector.extract_strided_slice %14 {offsets = [54, 0], sizes = [1, 128], strides = [1, 1]} : vector<128x128xf32> to vector<1x128xf32>
    %1022 = vector.broadcast %1020 : vector<8x1xf32> to vector<8x128xf32>
    %1023 = vector.broadcast %1021 : vector<1x128xf32> to vector<8x128xf32>
    %1024 = arith.addf %1022, %1023 : vector<8x128xf32>
    %1025 = tpu.reciprocal %1024 {approx = true} : vector<8x128xf32> -> vector<8x128xf32>
    %1026 = arith.truncf %1025 : vector<8x128xf32> to vector<8x128xbf16>
    %1027 = vector.broadcast %1018 : vector<8x1xbf16> to vector<8x128xbf16>
    %1028 = vector.broadcast %1019 : vector<1x128xbf16> to vector<8x128xbf16>
    %1029 = arith.subf %1027, %1028 : vector<8x128xbf16>
    %1030 = arith.truncf %1024 : vector<8x128xf32> to vector<8x128xbf16>
    %1031 = math.log %1030 : vector<8x128xbf16>
    %1032 = arith.mulf %1029, %1029 : vector<8x128xbf16>
    %1033 = arith.mulf %1032, %1026 : vector<8x128xbf16>
    %1034 = arith.addf %1017, %1033 : vector<8x128xbf16>
    %1035 = arith.addf %1034, %1031 : vector<8x128xbf16>
    %1036 = vector.extract_strided_slice %6 {offsets = [0, 55], sizes = [8, 1], strides = [1, 1]} : vector<8x128xbf16> to vector<8x1xbf16>
    %1037 = vector.extract_strided_slice %8 {offsets = [55, 0], sizes = [1, 128], strides = [1, 1]} : vector<128x128xbf16> to vector<1x128xbf16>
    %1038 = vector.extract_strided_slice %11 {offsets = [0, 55], sizes = [8, 1], strides = [1, 1]} : vector<8x128xf32> to vector<8x1xf32>
    %1039 = vector.extract_strided_slice %14 {offsets = [55, 0], sizes = [1, 128], strides = [1, 1]} : vector<128x128xf32> to vector<1x128xf32>
    %1040 = vector.broadcast %1038 : vector<8x1xf32> to vector<8x128xf32>
    %1041 = vector.broadcast %1039 : vector<1x128xf32> to vector<8x128xf32>
    %1042 = arith.addf %1040, %1041 : vector<8x128xf32>
    %1043 = tpu.reciprocal %1042 {approx = true} : vector<8x128xf32> -> vector<8x128xf32>
    %1044 = arith.truncf %1043 : vector<8x128xf32> to vector<8x128xbf16>
    %1045 = vector.broadcast %1036 : vector<8x1xbf16> to vector<8x128xbf16>
    %1046 = vector.broadcast %1037 : vector<1x128xbf16> to vector<8x128xbf16>
    %1047 = arith.subf %1045, %1046 : vector<8x128xbf16>
    %1048 = arith.truncf %1042 : vector<8x128xf32> to vector<8x128xbf16>
    %1049 = math.log %1048 : vector<8x128xbf16>
    %1050 = arith.mulf %1047, %1047 : vector<8x128xbf16>
    %1051 = arith.mulf %1050, %1044 : vector<8x128xbf16>
    %1052 = arith.addf %1035, %1051 : vector<8x128xbf16>
    %1053 = arith.addf %1052, %1049 : vector<8x128xbf16>
    %c0_40 = arith.constant 0 : index
    %c0_41 = arith.constant 0 : index
    %1054 = vector.load %arg7[%c0_40, %c0_41] : memref<8x128xf32, #tpu.memory_space<vmem>>, vector<8x128xf32>
    %1055 = arith.extf %1053 : vector<8x128xbf16> to vector<8x128xf32>
    %1056 = arith.addf %1054, %1055 : vector<8x128xf32>
    %c0_42 = arith.constant 0 : index
    %c0_43 = arith.constant 0 : index
    %1057 = vector.load %arg7[%c0_42, %c0_43] : memref<8x128xf32, #tpu.memory_space<vmem>>, vector<8x128xf32>
    tpu.vector_store %arg7[%c0_42, %c0_43], %1056 {strides = array<i32>} : memref<8x128xf32, #tpu.memory_space<vmem>>, vector<8x128xf32>,
    %cst_44 = arith.constant 0.000000e+00 : bf16
    %1058 = vector.broadcast %cst_44 : bf16 to vector<8x128xbf16>
    %1059 = vector.extract_strided_slice %6 {offsets = [0, 56], sizes = [8, 1], strides = [1, 1]} : vector<8x128xbf16> to vector<8x1xbf16>
    %1060 = vector.extract_strided_slice %8 {offsets = [56, 0], sizes = [1, 128], strides = [1, 1]} : vector<128x128xbf16> to vector<1x128xbf16>
    %1061 = vector.extract_strided_slice %11 {offsets = [0, 56], sizes = [8, 1], strides = [1, 1]} : vector<8x128xf32> to vector<8x1xf32>
    %1062 = vector.extract_strided_slice %14 {offsets = [56, 0], sizes = [1, 128], strides = [1, 1]} : vector<128x128xf32> to vector<1x128xf32>
    %1063 = vector.broadcast %1061 : vector<8x1xf32> to vector<8x128xf32>
    %1064 = vector.broadcast %1062 : vector<1x128xf32> to vector<8x128xf32>
    %1065 = arith.addf %1063, %1064 : vector<8x128xf32>
    %1066 = tpu.reciprocal %1065 {approx = true} : vector<8x128xf32> -> vector<8x128xf32>
    %1067 = arith.truncf %1066 : vector<8x128xf32> to vector<8x128xbf16>
    %1068 = vector.broadcast %1059 : vector<8x1xbf16> to vector<8x128xbf16>
    %1069 = vector.broadcast %1060 : vector<1x128xbf16> to vector<8x128xbf16>
    %1070 = arith.subf %1068, %1069 : vector<8x128xbf16>
    %1071 = arith.truncf %1065 : vector<8x128xf32> to vector<8x128xbf16>
    %1072 = math.log %1071 : vector<8x128xbf16>
    %1073 = arith.mulf %1070, %1070 : vector<8x128xbf16>
    %1074 = arith.mulf %1073, %1067 : vector<8x128xbf16>
    %1075 = arith.addf %1058, %1074 : vector<8x128xbf16>
    %1076 = arith.addf %1075, %1072 : vector<8x128xbf16>
    %1077 = vector.extract_strided_slice %6 {offsets = [0, 57], sizes = [8, 1], strides = [1, 1]} : vector<8x128xbf16> to vector<8x1xbf16>
    %1078 = vector.extract_strided_slice %8 {offsets = [57, 0], sizes = [1, 128], strides = [1, 1]} : vector<128x128xbf16> to vector<1x128xbf16>
    %1079 = vector.extract_strided_slice %11 {offsets = [0, 57], sizes = [8, 1], strides = [1, 1]} : vector<8x128xf32> to vector<8x1xf32>
    %1080 = vector.extract_strided_slice %14 {offsets = [57, 0], sizes = [1, 128], strides = [1, 1]} : vector<128x128xf32> to vector<1x128xf32>
    %1081 = vector.broadcast %1079 : vector<8x1xf32> to vector<8x128xf32>
    %1082 = vector.broadcast %1080 : vector<1x128xf32> to vector<8x128xf32>
    %1083 = arith.addf %1081, %1082 : vector<8x128xf32>
    %1084 = tpu.reciprocal %1083 {approx = true} : vector<8x128xf32> -> vector<8x128xf32>
    %1085 = arith.truncf %1084 : vector<8x128xf32> to vector<8x128xbf16>
    %1086 = vector.broadcast %1077 : vector<8x1xbf16> to vector<8x128xbf16>
    %1087 = vector.broadcast %1078 : vector<1x128xbf16> to vector<8x128xbf16>
    %1088 = arith.subf %1086, %1087 : vector<8x128xbf16>
    %1089 = arith.truncf %1083 : vector<8x128xf32> to vector<8x128xbf16>
    %1090 = math.log %1089 : vector<8x128xbf16>
    %1091 = arith.mulf %1088, %1088 : vector<8x128xbf16>
    %1092 = arith.mulf %1091, %1085 : vector<8x128xbf16>
    %1093 = arith.addf %1076, %1092 : vector<8x128xbf16>
    %1094 = arith.addf %1093, %1090 : vector<8x128xbf16>
    %1095 = vector.extract_strided_slice %6 {offsets = [0, 58], sizes = [8, 1], strides = [1, 1]} : vector<8x128xbf16> to vector<8x1xbf16>
    %1096 = vector.extract_strided_slice %8 {offsets = [58, 0], sizes = [1, 128], strides = [1, 1]} : vector<128x128xbf16> to vector<1x128xbf16>
    %1097 = vector.extract_strided_slice %11 {offsets = [0, 58], sizes = [8, 1], strides = [1, 1]} : vector<8x128xf32> to vector<8x1xf32>
    %1098 = vector.extract_strided_slice %14 {offsets = [58, 0], sizes = [1, 128], strides = [1, 1]} : vector<128x128xf32> to vector<1x128xf32>
    %1099 = vector.broadcast %1097 : vector<8x1xf32> to vector<8x128xf32>
    %1100 = vector.broadcast %1098 : vector<1x128xf32> to vector<8x128xf32>
    %1101 = arith.addf %1099, %1100 : vector<8x128xf32>
    %1102 = tpu.reciprocal %1101 {approx = true} : vector<8x128xf32> -> vector<8x128xf32>
    %1103 = arith.truncf %1102 : vector<8x128xf32> to vector<8x128xbf16>
    %1104 = vector.broadcast %1095 : vector<8x1xbf16> to vector<8x128xbf16>
    %1105 = vector.broadcast %1096 : vector<1x128xbf16> to vector<8x128xbf16>
    %1106 = arith.subf %1104, %1105 : vector<8x128xbf16>
    %1107 = arith.truncf %1101 : vector<8x128xf32> to vector<8x128xbf16>
    %1108 = math.log %1107 : vector<8x128xbf16>
    %1109 = arith.mulf %1106, %1106 : vector<8x128xbf16>
    %1110 = arith.mulf %1109, %1103 : vector<8x128xbf16>
    %1111 = arith.addf %1094, %1110 : vector<8x128xbf16>
    %1112 = arith.addf %1111, %1108 : vector<8x128xbf16>
    %1113 = vector.extract_strided_slice %6 {offsets = [0, 59], sizes = [8, 1], strides = [1, 1]} : vector<8x128xbf16> to vector<8x1xbf16>
    %1114 = vector.extract_strided_slice %8 {offsets = [59, 0], sizes = [1, 128], strides = [1, 1]} : vector<128x128xbf16> to vector<1x128xbf16>
    %1115 = vector.extract_strided_slice %11 {offsets = [0, 59], sizes = [8, 1], strides = [1, 1]} : vector<8x128xf32> to vector<8x1xf32>
    %1116 = vector.extract_strided_slice %14 {offsets = [59, 0], sizes = [1, 128], strides = [1, 1]} : vector<128x128xf32> to vector<1x128xf32>
    %1117 = vector.broadcast %1115 : vector<8x1xf32> to vector<8x128xf32>
    %1118 = vector.broadcast %1116 : vector<1x128xf32> to vector<8x128xf32>
    %1119 = arith.addf %1117, %1118 : vector<8x128xf32>
    %1120 = tpu.reciprocal %1119 {approx = true} : vector<8x128xf32> -> vector<8x128xf32>
    %1121 = arith.truncf %1120 : vector<8x128xf32> to vector<8x128xbf16>
    %1122 = vector.broadcast %1113 : vector<8x1xbf16> to vector<8x128xbf16>
    %1123 = vector.broadcast %1114 : vector<1x128xbf16> to vector<8x128xbf16>
    %1124 = arith.subf %1122, %1123 : vector<8x128xbf16>
    %1125 = arith.truncf %1119 : vector<8x128xf32> to vector<8x128xbf16>
    %1126 = math.log %1125 : vector<8x128xbf16>
    %1127 = arith.mulf %1124, %1124 : vector<8x128xbf16>
    %1128 = arith.mulf %1127, %1121 : vector<8x128xbf16>
    %1129 = arith.addf %1112, %1128 : vector<8x128xbf16>
    %1130 = arith.addf %1129, %1126 : vector<8x128xbf16>
    %1131 = vector.extract_strided_slice %6 {offsets = [0, 60], sizes = [8, 1], strides = [1, 1]} : vector<8x128xbf16> to vector<8x1xbf16>
    %1132 = vector.extract_strided_slice %8 {offsets = [60, 0], sizes = [1, 128], strides = [1, 1]} : vector<128x128xbf16> to vector<1x128xbf16>
    %1133 = vector.extract_strided_slice %11 {offsets = [0, 60], sizes = [8, 1], strides = [1, 1]} : vector<8x128xf32> to vector<8x1xf32>
    %1134 = vector.extract_strided_slice %14 {offsets = [60, 0], sizes = [1, 128], strides = [1, 1]} : vector<128x128xf32> to vector<1x128xf32>
    %1135 = vector.broadcast %1133 : vector<8x1xf32> to vector<8x128xf32>
    %1136 = vector.broadcast %1134 : vector<1x128xf32> to vector<8x128xf32>
    %1137 = arith.addf %1135, %1136 : vector<8x128xf32>
    %1138 = tpu.reciprocal %1137 {approx = true} : vector<8x128xf32> -> vector<8x128xf32>
    %1139 = arith.truncf %1138 : vector<8x128xf32> to vector<8x128xbf16>
    %1140 = vector.broadcast %1131 : vector<8x1xbf16> to vector<8x128xbf16>
    %1141 = vector.broadcast %1132 : vector<1x128xbf16> to vector<8x128xbf16>
    %1142 = arith.subf %1140, %1141 : vector<8x128xbf16>
    %1143 = arith.truncf %1137 : vector<8x128xf32> to vector<8x128xbf16>
    %1144 = math.log %1143 : vector<8x128xbf16>
    %1145 = arith.mulf %1142, %1142 : vector<8x128xbf16>
    %1146 = arith.mulf %1145, %1139 : vector<8x128xbf16>
    %1147 = arith.addf %1130, %1146 : vector<8x128xbf16>
    %1148 = arith.addf %1147, %1144 : vector<8x128xbf16>
    %1149 = vector.extract_strided_slice %6 {offsets = [0, 61], sizes = [8, 1], strides = [1, 1]} : vector<8x128xbf16> to vector<8x1xbf16>
    %1150 = vector.extract_strided_slice %8 {offsets = [61, 0], sizes = [1, 128], strides = [1, 1]} : vector<128x128xbf16> to vector<1x128xbf16>
    %1151 = vector.extract_strided_slice %11 {offsets = [0, 61], sizes = [8, 1], strides = [1, 1]} : vector<8x128xf32> to vector<8x1xf32>
    %1152 = vector.extract_strided_slice %14 {offsets = [61, 0], sizes = [1, 128], strides = [1, 1]} : vector<128x128xf32> to vector<1x128xf32>
    %1153 = vector.broadcast %1151 : vector<8x1xf32> to vector<8x128xf32>
    %1154 = vector.broadcast %1152 : vector<1x128xf32> to vector<8x128xf32>
    %1155 = arith.addf %1153, %1154 : vector<8x128xf32>
    %1156 = tpu.reciprocal %1155 {approx = true} : vector<8x128xf32> -> vector<8x128xf32>
    %1157 = arith.truncf %1156 : vector<8x128xf32> to vector<8x128xbf16>
    %1158 = vector.broadcast %1149 : vector<8x1xbf16> to vector<8x128xbf16>
    %1159 = vector.broadcast %1150 : vector<1x128xbf16> to vector<8x128xbf16>
    %1160 = arith.subf %1158, %1159 : vector<8x128xbf16>
    %1161 = arith.truncf %1155 : vector<8x128xf32> to vector<8x128xbf16>
    %1162 = math.log %1161 : vector<8x128xbf16>
    %1163 = arith.mulf %1160, %1160 : vector<8x128xbf16>
    %1164 = arith.mulf %1163, %1157 : vector<8x128xbf16>
    %1165 = arith.addf %1148, %1164 : vector<8x128xbf16>
    %1166 = arith.addf %1165, %1162 : vector<8x128xbf16>
    %1167 = vector.extract_strided_slice %6 {offsets = [0, 62], sizes = [8, 1], strides = [1, 1]} : vector<8x128xbf16> to vector<8x1xbf16>
    %1168 = vector.extract_strided_slice %8 {offsets = [62, 0], sizes = [1, 128], strides = [1, 1]} : vector<128x128xbf16> to vector<1x128xbf16>
    %1169 = vector.extract_strided_slice %11 {offsets = [0, 62], sizes = [8, 1], strides = [1, 1]} : vector<8x128xf32> to vector<8x1xf32>
    %1170 = vector.extract_strided_slice %14 {offsets = [62, 0], sizes = [1, 128], strides = [1, 1]} : vector<128x128xf32> to vector<1x128xf32>
    %1171 = vector.broadcast %1169 : vector<8x1xf32> to vector<8x128xf32>
    %1172 = vector.broadcast %1170 : vector<1x128xf32> to vector<8x128xf32>
    %1173 = arith.addf %1171, %1172 : vector<8x128xf32>
    %1174 = tpu.reciprocal %1173 {approx = true} : vector<8x128xf32> -> vector<8x128xf32>
    %1175 = arith.truncf %1174 : vector<8x128xf32> to vector<8x128xbf16>
    %1176 = vector.broadcast %1167 : vector<8x1xbf16> to vector<8x128xbf16>
    %1177 = vector.broadcast %1168 : vector<1x128xbf16> to vector<8x128xbf16>
    %1178 = arith.subf %1176, %1177 : vector<8x128xbf16>
    %1179 = arith.truncf %1173 : vector<8x128xf32> to vector<8x128xbf16>
    %1180 = math.log %1179 : vector<8x128xbf16>
    %1181 = arith.mulf %1178, %1178 : vector<8x128xbf16>
    %1182 = arith.mulf %1181, %1175 : vector<8x128xbf16>
    %1183 = arith.addf %1166, %1182 : vector<8x128xbf16>
    %1184 = arith.addf %1183, %1180 : vector<8x128xbf16>
    %1185 = vector.extract_strided_slice %6 {offsets = [0, 63], sizes = [8, 1], strides = [1, 1]} : vector<8x128xbf16> to vector<8x1xbf16>
    %1186 = vector.extract_strided_slice %8 {offsets = [63, 0], sizes = [1, 128], strides = [1, 1]} : vector<128x128xbf16> to vector<1x128xbf16>
    %1187 = vector.extract_strided_slice %11 {offsets = [0, 63], sizes = [8, 1], strides = [1, 1]} : vector<8x128xf32> to vector<8x1xf32>
    %1188 = vector.extract_strided_slice %14 {offsets = [63, 0], sizes = [1, 128], strides = [1, 1]} : vector<128x128xf32> to vector<1x128xf32>
    %1189 = vector.broadcast %1187 : vector<8x1xf32> to vector<8x128xf32>
    %1190 = vector.broadcast %1188 : vector<1x128xf32> to vector<8x128xf32>
    %1191 = arith.addf %1189, %1190 : vector<8x128xf32>
    %1192 = tpu.reciprocal %1191 {approx = true} : vector<8x128xf32> -> vector<8x128xf32>
    %1193 = arith.truncf %1192 : vector<8x128xf32> to vector<8x128xbf16>
    %1194 = vector.broadcast %1185 : vector<8x1xbf16> to vector<8x128xbf16>
    %1195 = vector.broadcast %1186 : vector<1x128xbf16> to vector<8x128xbf16>
    %1196 = arith.subf %1194, %1195 : vector<8x128xbf16>
    %1197 = arith.truncf %1191 : vector<8x128xf32> to vector<8x128xbf16>
    %1198 = math.log %1197 : vector<8x128xbf16>
    %1199 = arith.mulf %1196, %1196 : vector<8x128xbf16>
    %1200 = arith.mulf %1199, %1193 : vector<8x128xbf16>
    %1201 = arith.addf %1184, %1200 : vector<8x128xbf16>
    %1202 = arith.addf %1201, %1198 : vector<8x128xbf16>
    %c0_45 = arith.constant 0 : index
    %c0_46 = arith.constant 0 : index
    %1203 = vector.load %arg7[%c0_45, %c0_46] : memref<8x128xf32, #tpu.memory_space<vmem>>, vector<8x128xf32>
    %1204 = arith.extf %1202 : vector<8x128xbf16> to vector<8x128xf32>
    %1205 = arith.addf %1203, %1204 : vector<8x128xf32>
    %c0_47 = arith.constant 0 : index
    %c0_48 = arith.constant 0 : index
    %1206 = vector.load %arg7[%c0_47, %c0_48] : memref<8x128xf32, #tpu.memory_space<vmem>>, vector<8x128xf32>
    tpu.vector_store %arg7[%c0_47, %c0_48], %1205 {strides = array<i32>} : memref<8x128xf32, #tpu.memory_space<vmem>>, vector<8x128xf32>,
    %cst_49 = arith.constant 0.000000e+00 : bf16
    %1207 = vector.broadcast %cst_49 : bf16 to vector<8x128xbf16>
    %1208 = vector.extract_strided_slice %6 {offsets = [0, 64], sizes = [8, 1], strides = [1, 1]} : vector<8x128xbf16> to vector<8x1xbf16>
    %1209 = vector.extract_strided_slice %8 {offsets = [64, 0], sizes = [1, 128], strides = [1, 1]} : vector<128x128xbf16> to vector<1x128xbf16>
    %1210 = vector.extract_strided_slice %11 {offsets = [0, 64], sizes = [8, 1], strides = [1, 1]} : vector<8x128xf32> to vector<8x1xf32>
    %1211 = vector.extract_strided_slice %14 {offsets = [64, 0], sizes = [1, 128], strides = [1, 1]} : vector<128x128xf32> to vector<1x128xf32>
    %1212 = vector.broadcast %1210 : vector<8x1xf32> to vector<8x128xf32>
    %1213 = vector.broadcast %1211 : vector<1x128xf32> to vector<8x128xf32>
    %1214 = arith.addf %1212, %1213 : vector<8x128xf32>
    %1215 = tpu.reciprocal %1214 {approx = true} : vector<8x128xf32> -> vector<8x128xf32>
    %1216 = arith.truncf %1215 : vector<8x128xf32> to vector<8x128xbf16>
    %1217 = vector.broadcast %1208 : vector<8x1xbf16> to vector<8x128xbf16>
    %1218 = vector.broadcast %1209 : vector<1x128xbf16> to vector<8x128xbf16>
    %1219 = arith.subf %1217, %1218 : vector<8x128xbf16>
    %1220 = arith.truncf %1214 : vector<8x128xf32> to vector<8x128xbf16>
    %1221 = math.log %1220 : vector<8x128xbf16>
    %1222 = arith.mulf %1219, %1219 : vector<8x128xbf16>
    %1223 = arith.mulf %1222, %1216 : vector<8x128xbf16>
    %1224 = arith.addf %1207, %1223 : vector<8x128xbf16>
    %1225 = arith.addf %1224, %1221 : vector<8x128xbf16>
    %1226 = vector.extract_strided_slice %6 {offsets = [0, 65], sizes = [8, 1], strides = [1, 1]} : vector<8x128xbf16> to vector<8x1xbf16>
    %1227 = vector.extract_strided_slice %8 {offsets = [65, 0], sizes = [1, 128], strides = [1, 1]} : vector<128x128xbf16> to vector<1x128xbf16>
    %1228 = vector.extract_strided_slice %11 {offsets = [0, 65], sizes = [8, 1], strides = [1, 1]} : vector<8x128xf32> to vector<8x1xf32>
    %1229 = vector.extract_strided_slice %14 {offsets = [65, 0], sizes = [1, 128], strides = [1, 1]} : vector<128x128xf32> to vector<1x128xf32>
    %1230 = vector.broadcast %1228 : vector<8x1xf32> to vector<8x128xf32>
    %1231 = vector.broadcast %1229 : vector<1x128xf32> to vector<8x128xf32>
    %1232 = arith.addf %1230, %1231 : vector<8x128xf32>
    %1233 = tpu.reciprocal %1232 {approx = true} : vector<8x128xf32> -> vector<8x128xf32>
    %1234 = arith.truncf %1233 : vector<8x128xf32> to vector<8x128xbf16>
    %1235 = vector.broadcast %1226 : vector<8x1xbf16> to vector<8x128xbf16>
    %1236 = vector.broadcast %1227 : vector<1x128xbf16> to vector<8x128xbf16>
    %1237 = arith.subf %1235, %1236 : vector<8x128xbf16>
    %1238 = arith.truncf %1232 : vector<8x128xf32> to vector<8x128xbf16>
    %1239 = math.log %1238 : vector<8x128xbf16>
    %1240 = arith.mulf %1237, %1237 : vector<8x128xbf16>
    %1241 = arith.mulf %1240, %1234 : vector<8x128xbf16>
    %1242 = arith.addf %1225, %1241 : vector<8x128xbf16>
    %1243 = arith.addf %1242, %1239 : vector<8x128xbf16>
    %1244 = vector.extract_strided_slice %6 {offsets = [0, 66], sizes = [8, 1], strides = [1, 1]} : vector<8x128xbf16> to vector<8x1xbf16>
    %1245 = vector.extract_strided_slice %8 {offsets = [66, 0], sizes = [1, 128], strides = [1, 1]} : vector<128x128xbf16> to vector<1x128xbf16>
    %1246 = vector.extract_strided_slice %11 {offsets = [0, 66], sizes = [8, 1], strides = [1, 1]} : vector<8x128xf32> to vector<8x1xf32>
    %1247 = vector.extract_strided_slice %14 {offsets = [66, 0], sizes = [1, 128], strides = [1, 1]} : vector<128x128xf32> to vector<1x128xf32>
    %1248 = vector.broadcast %1246 : vector<8x1xf32> to vector<8x128xf32>
    %1249 = vector.broadcast %1247 : vector<1x128xf32> to vector<8x128xf32>
    %1250 = arith.addf %1248, %1249 : vector<8x128xf32>
    %1251 = tpu.reciprocal %1250 {approx = true} : vector<8x128xf32> -> vector<8x128xf32>
    %1252 = arith.truncf %1251 : vector<8x128xf32> to vector<8x128xbf16>
    %1253 = vector.broadcast %1244 : vector<8x1xbf16> to vector<8x128xbf16>
    %1254 = vector.broadcast %1245 : vector<1x128xbf16> to vector<8x128xbf16>
    %1255 = arith.subf %1253, %1254 : vector<8x128xbf16>
    %1256 = arith.truncf %1250 : vector<8x128xf32> to vector<8x128xbf16>
    %1257 = math.log %1256 : vector<8x128xbf16>
    %1258 = arith.mulf %1255, %1255 : vector<8x128xbf16>
    %1259 = arith.mulf %1258, %1252 : vector<8x128xbf16>
    %1260 = arith.addf %1243, %1259 : vector<8x128xbf16>
    %1261 = arith.addf %1260, %1257 : vector<8x128xbf16>
    %1262 = vector.extract_strided_slice %6 {offsets = [0, 67], sizes = [8, 1], strides = [1, 1]} : vector<8x128xbf16> to vector<8x1xbf16>
    %1263 = vector.extract_strided_slice %8 {offsets = [67, 0], sizes = [1, 128], strides = [1, 1]} : vector<128x128xbf16> to vector<1x128xbf16>
    %1264 = vector.extract_strided_slice %11 {offsets = [0, 67], sizes = [8, 1], strides = [1, 1]} : vector<8x128xf32> to vector<8x1xf32>
    %1265 = vector.extract_strided_slice %14 {offsets = [67, 0], sizes = [1, 128], strides = [1, 1]} : vector<128x128xf32> to vector<1x128xf32>
    %1266 = vector.broadcast %1264 : vector<8x1xf32> to vector<8x128xf32>
    %1267 = vector.broadcast %1265 : vector<1x128xf32> to vector<8x128xf32>
    %1268 = arith.addf %1266, %1267 : vector<8x128xf32>
    %1269 = tpu.reciprocal %1268 {approx = true} : vector<8x128xf32> -> vector<8x128xf32>
    %1270 = arith.truncf %1269 : vector<8x128xf32> to vector<8x128xbf16>
    %1271 = vector.broadcast %1262 : vector<8x1xbf16> to vector<8x128xbf16>
    %1272 = vector.broadcast %1263 : vector<1x128xbf16> to vector<8x128xbf16>
    %1273 = arith.subf %1271, %1272 : vector<8x128xbf16>
    %1274 = arith.truncf %1268 : vector<8x128xf32> to vector<8x128xbf16>
    %1275 = math.log %1274 : vector<8x128xbf16>
    %1276 = arith.mulf %1273, %1273 : vector<8x128xbf16>
    %1277 = arith.mulf %1276, %1270 : vector<8x128xbf16>
    %1278 = arith.addf %1261, %1277 : vector<8x128xbf16>
    %1279 = arith.addf %1278, %1275 : vector<8x128xbf16>
    %1280 = vector.extract_strided_slice %6 {offsets = [0, 68], sizes = [8, 1], strides = [1, 1]} : vector<8x128xbf16> to vector<8x1xbf16>
    %1281 = vector.extract_strided_slice %8 {offsets = [68, 0], sizes = [1, 128], strides = [1, 1]} : vector<128x128xbf16> to vector<1x128xbf16>
    %1282 = vector.extract_strided_slice %11 {offsets = [0, 68], sizes = [8, 1], strides = [1, 1]} : vector<8x128xf32> to vector<8x1xf32>
    %1283 = vector.extract_strided_slice %14 {offsets = [68, 0], sizes = [1, 128], strides = [1, 1]} : vector<128x128xf32> to vector<1x128xf32>
    %1284 = vector.broadcast %1282 : vector<8x1xf32> to vector<8x128xf32>
    %1285 = vector.broadcast %1283 : vector<1x128xf32> to vector<8x128xf32>
    %1286 = arith.addf %1284, %1285 : vector<8x128xf32>
    %1287 = tpu.reciprocal %1286 {approx = true} : vector<8x128xf32> -> vector<8x128xf32>
    %1288 = arith.truncf %1287 : vector<8x128xf32> to vector<8x128xbf16>
    %1289 = vector.broadcast %1280 : vector<8x1xbf16> to vector<8x128xbf16>
    %1290 = vector.broadcast %1281 : vector<1x128xbf16> to vector<8x128xbf16>
    %1291 = arith.subf %1289, %1290 : vector<8x128xbf16>
    %1292 = arith.truncf %1286 : vector<8x128xf32> to vector<8x128xbf16>
    %1293 = math.log %1292 : vector<8x128xbf16>
    %1294 = arith.mulf %1291, %1291 : vector<8x128xbf16>
    %1295 = arith.mulf %1294, %1288 : vector<8x128xbf16>
    %1296 = arith.addf %1279, %1295 : vector<8x128xbf16>
    %1297 = arith.addf %1296, %1293 : vector<8x128xbf16>
    %1298 = vector.extract_strided_slice %6 {offsets = [0, 69], sizes = [8, 1], strides = [1, 1]} : vector<8x128xbf16> to vector<8x1xbf16>
    %1299 = vector.extract_strided_slice %8 {offsets = [69, 0], sizes = [1, 128], strides = [1, 1]} : vector<128x128xbf16> to vector<1x128xbf16>
    %1300 = vector.extract_strided_slice %11 {offsets = [0, 69], sizes = [8, 1], strides = [1, 1]} : vector<8x128xf32> to vector<8x1xf32>
    %1301 = vector.extract_strided_slice %14 {offsets = [69, 0], sizes = [1, 128], strides = [1, 1]} : vector<128x128xf32> to vector<1x128xf32>
    %1302 = vector.broadcast %1300 : vector<8x1xf32> to vector<8x128xf32>
    %1303 = vector.broadcast %1301 : vector<1x128xf32> to vector<8x128xf32>
    %1304 = arith.addf %1302, %1303 : vector<8x128xf32>
    %1305 = tpu.reciprocal %1304 {approx = true} : vector<8x128xf32> -> vector<8x128xf32>
    %1306 = arith.truncf %1305 : vector<8x128xf32> to vector<8x128xbf16>
    %1307 = vector.broadcast %1298 : vector<8x1xbf16> to vector<8x128xbf16>
    %1308 = vector.broadcast %1299 : vector<1x128xbf16> to vector<8x128xbf16>
    %1309 = arith.subf %1307, %1308 : vector<8x128xbf16>
    %1310 = arith.truncf %1304 : vector<8x128xf32> to vector<8x128xbf16>
    %1311 = math.log %1310 : vector<8x128xbf16>
    %1312 = arith.mulf %1309, %1309 : vector<8x128xbf16>
    %1313 = arith.mulf %1312, %1306 : vector<8x128xbf16>
    %1314 = arith.addf %1297, %1313 : vector<8x128xbf16>
    %1315 = arith.addf %1314, %1311 : vector<8x128xbf16>
    %1316 = vector.extract_strided_slice %6 {offsets = [0, 70], sizes = [8, 1], strides = [1, 1]} : vector<8x128xbf16> to vector<8x1xbf16>
    %1317 = vector.extract_strided_slice %8 {offsets = [70, 0], sizes = [1, 128], strides = [1, 1]} : vector<128x128xbf16> to vector<1x128xbf16>
    %1318 = vector.extract_strided_slice %11 {offsets = [0, 70], sizes = [8, 1], strides = [1, 1]} : vector<8x128xf32> to vector<8x1xf32>
    %1319 = vector.extract_strided_slice %14 {offsets = [70, 0], sizes = [1, 128], strides = [1, 1]} : vector<128x128xf32> to vector<1x128xf32>
    %1320 = vector.broadcast %1318 : vector<8x1xf32> to vector<8x128xf32>
    %1321 = vector.broadcast %1319 : vector<1x128xf32> to vector<8x128xf32>
    %1322 = arith.addf %1320, %1321 : vector<8x128xf32>
    %1323 = tpu.reciprocal %1322 {approx = true} : vector<8x128xf32> -> vector<8x128xf32>
    %1324 = arith.truncf %1323 : vector<8x128xf32> to vector<8x128xbf16>
    %1325 = vector.broadcast %1316 : vector<8x1xbf16> to vector<8x128xbf16>
    %1326 = vector.broadcast %1317 : vector<1x128xbf16> to vector<8x128xbf16>
    %1327 = arith.subf %1325, %1326 : vector<8x128xbf16>
    %1328 = arith.truncf %1322 : vector<8x128xf32> to vector<8x128xbf16>
    %1329 = math.log %1328 : vector<8x128xbf16>
    %1330 = arith.mulf %1327, %1327 : vector<8x128xbf16>
    %1331 = arith.mulf %1330, %1324 : vector<8x128xbf16>
    %1332 = arith.addf %1315, %1331 : vector<8x128xbf16>
    %1333 = arith.addf %1332, %1329 : vector<8x128xbf16>
    %1334 = vector.extract_strided_slice %6 {offsets = [0, 71], sizes = [8, 1], strides = [1, 1]} : vector<8x128xbf16> to vector<8x1xbf16>
    %1335 = vector.extract_strided_slice %8 {offsets = [71, 0], sizes = [1, 128], strides = [1, 1]} : vector<128x128xbf16> to vector<1x128xbf16>
    %1336 = vector.extract_strided_slice %11 {offsets = [0, 71], sizes = [8, 1], strides = [1, 1]} : vector<8x128xf32> to vector<8x1xf32>
    %1337 = vector.extract_strided_slice %14 {offsets = [71, 0], sizes = [1, 128], strides = [1, 1]} : vector<128x128xf32> to vector<1x128xf32>
    %1338 = vector.broadcast %1336 : vector<8x1xf32> to vector<8x128xf32>
    %1339 = vector.broadcast %1337 : vector<1x128xf32> to vector<8x128xf32>
    %1340 = arith.addf %1338, %1339 : vector<8x128xf32>
    %1341 = tpu.reciprocal %1340 {approx = true} : vector<8x128xf32> -> vector<8x128xf32>
    %1342 = arith.truncf %1341 : vector<8x128xf32> to vector<8x128xbf16>
    %1343 = vector.broadcast %1334 : vector<8x1xbf16> to vector<8x128xbf16>
    %1344 = vector.broadcast %1335 : vector<1x128xbf16> to vector<8x128xbf16>
    %1345 = arith.subf %1343, %1344 : vector<8x128xbf16>
    %1346 = arith.truncf %1340 : vector<8x128xf32> to vector<8x128xbf16>
    %1347 = math.log %1346 : vector<8x128xbf16>
    %1348 = arith.mulf %1345, %1345 : vector<8x128xbf16>
    %1349 = arith.mulf %1348, %1342 : vector<8x128xbf16>
    %1350 = arith.addf %1333, %1349 : vector<8x128xbf16>
    %1351 = arith.addf %1350, %1347 : vector<8x128xbf16>
    %c0_50 = arith.constant 0 : index
    %c0_51 = arith.constant 0 : index
    %1352 = vector.load %arg7[%c0_50, %c0_51] : memref<8x128xf32, #tpu.memory_space<vmem>>, vector<8x128xf32>
    %1353 = arith.extf %1351 : vector<8x128xbf16> to vector<8x128xf32>
    %1354 = arith.addf %1352, %1353 : vector<8x128xf32>
    %c0_52 = arith.constant 0 : index
    %c0_53 = arith.constant 0 : index
    %1355 = vector.load %arg7[%c0_52, %c0_53] : memref<8x128xf32, #tpu.memory_space<vmem>>, vector<8x128xf32>
    tpu.vector_store %arg7[%c0_52, %c0_53], %1354 {strides = array<i32>} : memref<8x128xf32, #tpu.memory_space<vmem>>, vector<8x128xf32>,
    %cst_54 = arith.constant 0.000000e+00 : bf16
    %1356 = vector.broadcast %cst_54 : bf16 to vector<8x128xbf16>
    %1357 = vector.extract_strided_slice %6 {offsets = [0, 72], sizes = [8, 1], strides = [1, 1]} : vector<8x128xbf16> to vector<8x1xbf16>
    %1358 = vector.extract_strided_slice %8 {offsets = [72, 0], sizes = [1, 128], strides = [1, 1]} : vector<128x128xbf16> to vector<1x128xbf16>
    %1359 = vector.extract_strided_slice %11 {offsets = [0, 72], sizes = [8, 1], strides = [1, 1]} : vector<8x128xf32> to vector<8x1xf32>
    %1360 = vector.extract_strided_slice %14 {offsets = [72, 0], sizes = [1, 128], strides = [1, 1]} : vector<128x128xf32> to vector<1x128xf32>
    %1361 = vector.broadcast %1359 : vector<8x1xf32> to vector<8x128xf32>
    %1362 = vector.broadcast %1360 : vector<1x128xf32> to vector<8x128xf32>
    %1363 = arith.addf %1361, %1362 : vector<8x128xf32>
    %1364 = tpu.reciprocal %1363 {approx = true} : vector<8x128xf32> -> vector<8x128xf32>
    %1365 = arith.truncf %1364 : vector<8x128xf32> to vector<8x128xbf16>
    %1366 = vector.broadcast %1357 : vector<8x1xbf16> to vector<8x128xbf16>
    %1367 = vector.broadcast %1358 : vector<1x128xbf16> to vector<8x128xbf16>
    %1368 = arith.subf %1366, %1367 : vector<8x128xbf16>
    %1369 = arith.truncf %1363 : vector<8x128xf32> to vector<8x128xbf16>
    %1370 = math.log %1369 : vector<8x128xbf16>
    %1371 = arith.mulf %1368, %1368 : vector<8x128xbf16>
    %1372 = arith.mulf %1371, %1365 : vector<8x128xbf16>
    %1373 = arith.addf %1356, %1372 : vector<8x128xbf16>
    %1374 = arith.addf %1373, %1370 : vector<8x128xbf16>
    %1375 = vector.extract_strided_slice %6 {offsets = [0, 73], sizes = [8, 1], strides = [1, 1]} : vector<8x128xbf16> to vector<8x1xbf16>
    %1376 = vector.extract_strided_slice %8 {offsets = [73, 0], sizes = [1, 128], strides = [1, 1]} : vector<128x128xbf16> to vector<1x128xbf16>
    %1377 = vector.extract_strided_slice %11 {offsets = [0, 73], sizes = [8, 1], strides = [1, 1]} : vector<8x128xf32> to vector<8x1xf32>
    %1378 = vector.extract_strided_slice %14 {offsets = [73, 0], sizes = [1, 128], strides = [1, 1]} : vector<128x128xf32> to vector<1x128xf32>
    %1379 = vector.broadcast %1377 : vector<8x1xf32> to vector<8x128xf32>
    %1380 = vector.broadcast %1378 : vector<1x128xf32> to vector<8x128xf32>
    %1381 = arith.addf %1379, %1380 : vector<8x128xf32>
    %1382 = tpu.reciprocal %1381 {approx = true} : vector<8x128xf32> -> vector<8x128xf32>
    %1383 = arith.truncf %1382 : vector<8x128xf32> to vector<8x128xbf16>
    %1384 = vector.broadcast %1375 : vector<8x1xbf16> to vector<8x128xbf16>
    %1385 = vector.broadcast %1376 : vector<1x128xbf16> to vector<8x128xbf16>
    %1386 = arith.subf %1384, %1385 : vector<8x128xbf16>
    %1387 = arith.truncf %1381 : vector<8x128xf32> to vector<8x128xbf16>
    %1388 = math.log %1387 : vector<8x128xbf16>
    %1389 = arith.mulf %1386, %1386 : vector<8x128xbf16>
    %1390 = arith.mulf %1389, %1383 : vector<8x128xbf16>
    %1391 = arith.addf %1374, %1390 : vector<8x128xbf16>
    %1392 = arith.addf %1391, %1388 : vector<8x128xbf16>
    %1393 = vector.extract_strided_slice %6 {offsets = [0, 74], sizes = [8, 1], strides = [1, 1]} : vector<8x128xbf16> to vector<8x1xbf16>
    %1394 = vector.extract_strided_slice %8 {offsets = [74, 0], sizes = [1, 128], strides = [1, 1]} : vector<128x128xbf16> to vector<1x128xbf16>
    %1395 = vector.extract_strided_slice %11 {offsets = [0, 74], sizes = [8, 1], strides = [1, 1]} : vector<8x128xf32> to vector<8x1xf32>
    %1396 = vector.extract_strided_slice %14 {offsets = [74, 0], sizes = [1, 128], strides = [1, 1]} : vector<128x128xf32> to vector<1x128xf32>
    %1397 = vector.broadcast %1395 : vector<8x1xf32> to vector<8x128xf32>
    %1398 = vector.broadcast %1396 : vector<1x128xf32> to vector<8x128xf32>
    %1399 = arith.addf %1397, %1398 : vector<8x128xf32>
    %1400 = tpu.reciprocal %1399 {approx = true} : vector<8x128xf32> -> vector<8x128xf32>
    %1401 = arith.truncf %1400 : vector<8x128xf32> to vector<8x128xbf16>
    %1402 = vector.broadcast %1393 : vector<8x1xbf16> to vector<8x128xbf16>
    %1403 = vector.broadcast %1394 : vector<1x128xbf16> to vector<8x128xbf16>
    %1404 = arith.subf %1402, %1403 : vector<8x128xbf16>
    %1405 = arith.truncf %1399 : vector<8x128xf32> to vector<8x128xbf16>
    %1406 = math.log %1405 : vector<8x128xbf16>
    %1407 = arith.mulf %1404, %1404 : vector<8x128xbf16>
    %1408 = arith.mulf %1407, %1401 : vector<8x128xbf16>
    %1409 = arith.addf %1392, %1408 : vector<8x128xbf16>
    %1410 = arith.addf %1409, %1406 : vector<8x128xbf16>
    %1411 = vector.extract_strided_slice %6 {offsets = [0, 75], sizes = [8, 1], strides = [1, 1]} : vector<8x128xbf16> to vector<8x1xbf16>
    %1412 = vector.extract_strided_slice %8 {offsets = [75, 0], sizes = [1, 128], strides = [1, 1]} : vector<128x128xbf16> to vector<1x128xbf16>
    %1413 = vector.extract_strided_slice %11 {offsets = [0, 75], sizes = [8, 1], strides = [1, 1]} : vector<8x128xf32> to vector<8x1xf32>
    %1414 = vector.extract_strided_slice %14 {offsets = [75, 0], sizes = [1, 128], strides = [1, 1]} : vector<128x128xf32> to vector<1x128xf32>
    %1415 = vector.broadcast %1413 : vector<8x1xf32> to vector<8x128xf32>
    %1416 = vector.broadcast %1414 : vector<1x128xf32> to vector<8x128xf32>
    %1417 = arith.addf %1415, %1416 : vector<8x128xf32>
    %1418 = tpu.reciprocal %1417 {approx = true} : vector<8x128xf32> -> vector<8x128xf32>
    %1419 = arith.truncf %1418 : vector<8x128xf32> to vector<8x128xbf16>
    %1420 = vector.broadcast %1411 : vector<8x1xbf16> to vector<8x128xbf16>
    %1421 = vector.broadcast %1412 : vector<1x128xbf16> to vector<8x128xbf16>
    %1422 = arith.subf %1420, %1421 : vector<8x128xbf16>
    %1423 = arith.truncf %1417 : vector<8x128xf32> to vector<8x128xbf16>
    %1424 = math.log %1423 : vector<8x128xbf16>
    %1425 = arith.mulf %1422, %1422 : vector<8x128xbf16>
    %1426 = arith.mulf %1425, %1419 : vector<8x128xbf16>
    %1427 = arith.addf %1410, %1426 : vector<8x128xbf16>
    %1428 = arith.addf %1427, %1424 : vector<8x128xbf16>
    %1429 = vector.extract_strided_slice %6 {offsets = [0, 76], sizes = [8, 1], strides = [1, 1]} : vector<8x128xbf16> to vector<8x1xbf16>
    %1430 = vector.extract_strided_slice %8 {offsets = [76, 0], sizes = [1, 128], strides = [1, 1]} : vector<128x128xbf16> to vector<1x128xbf16>
    %1431 = vector.extract_strided_slice %11 {offsets = [0, 76], sizes = [8, 1], strides = [1, 1]} : vector<8x128xf32> to vector<8x1xf32>
    %1432 = vector.extract_strided_slice %14 {offsets = [76, 0], sizes = [1, 128], strides = [1, 1]} : vector<128x128xf32> to vector<1x128xf32>
    %1433 = vector.broadcast %1431 : vector<8x1xf32> to vector<8x128xf32>
    %1434 = vector.broadcast %1432 : vector<1x128xf32> to vector<8x128xf32>
    %1435 = arith.addf %1433, %1434 : vector<8x128xf32>
    %1436 = tpu.reciprocal %1435 {approx = true} : vector<8x128xf32> -> vector<8x128xf32>
    %1437 = arith.truncf %1436 : vector<8x128xf32> to vector<8x128xbf16>
    %1438 = vector.broadcast %1429 : vector<8x1xbf16> to vector<8x128xbf16>
    %1439 = vector.broadcast %1430 : vector<1x128xbf16> to vector<8x128xbf16>
    %1440 = arith.subf %1438, %1439 : vector<8x128xbf16>
    %1441 = arith.truncf %1435 : vector<8x128xf32> to vector<8x128xbf16>
    %1442 = math.log %1441 : vector<8x128xbf16>
    %1443 = arith.mulf %1440, %1440 : vector<8x128xbf16>
    %1444 = arith.mulf %1443, %1437 : vector<8x128xbf16>
    %1445 = arith.addf %1428, %1444 : vector<8x128xbf16>
    %1446 = arith.addf %1445, %1442 : vector<8x128xbf16>
    %1447 = vector.extract_strided_slice %6 {offsets = [0, 77], sizes = [8, 1], strides = [1, 1]} : vector<8x128xbf16> to vector<8x1xbf16>
    %1448 = vector.extract_strided_slice %8 {offsets = [77, 0], sizes = [1, 128], strides = [1, 1]} : vector<128x128xbf16> to vector<1x128xbf16>
    %1449 = vector.extract_strided_slice %11 {offsets = [0, 77], sizes = [8, 1], strides = [1, 1]} : vector<8x128xf32> to vector<8x1xf32>
    %1450 = vector.extract_strided_slice %14 {offsets = [77, 0], sizes = [1, 128], strides = [1, 1]} : vector<128x128xf32> to vector<1x128xf32>
    %1451 = vector.broadcast %1449 : vector<8x1xf32> to vector<8x128xf32>
    %1452 = vector.broadcast %1450 : vector<1x128xf32> to vector<8x128xf32>
    %1453 = arith.addf %1451, %1452 : vector<8x128xf32>
    %1454 = tpu.reciprocal %1453 {approx = true} : vector<8x128xf32> -> vector<8x128xf32>
    %1455 = arith.truncf %1454 : vector<8x128xf32> to vector<8x128xbf16>
    %1456 = vector.broadcast %1447 : vector<8x1xbf16> to vector<8x128xbf16>
    %1457 = vector.broadcast %1448 : vector<1x128xbf16> to vector<8x128xbf16>
    %1458 = arith.subf %1456, %1457 : vector<8x128xbf16>
    %1459 = arith.truncf %1453 : vector<8x128xf32> to vector<8x128xbf16>
    %1460 = math.log %1459 : vector<8x128xbf16>
    %1461 = arith.mulf %1458, %1458 : vector<8x128xbf16>
    %1462 = arith.mulf %1461, %1455 : vector<8x128xbf16>
    %1463 = arith.addf %1446, %1462 : vector<8x128xbf16>
    %1464 = arith.addf %1463, %1460 : vector<8x128xbf16>
    %1465 = vector.extract_strided_slice %6 {offsets = [0, 78], sizes = [8, 1], strides = [1, 1]} : vector<8x128xbf16> to vector<8x1xbf16>
    %1466 = vector.extract_strided_slice %8 {offsets = [78, 0], sizes = [1, 128], strides = [1, 1]} : vector<128x128xbf16> to vector<1x128xbf16>
    %1467 = vector.extract_strided_slice %11 {offsets = [0, 78], sizes = [8, 1], strides = [1, 1]} : vector<8x128xf32> to vector<8x1xf32>
    %1468 = vector.extract_strided_slice %14 {offsets = [78, 0], sizes = [1, 128], strides = [1, 1]} : vector<128x128xf32> to vector<1x128xf32>
    %1469 = vector.broadcast %1467 : vector<8x1xf32> to vector<8x128xf32>
    %1470 = vector.broadcast %1468 : vector<1x128xf32> to vector<8x128xf32>
    %1471 = arith.addf %1469, %1470 : vector<8x128xf32>
    %1472 = tpu.reciprocal %1471 {approx = true} : vector<8x128xf32> -> vector<8x128xf32>
    %1473 = arith.truncf %1472 : vector<8x128xf32> to vector<8x128xbf16>
    %1474 = vector.broadcast %1465 : vector<8x1xbf16> to vector<8x128xbf16>
    %1475 = vector.broadcast %1466 : vector<1x128xbf16> to vector<8x128xbf16>
    %1476 = arith.subf %1474, %1475 : vector<8x128xbf16>
    %1477 = arith.truncf %1471 : vector<8x128xf32> to vector<8x128xbf16>
    %1478 = math.log %1477 : vector<8x128xbf16>
    %1479 = arith.mulf %1476, %1476 : vector<8x128xbf16>
    %1480 = arith.mulf %1479, %1473 : vector<8x128xbf16>
    %1481 = arith.addf %1464, %1480 : vector<8x128xbf16>
    %1482 = arith.addf %1481, %1478 : vector<8x128xbf16>
    %1483 = vector.extract_strided_slice %6 {offsets = [0, 79], sizes = [8, 1], strides = [1, 1]} : vector<8x128xbf16> to vector<8x1xbf16>
    %1484 = vector.extract_strided_slice %8 {offsets = [79, 0], sizes = [1, 128], strides = [1, 1]} : vector<128x128xbf16> to vector<1x128xbf16>
    %1485 = vector.extract_strided_slice %11 {offsets = [0, 79], sizes = [8, 1], strides = [1, 1]} : vector<8x128xf32> to vector<8x1xf32>
    %1486 = vector.extract_strided_slice %14 {offsets = [79, 0], sizes = [1, 128], strides = [1, 1]} : vector<128x128xf32> to vector<1x128xf32>
    %1487 = vector.broadcast %1485 : vector<8x1xf32> to vector<8x128xf32>
    %1488 = vector.broadcast %1486 : vector<1x128xf32> to vector<8x128xf32>
    %1489 = arith.addf %1487, %1488 : vector<8x128xf32>
    %1490 = tpu.reciprocal %1489 {approx = true} : vector<8x128xf32> -> vector<8x128xf32>
    %1491 = arith.truncf %1490 : vector<8x128xf32> to vector<8x128xbf16>
    %1492 = vector.broadcast %1483 : vector<8x1xbf16> to vector<8x128xbf16>
    %1493 = vector.broadcast %1484 : vector<1x128xbf16> to vector<8x128xbf16>
    %1494 = arith.subf %1492, %1493 : vector<8x128xbf16>
    %1495 = arith.truncf %1489 : vector<8x128xf32> to vector<8x128xbf16>
    %1496 = math.log %1495 : vector<8x128xbf16>
    %1497 = arith.mulf %1494, %1494 : vector<8x128xbf16>
    %1498 = arith.mulf %1497, %1491 : vector<8x128xbf16>
    %1499 = arith.addf %1482, %1498 : vector<8x128xbf16>
    %1500 = arith.addf %1499, %1496 : vector<8x128xbf16>
    %c0_55 = arith.constant 0 : index
    %c0_56 = arith.constant 0 : index
    %1501 = vector.load %arg7[%c0_55, %c0_56] : memref<8x128xf32, #tpu.memory_space<vmem>>, vector<8x128xf32>
    %1502 = arith.extf %1500 : vector<8x128xbf16> to vector<8x128xf32>
    %1503 = arith.addf %1501, %1502 : vector<8x128xf32>
    %c0_57 = arith.constant 0 : index
    %c0_58 = arith.constant 0 : index
    %1504 = vector.load %arg7[%c0_57, %c0_58] : memref<8x128xf32, #tpu.memory_space<vmem>>, vector<8x128xf32>
    tpu.vector_store %arg7[%c0_57, %c0_58], %1503 {strides = array<i32>} : memref<8x128xf32, #tpu.memory_space<vmem>>, vector<8x128xf32>,
    %cst_59 = arith.constant 0.000000e+00 : bf16
    %1505 = vector.broadcast %cst_59 : bf16 to vector<8x128xbf16>
    %1506 = vector.extract_strided_slice %6 {offsets = [0, 80], sizes = [8, 1], strides = [1, 1]} : vector<8x128xbf16> to vector<8x1xbf16>
    %1507 = vector.extract_strided_slice %8 {offsets = [80, 0], sizes = [1, 128], strides = [1, 1]} : vector<128x128xbf16> to vector<1x128xbf16>
    %1508 = vector.extract_strided_slice %11 {offsets = [0, 80], sizes = [8, 1], strides = [1, 1]} : vector<8x128xf32> to vector<8x1xf32>
    %1509 = vector.extract_strided_slice %14 {offsets = [80, 0], sizes = [1, 128], strides = [1, 1]} : vector<128x128xf32> to vector<1x128xf32>
    %1510 = vector.broadcast %1508 : vector<8x1xf32> to vector<8x128xf32>
    %1511 = vector.broadcast %1509 : vector<1x128xf32> to vector<8x128xf32>
    %1512 = arith.addf %1510, %1511 : vector<8x128xf32>
    %1513 = tpu.reciprocal %1512 {approx = true} : vector<8x128xf32> -> vector<8x128xf32>
    %1514 = arith.truncf %1513 : vector<8x128xf32> to vector<8x128xbf16>
    %1515 = vector.broadcast %1506 : vector<8x1xbf16> to vector<8x128xbf16>
    %1516 = vector.broadcast %1507 : vector<1x128xbf16> to vector<8x128xbf16>
    %1517 = arith.subf %1515, %1516 : vector<8x128xbf16>
    %1518 = arith.truncf %1512 : vector<8x128xf32> to vector<8x128xbf16>
    %1519 = math.log %1518 : vector<8x128xbf16>
    %1520 = arith.mulf %1517, %1517 : vector<8x128xbf16>
    %1521 = arith.mulf %1520, %1514 : vector<8x128xbf16>
    %1522 = arith.addf %1505, %1521 : vector<8x128xbf16>
    %1523 = arith.addf %1522, %1519 : vector<8x128xbf16>
    %1524 = vector.extract_strided_slice %6 {offsets = [0, 81], sizes = [8, 1], strides = [1, 1]} : vector<8x128xbf16> to vector<8x1xbf16>
    %1525 = vector.extract_strided_slice %8 {offsets = [81, 0], sizes = [1, 128], strides = [1, 1]} : vector<128x128xbf16> to vector<1x128xbf16>
    %1526 = vector.extract_strided_slice %11 {offsets = [0, 81], sizes = [8, 1], strides = [1, 1]} : vector<8x128xf32> to vector<8x1xf32>
    %1527 = vector.extract_strided_slice %14 {offsets = [81, 0], sizes = [1, 128], strides = [1, 1]} : vector<128x128xf32> to vector<1x128xf32>
    %1528 = vector.broadcast %1526 : vector<8x1xf32> to vector<8x128xf32>
    %1529 = vector.broadcast %1527 : vector<1x128xf32> to vector<8x128xf32>
    %1530 = arith.addf %1528, %1529 : vector<8x128xf32>
    %1531 = tpu.reciprocal %1530 {approx = true} : vector<8x128xf32> -> vector<8x128xf32>
    %1532 = arith.truncf %1531 : vector<8x128xf32> to vector<8x128xbf16>
    %1533 = vector.broadcast %1524 : vector<8x1xbf16> to vector<8x128xbf16>
    %1534 = vector.broadcast %1525 : vector<1x128xbf16> to vector<8x128xbf16>
    %1535 = arith.subf %1533, %1534 : vector<8x128xbf16>
    %1536 = arith.truncf %1530 : vector<8x128xf32> to vector<8x128xbf16>
    %1537 = math.log %1536 : vector<8x128xbf16>
    %1538 = arith.mulf %1535, %1535 : vector<8x128xbf16>
    %1539 = arith.mulf %1538, %1532 : vector<8x128xbf16>
    %1540 = arith.addf %1523, %1539 : vector<8x128xbf16>
    %1541 = arith.addf %1540, %1537 : vector<8x128xbf16>
    %1542 = vector.extract_strided_slice %6 {offsets = [0, 82], sizes = [8, 1], strides = [1, 1]} : vector<8x128xbf16> to vector<8x1xbf16>
    %1543 = vector.extract_strided_slice %8 {offsets = [82, 0], sizes = [1, 128], strides = [1, 1]} : vector<128x128xbf16> to vector<1x128xbf16>
    %1544 = vector.extract_strided_slice %11 {offsets = [0, 82], sizes = [8, 1], strides = [1, 1]} : vector<8x128xf32> to vector<8x1xf32>
    %1545 = vector.extract_strided_slice %14 {offsets = [82, 0], sizes = [1, 128], strides = [1, 1]} : vector<128x128xf32> to vector<1x128xf32>
    %1546 = vector.broadcast %1544 : vector<8x1xf32> to vector<8x128xf32>
    %1547 = vector.broadcast %1545 : vector<1x128xf32> to vector<8x128xf32>
    %1548 = arith.addf %1546, %1547 : vector<8x128xf32>
    %1549 = tpu.reciprocal %1548 {approx = true} : vector<8x128xf32> -> vector<8x128xf32>
    %1550 = arith.truncf %1549 : vector<8x128xf32> to vector<8x128xbf16>
    %1551 = vector.broadcast %1542 : vector<8x1xbf16> to vector<8x128xbf16>
    %1552 = vector.broadcast %1543 : vector<1x128xbf16> to vector<8x128xbf16>
    %1553 = arith.subf %1551, %1552 : vector<8x128xbf16>
    %1554 = arith.truncf %1548 : vector<8x128xf32> to vector<8x128xbf16>
    %1555 = math.log %1554 : vector<8x128xbf16>
    %1556 = arith.mulf %1553, %1553 : vector<8x128xbf16>
    %1557 = arith.mulf %1556, %1550 : vector<8x128xbf16>
    %1558 = arith.addf %1541, %1557 : vector<8x128xbf16>
    %1559 = arith.addf %1558, %1555 : vector<8x128xbf16>
    %1560 = vector.extract_strided_slice %6 {offsets = [0, 83], sizes = [8, 1], strides = [1, 1]} : vector<8x128xbf16> to vector<8x1xbf16>
    %1561 = vector.extract_strided_slice %8 {offsets = [83, 0], sizes = [1, 128], strides = [1, 1]} : vector<128x128xbf16> to vector<1x128xbf16>
    %1562 = vector.extract_strided_slice %11 {offsets = [0, 83], sizes = [8, 1], strides = [1, 1]} : vector<8x128xf32> to vector<8x1xf32>
    %1563 = vector.extract_strided_slice %14 {offsets = [83, 0], sizes = [1, 128], strides = [1, 1]} : vector<128x128xf32> to vector<1x128xf32>
    %1564 = vector.broadcast %1562 : vector<8x1xf32> to vector<8x128xf32>
    %1565 = vector.broadcast %1563 : vector<1x128xf32> to vector<8x128xf32>
    %1566 = arith.addf %1564, %1565 : vector<8x128xf32>
    %1567 = tpu.reciprocal %1566 {approx = true} : vector<8x128xf32> -> vector<8x128xf32>
    %1568 = arith.truncf %1567 : vector<8x128xf32> to vector<8x128xbf16>
    %1569 = vector.broadcast %1560 : vector<8x1xbf16> to vector<8x128xbf16>
    %1570 = vector.broadcast %1561 : vector<1x128xbf16> to vector<8x128xbf16>
    %1571 = arith.subf %1569, %1570 : vector<8x128xbf16>
    %1572 = arith.truncf %1566 : vector<8x128xf32> to vector<8x128xbf16>
    %1573 = math.log %1572 : vector<8x128xbf16>
    %1574 = arith.mulf %1571, %1571 : vector<8x128xbf16>
    %1575 = arith.mulf %1574, %1568 : vector<8x128xbf16>
    %1576 = arith.addf %1559, %1575 : vector<8x128xbf16>
    %1577 = arith.addf %1576, %1573 : vector<8x128xbf16>
    %1578 = vector.extract_strided_slice %6 {offsets = [0, 84], sizes = [8, 1], strides = [1, 1]} : vector<8x128xbf16> to vector<8x1xbf16>
    %1579 = vector.extract_strided_slice %8 {offsets = [84, 0], sizes = [1, 128], strides = [1, 1]} : vector<128x128xbf16> to vector<1x128xbf16>
    %1580 = vector.extract_strided_slice %11 {offsets = [0, 84], sizes = [8, 1], strides = [1, 1]} : vector<8x128xf32> to vector<8x1xf32>
    %1581 = vector.extract_strided_slice %14 {offsets = [84, 0], sizes = [1, 128], strides = [1, 1]} : vector<128x128xf32> to vector<1x128xf32>
    %1582 = vector.broadcast %1580 : vector<8x1xf32> to vector<8x128xf32>
    %1583 = vector.broadcast %1581 : vector<1x128xf32> to vector<8x128xf32>
    %1584 = arith.addf %1582, %1583 : vector<8x128xf32>
    %1585 = tpu.reciprocal %1584 {approx = true} : vector<8x128xf32> -> vector<8x128xf32>
    %1586 = arith.truncf %1585 : vector<8x128xf32> to vector<8x128xbf16>
    %1587 = vector.broadcast %1578 : vector<8x1xbf16> to vector<8x128xbf16>
    %1588 = vector.broadcast %1579 : vector<1x128xbf16> to vector<8x128xbf16>
    %1589 = arith.subf %1587, %1588 : vector<8x128xbf16>
    %1590 = arith.truncf %1584 : vector<8x128xf32> to vector<8x128xbf16>
    %1591 = math.log %1590 : vector<8x128xbf16>
    %1592 = arith.mulf %1589, %1589 : vector<8x128xbf16>
    %1593 = arith.mulf %1592, %1586 : vector<8x128xbf16>
    %1594 = arith.addf %1577, %1593 : vector<8x128xbf16>
    %1595 = arith.addf %1594, %1591 : vector<8x128xbf16>
    %1596 = vector.extract_strided_slice %6 {offsets = [0, 85], sizes = [8, 1], strides = [1, 1]} : vector<8x128xbf16> to vector<8x1xbf16>
    %1597 = vector.extract_strided_slice %8 {offsets = [85, 0], sizes = [1, 128], strides = [1, 1]} : vector<128x128xbf16> to vector<1x128xbf16>
    %1598 = vector.extract_strided_slice %11 {offsets = [0, 85], sizes = [8, 1], strides = [1, 1]} : vector<8x128xf32> to vector<8x1xf32>
    %1599 = vector.extract_strided_slice %14 {offsets = [85, 0], sizes = [1, 128], strides = [1, 1]} : vector<128x128xf32> to vector<1x128xf32>
    %1600 = vector.broadcast %1598 : vector<8x1xf32> to vector<8x128xf32>
    %1601 = vector.broadcast %1599 : vector<1x128xf32> to vector<8x128xf32>
    %1602 = arith.addf %1600, %1601 : vector<8x128xf32>
    %1603 = tpu.reciprocal %1602 {approx = true} : vector<8x128xf32> -> vector<8x128xf32>
    %1604 = arith.truncf %1603 : vector<8x128xf32> to vector<8x128xbf16>
    %1605 = vector.broadcast %1596 : vector<8x1xbf16> to vector<8x128xbf16>
    %1606 = vector.broadcast %1597 : vector<1x128xbf16> to vector<8x128xbf16>
    %1607 = arith.subf %1605, %1606 : vector<8x128xbf16>
    %1608 = arith.truncf %1602 : vector<8x128xf32> to vector<8x128xbf16>
    %1609 = math.log %1608 : vector<8x128xbf16>
    %1610 = arith.mulf %1607, %1607 : vector<8x128xbf16>
    %1611 = arith.mulf %1610, %1604 : vector<8x128xbf16>
    %1612 = arith.addf %1595, %1611 : vector<8x128xbf16>
    %1613 = arith.addf %1612, %1609 : vector<8x128xbf16>
    %1614 = vector.extract_strided_slice %6 {offsets = [0, 86], sizes = [8, 1], strides = [1, 1]} : vector<8x128xbf16> to vector<8x1xbf16>
    %1615 = vector.extract_strided_slice %8 {offsets = [86, 0], sizes = [1, 128], strides = [1, 1]} : vector<128x128xbf16> to vector<1x128xbf16>
    %1616 = vector.extract_strided_slice %11 {offsets = [0, 86], sizes = [8, 1], strides = [1, 1]} : vector<8x128xf32> to vector<8x1xf32>
    %1617 = vector.extract_strided_slice %14 {offsets = [86, 0], sizes = [1, 128], strides = [1, 1]} : vector<128x128xf32> to vector<1x128xf32>
    %1618 = vector.broadcast %1616 : vector<8x1xf32> to vector<8x128xf32>
    %1619 = vector.broadcast %1617 : vector<1x128xf32> to vector<8x128xf32>
    %1620 = arith.addf %1618, %1619 : vector<8x128xf32>
    %1621 = tpu.reciprocal %1620 {approx = true} : vector<8x128xf32> -> vector<8x128xf32>
    %1622 = arith.truncf %1621 : vector<8x128xf32> to vector<8x128xbf16>
    %1623 = vector.broadcast %1614 : vector<8x1xbf16> to vector<8x128xbf16>
    %1624 = vector.broadcast %1615 : vector<1x128xbf16> to vector<8x128xbf16>
    %1625 = arith.subf %1623, %1624 : vector<8x128xbf16>
    %1626 = arith.truncf %1620 : vector<8x128xf32> to vector<8x128xbf16>
    %1627 = math.log %1626 : vector<8x128xbf16>
    %1628 = arith.mulf %1625, %1625 : vector<8x128xbf16>
    %1629 = arith.mulf %1628, %1622 : vector<8x128xbf16>
    %1630 = arith.addf %1613, %1629 : vector<8x128xbf16>
    %1631 = arith.addf %1630, %1627 : vector<8x128xbf16>
    %1632 = vector.extract_strided_slice %6 {offsets = [0, 87], sizes = [8, 1], strides = [1, 1]} : vector<8x128xbf16> to vector<8x1xbf16>
    %1633 = vector.extract_strided_slice %8 {offsets = [87, 0], sizes = [1, 128], strides = [1, 1]} : vector<128x128xbf16> to vector<1x128xbf16>
    %1634 = vector.extract_strided_slice %11 {offsets = [0, 87], sizes = [8, 1], strides = [1, 1]} : vector<8x128xf32> to vector<8x1xf32>
    %1635 = vector.extract_strided_slice %14 {offsets = [87, 0], sizes = [1, 128], strides = [1, 1]} : vector<128x128xf32> to vector<1x128xf32>
    %1636 = vector.broadcast %1634 : vector<8x1xf32> to vector<8x128xf32>
    %1637 = vector.broadcast %1635 : vector<1x128xf32> to vector<8x128xf32>
    %1638 = arith.addf %1636, %1637 : vector<8x128xf32>
    %1639 = tpu.reciprocal %1638 {approx = true} : vector<8x128xf32> -> vector<8x128xf32>
    %1640 = arith.truncf %1639 : vector<8x128xf32> to vector<8x128xbf16>
    %1641 = vector.broadcast %1632 : vector<8x1xbf16> to vector<8x128xbf16>
    %1642 = vector.broadcast %1633 : vector<1x128xbf16> to vector<8x128xbf16>
    %1643 = arith.subf %1641, %1642 : vector<8x128xbf16>
    %1644 = arith.truncf %1638 : vector<8x128xf32> to vector<8x128xbf16>
    %1645 = math.log %1644 : vector<8x128xbf16>
    %1646 = arith.mulf %1643, %1643 : vector<8x128xbf16>
    %1647 = arith.mulf %1646, %1640 : vector<8x128xbf16>
    %1648 = arith.addf %1631, %1647 : vector<8x128xbf16>
    %1649 = arith.addf %1648, %1645 : vector<8x128xbf16>
    %c0_60 = arith.constant 0 : index
    %c0_61 = arith.constant 0 : index
    %1650 = vector.load %arg7[%c0_60, %c0_61] : memref<8x128xf32, #tpu.memory_space<vmem>>, vector<8x128xf32>
    %1651 = arith.extf %1649 : vector<8x128xbf16> to vector<8x128xf32>
    %1652 = arith.addf %1650, %1651 : vector<8x128xf32>
    %c0_62 = arith.constant 0 : index
    %c0_63 = arith.constant 0 : index
    %1653 = vector.load %arg7[%c0_62, %c0_63] : memref<8x128xf32, #tpu.memory_space<vmem>>, vector<8x128xf32>
    tpu.vector_store %arg7[%c0_62, %c0_63], %1652 {strides = array<i32>} : memref<8x128xf32, #tpu.memory_space<vmem>>, vector<8x128xf32>,
    %cst_64 = arith.constant 0.000000e+00 : bf16
    %1654 = vector.broadcast %cst_64 : bf16 to vector<8x128xbf16>
    %1655 = vector.extract_strided_slice %6 {offsets = [0, 88], sizes = [8, 1], strides = [1, 1]} : vector<8x128xbf16> to vector<8x1xbf16>
    %1656 = vector.extract_strided_slice %8 {offsets = [88, 0], sizes = [1, 128], strides = [1, 1]} : vector<128x128xbf16> to vector<1x128xbf16>
    %1657 = vector.extract_strided_slice %11 {offsets = [0, 88], sizes = [8, 1], strides = [1, 1]} : vector<8x128xf32> to vector<8x1xf32>
    %1658 = vector.extract_strided_slice %14 {offsets = [88, 0], sizes = [1, 128], strides = [1, 1]} : vector<128x128xf32> to vector<1x128xf32>
    %1659 = vector.broadcast %1657 : vector<8x1xf32> to vector<8x128xf32>
    %1660 = vector.broadcast %1658 : vector<1x128xf32> to vector<8x128xf32>
    %1661 = arith.addf %1659, %1660 : vector<8x128xf32>
    %1662 = tpu.reciprocal %1661 {approx = true} : vector<8x128xf32> -> vector<8x128xf32>
    %1663 = arith.truncf %1662 : vector<8x128xf32> to vector<8x128xbf16>
    %1664 = vector.broadcast %1655 : vector<8x1xbf16> to vector<8x128xbf16>
    %1665 = vector.broadcast %1656 : vector<1x128xbf16> to vector<8x128xbf16>
    %1666 = arith.subf %1664, %1665 : vector<8x128xbf16>
    %1667 = arith.truncf %1661 : vector<8x128xf32> to vector<8x128xbf16>
    %1668 = math.log %1667 : vector<8x128xbf16>
    %1669 = arith.mulf %1666, %1666 : vector<8x128xbf16>
    %1670 = arith.mulf %1669, %1663 : vector<8x128xbf16>
    %1671 = arith.addf %1654, %1670 : vector<8x128xbf16>
    %1672 = arith.addf %1671, %1668 : vector<8x128xbf16>
    %1673 = vector.extract_strided_slice %6 {offsets = [0, 89], sizes = [8, 1], strides = [1, 1]} : vector<8x128xbf16> to vector<8x1xbf16>
    %1674 = vector.extract_strided_slice %8 {offsets = [89, 0], sizes = [1, 128], strides = [1, 1]} : vector<128x128xbf16> to vector<1x128xbf16>
    %1675 = vector.extract_strided_slice %11 {offsets = [0, 89], sizes = [8, 1], strides = [1, 1]} : vector<8x128xf32> to vector<8x1xf32>
    %1676 = vector.extract_strided_slice %14 {offsets = [89, 0], sizes = [1, 128], strides = [1, 1]} : vector<128x128xf32> to vector<1x128xf32>
    %1677 = vector.broadcast %1675 : vector<8x1xf32> to vector<8x128xf32>
    %1678 = vector.broadcast %1676 : vector<1x128xf32> to vector<8x128xf32>
    %1679 = arith.addf %1677, %1678 : vector<8x128xf32>
    %1680 = tpu.reciprocal %1679 {approx = true} : vector<8x128xf32> -> vector<8x128xf32>
    %1681 = arith.truncf %1680 : vector<8x128xf32> to vector<8x128xbf16>
    %1682 = vector.broadcast %1673 : vector<8x1xbf16> to vector<8x128xbf16>
    %1683 = vector.broadcast %1674 : vector<1x128xbf16> to vector<8x128xbf16>
    %1684 = arith.subf %1682, %1683 : vector<8x128xbf16>
    %1685 = arith.truncf %1679 : vector<8x128xf32> to vector<8x128xbf16>
    %1686 = math.log %1685 : vector<8x128xbf16>
    %1687 = arith.mulf %1684, %1684 : vector<8x128xbf16>
    %1688 = arith.mulf %1687, %1681 : vector<8x128xbf16>
    %1689 = arith.addf %1672, %1688 : vector<8x128xbf16>
    %1690 = arith.addf %1689, %1686 : vector<8x128xbf16>
    %1691 = vector.extract_strided_slice %6 {offsets = [0, 90], sizes = [8, 1], strides = [1, 1]} : vector<8x128xbf16> to vector<8x1xbf16>
    %1692 = vector.extract_strided_slice %8 {offsets = [90, 0], sizes = [1, 128], strides = [1, 1]} : vector<128x128xbf16> to vector<1x128xbf16>
    %1693 = vector.extract_strided_slice %11 {offsets = [0, 90], sizes = [8, 1], strides = [1, 1]} : vector<8x128xf32> to vector<8x1xf32>
    %1694 = vector.extract_strided_slice %14 {offsets = [90, 0], sizes = [1, 128], strides = [1, 1]} : vector<128x128xf32> to vector<1x128xf32>
    %1695 = vector.broadcast %1693 : vector<8x1xf32> to vector<8x128xf32>
    %1696 = vector.broadcast %1694 : vector<1x128xf32> to vector<8x128xf32>
    %1697 = arith.addf %1695, %1696 : vector<8x128xf32>
    %1698 = tpu.reciprocal %1697 {approx = true} : vector<8x128xf32> -> vector<8x128xf32>
    %1699 = arith.truncf %1698 : vector<8x128xf32> to vector<8x128xbf16>
    %1700 = vector.broadcast %1691 : vector<8x1xbf16> to vector<8x128xbf16>
    %1701 = vector.broadcast %1692 : vector<1x128xbf16> to vector<8x128xbf16>
    %1702 = arith.subf %1700, %1701 : vector<8x128xbf16>
    %1703 = arith.truncf %1697 : vector<8x128xf32> to vector<8x128xbf16>
    %1704 = math.log %1703 : vector<8x128xbf16>
    %1705 = arith.mulf %1702, %1702 : vector<8x128xbf16>
    %1706 = arith.mulf %1705, %1699 : vector<8x128xbf16>
    %1707 = arith.addf %1690, %1706 : vector<8x128xbf16>
    %1708 = arith.addf %1707, %1704 : vector<8x128xbf16>
    %1709 = vector.extract_strided_slice %6 {offsets = [0, 91], sizes = [8, 1], strides = [1, 1]} : vector<8x128xbf16> to vector<8x1xbf16>
    %1710 = vector.extract_strided_slice %8 {offsets = [91, 0], sizes = [1, 128], strides = [1, 1]} : vector<128x128xbf16> to vector<1x128xbf16>
    %1711 = vector.extract_strided_slice %11 {offsets = [0, 91], sizes = [8, 1], strides = [1, 1]} : vector<8x128xf32> to vector<8x1xf32>
    %1712 = vector.extract_strided_slice %14 {offsets = [91, 0], sizes = [1, 128], strides = [1, 1]} : vector<128x128xf32> to vector<1x128xf32>
    %1713 = vector.broadcast %1711 : vector<8x1xf32> to vector<8x128xf32>
    %1714 = vector.broadcast %1712 : vector<1x128xf32> to vector<8x128xf32>
    %1715 = arith.addf %1713, %1714 : vector<8x128xf32>
    %1716 = tpu.reciprocal %1715 {approx = true} : vector<8x128xf32> -> vector<8x128xf32>
    %1717 = arith.truncf %1716 : vector<8x128xf32> to vector<8x128xbf16>
    %1718 = vector.broadcast %1709 : vector<8x1xbf16> to vector<8x128xbf16>
    %1719 = vector.broadcast %1710 : vector<1x128xbf16> to vector<8x128xbf16>
    %1720 = arith.subf %1718, %1719 : vector<8x128xbf16>
    %1721 = arith.truncf %1715 : vector<8x128xf32> to vector<8x128xbf16>
    %1722 = math.log %1721 : vector<8x128xbf16>
    %1723 = arith.mulf %1720, %1720 : vector<8x128xbf16>
    %1724 = arith.mulf %1723, %1717 : vector<8x128xbf16>
    %1725 = arith.addf %1708, %1724 : vector<8x128xbf16>
    %1726 = arith.addf %1725, %1722 : vector<8x128xbf16>
    %1727 = vector.extract_strided_slice %6 {offsets = [0, 92], sizes = [8, 1], strides = [1, 1]} : vector<8x128xbf16> to vector<8x1xbf16>
    %1728 = vector.extract_strided_slice %8 {offsets = [92, 0], sizes = [1, 128], strides = [1, 1]} : vector<128x128xbf16> to vector<1x128xbf16>
    %1729 = vector.extract_strided_slice %11 {offsets = [0, 92], sizes = [8, 1], strides = [1, 1]} : vector<8x128xf32> to vector<8x1xf32>
    %1730 = vector.extract_strided_slice %14 {offsets = [92, 0], sizes = [1, 128], strides = [1, 1]} : vector<128x128xf32> to vector<1x128xf32>
    %1731 = vector.broadcast %1729 : vector<8x1xf32> to vector<8x128xf32>
    %1732 = vector.broadcast %1730 : vector<1x128xf32> to vector<8x128xf32>
    %1733 = arith.addf %1731, %1732 : vector<8x128xf32>
    %1734 = tpu.reciprocal %1733 {approx = true} : vector<8x128xf32> -> vector<8x128xf32>
    %1735 = arith.truncf %1734 : vector<8x128xf32> to vector<8x128xbf16>
    %1736 = vector.broadcast %1727 : vector<8x1xbf16> to vector<8x128xbf16>
    %1737 = vector.broadcast %1728 : vector<1x128xbf16> to vector<8x128xbf16>
    %1738 = arith.subf %1736, %1737 : vector<8x128xbf16>
    %1739 = arith.truncf %1733 : vector<8x128xf32> to vector<8x128xbf16>
    %1740 = math.log %1739 : vector<8x128xbf16>
    %1741 = arith.mulf %1738, %1738 : vector<8x128xbf16>
    %1742 = arith.mulf %1741, %1735 : vector<8x128xbf16>
    %1743 = arith.addf %1726, %1742 : vector<8x128xbf16>
    %1744 = arith.addf %1743, %1740 : vector<8x128xbf16>
    %1745 = vector.extract_strided_slice %6 {offsets = [0, 93], sizes = [8, 1], strides = [1, 1]} : vector<8x128xbf16> to vector<8x1xbf16>
    %1746 = vector.extract_strided_slice %8 {offsets = [93, 0], sizes = [1, 128], strides = [1, 1]} : vector<128x128xbf16> to vector<1x128xbf16>
    %1747 = vector.extract_strided_slice %11 {offsets = [0, 93], sizes = [8, 1], strides = [1, 1]} : vector<8x128xf32> to vector<8x1xf32>
    %1748 = vector.extract_strided_slice %14 {offsets = [93, 0], sizes = [1, 128], strides = [1, 1]} : vector<128x128xf32> to vector<1x128xf32>
    %1749 = vector.broadcast %1747 : vector<8x1xf32> to vector<8x128xf32>
    %1750 = vector.broadcast %1748 : vector<1x128xf32> to vector<8x128xf32>
    %1751 = arith.addf %1749, %1750 : vector<8x128xf32>
    %1752 = tpu.reciprocal %1751 {approx = true} : vector<8x128xf32> -> vector<8x128xf32>
    %1753 = arith.truncf %1752 : vector<8x128xf32> to vector<8x128xbf16>
    %1754 = vector.broadcast %1745 : vector<8x1xbf16> to vector<8x128xbf16>
    %1755 = vector.broadcast %1746 : vector<1x128xbf16> to vector<8x128xbf16>
    %1756 = arith.subf %1754, %1755 : vector<8x128xbf16>
    %1757 = arith.truncf %1751 : vector<8x128xf32> to vector<8x128xbf16>
    %1758 = math.log %1757 : vector<8x128xbf16>
    %1759 = arith.mulf %1756, %1756 : vector<8x128xbf16>
    %1760 = arith.mulf %1759, %1753 : vector<8x128xbf16>
    %1761 = arith.addf %1744, %1760 : vector<8x128xbf16>
    %1762 = arith.addf %1761, %1758 : vector<8x128xbf16>
    %1763 = vector.extract_strided_slice %6 {offsets = [0, 94], sizes = [8, 1], strides = [1, 1]} : vector<8x128xbf16> to vector<8x1xbf16>
    %1764 = vector.extract_strided_slice %8 {offsets = [94, 0], sizes = [1, 128], strides = [1, 1]} : vector<128x128xbf16> to vector<1x128xbf16>
    %1765 = vector.extract_strided_slice %11 {offsets = [0, 94], sizes = [8, 1], strides = [1, 1]} : vector<8x128xf32> to vector<8x1xf32>
    %1766 = vector.extract_strided_slice %14 {offsets = [94, 0], sizes = [1, 128], strides = [1, 1]} : vector<128x128xf32> to vector<1x128xf32>
    %1767 = vector.broadcast %1765 : vector<8x1xf32> to vector<8x128xf32>
    %1768 = vector.broadcast %1766 : vector<1x128xf32> to vector<8x128xf32>
    %1769 = arith.addf %1767, %1768 : vector<8x128xf32>
    %1770 = tpu.reciprocal %1769 {approx = true} : vector<8x128xf32> -> vector<8x128xf32>
    %1771 = arith.truncf %1770 : vector<8x128xf32> to vector<8x128xbf16>
    %1772 = vector.broadcast %1763 : vector<8x1xbf16> to vector<8x128xbf16>
    %1773 = vector.broadcast %1764 : vector<1x128xbf16> to vector<8x128xbf16>
    %1774 = arith.subf %1772, %1773 : vector<8x128xbf16>
    %1775 = arith.truncf %1769 : vector<8x128xf32> to vector<8x128xbf16>
    %1776 = math.log %1775 : vector<8x128xbf16>
    %1777 = arith.mulf %1774, %1774 : vector<8x128xbf16>
    %1778 = arith.mulf %1777, %1771 : vector<8x128xbf16>
    %1779 = arith.addf %1762, %1778 : vector<8x128xbf16>
    %1780 = arith.addf %1779, %1776 : vector<8x128xbf16>
    %1781 = vector.extract_strided_slice %6 {offsets = [0, 95], sizes = [8, 1], strides = [1, 1]} : vector<8x128xbf16> to vector<8x1xbf16>
    %1782 = vector.extract_strided_slice %8 {offsets = [95, 0], sizes = [1, 128], strides = [1, 1]} : vector<128x128xbf16> to vector<1x128xbf16>
    %1783 = vector.extract_strided_slice %11 {offsets = [0, 95], sizes = [8, 1], strides = [1, 1]} : vector<8x128xf32> to vector<8x1xf32>
    %1784 = vector.extract_strided_slice %14 {offsets = [95, 0], sizes = [1, 128], strides = [1, 1]} : vector<128x128xf32> to vector<1x128xf32>
    %1785 = vector.broadcast %1783 : vector<8x1xf32> to vector<8x128xf32>
    %1786 = vector.broadcast %1784 : vector<1x128xf32> to vector<8x128xf32>
    %1787 = arith.addf %1785, %1786 : vector<8x128xf32>
    %1788 = tpu.reciprocal %1787 {approx = true} : vector<8x128xf32> -> vector<8x128xf32>
    %1789 = arith.truncf %1788 : vector<8x128xf32> to vector<8x128xbf16>
    %1790 = vector.broadcast %1781 : vector<8x1xbf16> to vector<8x128xbf16>
    %1791 = vector.broadcast %1782 : vector<1x128xbf16> to vector<8x128xbf16>
    %1792 = arith.subf %1790, %1791 : vector<8x128xbf16>
    %1793 = arith.truncf %1787 : vector<8x128xf32> to vector<8x128xbf16>
    %1794 = math.log %1793 : vector<8x128xbf16>
    %1795 = arith.mulf %1792, %1792 : vector<8x128xbf16>
    %1796 = arith.mulf %1795, %1789 : vector<8x128xbf16>
    %1797 = arith.addf %1780, %1796 : vector<8x128xbf16>
    %1798 = arith.addf %1797, %1794 : vector<8x128xbf16>
    %c0_65 = arith.constant 0 : index
    %c0_66 = arith.constant 0 : index
    %1799 = vector.load %arg7[%c0_65, %c0_66] : memref<8x128xf32, #tpu.memory_space<vmem>>, vector<8x128xf32>
    %1800 = arith.extf %1798 : vector<8x128xbf16> to vector<8x128xf32>
    %1801 = arith.addf %1799, %1800 : vector<8x128xf32>
    %c0_67 = arith.constant 0 : index
    %c0_68 = arith.constant 0 : index
    %1802 = vector.load %arg7[%c0_67, %c0_68] : memref<8x128xf32, #tpu.memory_space<vmem>>, vector<8x128xf32>
    tpu.vector_store %arg7[%c0_67, %c0_68], %1801 {strides = array<i32>} : memref<8x128xf32, #tpu.memory_space<vmem>>, vector<8x128xf32>,
    %cst_69 = arith.constant 0.000000e+00 : bf16
    %1803 = vector.broadcast %cst_69 : bf16 to vector<8x128xbf16>
    %1804 = vector.extract_strided_slice %6 {offsets = [0, 96], sizes = [8, 1], strides = [1, 1]} : vector<8x128xbf16> to vector<8x1xbf16>
    %1805 = vector.extract_strided_slice %8 {offsets = [96, 0], sizes = [1, 128], strides = [1, 1]} : vector<128x128xbf16> to vector<1x128xbf16>
    %1806 = vector.extract_strided_slice %11 {offsets = [0, 96], sizes = [8, 1], strides = [1, 1]} : vector<8x128xf32> to vector<8x1xf32>
    %1807 = vector.extract_strided_slice %14 {offsets = [96, 0], sizes = [1, 128], strides = [1, 1]} : vector<128x128xf32> to vector<1x128xf32>
    %1808 = vector.broadcast %1806 : vector<8x1xf32> to vector<8x128xf32>
    %1809 = vector.broadcast %1807 : vector<1x128xf32> to vector<8x128xf32>
    %1810 = arith.addf %1808, %1809 : vector<8x128xf32>
    %1811 = tpu.reciprocal %1810 {approx = true} : vector<8x128xf32> -> vector<8x128xf32>
    %1812 = arith.truncf %1811 : vector<8x128xf32> to vector<8x128xbf16>
    %1813 = vector.broadcast %1804 : vector<8x1xbf16> to vector<8x128xbf16>
    %1814 = vector.broadcast %1805 : vector<1x128xbf16> to vector<8x128xbf16>
    %1815 = arith.subf %1813, %1814 : vector<8x128xbf16>
    %1816 = arith.truncf %1810 : vector<8x128xf32> to vector<8x128xbf16>
    %1817 = math.log %1816 : vector<8x128xbf16>
    %1818 = arith.mulf %1815, %1815 : vector<8x128xbf16>
    %1819 = arith.mulf %1818, %1812 : vector<8x128xbf16>
    %1820 = arith.addf %1803, %1819 : vector<8x128xbf16>
    %1821 = arith.addf %1820, %1817 : vector<8x128xbf16>
    %1822 = vector.extract_strided_slice %6 {offsets = [0, 97], sizes = [8, 1], strides = [1, 1]} : vector<8x128xbf16> to vector<8x1xbf16>
    %1823 = vector.extract_strided_slice %8 {offsets = [97, 0], sizes = [1, 128], strides = [1, 1]} : vector<128x128xbf16> to vector<1x128xbf16>
    %1824 = vector.extract_strided_slice %11 {offsets = [0, 97], sizes = [8, 1], strides = [1, 1]} : vector<8x128xf32> to vector<8x1xf32>
    %1825 = vector.extract_strided_slice %14 {offsets = [97, 0], sizes = [1, 128], strides = [1, 1]} : vector<128x128xf32> to vector<1x128xf32>
    %1826 = vector.broadcast %1824 : vector<8x1xf32> to vector<8x128xf32>
    %1827 = vector.broadcast %1825 : vector<1x128xf32> to vector<8x128xf32>
    %1828 = arith.addf %1826, %1827 : vector<8x128xf32>
    %1829 = tpu.reciprocal %1828 {approx = true} : vector<8x128xf32> -> vector<8x128xf32>
    %1830 = arith.truncf %1829 : vector<8x128xf32> to vector<8x128xbf16>
    %1831 = vector.broadcast %1822 : vector<8x1xbf16> to vector<8x128xbf16>
    %1832 = vector.broadcast %1823 : vector<1x128xbf16> to vector<8x128xbf16>
    %1833 = arith.subf %1831, %1832 : vector<8x128xbf16>
    %1834 = arith.truncf %1828 : vector<8x128xf32> to vector<8x128xbf16>
    %1835 = math.log %1834 : vector<8x128xbf16>
    %1836 = arith.mulf %1833, %1833 : vector<8x128xbf16>
    %1837 = arith.mulf %1836, %1830 : vector<8x128xbf16>
    %1838 = arith.addf %1821, %1837 : vector<8x128xbf16>
    %1839 = arith.addf %1838, %1835 : vector<8x128xbf16>
    %1840 = vector.extract_strided_slice %6 {offsets = [0, 98], sizes = [8, 1], strides = [1, 1]} : vector<8x128xbf16> to vector<8x1xbf16>
    %1841 = vector.extract_strided_slice %8 {offsets = [98, 0], sizes = [1, 128], strides = [1, 1]} : vector<128x128xbf16> to vector<1x128xbf16>
    %1842 = vector.extract_strided_slice %11 {offsets = [0, 98], sizes = [8, 1], strides = [1, 1]} : vector<8x128xf32> to vector<8x1xf32>
    %1843 = vector.extract_strided_slice %14 {offsets = [98, 0], sizes = [1, 128], strides = [1, 1]} : vector<128x128xf32> to vector<1x128xf32>
    %1844 = vector.broadcast %1842 : vector<8x1xf32> to vector<8x128xf32>
    %1845 = vector.broadcast %1843 : vector<1x128xf32> to vector<8x128xf32>
    %1846 = arith.addf %1844, %1845 : vector<8x128xf32>
    %1847 = tpu.reciprocal %1846 {approx = true} : vector<8x128xf32> -> vector<8x128xf32>
    %1848 = arith.truncf %1847 : vector<8x128xf32> to vector<8x128xbf16>
    %1849 = vector.broadcast %1840 : vector<8x1xbf16> to vector<8x128xbf16>
    %1850 = vector.broadcast %1841 : vector<1x128xbf16> to vector<8x128xbf16>
    %1851 = arith.subf %1849, %1850 : vector<8x128xbf16>
    %1852 = arith.truncf %1846 : vector<8x128xf32> to vector<8x128xbf16>
    %1853 = math.log %1852 : vector<8x128xbf16>
    %1854 = arith.mulf %1851, %1851 : vector<8x128xbf16>
    %1855 = arith.mulf %1854, %1848 : vector<8x128xbf16>
    %1856 = arith.addf %1839, %1855 : vector<8x128xbf16>
    %1857 = arith.addf %1856, %1853 : vector<8x128xbf16>
    %1858 = vector.extract_strided_slice %6 {offsets = [0, 99], sizes = [8, 1], strides = [1, 1]} : vector<8x128xbf16> to vector<8x1xbf16>
    %1859 = vector.extract_strided_slice %8 {offsets = [99, 0], sizes = [1, 128], strides = [1, 1]} : vector<128x128xbf16> to vector<1x128xbf16>
    %1860 = vector.extract_strided_slice %11 {offsets = [0, 99], sizes = [8, 1], strides = [1, 1]} : vector<8x128xf32> to vector<8x1xf32>
    %1861 = vector.extract_strided_slice %14 {offsets = [99, 0], sizes = [1, 128], strides = [1, 1]} : vector<128x128xf32> to vector<1x128xf32>
    %1862 = vector.broadcast %1860 : vector<8x1xf32> to vector<8x128xf32>
    %1863 = vector.broadcast %1861 : vector<1x128xf32> to vector<8x128xf32>
    %1864 = arith.addf %1862, %1863 : vector<8x128xf32>
    %1865 = tpu.reciprocal %1864 {approx = true} : vector<8x128xf32> -> vector<8x128xf32>
    %1866 = arith.truncf %1865 : vector<8x128xf32> to vector<8x128xbf16>
    %1867 = vector.broadcast %1858 : vector<8x1xbf16> to vector<8x128xbf16>
    %1868 = vector.broadcast %1859 : vector<1x128xbf16> to vector<8x128xbf16>
    %1869 = arith.subf %1867, %1868 : vector<8x128xbf16>
    %1870 = arith.truncf %1864 : vector<8x128xf32> to vector<8x128xbf16>
    %1871 = math.log %1870 : vector<8x128xbf16>
    %1872 = arith.mulf %1869, %1869 : vector<8x128xbf16>
    %1873 = arith.mulf %1872, %1866 : vector<8x128xbf16>
    %1874 = arith.addf %1857, %1873 : vector<8x128xbf16>
    %1875 = arith.addf %1874, %1871 : vector<8x128xbf16>
    %1876 = vector.extract_strided_slice %6 {offsets = [0, 100], sizes = [8, 1], strides = [1, 1]} : vector<8x128xbf16> to vector<8x1xbf16>
    %1877 = vector.extract_strided_slice %8 {offsets = [100, 0], sizes = [1, 128], strides = [1, 1]} : vector<128x128xbf16> to vector<1x128xbf16>
    %1878 = vector.extract_strided_slice %11 {offsets = [0, 100], sizes = [8, 1], strides = [1, 1]} : vector<8x128xf32> to vector<8x1xf32>
    %1879 = vector.extract_strided_slice %14 {offsets = [100, 0], sizes = [1, 128], strides = [1, 1]} : vector<128x128xf32> to vector<1x128xf32>
    %1880 = vector.broadcast %1878 : vector<8x1xf32> to vector<8x128xf32>
    %1881 = vector.broadcast %1879 : vector<1x128xf32> to vector<8x128xf32>
    %1882 = arith.addf %1880, %1881 : vector<8x128xf32>
    %1883 = tpu.reciprocal %1882 {approx = true} : vector<8x128xf32> -> vector<8x128xf32>
    %1884 = arith.truncf %1883 : vector<8x128xf32> to vector<8x128xbf16>
    %1885 = vector.broadcast %1876 : vector<8x1xbf16> to vector<8x128xbf16>
    %1886 = vector.broadcast %1877 : vector<1x128xbf16> to vector<8x128xbf16>
    %1887 = arith.subf %1885, %1886 : vector<8x128xbf16>
    %1888 = arith.truncf %1882 : vector<8x128xf32> to vector<8x128xbf16>
    %1889 = math.log %1888 : vector<8x128xbf16>
    %1890 = arith.mulf %1887, %1887 : vector<8x128xbf16>
    %1891 = arith.mulf %1890, %1884 : vector<8x128xbf16>
    %1892 = arith.addf %1875, %1891 : vector<8x128xbf16>
    %1893 = arith.addf %1892, %1889 : vector<8x128xbf16>
    %1894 = vector.extract_strided_slice %6 {offsets = [0, 101], sizes = [8, 1], strides = [1, 1]} : vector<8x128xbf16> to vector<8x1xbf16>
    %1895 = vector.extract_strided_slice %8 {offsets = [101, 0], sizes = [1, 128], strides = [1, 1]} : vector<128x128xbf16> to vector<1x128xbf16>
    %1896 = vector.extract_strided_slice %11 {offsets = [0, 101], sizes = [8, 1], strides = [1, 1]} : vector<8x128xf32> to vector<8x1xf32>
    %1897 = vector.extract_strided_slice %14 {offsets = [101, 0], sizes = [1, 128], strides = [1, 1]} : vector<128x128xf32> to vector<1x128xf32>
    %1898 = vector.broadcast %1896 : vector<8x1xf32> to vector<8x128xf32>
    %1899 = vector.broadcast %1897 : vector<1x128xf32> to vector<8x128xf32>
    %1900 = arith.addf %1898, %1899 : vector<8x128xf32>
    %1901 = tpu.reciprocal %1900 {approx = true} : vector<8x128xf32> -> vector<8x128xf32>
    %1902 = arith.truncf %1901 : vector<8x128xf32> to vector<8x128xbf16>
    %1903 = vector.broadcast %1894 : vector<8x1xbf16> to vector<8x128xbf16>
    %1904 = vector.broadcast %1895 : vector<1x128xbf16> to vector<8x128xbf16>
    %1905 = arith.subf %1903, %1904 : vector<8x128xbf16>
    %1906 = arith.truncf %1900 : vector<8x128xf32> to vector<8x128xbf16>
    %1907 = math.log %1906 : vector<8x128xbf16>
    %1908 = arith.mulf %1905, %1905 : vector<8x128xbf16>
    %1909 = arith.mulf %1908, %1902 : vector<8x128xbf16>
    %1910 = arith.addf %1893, %1909 : vector<8x128xbf16>
    %1911 = arith.addf %1910, %1907 : vector<8x128xbf16>
    %1912 = vector.extract_strided_slice %6 {offsets = [0, 102], sizes = [8, 1], strides = [1, 1]} : vector<8x128xbf16> to vector<8x1xbf16>
    %1913 = vector.extract_strided_slice %8 {offsets = [102, 0], sizes = [1, 128], strides = [1, 1]} : vector<128x128xbf16> to vector<1x128xbf16>
    %1914 = vector.extract_strided_slice %11 {offsets = [0, 102], sizes = [8, 1], strides = [1, 1]} : vector<8x128xf32> to vector<8x1xf32>
    %1915 = vector.extract_strided_slice %14 {offsets = [102, 0], sizes = [1, 128], strides = [1, 1]} : vector<128x128xf32> to vector<1x128xf32>
    %1916 = vector.broadcast %1914 : vector<8x1xf32> to vector<8x128xf32>
    %1917 = vector.broadcast %1915 : vector<1x128xf32> to vector<8x128xf32>
    %1918 = arith.addf %1916, %1917 : vector<8x128xf32>
    %1919 = tpu.reciprocal %1918 {approx = true} : vector<8x128xf32> -> vector<8x128xf32>
    %1920 = arith.truncf %1919 : vector<8x128xf32> to vector<8x128xbf16>
    %1921 = vector.broadcast %1912 : vector<8x1xbf16> to vector<8x128xbf16>
    %1922 = vector.broadcast %1913 : vector<1x128xbf16> to vector<8x128xbf16>
    %1923 = arith.subf %1921, %1922 : vector<8x128xbf16>
    %1924 = arith.truncf %1918 : vector<8x128xf32> to vector<8x128xbf16>
    %1925 = math.log %1924 : vector<8x128xbf16>
    %1926 = arith.mulf %1923, %1923 : vector<8x128xbf16>
    %1927 = arith.mulf %1926, %1920 : vector<8x128xbf16>
    %1928 = arith.addf %1911, %1927 : vector<8x128xbf16>
    %1929 = arith.addf %1928, %1925 : vector<8x128xbf16>
    %1930 = vector.extract_strided_slice %6 {offsets = [0, 103], sizes = [8, 1], strides = [1, 1]} : vector<8x128xbf16> to vector<8x1xbf16>
    %1931 = vector.extract_strided_slice %8 {offsets = [103, 0], sizes = [1, 128], strides = [1, 1]} : vector<128x128xbf16> to vector<1x128xbf16>
    %1932 = vector.extract_strided_slice %11 {offsets = [0, 103], sizes = [8, 1], strides = [1, 1]} : vector<8x128xf32> to vector<8x1xf32>
    %1933 = vector.extract_strided_slice %14 {offsets = [103, 0], sizes = [1, 128], strides = [1, 1]} : vector<128x128xf32> to vector<1x128xf32>
    %1934 = vector.broadcast %1932 : vector<8x1xf32> to vector<8x128xf32>
    %1935 = vector.broadcast %1933 : vector<1x128xf32> to vector<8x128xf32>
    %1936 = arith.addf %1934, %1935 : vector<8x128xf32>
    %1937 = tpu.reciprocal %1936 {approx = true} : vector<8x128xf32> -> vector<8x128xf32>
    %1938 = arith.truncf %1937 : vector<8x128xf32> to vector<8x128xbf16>
    %1939 = vector.broadcast %1930 : vector<8x1xbf16> to vector<8x128xbf16>
    %1940 = vector.broadcast %1931 : vector<1x128xbf16> to vector<8x128xbf16>
    %1941 = arith.subf %1939, %1940 : vector<8x128xbf16>
    %1942 = arith.truncf %1936 : vector<8x128xf32> to vector<8x128xbf16>
    %1943 = math.log %1942 : vector<8x128xbf16>
    %1944 = arith.mulf %1941, %1941 : vector<8x128xbf16>
    %1945 = arith.mulf %1944, %1938 : vector<8x128xbf16>
    %1946 = arith.addf %1929, %1945 : vector<8x128xbf16>
    %1947 = arith.addf %1946, %1943 : vector<8x128xbf16>
    %c0_70 = arith.constant 0 : index
    %c0_71 = arith.constant 0 : index
    %1948 = vector.load %arg7[%c0_70, %c0_71] : memref<8x128xf32, #tpu.memory_space<vmem>>, vector<8x128xf32>
    %1949 = arith.extf %1947 : vector<8x128xbf16> to vector<8x128xf32>
    %1950 = arith.addf %1948, %1949 : vector<8x128xf32>
    %c0_72 = arith.constant 0 : index
    %c0_73 = arith.constant 0 : index
    %1951 = vector.load %arg7[%c0_72, %c0_73] : memref<8x128xf32, #tpu.memory_space<vmem>>, vector<8x128xf32>
    tpu.vector_store %arg7[%c0_72, %c0_73], %1950 {strides = array<i32>} : memref<8x128xf32, #tpu.memory_space<vmem>>, vector<8x128xf32>,
    %cst_74 = arith.constant 0.000000e+00 : bf16
    %1952 = vector.broadcast %cst_74 : bf16 to vector<8x128xbf16>
    %1953 = vector.extract_strided_slice %6 {offsets = [0, 104], sizes = [8, 1], strides = [1, 1]} : vector<8x128xbf16> to vector<8x1xbf16>
    %1954 = vector.extract_strided_slice %8 {offsets = [104, 0], sizes = [1, 128], strides = [1, 1]} : vector<128x128xbf16> to vector<1x128xbf16>
    %1955 = vector.extract_strided_slice %11 {offsets = [0, 104], sizes = [8, 1], strides = [1, 1]} : vector<8x128xf32> to vector<8x1xf32>
    %1956 = vector.extract_strided_slice %14 {offsets = [104, 0], sizes = [1, 128], strides = [1, 1]} : vector<128x128xf32> to vector<1x128xf32>
    %1957 = vector.broadcast %1955 : vector<8x1xf32> to vector<8x128xf32>
    %1958 = vector.broadcast %1956 : vector<1x128xf32> to vector<8x128xf32>
    %1959 = arith.addf %1957, %1958 : vector<8x128xf32>
    %1960 = tpu.reciprocal %1959 {approx = true} : vector<8x128xf32> -> vector<8x128xf32>
    %1961 = arith.truncf %1960 : vector<8x128xf32> to vector<8x128xbf16>
    %1962 = vector.broadcast %1953 : vector<8x1xbf16> to vector<8x128xbf16>
    %1963 = vector.broadcast %1954 : vector<1x128xbf16> to vector<8x128xbf16>
    %1964 = arith.subf %1962, %1963 : vector<8x128xbf16>
    %1965 = arith.truncf %1959 : vector<8x128xf32> to vector<8x128xbf16>
    %1966 = math.log %1965 : vector<8x128xbf16>
    %1967 = arith.mulf %1964, %1964 : vector<8x128xbf16>
    %1968 = arith.mulf %1967, %1961 : vector<8x128xbf16>
    %1969 = arith.addf %1952, %1968 : vector<8x128xbf16>
    %1970 = arith.addf %1969, %1966 : vector<8x128xbf16>
    %1971 = vector.extract_strided_slice %6 {offsets = [0, 105], sizes = [8, 1], strides = [1, 1]} : vector<8x128xbf16> to vector<8x1xbf16>
    %1972 = vector.extract_strided_slice %8 {offsets = [105, 0], sizes = [1, 128], strides = [1, 1]} : vector<128x128xbf16> to vector<1x128xbf16>
    %1973 = vector.extract_strided_slice %11 {offsets = [0, 105], sizes = [8, 1], strides = [1, 1]} : vector<8x128xf32> to vector<8x1xf32>
    %1974 = vector.extract_strided_slice %14 {offsets = [105, 0], sizes = [1, 128], strides = [1, 1]} : vector<128x128xf32> to vector<1x128xf32>
    %1975 = vector.broadcast %1973 : vector<8x1xf32> to vector<8x128xf32>
    %1976 = vector.broadcast %1974 : vector<1x128xf32> to vector<8x128xf32>
    %1977 = arith.addf %1975, %1976 : vector<8x128xf32>
    %1978 = tpu.reciprocal %1977 {approx = true} : vector<8x128xf32> -> vector<8x128xf32>
    %1979 = arith.truncf %1978 : vector<8x128xf32> to vector<8x128xbf16>
    %1980 = vector.broadcast %1971 : vector<8x1xbf16> to vector<8x128xbf16>
    %1981 = vector.broadcast %1972 : vector<1x128xbf16> to vector<8x128xbf16>
    %1982 = arith.subf %1980, %1981 : vector<8x128xbf16>
    %1983 = arith.truncf %1977 : vector<8x128xf32> to vector<8x128xbf16>
    %1984 = math.log %1983 : vector<8x128xbf16>
    %1985 = arith.mulf %1982, %1982 : vector<8x128xbf16>
    %1986 = arith.mulf %1985, %1979 : vector<8x128xbf16>
    %1987 = arith.addf %1970, %1986 : vector<8x128xbf16>
    %1988 = arith.addf %1987, %1984 : vector<8x128xbf16>
    %1989 = vector.extract_strided_slice %6 {offsets = [0, 106], sizes = [8, 1], strides = [1, 1]} : vector<8x128xbf16> to vector<8x1xbf16>
    %1990 = vector.extract_strided_slice %8 {offsets = [106, 0], sizes = [1, 128], strides = [1, 1]} : vector<128x128xbf16> to vector<1x128xbf16>
    %1991 = vector.extract_strided_slice %11 {offsets = [0, 106], sizes = [8, 1], strides = [1, 1]} : vector<8x128xf32> to vector<8x1xf32>
    %1992 = vector.extract_strided_slice %14 {offsets = [106, 0], sizes = [1, 128], strides = [1, 1]} : vector<128x128xf32> to vector<1x128xf32>
    %1993 = vector.broadcast %1991 : vector<8x1xf32> to vector<8x128xf32>
    %1994 = vector.broadcast %1992 : vector<1x128xf32> to vector<8x128xf32>
    %1995 = arith.addf %1993, %1994 : vector<8x128xf32>
    %1996 = tpu.reciprocal %1995 {approx = true} : vector<8x128xf32> -> vector<8x128xf32>
    %1997 = arith.truncf %1996 : vector<8x128xf32> to vector<8x128xbf16>
    %1998 = vector.broadcast %1989 : vector<8x1xbf16> to vector<8x128xbf16>
    %1999 = vector.broadcast %1990 : vector<1x128xbf16> to vector<8x128xbf16>
    %2000 = arith.subf %1998, %1999 : vector<8x128xbf16>
    %2001 = arith.truncf %1995 : vector<8x128xf32> to vector<8x128xbf16>
    %2002 = math.log %2001 : vector<8x128xbf16>
    %2003 = arith.mulf %2000, %2000 : vector<8x128xbf16>
    %2004 = arith.mulf %2003, %1997 : vector<8x128xbf16>
    %2005 = arith.addf %1988, %2004 : vector<8x128xbf16>
    %2006 = arith.addf %2005, %2002 : vector<8x128xbf16>
    %2007 = vector.extract_strided_slice %6 {offsets = [0, 107], sizes = [8, 1], strides = [1, 1]} : vector<8x128xbf16> to vector<8x1xbf16>
    %2008 = vector.extract_strided_slice %8 {offsets = [107, 0], sizes = [1, 128], strides = [1, 1]} : vector<128x128xbf16> to vector<1x128xbf16>
    %2009 = vector.extract_strided_slice %11 {offsets = [0, 107], sizes = [8, 1], strides = [1, 1]} : vector<8x128xf32> to vector<8x1xf32>
    %2010 = vector.extract_strided_slice %14 {offsets = [107, 0], sizes = [1, 128], strides = [1, 1]} : vector<128x128xf32> to vector<1x128xf32>
    %2011 = vector.broadcast %2009 : vector<8x1xf32> to vector<8x128xf32>
    %2012 = vector.broadcast %2010 : vector<1x128xf32> to vector<8x128xf32>
    %2013 = arith.addf %2011, %2012 : vector<8x128xf32>
    %2014 = tpu.reciprocal %2013 {approx = true} : vector<8x128xf32> -> vector<8x128xf32>
    %2015 = arith.truncf %2014 : vector<8x128xf32> to vector<8x128xbf16>
    %2016 = vector.broadcast %2007 : vector<8x1xbf16> to vector<8x128xbf16>
    %2017 = vector.broadcast %2008 : vector<1x128xbf16> to vector<8x128xbf16>
    %2018 = arith.subf %2016, %2017 : vector<8x128xbf16>
    %2019 = arith.truncf %2013 : vector<8x128xf32> to vector<8x128xbf16>
    %2020 = math.log %2019 : vector<8x128xbf16>
    %2021 = arith.mulf %2018, %2018 : vector<8x128xbf16>
    %2022 = arith.mulf %2021, %2015 : vector<8x128xbf16>
    %2023 = arith.addf %2006, %2022 : vector<8x128xbf16>
    %2024 = arith.addf %2023, %2020 : vector<8x128xbf16>
    %2025 = vector.extract_strided_slice %6 {offsets = [0, 108], sizes = [8, 1], strides = [1, 1]} : vector<8x128xbf16> to vector<8x1xbf16>
    %2026 = vector.extract_strided_slice %8 {offsets = [108, 0], sizes = [1, 128], strides = [1, 1]} : vector<128x128xbf16> to vector<1x128xbf16>
    %2027 = vector.extract_strided_slice %11 {offsets = [0, 108], sizes = [8, 1], strides = [1, 1]} : vector<8x128xf32> to vector<8x1xf32>
    %2028 = vector.extract_strided_slice %14 {offsets = [108, 0], sizes = [1, 128], strides = [1, 1]} : vector<128x128xf32> to vector<1x128xf32>
    %2029 = vector.broadcast %2027 : vector<8x1xf32> to vector<8x128xf32>
    %2030 = vector.broadcast %2028 : vector<1x128xf32> to vector<8x128xf32>
    %2031 = arith.addf %2029, %2030 : vector<8x128xf32>
    %2032 = tpu.reciprocal %2031 {approx = true} : vector<8x128xf32> -> vector<8x128xf32>
    %2033 = arith.truncf %2032 : vector<8x128xf32> to vector<8x128xbf16>
    %2034 = vector.broadcast %2025 : vector<8x1xbf16> to vector<8x128xbf16>
    %2035 = vector.broadcast %2026 : vector<1x128xbf16> to vector<8x128xbf16>
    %2036 = arith.subf %2034, %2035 : vector<8x128xbf16>
    %2037 = arith.truncf %2031 : vector<8x128xf32> to vector<8x128xbf16>
    %2038 = math.log %2037 : vector<8x128xbf16>
    %2039 = arith.mulf %2036, %2036 : vector<8x128xbf16>
    %2040 = arith.mulf %2039, %2033 : vector<8x128xbf16>
    %2041 = arith.addf %2024, %2040 : vector<8x128xbf16>
    %2042 = arith.addf %2041, %2038 : vector<8x128xbf16>
    %2043 = vector.extract_strided_slice %6 {offsets = [0, 109], sizes = [8, 1], strides = [1, 1]} : vector<8x128xbf16> to vector<8x1xbf16>
    %2044 = vector.extract_strided_slice %8 {offsets = [109, 0], sizes = [1, 128], strides = [1, 1]} : vector<128x128xbf16> to vector<1x128xbf16>
    %2045 = vector.extract_strided_slice %11 {offsets = [0, 109], sizes = [8, 1], strides = [1, 1]} : vector<8x128xf32> to vector<8x1xf32>
    %2046 = vector.extract_strided_slice %14 {offsets = [109, 0], sizes = [1, 128], strides = [1, 1]} : vector<128x128xf32> to vector<1x128xf32>
    %2047 = vector.broadcast %2045 : vector<8x1xf32> to vector<8x128xf32>
    %2048 = vector.broadcast %2046 : vector<1x128xf32> to vector<8x128xf32>
    %2049 = arith.addf %2047, %2048 : vector<8x128xf32>
    %2050 = tpu.reciprocal %2049 {approx = true} : vector<8x128xf32> -> vector<8x128xf32>
    %2051 = arith.truncf %2050 : vector<8x128xf32> to vector<8x128xbf16>
    %2052 = vector.broadcast %2043 : vector<8x1xbf16> to vector<8x128xbf16>
    %2053 = vector.broadcast %2044 : vector<1x128xbf16> to vector<8x128xbf16>
    %2054 = arith.subf %2052, %2053 : vector<8x128xbf16>
    %2055 = arith.truncf %2049 : vector<8x128xf32> to vector<8x128xbf16>
    %2056 = math.log %2055 : vector<8x128xbf16>
    %2057 = arith.mulf %2054, %2054 : vector<8x128xbf16>
    %2058 = arith.mulf %2057, %2051 : vector<8x128xbf16>
    %2059 = arith.addf %2042, %2058 : vector<8x128xbf16>
    %2060 = arith.addf %2059, %2056 : vector<8x128xbf16>
    %2061 = vector.extract_strided_slice %6 {offsets = [0, 110], sizes = [8, 1], strides = [1, 1]} : vector<8x128xbf16> to vector<8x1xbf16>
    %2062 = vector.extract_strided_slice %8 {offsets = [110, 0], sizes = [1, 128], strides = [1, 1]} : vector<128x128xbf16> to vector<1x128xbf16>
    %2063 = vector.extract_strided_slice %11 {offsets = [0, 110], sizes = [8, 1], strides = [1, 1]} : vector<8x128xf32> to vector<8x1xf32>
    %2064 = vector.extract_strided_slice %14 {offsets = [110, 0], sizes = [1, 128], strides = [1, 1]} : vector<128x128xf32> to vector<1x128xf32>
    %2065 = vector.broadcast %2063 : vector<8x1xf32> to vector<8x128xf32>
    %2066 = vector.broadcast %2064 : vector<1x128xf32> to vector<8x128xf32>
    %2067 = arith.addf %2065, %2066 : vector<8x128xf32>
    %2068 = tpu.reciprocal %2067 {approx = true} : vector<8x128xf32> -> vector<8x128xf32>
    %2069 = arith.truncf %2068 : vector<8x128xf32> to vector<8x128xbf16>
    %2070 = vector.broadcast %2061 : vector<8x1xbf16> to vector<8x128xbf16>
    %2071 = vector.broadcast %2062 : vector<1x128xbf16> to vector<8x128xbf16>
    %2072 = arith.subf %2070, %2071 : vector<8x128xbf16>
    %2073 = arith.truncf %2067 : vector<8x128xf32> to vector<8x128xbf16>
    %2074 = math.log %2073 : vector<8x128xbf16>
    %2075 = arith.mulf %2072, %2072 : vector<8x128xbf16>
    %2076 = arith.mulf %2075, %2069 : vector<8x128xbf16>
    %2077 = arith.addf %2060, %2076 : vector<8x128xbf16>
    %2078 = arith.addf %2077, %2074 : vector<8x128xbf16>
    %2079 = vector.extract_strided_slice %6 {offsets = [0, 111], sizes = [8, 1], strides = [1, 1]} : vector<8x128xbf16> to vector<8x1xbf16>
    %2080 = vector.extract_strided_slice %8 {offsets = [111, 0], sizes = [1, 128], strides = [1, 1]} : vector<128x128xbf16> to vector<1x128xbf16>
    %2081 = vector.extract_strided_slice %11 {offsets = [0, 111], sizes = [8, 1], strides = [1, 1]} : vector<8x128xf32> to vector<8x1xf32>
    %2082 = vector.extract_strided_slice %14 {offsets = [111, 0], sizes = [1, 128], strides = [1, 1]} : vector<128x128xf32> to vector<1x128xf32>
    %2083 = vector.broadcast %2081 : vector<8x1xf32> to vector<8x128xf32>
    %2084 = vector.broadcast %2082 : vector<1x128xf32> to vector<8x128xf32>
    %2085 = arith.addf %2083, %2084 : vector<8x128xf32>
    %2086 = tpu.reciprocal %2085 {approx = true} : vector<8x128xf32> -> vector<8x128xf32>
    %2087 = arith.truncf %2086 : vector<8x128xf32> to vector<8x128xbf16>
    %2088 = vector.broadcast %2079 : vector<8x1xbf16> to vector<8x128xbf16>
    %2089 = vector.broadcast %2080 : vector<1x128xbf16> to vector<8x128xbf16>
    %2090 = arith.subf %2088, %2089 : vector<8x128xbf16>
    %2091 = arith.truncf %2085 : vector<8x128xf32> to vector<8x128xbf16>
    %2092 = math.log %2091 : vector<8x128xbf16>
    %2093 = arith.mulf %2090, %2090 : vector<8x128xbf16>
    %2094 = arith.mulf %2093, %2087 : vector<8x128xbf16>
    %2095 = arith.addf %2078, %2094 : vector<8x128xbf16>
    %2096 = arith.addf %2095, %2092 : vector<8x128xbf16>
    %c0_75 = arith.constant 0 : index
    %c0_76 = arith.constant 0 : index
    %2097 = vector.load %arg7[%c0_75, %c0_76] : memref<8x128xf32, #tpu.memory_space<vmem>>, vector<8x128xf32>
    %2098 = arith.extf %2096 : vector<8x128xbf16> to vector<8x128xf32>
    %2099 = arith.addf %2097, %2098 : vector<8x128xf32>
    %c0_77 = arith.constant 0 : index
    %c0_78 = arith.constant 0 : index
    %2100 = vector.load %arg7[%c0_77, %c0_78] : memref<8x128xf32, #tpu.memory_space<vmem>>, vector<8x128xf32>
    tpu.vector_store %arg7[%c0_77, %c0_78], %2099 {strides = array<i32>} : memref<8x128xf32, #tpu.memory_space<vmem>>, vector<8x128xf32>,
    %cst_79 = arith.constant 0.000000e+00 : bf16
    %2101 = vector.broadcast %cst_79 : bf16 to vector<8x128xbf16>
    %2102 = vector.extract_strided_slice %6 {offsets = [0, 112], sizes = [8, 1], strides = [1, 1]} : vector<8x128xbf16> to vector<8x1xbf16>
    %2103 = vector.extract_strided_slice %8 {offsets = [112, 0], sizes = [1, 128], strides = [1, 1]} : vector<128x128xbf16> to vector<1x128xbf16>
    %2104 = vector.extract_strided_slice %11 {offsets = [0, 112], sizes = [8, 1], strides = [1, 1]} : vector<8x128xf32> to vector<8x1xf32>
    %2105 = vector.extract_strided_slice %14 {offsets = [112, 0], sizes = [1, 128], strides = [1, 1]} : vector<128x128xf32> to vector<1x128xf32>
    %2106 = vector.broadcast %2104 : vector<8x1xf32> to vector<8x128xf32>
    %2107 = vector.broadcast %2105 : vector<1x128xf32> to vector<8x128xf32>
    %2108 = arith.addf %2106, %2107 : vector<8x128xf32>
    %2109 = tpu.reciprocal %2108 {approx = true} : vector<8x128xf32> -> vector<8x128xf32>
    %2110 = arith.truncf %2109 : vector<8x128xf32> to vector<8x128xbf16>
    %2111 = vector.broadcast %2102 : vector<8x1xbf16> to vector<8x128xbf16>
    %2112 = vector.broadcast %2103 : vector<1x128xbf16> to vector<8x128xbf16>
    %2113 = arith.subf %2111, %2112 : vector<8x128xbf16>
    %2114 = arith.truncf %2108 : vector<8x128xf32> to vector<8x128xbf16>
    %2115 = math.log %2114 : vector<8x128xbf16>
    %2116 = arith.mulf %2113, %2113 : vector<8x128xbf16>
    %2117 = arith.mulf %2116, %2110 : vector<8x128xbf16>
    %2118 = arith.addf %2101, %2117 : vector<8x128xbf16>
    %2119 = arith.addf %2118, %2115 : vector<8x128xbf16>
    %2120 = vector.extract_strided_slice %6 {offsets = [0, 113], sizes = [8, 1], strides = [1, 1]} : vector<8x128xbf16> to vector<8x1xbf16>
    %2121 = vector.extract_strided_slice %8 {offsets = [113, 0], sizes = [1, 128], strides = [1, 1]} : vector<128x128xbf16> to vector<1x128xbf16>
    %2122 = vector.extract_strided_slice %11 {offsets = [0, 113], sizes = [8, 1], strides = [1, 1]} : vector<8x128xf32> to vector<8x1xf32>
    %2123 = vector.extract_strided_slice %14 {offsets = [113, 0], sizes = [1, 128], strides = [1, 1]} : vector<128x128xf32> to vector<1x128xf32>
    %2124 = vector.broadcast %2122 : vector<8x1xf32> to vector<8x128xf32>
    %2125 = vector.broadcast %2123 : vector<1x128xf32> to vector<8x128xf32>
    %2126 = arith.addf %2124, %2125 : vector<8x128xf32>
    %2127 = tpu.reciprocal %2126 {approx = true} : vector<8x128xf32> -> vector<8x128xf32>
    %2128 = arith.truncf %2127 : vector<8x128xf32> to vector<8x128xbf16>
    %2129 = vector.broadcast %2120 : vector<8x1xbf16> to vector<8x128xbf16>
    %2130 = vector.broadcast %2121 : vector<1x128xbf16> to vector<8x128xbf16>
    %2131 = arith.subf %2129, %2130 : vector<8x128xbf16>
    %2132 = arith.truncf %2126 : vector<8x128xf32> to vector<8x128xbf16>
    %2133 = math.log %2132 : vector<8x128xbf16>
    %2134 = arith.mulf %2131, %2131 : vector<8x128xbf16>
    %2135 = arith.mulf %2134, %2128 : vector<8x128xbf16>
    %2136 = arith.addf %2119, %2135 : vector<8x128xbf16>
    %2137 = arith.addf %2136, %2133 : vector<8x128xbf16>
    %2138 = vector.extract_strided_slice %6 {offsets = [0, 114], sizes = [8, 1], strides = [1, 1]} : vector<8x128xbf16> to vector<8x1xbf16>
    %2139 = vector.extract_strided_slice %8 {offsets = [114, 0], sizes = [1, 128], strides = [1, 1]} : vector<128x128xbf16> to vector<1x128xbf16>
    %2140 = vector.extract_strided_slice %11 {offsets = [0, 114], sizes = [8, 1], strides = [1, 1]} : vector<8x128xf32> to vector<8x1xf32>
    %2141 = vector.extract_strided_slice %14 {offsets = [114, 0], sizes = [1, 128], strides = [1, 1]} : vector<128x128xf32> to vector<1x128xf32>
    %2142 = vector.broadcast %2140 : vector<8x1xf32> to vector<8x128xf32>
    %2143 = vector.broadcast %2141 : vector<1x128xf32> to vector<8x128xf32>
    %2144 = arith.addf %2142, %2143 : vector<8x128xf32>
    %2145 = tpu.reciprocal %2144 {approx = true} : vector<8x128xf32> -> vector<8x128xf32>
    %2146 = arith.truncf %2145 : vector<8x128xf32> to vector<8x128xbf16>
    %2147 = vector.broadcast %2138 : vector<8x1xbf16> to vector<8x128xbf16>
    %2148 = vector.broadcast %2139 : vector<1x128xbf16> to vector<8x128xbf16>
    %2149 = arith.subf %2147, %2148 : vector<8x128xbf16>
    %2150 = arith.truncf %2144 : vector<8x128xf32> to vector<8x128xbf16>
    %2151 = math.log %2150 : vector<8x128xbf16>
    %2152 = arith.mulf %2149, %2149 : vector<8x128xbf16>
    %2153 = arith.mulf %2152, %2146 : vector<8x128xbf16>
    %2154 = arith.addf %2137, %2153 : vector<8x128xbf16>
    %2155 = arith.addf %2154, %2151 : vector<8x128xbf16>
    %2156 = vector.extract_strided_slice %6 {offsets = [0, 115], sizes = [8, 1], strides = [1, 1]} : vector<8x128xbf16> to vector<8x1xbf16>
    %2157 = vector.extract_strided_slice %8 {offsets = [115, 0], sizes = [1, 128], strides = [1, 1]} : vector<128x128xbf16> to vector<1x128xbf16>
    %2158 = vector.extract_strided_slice %11 {offsets = [0, 115], sizes = [8, 1], strides = [1, 1]} : vector<8x128xf32> to vector<8x1xf32>
    %2159 = vector.extract_strided_slice %14 {offsets = [115, 0], sizes = [1, 128], strides = [1, 1]} : vector<128x128xf32> to vector<1x128xf32>
    %2160 = vector.broadcast %2158 : vector<8x1xf32> to vector<8x128xf32>
    %2161 = vector.broadcast %2159 : vector<1x128xf32> to vector<8x128xf32>
    %2162 = arith.addf %2160, %2161 : vector<8x128xf32>
    %2163 = tpu.reciprocal %2162 {approx = true} : vector<8x128xf32> -> vector<8x128xf32>
    %2164 = arith.truncf %2163 : vector<8x128xf32> to vector<8x128xbf16>
    %2165 = vector.broadcast %2156 : vector<8x1xbf16> to vector<8x128xbf16>
    %2166 = vector.broadcast %2157 : vector<1x128xbf16> to vector<8x128xbf16>
    %2167 = arith.subf %2165, %2166 : vector<8x128xbf16>
    %2168 = arith.truncf %2162 : vector<8x128xf32> to vector<8x128xbf16>
    %2169 = math.log %2168 : vector<8x128xbf16>
    %2170 = arith.mulf %2167, %2167 : vector<8x128xbf16>
    %2171 = arith.mulf %2170, %2164 : vector<8x128xbf16>
    %2172 = arith.addf %2155, %2171 : vector<8x128xbf16>
    %2173 = arith.addf %2172, %2169 : vector<8x128xbf16>
    %2174 = vector.extract_strided_slice %6 {offsets = [0, 116], sizes = [8, 1], strides = [1, 1]} : vector<8x128xbf16> to vector<8x1xbf16>
    %2175 = vector.extract_strided_slice %8 {offsets = [116, 0], sizes = [1, 128], strides = [1, 1]} : vector<128x128xbf16> to vector<1x128xbf16>
    %2176 = vector.extract_strided_slice %11 {offsets = [0, 116], sizes = [8, 1], strides = [1, 1]} : vector<8x128xf32> to vector<8x1xf32>
    %2177 = vector.extract_strided_slice %14 {offsets = [116, 0], sizes = [1, 128], strides = [1, 1]} : vector<128x128xf32> to vector<1x128xf32>
    %2178 = vector.broadcast %2176 : vector<8x1xf32> to vector<8x128xf32>
    %2179 = vector.broadcast %2177 : vector<1x128xf32> to vector<8x128xf32>
    %2180 = arith.addf %2178, %2179 : vector<8x128xf32>
    %2181 = tpu.reciprocal %2180 {approx = true} : vector<8x128xf32> -> vector<8x128xf32>
    %2182 = arith.truncf %2181 : vector<8x128xf32> to vector<8x128xbf16>
    %2183 = vector.broadcast %2174 : vector<8x1xbf16> to vector<8x128xbf16>
    %2184 = vector.broadcast %2175 : vector<1x128xbf16> to vector<8x128xbf16>
    %2185 = arith.subf %2183, %2184 : vector<8x128xbf16>
    %2186 = arith.truncf %2180 : vector<8x128xf32> to vector<8x128xbf16>
    %2187 = math.log %2186 : vector<8x128xbf16>
    %2188 = arith.mulf %2185, %2185 : vector<8x128xbf16>
    %2189 = arith.mulf %2188, %2182 : vector<8x128xbf16>
    %2190 = arith.addf %2173, %2189 : vector<8x128xbf16>
    %2191 = arith.addf %2190, %2187 : vector<8x128xbf16>
    %2192 = vector.extract_strided_slice %6 {offsets = [0, 117], sizes = [8, 1], strides = [1, 1]} : vector<8x128xbf16> to vector<8x1xbf16>
    %2193 = vector.extract_strided_slice %8 {offsets = [117, 0], sizes = [1, 128], strides = [1, 1]} : vector<128x128xbf16> to vector<1x128xbf16>
    %2194 = vector.extract_strided_slice %11 {offsets = [0, 117], sizes = [8, 1], strides = [1, 1]} : vector<8x128xf32> to vector<8x1xf32>
    %2195 = vector.extract_strided_slice %14 {offsets = [117, 0], sizes = [1, 128], strides = [1, 1]} : vector<128x128xf32> to vector<1x128xf32>
    %2196 = vector.broadcast %2194 : vector<8x1xf32> to vector<8x128xf32>
    %2197 = vector.broadcast %2195 : vector<1x128xf32> to vector<8x128xf32>
    %2198 = arith.addf %2196, %2197 : vector<8x128xf32>
    %2199 = tpu.reciprocal %2198 {approx = true} : vector<8x128xf32> -> vector<8x128xf32>
    %2200 = arith.truncf %2199 : vector<8x128xf32> to vector<8x128xbf16>
    %2201 = vector.broadcast %2192 : vector<8x1xbf16> to vector<8x128xbf16>
    %2202 = vector.broadcast %2193 : vector<1x128xbf16> to vector<8x128xbf16>
    %2203 = arith.subf %2201, %2202 : vector<8x128xbf16>
    %2204 = arith.truncf %2198 : vector<8x128xf32> to vector<8x128xbf16>
    %2205 = math.log %2204 : vector<8x128xbf16>
    %2206 = arith.mulf %2203, %2203 : vector<8x128xbf16>
    %2207 = arith.mulf %2206, %2200 : vector<8x128xbf16>
    %2208 = arith.addf %2191, %2207 : vector<8x128xbf16>
    %2209 = arith.addf %2208, %2205 : vector<8x128xbf16>
    %2210 = vector.extract_strided_slice %6 {offsets = [0, 118], sizes = [8, 1], strides = [1, 1]} : vector<8x128xbf16> to vector<8x1xbf16>
    %2211 = vector.extract_strided_slice %8 {offsets = [118, 0], sizes = [1, 128], strides = [1, 1]} : vector<128x128xbf16> to vector<1x128xbf16>
    %2212 = vector.extract_strided_slice %11 {offsets = [0, 118], sizes = [8, 1], strides = [1, 1]} : vector<8x128xf32> to vector<8x1xf32>
    %2213 = vector.extract_strided_slice %14 {offsets = [118, 0], sizes = [1, 128], strides = [1, 1]} : vector<128x128xf32> to vector<1x128xf32>
    %2214 = vector.broadcast %2212 : vector<8x1xf32> to vector<8x128xf32>
    %2215 = vector.broadcast %2213 : vector<1x128xf32> to vector<8x128xf32>
    %2216 = arith.addf %2214, %2215 : vector<8x128xf32>
    %2217 = tpu.reciprocal %2216 {approx = true} : vector<8x128xf32> -> vector<8x128xf32>
    %2218 = arith.truncf %2217 : vector<8x128xf32> to vector<8x128xbf16>
    %2219 = vector.broadcast %2210 : vector<8x1xbf16> to vector<8x128xbf16>
    %2220 = vector.broadcast %2211 : vector<1x128xbf16> to vector<8x128xbf16>
    %2221 = arith.subf %2219, %2220 : vector<8x128xbf16>
    %2222 = arith.truncf %2216 : vector<8x128xf32> to vector<8x128xbf16>
    %2223 = math.log %2222 : vector<8x128xbf16>
    %2224 = arith.mulf %2221, %2221 : vector<8x128xbf16>
    %2225 = arith.mulf %2224, %2218 : vector<8x128xbf16>
    %2226 = arith.addf %2209, %2225 : vector<8x128xbf16>
    %2227 = arith.addf %2226, %2223 : vector<8x128xbf16>
    %2228 = vector.extract_strided_slice %6 {offsets = [0, 119], sizes = [8, 1], strides = [1, 1]} : vector<8x128xbf16> to vector<8x1xbf16>
    %2229 = vector.extract_strided_slice %8 {offsets = [119, 0], sizes = [1, 128], strides = [1, 1]} : vector<128x128xbf16> to vector<1x128xbf16>
    %2230 = vector.extract_strided_slice %11 {offsets = [0, 119], sizes = [8, 1], strides = [1, 1]} : vector<8x128xf32> to vector<8x1xf32>
    %2231 = vector.extract_strided_slice %14 {offsets = [119, 0], sizes = [1, 128], strides = [1, 1]} : vector<128x128xf32> to vector<1x128xf32>
    %2232 = vector.broadcast %2230 : vector<8x1xf32> to vector<8x128xf32>
    %2233 = vector.broadcast %2231 : vector<1x128xf32> to vector<8x128xf32>
    %2234 = arith.addf %2232, %2233 : vector<8x128xf32>
    %2235 = tpu.reciprocal %2234 {approx = true} : vector<8x128xf32> -> vector<8x128xf32>
    %2236 = arith.truncf %2235 : vector<8x128xf32> to vector<8x128xbf16>
    %2237 = vector.broadcast %2228 : vector<8x1xbf16> to vector<8x128xbf16>
    %2238 = vector.broadcast %2229 : vector<1x128xbf16> to vector<8x128xbf16>
    %2239 = arith.subf %2237, %2238 : vector<8x128xbf16>
    %2240 = arith.truncf %2234 : vector<8x128xf32> to vector<8x128xbf16>
    %2241 = math.log %2240 : vector<8x128xbf16>
    %2242 = arith.mulf %2239, %2239 : vector<8x128xbf16>
    %2243 = arith.mulf %2242, %2236 : vector<8x128xbf16>
    %2244 = arith.addf %2227, %2243 : vector<8x128xbf16>
    %2245 = arith.addf %2244, %2241 : vector<8x128xbf16>
    %c0_80 = arith.constant 0 : index
    %c0_81 = arith.constant 0 : index
    %2246 = vector.load %arg7[%c0_80, %c0_81] : memref<8x128xf32, #tpu.memory_space<vmem>>, vector<8x128xf32>
    %2247 = arith.extf %2245 : vector<8x128xbf16> to vector<8x128xf32>
    %2248 = arith.addf %2246, %2247 : vector<8x128xf32>
    %c0_82 = arith.constant 0 : index
    %c0_83 = arith.constant 0 : index
    %2249 = vector.load %arg7[%c0_82, %c0_83] : memref<8x128xf32, #tpu.memory_space<vmem>>, vector<8x128xf32>
    tpu.vector_store %arg7[%c0_82, %c0_83], %2248 {strides = array<i32>} : memref<8x128xf32, #tpu.memory_space<vmem>>, vector<8x128xf32>,
    %cst_84 = arith.constant 0.000000e+00 : bf16
    %2250 = vector.broadcast %cst_84 : bf16 to vector<8x128xbf16>
    %2251 = vector.extract_strided_slice %6 {offsets = [0, 120], sizes = [8, 1], strides = [1, 1]} : vector<8x128xbf16> to vector<8x1xbf16>
    %2252 = vector.extract_strided_slice %8 {offsets = [120, 0], sizes = [1, 128], strides = [1, 1]} : vector<128x128xbf16> to vector<1x128xbf16>
    %2253 = vector.extract_strided_slice %11 {offsets = [0, 120], sizes = [8, 1], strides = [1, 1]} : vector<8x128xf32> to vector<8x1xf32>
    %2254 = vector.extract_strided_slice %14 {offsets = [120, 0], sizes = [1, 128], strides = [1, 1]} : vector<128x128xf32> to vector<1x128xf32>
    %2255 = vector.broadcast %2253 : vector<8x1xf32> to vector<8x128xf32>
    %2256 = vector.broadcast %2254 : vector<1x128xf32> to vector<8x128xf32>
    %2257 = arith.addf %2255, %2256 : vector<8x128xf32>
    %2258 = tpu.reciprocal %2257 {approx = true} : vector<8x128xf32> -> vector<8x128xf32>
    %2259 = arith.truncf %2258 : vector<8x128xf32> to vector<8x128xbf16>
    %2260 = vector.broadcast %2251 : vector<8x1xbf16> to vector<8x128xbf16>
    %2261 = vector.broadcast %2252 : vector<1x128xbf16> to vector<8x128xbf16>
    %2262 = arith.subf %2260, %2261 : vector<8x128xbf16>
    %2263 = arith.truncf %2257 : vector<8x128xf32> to vector<8x128xbf16>
    %2264 = math.log %2263 : vector<8x128xbf16>
    %2265 = arith.mulf %2262, %2262 : vector<8x128xbf16>
    %2266 = arith.mulf %2265, %2259 : vector<8x128xbf16>
    %2267 = arith.addf %2250, %2266 : vector<8x128xbf16>
    %2268 = arith.addf %2267, %2264 : vector<8x128xbf16>
    %2269 = vector.extract_strided_slice %6 {offsets = [0, 121], sizes = [8, 1], strides = [1, 1]} : vector<8x128xbf16> to vector<8x1xbf16>
    %2270 = vector.extract_strided_slice %8 {offsets = [121, 0], sizes = [1, 128], strides = [1, 1]} : vector<128x128xbf16> to vector<1x128xbf16>
    %2271 = vector.extract_strided_slice %11 {offsets = [0, 121], sizes = [8, 1], strides = [1, 1]} : vector<8x128xf32> to vector<8x1xf32>
    %2272 = vector.extract_strided_slice %14 {offsets = [121, 0], sizes = [1, 128], strides = [1, 1]} : vector<128x128xf32> to vector<1x128xf32>
    %2273 = vector.broadcast %2271 : vector<8x1xf32> to vector<8x128xf32>
    %2274 = vector.broadcast %2272 : vector<1x128xf32> to vector<8x128xf32>
    %2275 = arith.addf %2273, %2274 : vector<8x128xf32>
    %2276 = tpu.reciprocal %2275 {approx = true} : vector<8x128xf32> -> vector<8x128xf32>
    %2277 = arith.truncf %2276 : vector<8x128xf32> to vector<8x128xbf16>
    %2278 = vector.broadcast %2269 : vector<8x1xbf16> to vector<8x128xbf16>
    %2279 = vector.broadcast %2270 : vector<1x128xbf16> to vector<8x128xbf16>
    %2280 = arith.subf %2278, %2279 : vector<8x128xbf16>
    %2281 = arith.truncf %2275 : vector<8x128xf32> to vector<8x128xbf16>
    %2282 = math.log %2281 : vector<8x128xbf16>
    %2283 = arith.mulf %2280, %2280 : vector<8x128xbf16>
    %2284 = arith.mulf %2283, %2277 : vector<8x128xbf16>
    %2285 = arith.addf %2268, %2284 : vector<8x128xbf16>
    %2286 = arith.addf %2285, %2282 : vector<8x128xbf16>
    %2287 = vector.extract_strided_slice %6 {offsets = [0, 122], sizes = [8, 1], strides = [1, 1]} : vector<8x128xbf16> to vector<8x1xbf16>
    %2288 = vector.extract_strided_slice %8 {offsets = [122, 0], sizes = [1, 128], strides = [1, 1]} : vector<128x128xbf16> to vector<1x128xbf16>
    %2289 = vector.extract_strided_slice %11 {offsets = [0, 122], sizes = [8, 1], strides = [1, 1]} : vector<8x128xf32> to vector<8x1xf32>
    %2290 = vector.extract_strided_slice %14 {offsets = [122, 0], sizes = [1, 128], strides = [1, 1]} : vector<128x128xf32> to vector<1x128xf32>
    %2291 = vector.broadcast %2289 : vector<8x1xf32> to vector<8x128xf32>
    %2292 = vector.broadcast %2290 : vector<1x128xf32> to vector<8x128xf32>
    %2293 = arith.addf %2291, %2292 : vector<8x128xf32>
    %2294 = tpu.reciprocal %2293 {approx = true} : vector<8x128xf32> -> vector<8x128xf32>
    %2295 = arith.truncf %2294 : vector<8x128xf32> to vector<8x128xbf16>
    %2296 = vector.broadcast %2287 : vector<8x1xbf16> to vector<8x128xbf16>
    %2297 = vector.broadcast %2288 : vector<1x128xbf16> to vector<8x128xbf16>
    %2298 = arith.subf %2296, %2297 : vector<8x128xbf16>
    %2299 = arith.truncf %2293 : vector<8x128xf32> to vector<8x128xbf16>
    %2300 = math.log %2299 : vector<8x128xbf16>
    %2301 = arith.mulf %2298, %2298 : vector<8x128xbf16>
    %2302 = arith.mulf %2301, %2295 : vector<8x128xbf16>
    %2303 = arith.addf %2286, %2302 : vector<8x128xbf16>
    %2304 = arith.addf %2303, %2300 : vector<8x128xbf16>
    %2305 = vector.extract_strided_slice %6 {offsets = [0, 123], sizes = [8, 1], strides = [1, 1]} : vector<8x128xbf16> to vector<8x1xbf16>
    %2306 = vector.extract_strided_slice %8 {offsets = [123, 0], sizes = [1, 128], strides = [1, 1]} : vector<128x128xbf16> to vector<1x128xbf16>
    %2307 = vector.extract_strided_slice %11 {offsets = [0, 123], sizes = [8, 1], strides = [1, 1]} : vector<8x128xf32> to vector<8x1xf32>
    %2308 = vector.extract_strided_slice %14 {offsets = [123, 0], sizes = [1, 128], strides = [1, 1]} : vector<128x128xf32> to vector<1x128xf32>
    %2309 = vector.broadcast %2307 : vector<8x1xf32> to vector<8x128xf32>
    %2310 = vector.broadcast %2308 : vector<1x128xf32> to vector<8x128xf32>
    %2311 = arith.addf %2309, %2310 : vector<8x128xf32>
    %2312 = tpu.reciprocal %2311 {approx = true} : vector<8x128xf32> -> vector<8x128xf32>
    %2313 = arith.truncf %2312 : vector<8x128xf32> to vector<8x128xbf16>
    %2314 = vector.broadcast %2305 : vector<8x1xbf16> to vector<8x128xbf16>
    %2315 = vector.broadcast %2306 : vector<1x128xbf16> to vector<8x128xbf16>
    %2316 = arith.subf %2314, %2315 : vector<8x128xbf16>
    %2317 = arith.truncf %2311 : vector<8x128xf32> to vector<8x128xbf16>
    %2318 = math.log %2317 : vector<8x128xbf16>
    %2319 = arith.mulf %2316, %2316 : vector<8x128xbf16>
    %2320 = arith.mulf %2319, %2313 : vector<8x128xbf16>
    %2321 = arith.addf %2304, %2320 : vector<8x128xbf16>
    %2322 = arith.addf %2321, %2318 : vector<8x128xbf16>
    %2323 = vector.extract_strided_slice %6 {offsets = [0, 124], sizes = [8, 1], strides = [1, 1]} : vector<8x128xbf16> to vector<8x1xbf16>
    %2324 = vector.extract_strided_slice %8 {offsets = [124, 0], sizes = [1, 128], strides = [1, 1]} : vector<128x128xbf16> to vector<1x128xbf16>
    %2325 = vector.extract_strided_slice %11 {offsets = [0, 124], sizes = [8, 1], strides = [1, 1]} : vector<8x128xf32> to vector<8x1xf32>
    %2326 = vector.extract_strided_slice %14 {offsets = [124, 0], sizes = [1, 128], strides = [1, 1]} : vector<128x128xf32> to vector<1x128xf32>
    %2327 = vector.broadcast %2325 : vector<8x1xf32> to vector<8x128xf32>
    %2328 = vector.broadcast %2326 : vector<1x128xf32> to vector<8x128xf32>
    %2329 = arith.addf %2327, %2328 : vector<8x128xf32>
    %2330 = tpu.reciprocal %2329 {approx = true} : vector<8x128xf32> -> vector<8x128xf32>
    %2331 = arith.truncf %2330 : vector<8x128xf32> to vector<8x128xbf16>
    %2332 = vector.broadcast %2323 : vector<8x1xbf16> to vector<8x128xbf16>
    %2333 = vector.broadcast %2324 : vector<1x128xbf16> to vector<8x128xbf16>
    %2334 = arith.subf %2332, %2333 : vector<8x128xbf16>
    %2335 = arith.truncf %2329 : vector<8x128xf32> to vector<8x128xbf16>
    %2336 = math.log %2335 : vector<8x128xbf16>
    %2337 = arith.mulf %2334, %2334 : vector<8x128xbf16>
    %2338 = arith.mulf %2337, %2331 : vector<8x128xbf16>
    %2339 = arith.addf %2322, %2338 : vector<8x128xbf16>
    %2340 = arith.addf %2339, %2336 : vector<8x128xbf16>
    %2341 = vector.extract_strided_slice %6 {offsets = [0, 125], sizes = [8, 1], strides = [1, 1]} : vector<8x128xbf16> to vector<8x1xbf16>
    %2342 = vector.extract_strided_slice %8 {offsets = [125, 0], sizes = [1, 128], strides = [1, 1]} : vector<128x128xbf16> to vector<1x128xbf16>
    %2343 = vector.extract_strided_slice %11 {offsets = [0, 125], sizes = [8, 1], strides = [1, 1]} : vector<8x128xf32> to vector<8x1xf32>
    %2344 = vector.extract_strided_slice %14 {offsets = [125, 0], sizes = [1, 128], strides = [1, 1]} : vector<128x128xf32> to vector<1x128xf32>
    %2345 = vector.broadcast %2343 : vector<8x1xf32> to vector<8x128xf32>
    %2346 = vector.broadcast %2344 : vector<1x128xf32> to vector<8x128xf32>
    %2347 = arith.addf %2345, %2346 : vector<8x128xf32>
    %2348 = tpu.reciprocal %2347 {approx = true} : vector<8x128xf32> -> vector<8x128xf32>
    %2349 = arith.truncf %2348 : vector<8x128xf32> to vector<8x128xbf16>
    %2350 = vector.broadcast %2341 : vector<8x1xbf16> to vector<8x128xbf16>
    %2351 = vector.broadcast %2342 : vector<1x128xbf16> to vector<8x128xbf16>
    %2352 = arith.subf %2350, %2351 : vector<8x128xbf16>
    %2353 = arith.truncf %2347 : vector<8x128xf32> to vector<8x128xbf16>
    %2354 = math.log %2353 : vector<8x128xbf16>
    %2355 = arith.mulf %2352, %2352 : vector<8x128xbf16>
    %2356 = arith.mulf %2355, %2349 : vector<8x128xbf16>
    %2357 = arith.addf %2340, %2356 : vector<8x128xbf16>
    %2358 = arith.addf %2357, %2354 : vector<8x128xbf16>
    %2359 = vector.extract_strided_slice %6 {offsets = [0, 126], sizes = [8, 1], strides = [1, 1]} : vector<8x128xbf16> to vector<8x1xbf16>
    %2360 = vector.extract_strided_slice %8 {offsets = [126, 0], sizes = [1, 128], strides = [1, 1]} : vector<128x128xbf16> to vector<1x128xbf16>
    %2361 = vector.extract_strided_slice %11 {offsets = [0, 126], sizes = [8, 1], strides = [1, 1]} : vector<8x128xf32> to vector<8x1xf32>
    %2362 = vector.extract_strided_slice %14 {offsets = [126, 0], sizes = [1, 128], strides = [1, 1]} : vector<128x128xf32> to vector<1x128xf32>
    %2363 = vector.broadcast %2361 : vector<8x1xf32> to vector<8x128xf32>
    %2364 = vector.broadcast %2362 : vector<1x128xf32> to vector<8x128xf32>
    %2365 = arith.addf %2363, %2364 : vector<8x128xf32>
    %2366 = tpu.reciprocal %2365 {approx = true} : vector<8x128xf32> -> vector<8x128xf32>
    %2367 = arith.truncf %2366 : vector<8x128xf32> to vector<8x128xbf16>
    %2368 = vector.broadcast %2359 : vector<8x1xbf16> to vector<8x128xbf16>
    %2369 = vector.broadcast %2360 : vector<1x128xbf16> to vector<8x128xbf16>
    %2370 = arith.subf %2368, %2369 : vector<8x128xbf16>
    %2371 = arith.truncf %2365 : vector<8x128xf32> to vector<8x128xbf16>
    %2372 = math.log %2371 : vector<8x128xbf16>
    %2373 = arith.mulf %2370, %2370 : vector<8x128xbf16>
    %2374 = arith.mulf %2373, %2367 : vector<8x128xbf16>
    %2375 = arith.addf %2358, %2374 : vector<8x128xbf16>
    %2376 = arith.addf %2375, %2372 : vector<8x128xbf16>
    %2377 = vector.extract_strided_slice %6 {offsets = [0, 127], sizes = [8, 1], strides = [1, 1]} : vector<8x128xbf16> to vector<8x1xbf16>
    %2378 = vector.extract_strided_slice %8 {offsets = [127, 0], sizes = [1, 128], strides = [1, 1]} : vector<128x128xbf16> to vector<1x128xbf16>
    %2379 = vector.extract_strided_slice %11 {offsets = [0, 127], sizes = [8, 1], strides = [1, 1]} : vector<8x128xf32> to vector<8x1xf32>
    %2380 = vector.extract_strided_slice %14 {offsets = [127, 0], sizes = [1, 128], strides = [1, 1]} : vector<128x128xf32> to vector<1x128xf32>
    %2381 = vector.broadcast %2379 : vector<8x1xf32> to vector<8x128xf32>
    %2382 = vector.broadcast %2380 : vector<1x128xf32> to vector<8x128xf32>
    %2383 = arith.addf %2381, %2382 : vector<8x128xf32>
    %2384 = tpu.reciprocal %2383 {approx = true} : vector<8x128xf32> -> vector<8x128xf32>
    %2385 = arith.truncf %2384 : vector<8x128xf32> to vector<8x128xbf16>
    %2386 = vector.broadcast %2377 : vector<8x1xbf16> to vector<8x128xbf16>
    %2387 = vector.broadcast %2378 : vector<1x128xbf16> to vector<8x128xbf16>
    %2388 = arith.subf %2386, %2387 : vector<8x128xbf16>
    %2389 = arith.truncf %2383 : vector<8x128xf32> to vector<8x128xbf16>
    %2390 = math.log %2389 : vector<8x128xbf16>
    %2391 = arith.mulf %2388, %2388 : vector<8x128xbf16>
    %2392 = arith.mulf %2391, %2385 : vector<8x128xbf16>
    %2393 = arith.addf %2376, %2392 : vector<8x128xbf16>
    %2394 = arith.addf %2393, %2390 : vector<8x128xbf16>
    %c0_85 = arith.constant 0 : index
    %c0_86 = arith.constant 0 : index
    %2395 = vector.load %arg7[%c0_85, %c0_86] : memref<8x128xf32, #tpu.memory_space<vmem>>, vector<8x128xf32>
    %2396 = arith.extf %2394 : vector<8x128xbf16> to vector<8x128xf32>
    %2397 = arith.addf %2395, %2396 : vector<8x128xf32>
    %c0_87 = arith.constant 0 : index
    %c0_88 = arith.constant 0 : index
    %2398 = vector.load %arg7[%c0_87, %c0_88] : memref<8x128xf32, #tpu.memory_space<vmem>>, vector<8x128xf32>
    tpu.vector_store %arg7[%c0_87, %c0_88], %2397 {strides = array<i32>} : memref<8x128xf32, #tpu.memory_space<vmem>>, vector<8x128xf32>,
    %c0_i32_89 = arith.constant 0 : i32
    %2399 = arith.cmpi eq, %arg2, %c0_i32_89 : i32
    %2400 = arith.extui %2399 : i1 to i32
    %c0_i32_90 = arith.constant 0 : i32
    %2401 = arith.cmpi ne, %2400, %c0_i32_90 : i32
    scf.if %2401 {
      %c0_91 = arith.constant 0 : index
      %c0_92 = arith.constant 0 : index
      %2402 = vector.load %arg7[%c0_91, %c0_92] : memref<8x128xf32, #tpu.memory_space<vmem>>, vector<8x128xf32>
      %cst_93 = arith.constant -5.000000e-01 : f32
      %2403 = vector.broadcast %cst_93 : f32 to vector<8x128xf32>
      %2404 = arith.mulf %2402, %2403 : vector<8x128xf32>
      %c0_94 = arith.constant 0 : index
      %c0_95 = arith.constant 0 : index
      %2405 = vector.load %arg7[%c0_94, %c0_95] : memref<8x128xf32, #tpu.memory_space<vmem>>, vector<8x128xf32>
      tpu.vector_store %arg7[%c0_94, %c0_95], %2404 {strides = array<i32>} : memref<8x128xf32, #tpu.memory_space<vmem>>, vector<8x128xf32>,
    } else {
    }
    return
  }
  func.func @transform_0(%arg0: i32, %arg1: i32, %arg2: i32) -> (i32, i32) {
    %c0_i32 = arith.constant 0 : i32
    return %arg0, %arg2 : i32, i32
  }
  func.func @transform_1(%arg0: i32, %arg1: i32, %arg2: i32) -> (i32, i32) {
    %c0_i32 = arith.constant 0 : i32
    return %arg0, %arg2 : i32, i32
  }
  func.func @transform_2(%arg0: i32, %arg1: i32, %arg2: i32) -> (i32, i32) {
    %c0_i32 = arith.constant 0 : i32
    return %arg2, %arg1 : i32, i32
  }
  func.func @transform_3(%arg0: i32, %arg1: i32, %arg2: i32) -> (i32, i32) {
    %c0_i32 = arith.constant 0 : i32
    return %arg2, %arg1 : i32, i32
  }
  func.func @transform_4(%arg0: i32, %arg1: i32, %arg2: i32) -> (i32, i32) {
    %c0_i32 = arith.constant 0 : i32
    return %arg0, %arg1 : i32, i32
  }
}

</mosaic_0001>

<llo_original>
// kernel: _sims_padded.1
$region0: #{_sims_padded.1}
  #allocation0 [shape = 'u32[]', space=smem, size = 0x4, offset = 0x4, fixed_abs, tag = 'smem constant byte address 0x4 - core index']
  #allocation1 [shape = 'u32[144,128]{1,0:T(1,128)}', space=vmem, size = 0x12000, scoped, tag = 'internal scratch']
  %s0 = inlined_call_operand.hbm [shape: f32[8,128], index: 0, kind: input, shape index: {}]
  %s1 = inlined_call_operand.hbm [shape: f32[8,128], index: 1, kind: input, shape index: {}]
  %s2 = inlined_call_operand.hbm [shape: f32[128,128], index: 2, kind: input, shape index: {}]
  %s3 = inlined_call_operand.hbm [shape: f32[128,128], index: 3, kind: input, shape index: {}]
  %s4 = inlined_call_operand.hbm [shape: f32[8,128], index: 4, kind: output, shape index: {}]
  %s5 = sld [smem:[#allocation0]]
  $region50: #{_sims_padded.1} parent=0
    _
  %s7 = ssub.s32 1, %s5
  %s8 = scalar_select 0, %s7, %s5
  $region1: #{_sims_padded.1} parent=0
    #allocation2 [shape = 'u8[4096]{0}', space=vmem, size = 0x1000, scoped, tag = 'input window, operand 0, single buffered']
    #allocation3 [shape = 's32[1]{0}', space=sflag, size = 0x4, scoped, tag = 'scoped memory for _sims_padded.1']
    #allocation4 [shape = 's32[1]{0}', space=sflag, size = 0x4, scoped, tag = 'scoped memory for _sims_padded.1']
    #allocation5 [shape = 'u8[4096]{0}', space=vmem, size = 0x1000, scoped, tag = 'input window, operand 1, single buffered']
    #allocation6 [shape = 's32[1]{0}', space=sflag, size = 0x4, scoped, tag = 'scoped memory for _sims_padded.1']
    #allocation7 [shape = 'u8[65536]{0}', space=vmem, size = 0x10000, scoped, tag = 'input window, operand 2, single buffered']
    #allocation8 [shape = 'u8[65536]{0}', space=vmem, size = 0x10000, scoped, tag = 'input window, operand 3, single buffered']
    #allocation9 [shape = 's32[1]{0}', space=sflag, size = 0x4, scoped, tag = 'scoped memory for _sims_padded.1']
    #allocation10 [shape = 'u8[4096]{0}', space=vmem, size = 0x1000, scoped, tag = 'output window, operand 0, single buffered']
    %9 = vsyncpa [#allocation3], 0
    %10 = vsyncpa [#allocation6], 0
    %11 = vsyncpa [#allocation9], 0
    %12 = vsyncpa [#allocation4], 0
    // Predicated region
    $region2: #{_sims_padded.1} parent=1 // pred_check
      _
    $region3: #{_sims_padded.1} parent=1 // pred_check_branch
      %14 = sbr.rel (0) target = $region5
    $region4: #{_sims_padded.1} parent=1 // pred_region
      %s16 = ssub.s32 128, 128
      %17 = vsyncadd [#allocation3], %s16
      %s19 = sshll.u32 [#allocation2], 4
      %s20 = int_to_ptr.vmem [resolvable:$true] %s19
      %22 = dma.hbm_to_vmem [thread:$0]  %s0, 128, %s20, [#allocation3]
    $region5: #{_sims_padded.1} parent=1 // pred_fallthru
      _
    // Predicated region
    $region6: #{_sims_padded.1} parent=1 // pred_check
      _
    $region7: #{_sims_padded.1} parent=1 // pred_check_branch
      %24 = sbr.rel (0) target = $region9
    $region8: #{_sims_padded.1} parent=1 // pred_region
      %s26 = ssub.s32 128, 128
      %27 = vsyncadd [#allocation6], %s26
      %s29 = sshll.u32 [#allocation5], 4
      %s30 = int_to_ptr.vmem [resolvable:$true] %s29
      %32 = dma.hbm_to_vmem [thread:$0]  %s1, 128, %s30, [#allocation6]
    $region9: #{_sims_padded.1} parent=1 // pred_fallthru
      _
    // Predicated region
    $region10: #{_sims_padded.1} parent=1 // pred_check
      _
    $region11: #{_sims_padded.1} parent=1 // pred_check_branch
      %34 = sbr.rel (0) target = $region13
    $region12: #{_sims_padded.1} parent=1 // pred_region
      %s36 = ssub.s32 2048, 2048
      %37 = vsyncadd [#allocation6], %s36
      %s38 = sshll.u32 [#allocation7], 4
      %s39 = int_to_ptr.vmem [resolvable:$true] %s38
      %44 = dma.hbm_to_vmem [thread:$0]  %s2, 2048, %s39, [#allocation6], 128, 128, 8
    $region13: #{_sims_padded.1} parent=1 // pred_fallthru
      _
    // Predicated region
    $region14: #{_sims_padded.1} parent=1 // pred_check
      _
    $region15: #{_sims_padded.1} parent=1 // pred_check_branch
      %46 = sbr.rel (0) target = $region17
    $region16: #{_sims_padded.1} parent=1 // pred_region
      %s48 = ssub.s32 2048, 2048
      %49 = vsyncadd [#allocation9], %s48
      %s50 = sshll.u32 [#allocation8], 4
      %s51 = int_to_ptr.vmem [resolvable:$true] %s50
      %56 = dma.hbm_to_vmem [thread:$0]  %s3, 2048, %s51, [#allocation9], 128, 128, 8
    $region17: #{_sims_padded.1} parent=1 // pred_fallthru
      _
    // Predicated region
    $region18: #{_sims_padded.1} parent=1 // pred_check
      _
    $region19: #{_sims_padded.1} parent=1 // pred_check_branch
      %58 = sbr.rel (0) target = $region21
    $region20: #{_sims_padded.1} parent=1 // pred_region
      %59 = dma.done [#allocation3], 128
    $region21: #{_sims_padded.1} parent=1 // pred_fallthru
      _
    // Predicated region
    $region22: #{_sims_padded.1} parent=1 // pred_check
      _
    $region23: #{_sims_padded.1} parent=1 // pred_check_branch
      %61 = sbr.rel (0) target = $region25
    $region24: #{_sims_padded.1} parent=1 // pred_region
      %62 = dma.done [#allocation6], 128
    $region25: #{_sims_padded.1} parent=1 // pred_fallthru
      _
    // Predicated region
    $region26: #{_sims_padded.1} parent=1 // pred_check
      _
    $region27: #{_sims_padded.1} parent=1 // pred_check_branch
      %64 = sbr.rel (0) target = $region29
    $region28: #{_sims_padded.1} parent=1 // pred_region
      %65 = dma.done [#allocation6], 2048
    $region29: #{_sims_padded.1} parent=1 // pred_fallthru
      _
    // Predicated region
    $region30: #{_sims_padded.1} parent=1 // pred_check
      _
    $region31: #{_sims_padded.1} parent=1 // pred_check_branch
      %67 = sbr.rel (0) target = $region33
    $region32: #{_sims_padded.1} parent=1 // pred_region
      %68 = dma.done [#allocation9], 2048
    $region33: #{_sims_padded.1} parent=1 // pred_fallthru
      _
    %p70 = scmp.eq.s32.totalorder 0, 0
    // Predicated region
    $region34: #{_sims_padded.1} parent=1 // pred_check
      %p71 = pneg %p70
    $region35: #{_sims_padded.1} parent=1 // pred_check_branch
      %73 = sbr.rel (%p71) target = $region37
    $region36: #{_sims_padded.1} parent=1 // pred_region
      %74 = vst [vmem:[#allocation10] sm:$0xff] 0.0
    $region37: #{_sims_padded.1} parent=1 // pred_fallthru
      _
    %v75 = vld [vmem:[#allocation5] sm:$0xff]
    %v76 = vld [vmem:[#allocation8] sm:$0xff]
    %v77 = vld [vmem:[#allocation8 + $0x8] sm:$0xff]
    %v78 = vld [vmem:[#allocation8 + $0x10] sm:$0xff]
    %v79 = vld [vmem:[#allocation8 + $0x18] sm:$0xff]
    %v80 = vld [vmem:[#allocation8 + $0x20] sm:$0xff]
    %v81 = vld [vmem:[#allocation8 + $0x28] sm:$0xff]
    %v82 = vld [vmem:[#allocation8 + $0x30] sm:$0xff]
    %v83 = vld [vmem:[#allocation8 + $0x38] sm:$0xff]
    %v84 = vld [vmem:[#allocation8 + $0x40] sm:$0xff]
    %v85 = vld [vmem:[#allocation8 + $0x48] sm:$0xff]
    %v86 = vld [vmem:[#allocation8 + $0x50] sm:$0xff]
    %v87 = vld [vmem:[#allocation8 + $0x58] sm:$0xff]
    %v88 = vld [vmem:[#allocation8 + $0x60] sm:$0xff]
    %v89 = vld [vmem:[#allocation8 + $0x68] sm:$0xff]
    %v90 = vld [vmem:[#allocation8 + $0x70] sm:$0xff]
    %v91 = vld [vmem:[#allocation8 + $0x78] sm:$0xff]
    %v92 = vld [vmem:[#allocation2] sm:$0xff]
    %v93 = vpack.c.bf16 %v92, %v92
    %v94 = vld [vmem:[#allocation7] sm:$0xff]
    %v95 = vld [vmem:[#allocation7 + $0x8] sm:$0xff]
    %v96 = vld [vmem:[#allocation7 + $0x10] sm:$0xff]
    %v97 = vld [vmem:[#allocation7 + $0x18] sm:$0xff]
    %v98 = vld [vmem:[#allocation7 + $0x20] sm:$0xff]
    %v99 = vld [vmem:[#allocation7 + $0x28] sm:$0xff]
    %v100 = vld [vmem:[#allocation7 + $0x30] sm:$0xff]
    %v101 = vld [vmem:[#allocation7 + $0x38] sm:$0xff]
    %v102 = vld [vmem:[#allocation7 + $0x40] sm:$0xff]
    %v103 = vld [vmem:[#allocation7 + $0x48] sm:$0xff]
    %v104 = vld [vmem:[#allocation7 + $0x50] sm:$0xff]
    %v105 = vld [vmem:[#allocation7 + $0x58] sm:$0xff]
    %v106 = vld [vmem:[#allocation7 + $0x60] sm:$0xff]
    %v107 = vld [vmem:[#allocation7 + $0x68] sm:$0xff]
    %v108 = vld [vmem:[#allocation7 + $0x70] sm:$0xff]
    %v109 = vld [vmem:[#allocation7 + $0x78] sm:$0xff]
    %v110 = vpack.c.bf16 %v95, %v94
    %v111 = vpack.c.bf16 %v97, %v96
    %v112 = vpack.c.bf16 %v99, %v98
    %v113 = vpack.c.bf16 %v101, %v100
    %v114 = vpack.c.bf16 %v103, %v102
    %v115 = vpack.c.bf16 %v105, %v104
    %v116 = vpack.c.bf16 %v107, %v106
    %v117 = vpack.c.bf16 %v109, %v108
    %v118 = vmul.f32 %v75, 2.0
    %v119 = vmul.f32 %v118, 1.442695
    %v120 = vpow.pop %v119
    %v121 = vmul.f32 %v76, 2.0
    %v122 = vmul.f32 %v77, 2.0
    %v123 = vmul.f32 %v78, 2.0
    %v124 = vmul.f32 %v79, 2.0
    %v125 = vmul.f32 %v80, 2.0
    %v126 = vmul.f32 %v81, 2.0
    %v127 = vmul.f32 %v82, 2.0
    %v128 = vmul.f32 %v83, 2.0
    %v129 = vmul.f32 %v84, 2.0
    %v130 = vmul.f32 %v85, 2.0
    %v131 = vmul.f32 %v86, 2.0
    %v132 = vmul.f32 %v87, 2.0
    %v133 = vmul.f32 %v88, 2.0
    %v134 = vmul.f32 %v89, 2.0
    %v135 = vmul.f32 %v90, 2.0
    %v136 = vmul.f32 %v91, 2.0
    %v137 = vmul.f32 %v121, 1.442695
    %v138 = vpow.pop %v137
    %v139 = vmul.f32 %v122, 1.442695
    %v140 = vpow.pop %v139
    %v141 = vmul.f32 %v123, 1.442695
    %v142 = vpow.pop %v141
    %v143 = vmul.f32 %v124, 1.442695
    %v144 = vpow.pop %v143
    %v145 = vmul.f32 %v125, 1.442695
    %v146 = vpow.pop %v145
    %v147 = vmul.f32 %v126, 1.442695
    %v148 = vpow.pop %v147
    %v149 = vmul.f32 %v127, 1.442695
    %v150 = vpow.pop %v149
    %v151 = vmul.f32 %v128, 1.442695
    %v152 = vpow.pop %v151
    %v153 = vmul.f32 %v129, 1.442695
    %v154 = vpow.pop %v153
    %v155 = vmul.f32 %v130, 1.442695
    %v156 = vpow.pop %v155
    %v157 = vmul.f32 %v131, 1.442695
    %v158 = vpow.pop %v157
    %v159 = vmul.f32 %v132, 1.442695
    %v160 = vpow.pop %v159
    %v161 = vmul.f32 %v133, 1.442695
    %v162 = vpow.pop %v161
    %v163 = vmul.f32 %v134, 1.442695
    %v164 = vpow.pop %v163
    %v165 = vmul.f32 %v135, 1.442695
    %v166 = vpow.pop %v165
    %v167 = vmul.f32 %v136, 1.442695
    %v168 = vpow.pop %v167
    %170 = vset.pattern.permute.xlu0 0
    %171 = vperm.xlu0 %170, %v120
    %v172 = vpop.permute.xlu0 %171
    %v174 = vlaneseq
    %v175 = vshrl.u32 %v174, 7
    %v176 = vsub.s32 0, %v175
    %v177 = vrot.slane %v138, %v176
    %v178 = vadd.f32 %v172, %v177
    %v179 = vrcp.pop %v178
    %v180 = vpack.c.bf16 %v179, %v179
    %182 = vset.pattern.permute.xlu0 0
    %183 = vperm.xlu0 %182, %v93
    %v184 = vpop.permute.xlu0 %183
    %v187 = vpack.i.b16 %v110, %v110
    %v189 = vlaneseq
    %v190 = vshrl.u32 %v189, 7
    %v191 = vsub.s32 0, %v190
    %v192 = vrot.slane %v187, %v191
    %v193 = vsub.bf16 %v184, %v192
    %v194 = vpack.c.bf16 %v178, %v178
    %v195 = vlog2.bf16.pop %v194
    %v197 = vmul.bf16 %v195, 1060192049
    %v198 = vmul.bf16 %v193, %v193
    %v199 = vmul.bf16 %v198, %v180
    %v200 = vadd.bf16 %v199, 0
    %v201 = vadd.bf16 %v200, %v197
    %202 = vset.pattern.permute.xlu0 1
    %203 = vperm.xlu0 %202, %v120
    %v204 = vpop.permute.xlu0 %203
    %v206 = vlaneseq
    %v207 = vshrl.u32 %v206, 7
    %v208 = vsub.s32 1, %v207
    %v209 = vrot.slane %v138, %v208
    %v210 = vadd.f32 %v204, %v209
    %v211 = vrcp.pop %v210
    %v212 = vpack.c.bf16 %v211, %v211
    %213 = vset.pattern.permute.xlu0 1
    %214 = vperm.xlu0 %213, %v93
    %v215 = vpop.permute.xlu0 %214
    %v217 = vshrl.u32 %v110, 16
    %v218 = vpack.i.b16 %v217, %v217
    %v220 = vlaneseq
    %v221 = vshrl.u32 %v220, 7
    %v222 = vsub.s32 0, %v221
    %v223 = vrot.slane %v218, %v222
    %v224 = vsub.bf16 %v215, %v223
    %v225 = vpack.c.bf16 %v210, %v210
    %v226 = vlog2.bf16.pop %v225
    %v228 = vmul.bf16 %v226, 1060192049
    %v229 = vmul.bf16 %v224, %v224
    %v230 = vmul.bf16 %v229, %v212
    %v231 = vadd.bf16 %v201, %v230
    %v232 = vadd.bf16 %v231, %v228
    %233 = vset.pattern.permute.xlu0 2
    %234 = vperm.xlu0 %233, %v120
    %v235 = vpop.permute.xlu0 %234
    %v237 = vlaneseq
    %v238 = vshrl.u32 %v237, 7
    %v239 = vsub.s32 2, %v238
    %v240 = vrot.slane %v138, %v239
    %v241 = vadd.f32 %v235, %v240
    %v242 = vrcp.pop %v241
    %v243 = vpack.c.bf16 %v242, %v242
    %244 = vset.pattern.permute.xlu0 2
    %245 = vperm.xlu0 %244, %v93
    %v246 = vpop.permute.xlu0 %245
    %v248 = vlaneseq
    %v249 = vshrl.u32 %v248, 7
    %v250 = vsub.s32 1, %v249
    %v251 = vrot.slane %v187, %v250
    %v252 = vsub.bf16 %v246, %v251
    %v253 = vpack.c.bf16 %v241, %v241
    %v254 = vlog2.bf16.pop %v253
    %v256 = vmul.bf16 %v254, 1060192049
    %v257 = vmul.bf16 %v252, %v252
    %v258 = vmul.bf16 %v257, %v243
    %v259 = vadd.bf16 %v232, %v258
    %v260 = vadd.bf16 %v259, %v256
    %261 = vset.pattern.permute.xlu0 3
    %262 = vperm.xlu0 %261, %v120
    %v263 = vpop.permute.xlu0 %262
    %v265 = vlaneseq
    %v266 = vshrl.u32 %v265, 7
    %v267 = vsub.s32 3, %v266
    %v268 = vrot.slane %v138, %v267
    %v269 = vadd.f32 %v263, %v268
    %v270 = vrcp.pop %v269
    %v271 = vpack.c.bf16 %v270, %v270
    %272 = vset.pattern.permute.xlu0 3
    %273 = vperm.xlu0 %272, %v93
    %v274 = vpop.permute.xlu0 %273
    %v276 = vlaneseq
    %v277 = vshrl.u32 %v276, 7
    %v278 = vsub.s32 1, %v277
    %v279 = vrot.slane %v218, %v278
    %v280 = vsub.bf16 %v274, %v279
    %v281 = vpack.c.bf16 %v269, %v269
    %v282 = vlog2.bf16.pop %v281
    %v284 = vmul.bf16 %v282, 1060192049
    %v285 = vmul.bf16 %v280, %v280
    %v286 = vmul.bf16 %v285, %v271
    %v287 = vadd.bf16 %v260, %v286
    %v288 = vadd.bf16 %v287, %v284
    %289 = vset.pattern.permute.xlu0 4
    %290 = vperm.xlu0 %289, %v120
    %v291 = vpop.permute.xlu0 %290
    %v293 = vlaneseq
    %v294 = vshrl.u32 %v293, 7
    %v295 = vsub.s32 4, %v294
    %v296 = vrot.slane %v138, %v295
    %v297 = vadd.f32 %v291, %v296
    %v298 = vrcp.pop %v297
    %v299 = vpack.c.bf16 %v298, %v298
    %300 = vset.pattern.permute.xlu0 4
    %301 = vperm.xlu0 %300, %v93
    %v302 = vpop.permute.xlu0 %301
    %v304 = vlaneseq
    %v305 = vshrl.u32 %v304, 7
    %v306 = vsub.s32 2, %v305
    %v307 = vrot.slane %v187, %v306
    %v308 = vsub.bf16 %v302, %v307
    %v309 = vpack.c.bf16 %v297, %v297
    %v310 = vlog2.bf16.pop %v309
    %v312 = vmul.bf16 %v310, 1060192049
    %v313 = vmul.bf16 %v308, %v308
    %v314 = vmul.bf16 %v313, %v299
    %v315 = vadd.bf16 %v288, %v314
    %v316 = vadd.bf16 %v315, %v312
    %317 = vset.pattern.permute.xlu0 5
    %318 = vperm.xlu0 %317, %v120
    %v319 = vpop.permute.xlu0 %318
    %v321 = vlaneseq
    %v322 = vshrl.u32 %v321, 7
    %v323 = vsub.s32 5, %v322
    %v324 = vrot.slane %v138, %v323
    %v325 = vadd.f32 %v319, %v324
    %v326 = vrcp.pop %v325
    %v327 = vpack.c.bf16 %v326, %v326
    %328 = vset.pattern.permute.xlu0 5
    %329 = vperm.xlu0 %328, %v93
    %v330 = vpop.permute.xlu0 %329
    %v332 = vlaneseq
    %v333 = vshrl.u32 %v332, 7
    %v334 = vsub.s32 2, %v333
    %v335 = vrot.slane %v218, %v334
    %v336 = vsub.bf16 %v330, %v335
    %v337 = vpack.c.bf16 %v325, %v325
    %v338 = vlog2.bf16.pop %v337
    %v340 = vmul.bf16 %v338, 1060192049
    %v341 = vmul.bf16 %v336, %v336
    %v342 = vmul.bf16 %v341, %v327
    %v343 = vadd.bf16 %v316, %v342
    %v344 = vadd.bf16 %v343, %v340
    %345 = vset.pattern.permute.xlu0 6
    %346 = vperm.xlu0 %345, %v120
    %v347 = vpop.permute.xlu0 %346
    %v349 = vlaneseq
    %v350 = vshrl.u32 %v349, 7
    %v351 = vsub.s32 6, %v350
    %v352 = vrot.slane %v138, %v351
    %v353 = vadd.f32 %v347, %v352
    %v354 = vrcp.pop %v353
    %v355 = vpack.c.bf16 %v354, %v354
    %356 = vset.pattern.permute.xlu0 6
    %357 = vperm.xlu0 %356, %v93
    %v358 = vpop.permute.xlu0 %357
    %v360 = vlaneseq
    %v361 = vshrl.u32 %v360, 7
    %v362 = vsub.s32 3, %v361
    %v363 = vrot.slane %v187, %v362
    %v364 = vsub.bf16 %v358, %v363
    %v365 = vpack.c.bf16 %v353, %v353
    %v366 = vlog2.bf16.pop %v365
    %v368 = vmul.bf16 %v366, 1060192049
    %v369 = vmul.bf16 %v364, %v364
    %v370 = vmul.bf16 %v369, %v355
    %v371 = vadd.bf16 %v344, %v370
    %v372 = vadd.bf16 %v371, %v368
    %373 = vset.pattern.permute.xlu0 7
    %374 = vperm.xlu0 %373, %v120
    %v375 = vpop.permute.xlu0 %374
    %v377 = vlaneseq
    %v378 = vshrl.u32 %v377, 7
    %v379 = vsub.s32 7, %v378
    %v380 = vrot.slane %v138, %v379
    %v381 = vadd.f32 %v375, %v380
    %v382 = vrcp.pop %v381
    %v383 = vpack.c.bf16 %v382, %v382
    %384 = vset.pattern.permute.xlu0 7
    %385 = vperm.xlu0 %384, %v93
    %v386 = vpop.permute.xlu0 %385
    %v388 = vlaneseq
    %v389 = vshrl.u32 %v388, 7
    %v390 = vsub.s32 3, %v389
    %v391 = vrot.slane %v218, %v390
    %v392 = vsub.bf16 %v386, %v391
    %v393 = vpack.c.bf16 %v381, %v381
    %v394 = vlog2.bf16.pop %v393
    %v396 = vmul.bf16 %v394, 1060192049
    %v397 = vmul.bf16 %v392, %v392
    %v398 = vmul.bf16 %v397, %v383
    %v399 = vadd.bf16 %v372, %v398
    %v400 = vadd.bf16 %v399, %v396
    %v401 = vld [vmem:[#allocation10] sm:$0xff]
    %v402 = vunpack.c.l.bf16 %v400
    %v403 = vadd.f32 %v401, %v402
    %404 = vst [vmem:[#allocation10] sm:$0xff] %v403
    %405 = vset.pattern.permute.xlu0 8
    %406 = vperm.xlu0 %405, %v120
    %v407 = vpop.permute.xlu0 %406
    %v409 = vlaneseq
    %v410 = vshrl.u32 %v409, 7
    %v411 = vsub.s32 0, %v410
    %v412 = vrot.slane %v140, %v411
    %v413 = vadd.f32 %v407, %v412
    %v414 = vrcp.pop %v413
    %v415 = vpack.c.bf16 %v414, %v414
    %416 = vset.pattern.permute.xlu0 8
    %417 = vperm.xlu0 %416, %v93
    %v418 = vpop.permute.xlu0 %417
    %v420 = vlaneseq
    %v421 = vshrl.u32 %v420, 7
    %v422 = vsub.s32 4, %v421
    %v423 = vrot.slane %v187, %v422
    %v424 = vsub.bf16 %v418, %v423
    %v425 = vpack.c.bf16 %v413, %v413
    %v426 = vlog2.bf16.pop %v425
    %v428 = vmul.bf16 %v426, 1060192049
    %v429 = vmul.bf16 %v424, %v424
    %v430 = vmul.bf16 %v429, %v415
    %v431 = vadd.bf16 %v430, 0
    %v432 = vadd.bf16 %v431, %v428
    %433 = vset.pattern.permute.xlu0 9
    %434 = vperm.xlu0 %433, %v120
    %v435 = vpop.permute.xlu0 %434
    %v437 = vlaneseq
    %v438 = vshrl.u32 %v437, 7
    %v439 = vsub.s32 1, %v438
    %v440 = vrot.slane %v140, %v439
    %v441 = vadd.f32 %v435, %v440
    %v442 = vrcp.pop %v441
    %v443 = vpack.c.bf16 %v442, %v442
    %444 = vset.pattern.permute.xlu0 9
    %445 = vperm.xlu0 %444, %v93
    %v446 = vpop.permute.xlu0 %445
    %v448 = vlaneseq
    %v449 = vshrl.u32 %v448, 7
    %v450 = vsub.s32 4, %v449
    %v451 = vrot.slane %v218, %v450
    %v452 = vsub.bf16 %v446, %v451
    %v453 = vpack.c.bf16 %v441, %v441
    %v454 = vlog2.bf16.pop %v453
    %v456 = vmul.bf16 %v454, 1060192049
    %v457 = vmul.bf16 %v452, %v452
    %v458 = vmul.bf16 %v457, %v443
    %v459 = vadd.bf16 %v432, %v458
    %v460 = vadd.bf16 %v459, %v456
    %461 = vset.pattern.permute.xlu0 10
    %462 = vperm.xlu0 %461, %v120
    %v463 = vpop.permute.xlu0 %462
    %v465 = vlaneseq
    %v466 = vshrl.u32 %v465, 7
    %v467 = vsub.s32 2, %v466
    %v468 = vrot.slane %v140, %v467
    %v469 = vadd.f32 %v463, %v468
    %v470 = vrcp.pop %v469
    %v471 = vpack.c.bf16 %v470, %v470
    %472 = vset.pattern.permute.xlu0 10
    %473 = vperm.xlu0 %472, %v93
    %v474 = vpop.permute.xlu0 %473
    %v476 = vlaneseq
    %v477 = vshrl.u32 %v476, 7
    %v478 = vsub.s32 5, %v477
    %v479 = vrot.slane %v187, %v478
    %v480 = vsub.bf16 %v474, %v479
    %v481 = vpack.c.bf16 %v469, %v469
    %v482 = vlog2.bf16.pop %v481
    %v484 = vmul.bf16 %v482, 1060192049
    %v485 = vmul.bf16 %v480, %v480
    %v486 = vmul.bf16 %v485, %v471
    %v487 = vadd.bf16 %v460, %v486
    %v488 = vadd.bf16 %v487, %v484
    %489 = vset.pattern.permute.xlu0 11
    %490 = vperm.xlu0 %489, %v120
    %v491 = vpop.permute.xlu0 %490
    %v493 = vlaneseq
    %v494 = vshrl.u32 %v493, 7
    %v495 = vsub.s32 3, %v494
    %v496 = vrot.slane %v140, %v495
    %v497 = vadd.f32 %v491, %v496
    %v498 = vrcp.pop %v497
    %v499 = vpack.c.bf16 %v498, %v498
    %500 = vset.pattern.permute.xlu0 11
    %501 = vperm.xlu0 %500, %v93
    %v502 = vpop.permute.xlu0 %501
    %v504 = vlaneseq
    %v505 = vshrl.u32 %v504, 7
    %v506 = vsub.s32 5, %v505
    %v507 = vrot.slane %v218, %v506
    %v508 = vsub.bf16 %v502, %v507
    %v509 = vpack.c.bf16 %v497, %v497
    %v510 = vlog2.bf16.pop %v509
    %v512 = vmul.bf16 %v510, 1060192049
    %v513 = vmul.bf16 %v508, %v508
    %v514 = vmul.bf16 %v513, %v499
    %v515 = vadd.bf16 %v488, %v514
    %v516 = vadd.bf16 %v515, %v512
    %517 = vset.pattern.permute.xlu0 12
    %518 = vperm.xlu0 %517, %v120
    %v519 = vpop.permute.xlu0 %518
    %v521 = vlaneseq
    %v522 = vshrl.u32 %v521, 7
    %v523 = vsub.s32 4, %v522
    %v524 = vrot.slane %v140, %v523
    %v525 = vadd.f32 %v519, %v524
    %v526 = vrcp.pop %v525
    %v527 = vpack.c.bf16 %v526, %v526
    %528 = vset.pattern.permute.xlu0 12
    %529 = vperm.xlu0 %528, %v93
    %v530 = vpop.permute.xlu0 %529
    %v532 = vlaneseq
    %v533 = vshrl.u32 %v532, 7
    %v534 = vsub.s32 6, %v533
    %v535 = vrot.slane %v187, %v534
    %v536 = vsub.bf16 %v530, %v535
    %v537 = vpack.c.bf16 %v525, %v525
    %v538 = vlog2.bf16.pop %v537
    %v540 = vmul.bf16 %v538, 1060192049
    %v541 = vmul.bf16 %v536, %v536
    %v542 = vmul.bf16 %v541, %v527
    %v543 = vadd.bf16 %v516, %v542
    %v544 = vadd.bf16 %v543, %v540
    %545 = vset.pattern.permute.xlu0 13
    %546 = vperm.xlu0 %545, %v120
    %v547 = vpop.permute.xlu0 %546
    %v549 = vlaneseq
    %v550 = vshrl.u32 %v549, 7
    %v551 = vsub.s32 5, %v550
    %v552 = vrot.slane %v140, %v551
    %v553 = vadd.f32 %v547, %v552
    %v554 = vrcp.pop %v553
    %v555 = vpack.c.bf16 %v554, %v554
    %556 = vset.pattern.permute.xlu0 13
    %557 = vperm.xlu0 %556, %v93
    %v558 = vpop.permute.xlu0 %557
    %v560 = vlaneseq
    %v561 = vshrl.u32 %v560, 7
    %v562 = vsub.s32 6, %v561
    %v563 = vrot.slane %v218, %v562
    %v564 = vsub.bf16 %v558, %v563
    %v565 = vpack.c.bf16 %v553, %v553
    %v566 = vlog2.bf16.pop %v565
    %v568 = vmul.bf16 %v566, 1060192049
    %v569 = vmul.bf16 %v564, %v564
    %v570 = vmul.bf16 %v569, %v555
    %v571 = vadd.bf16 %v544, %v570
    %v572 = vadd.bf16 %v571, %v568
    %573 = vset.pattern.permute.xlu0 14
    %574 = vperm.xlu0 %573, %v120
    %v575 = vpop.permute.xlu0 %574
    %v577 = vlaneseq
    %v578 = vshrl.u32 %v577, 7
    %v579 = vsub.s32 6, %v578
    %v580 = vrot.slane %v140, %v579
    %v581 = vadd.f32 %v575, %v580
    %v582 = vrcp.pop %v581
    %v583 = vpack.c.bf16 %v582, %v582
    %584 = vset.pattern.permute.xlu0 14
    %585 = vperm.xlu0 %584, %v93
    %v586 = vpop.permute.xlu0 %585
    %v588 = vlaneseq
    %v589 = vshrl.u32 %v588, 7
    %v590 = vsub.s32 7, %v589
    %v591 = vrot.slane %v187, %v590
    %v592 = vsub.bf16 %v586, %v591
    %v593 = vpack.c.bf16 %v581, %v581
    %v594 = vlog2.bf16.pop %v593
    %v596 = vmul.bf16 %v594, 1060192049
    %v597 = vmul.bf16 %v592, %v592
    %v598 = vmul.bf16 %v597, %v583
    %v599 = vadd.bf16 %v572, %v598
    %v600 = vadd.bf16 %v599, %v596
    %601 = vset.pattern.permute.xlu0 15
    %602 = vperm.xlu0 %601, %v120
    %v603 = vpop.permute.xlu0 %602
    %v605 = vlaneseq
    %v606 = vshrl.u32 %v605, 7
    %v607 = vsub.s32 7, %v606
    %v608 = vrot.slane %v140, %v607
    %v609 = vadd.f32 %v603, %v608
    %v610 = vrcp.pop %v609
    %v611 = vpack.c.bf16 %v610, %v610
    %612 = vset.pattern.permute.xlu0 15
    %613 = vperm.xlu0 %612, %v93
    %v614 = vpop.permute.xlu0 %613
    %v616 = vlaneseq
    %v617 = vshrl.u32 %v616, 7
    %v618 = vsub.s32 7, %v617
    %v619 = vrot.slane %v218, %v618
    %v620 = vsub.bf16 %v614, %v619
    %v621 = vpack.c.bf16 %v609, %v609
    %v622 = vlog2.bf16.pop %v621
    %v624 = vmul.bf16 %v622, 1060192049
    %v625 = vmul.bf16 %v620, %v620
    %v626 = vmul.bf16 %v625, %v611
    %v627 = vadd.bf16 %v600, %v626
    %v628 = vadd.bf16 %v627, %v624
    %v629 = vld [vmem:[#allocation10] sm:$0xff]
    %v630 = vunpack.c.l.bf16 %v628
    %v631 = vadd.f32 %v629, %v630
    %632 = vst [vmem:[#allocation10] sm:$0xff] %v631
    %633 = vset.pattern.permute.xlu0 16
    %634 = vperm.xlu0 %633, %v120
    %v635 = vpop.permute.xlu0 %634
    %v637 = vlaneseq
    %v638 = vshrl.u32 %v637, 7
    %v639 = vsub.s32 0, %v638
    %v640 = vrot.slane %v142, %v639
    %v641 = vadd.f32 %v635, %v640
    %v642 = vrcp.pop %v641
    %v643 = vpack.c.bf16 %v642, %v642
    %644 = vset.pattern.permute.xlu0 16
    %645 = vperm.xlu0 %644, %v93
    %v646 = vpop.permute.xlu0 %645
    %v649 = vpack.i.b16 %v111, %v111
    %v651 = vlaneseq
    %v652 = vshrl.u32 %v651, 7
    %v653 = vsub.s32 0, %v652
    %v654 = vrot.slane %v649, %v653
    %v655 = vsub.bf16 %v646, %v654
    %v656 = vpack.c.bf16 %v641, %v641
    %v657 = vlog2.bf16.pop %v656
    %v659 = vmul.bf16 %v657, 1060192049
    %v660 = vmul.bf16 %v655, %v655
    %v661 = vmul.bf16 %v660, %v643
    %v662 = vadd.bf16 %v661, 0
    %v663 = vadd.bf16 %v662, %v659
    %664 = vset.pattern.permute.xlu0 17
    %665 = vperm.xlu0 %664, %v120
    %v666 = vpop.permute.xlu0 %665
    %v668 = vlaneseq
    %v669 = vshrl.u32 %v668, 7
    %v670 = vsub.s32 1, %v669
    %v671 = vrot.slane %v142, %v670
    %v672 = vadd.f32 %v666, %v671
    %v673 = vrcp.pop %v672
    %v674 = vpack.c.bf16 %v673, %v673
    %675 = vset.pattern.permute.xlu0 17
    %676 = vperm.xlu0 %675, %v93
    %v677 = vpop.permute.xlu0 %676
    %v679 = vshrl.u32 %v111, 16
    %v680 = vpack.i.b16 %v679, %v679
    %v682 = vlaneseq
    %v683 = vshrl.u32 %v682, 7
    %v684 = vsub.s32 0, %v683
    %v685 = vrot.slane %v680, %v684
    %v686 = vsub.bf16 %v677, %v685
    %v687 = vpack.c.bf16 %v672, %v672
    %v688 = vlog2.bf16.pop %v687
    %v690 = vmul.bf16 %v688, 1060192049
    %v691 = vmul.bf16 %v686, %v686
    %v692 = vmul.bf16 %v691, %v674
    %v693 = vadd.bf16 %v663, %v692
    %v694 = vadd.bf16 %v693, %v690
    %695 = vset.pattern.permute.xlu0 18
    %696 = vperm.xlu0 %695, %v120
    %v697 = vpop.permute.xlu0 %696
    %v699 = vlaneseq
    %v700 = vshrl.u32 %v699, 7
    %v701 = vsub.s32 2, %v700
    %v702 = vrot.slane %v142, %v701
    %v703 = vadd.f32 %v697, %v702
    %v704 = vrcp.pop %v703
    %v705 = vpack.c.bf16 %v704, %v704
    %706 = vset.pattern.permute.xlu0 18
    %707 = vperm.xlu0 %706, %v93
    %v708 = vpop.permute.xlu0 %707
    %v710 = vlaneseq
    %v711 = vshrl.u32 %v710, 7
    %v712 = vsub.s32 1, %v711
    %v713 = vrot.slane %v649, %v712
    %v714 = vsub.bf16 %v708, %v713
    %v715 = vpack.c.bf16 %v703, %v703
    %v716 = vlog2.bf16.pop %v715
    %v718 = vmul.bf16 %v716, 1060192049
    %v719 = vmul.bf16 %v714, %v714
    %v720 = vmul.bf16 %v719, %v705
    %v721 = vadd.bf16 %v694, %v720
    %v722 = vadd.bf16 %v721, %v718
    %723 = vset.pattern.permute.xlu0 19
    %724 = vperm.xlu0 %723, %v120
    %v725 = vpop.permute.xlu0 %724
    %v727 = vlaneseq
    %v728 = vshrl.u32 %v727, 7
    %v729 = vsub.s32 3, %v728
    %v730 = vrot.slane %v142, %v729
    %v731 = vadd.f32 %v725, %v730
    %v732 = vrcp.pop %v731
    %v733 = vpack.c.bf16 %v732, %v732
    %734 = vset.pattern.permute.xlu0 19
    %735 = vperm.xlu0 %734, %v93
    %v736 = vpop.permute.xlu0 %735
    %v738 = vlaneseq
    %v739 = vshrl.u32 %v738, 7
    %v740 = vsub.s32 1, %v739
    %v741 = vrot.slane %v680, %v740
    %v742 = vsub.bf16 %v736, %v741
    %v743 = vpack.c.bf16 %v731, %v731
    %v744 = vlog2.bf16.pop %v743
    %v746 = vmul.bf16 %v744, 1060192049
    %v747 = vmul.bf16 %v742, %v742
    %v748 = vmul.bf16 %v747, %v733
    %v749 = vadd.bf16 %v722, %v748
    %v750 = vadd.bf16 %v749, %v746
    %751 = vset.pattern.permute.xlu0 20
    %752 = vperm.xlu0 %751, %v120
    %v753 = vpop.permute.xlu0 %752
    %v755 = vlaneseq
    %v756 = vshrl.u32 %v755, 7
    %v757 = vsub.s32 4, %v756
    %v758 = vrot.slane %v142, %v757
    %v759 = vadd.f32 %v753, %v758
    %v760 = vrcp.pop %v759
    %v761 = vpack.c.bf16 %v760, %v760
    %762 = vset.pattern.permute.xlu0 20
    %763 = vperm.xlu0 %762, %v93
    %v764 = vpop.permute.xlu0 %763
    %v766 = vlaneseq
    %v767 = vshrl.u32 %v766, 7
    %v768 = vsub.s32 2, %v767
    %v769 = vrot.slane %v649, %v768
    %v770 = vsub.bf16 %v764, %v769
    %v771 = vpack.c.bf16 %v759, %v759
    %v772 = vlog2.bf16.pop %v771
    %v774 = vmul.bf16 %v772, 1060192049
    %v775 = vmul.bf16 %v770, %v770
    %v776 = vmul.bf16 %v775, %v761
    %v777 = vadd.bf16 %v750, %v776
    %v778 = vadd.bf16 %v777, %v774
    %779 = vset.pattern.permute.xlu0 21
    %780 = vperm.xlu0 %779, %v120
    %v781 = vpop.permute.xlu0 %780
    %v783 = vlaneseq
    %v784 = vshrl.u32 %v783, 7
    %v785 = vsub.s32 5, %v784
    %v786 = vrot.slane %v142, %v785
    %v787 = vadd.f32 %v781, %v786
    %v788 = vrcp.pop %v787
    %v789 = vpack.c.bf16 %v788, %v788
    %790 = vset.pattern.permute.xlu0 21
    %791 = vperm.xlu0 %790, %v93
    %v792 = vpop.permute.xlu0 %791
    %v794 = vlaneseq
    %v795 = vshrl.u32 %v794, 7
    %v796 = vsub.s32 2, %v795
    %v797 = vrot.slane %v680, %v796
    %v798 = vsub.bf16 %v792, %v797
    %v799 = vpack.c.bf16 %v787, %v787
    %v800 = vlog2.bf16.pop %v799
    %v802 = vmul.bf16 %v800, 1060192049
    %v803 = vmul.bf16 %v798, %v798
    %v804 = vmul.bf16 %v803, %v789
    %v805 = vadd.bf16 %v778, %v804
    %v806 = vadd.bf16 %v805, %v802
    %807 = vset.pattern.permute.xlu0 22
    %808 = vperm.xlu0 %807, %v120
    %v809 = vpop.permute.xlu0 %808
    %v811 = vlaneseq
    %v812 = vshrl.u32 %v811, 7
    %v813 = vsub.s32 6, %v812
    %v814 = vrot.slane %v142, %v813
    %v815 = vadd.f32 %v809, %v814
    %v816 = vrcp.pop %v815
    %v817 = vpack.c.bf16 %v816, %v816
    %818 = vset.pattern.permute.xlu0 22
    %819 = vperm.xlu0 %818, %v93
    %v820 = vpop.permute.xlu0 %819
    %v822 = vlaneseq
    %v823 = vshrl.u32 %v822, 7
    %v824 = vsub.s32 3, %v823
    %v825 = vrot.slane %v649, %v824
    %v826 = vsub.bf16 %v820, %v825
    %v827 = vpack.c.bf16 %v815, %v815
    %v828 = vlog2.bf16.pop %v827
    %v830 = vmul.bf16 %v828, 1060192049
    %v831 = vmul.bf16 %v826, %v826
    %v832 = vmul.bf16 %v831, %v817
    %v833 = vadd.bf16 %v806, %v832
    %v834 = vadd.bf16 %v833, %v830
    %835 = vset.pattern.permute.xlu0 23
    %836 = vperm.xlu0 %835, %v120
    %v837 = vpop.permute.xlu0 %836
    %v839 = vlaneseq
    %v840 = vshrl.u32 %v839, 7
    %v841 = vsub.s32 7, %v840
    %v842 = vrot.slane %v142, %v841
    %v843 = vadd.f32 %v837, %v842
    %v844 = vrcp.pop %v843
    %v845 = vpack.c.bf16 %v844, %v844
    %846 = vset.pattern.permute.xlu0 23
    %847 = vperm.xlu0 %846, %v93
    %v848 = vpop.permute.xlu0 %847
    %v850 = vlaneseq
    %v851 = vshrl.u32 %v850, 7
    %v852 = vsub.s32 3, %v851
    %v853 = vrot.slane %v680, %v852
    %v854 = vsub.bf16 %v848, %v853
    %v855 = vpack.c.bf16 %v843, %v843
    %v856 = vlog2.bf16.pop %v855
    %v858 = vmul.bf16 %v856, 1060192049
    %v859 = vmul.bf16 %v854, %v854
    %v860 = vmul.bf16 %v859, %v845
    %v861 = vadd.bf16 %v834, %v860
    %v862 = vadd.bf16 %v861, %v858
    %v863 = vld [vmem:[#allocation10] sm:$0xff]
    %v864 = vunpack.c.l.bf16 %v862
    %v865 = vadd.f32 %v863, %v864
    %866 = vst [vmem:[#allocation10] sm:$0xff] %v865
    %867 = vset.pattern.permute.xlu0 24
    %868 = vperm.xlu0 %867, %v120
    %v869 = vpop.permute.xlu0 %868
    %v871 = vlaneseq
    %v872 = vshrl.u32 %v871, 7
    %v873 = vsub.s32 0, %v872
    %v874 = vrot.slane %v144, %v873
    %v875 = vadd.f32 %v869, %v874
    %v876 = vrcp.pop %v875
    %v877 = vpack.c.bf16 %v876, %v876
    %878 = vset.pattern.permute.xlu0 24
    %879 = vperm.xlu0 %878, %v93
    %v880 = vpop.permute.xlu0 %879
    %v882 = vlaneseq
    %v883 = vshrl.u32 %v882, 7
    %v884 = vsub.s32 4, %v883
    %v885 = vrot.slane %v649, %v884
    %v886 = vsub.bf16 %v880, %v885
    %v887 = vpack.c.bf16 %v875, %v875
    %v888 = vlog2.bf16.pop %v887
    %v890 = vmul.bf16 %v888, 1060192049
    %v891 = vmul.bf16 %v886, %v886
    %v892 = vmul.bf16 %v891, %v877
    %v893 = vadd.bf16 %v892, 0
    %v894 = vadd.bf16 %v893, %v890
    %895 = vset.pattern.permute.xlu0 25
    %896 = vperm.xlu0 %895, %v120
    %v897 = vpop.permute.xlu0 %896
    %v899 = vlaneseq
    %v900 = vshrl.u32 %v899, 7
    %v901 = vsub.s32 1, %v900
    %v902 = vrot.slane %v144, %v901
    %v903 = vadd.f32 %v897, %v902
    %v904 = vrcp.pop %v903
    %v905 = vpack.c.bf16 %v904, %v904
    %906 = vset.pattern.permute.xlu0 25
    %907 = vperm.xlu0 %906, %v93
    %v908 = vpop.permute.xlu0 %907
    %v910 = vlaneseq
    %v911 = vshrl.u32 %v910, 7
    %v912 = vsub.s32 4, %v911
    %v913 = vrot.slane %v680, %v912
    %v914 = vsub.bf16 %v908, %v913
    %v915 = vpack.c.bf16 %v903, %v903
    %v916 = vlog2.bf16.pop %v915
    %v918 = vmul.bf16 %v916, 1060192049
    %v919 = vmul.bf16 %v914, %v914
    %v920 = vmul.bf16 %v919, %v905
    %v921 = vadd.bf16 %v894, %v920
    %v922 = vadd.bf16 %v921, %v918
    %923 = vset.pattern.permute.xlu0 26
    %924 = vperm.xlu0 %923, %v120
    %v925 = vpop.permute.xlu0 %924
    %v927 = vlaneseq
    %v928 = vshrl.u32 %v927, 7
    %v929 = vsub.s32 2, %v928
    %v930 = vrot.slane %v144, %v929
    %v931 = vadd.f32 %v925, %v930
    %v932 = vrcp.pop %v931
    %v933 = vpack.c.bf16 %v932, %v932
    %934 = vset.pattern.permute.xlu0 26
    %935 = vperm.xlu0 %934, %v93
    %v936 = vpop.permute.xlu0 %935
    %v938 = vlaneseq
    %v939 = vshrl.u32 %v938, 7
    %v940 = vsub.s32 5, %v939
    %v941 = vrot.slane %v649, %v940
    %v942 = vsub.bf16 %v936, %v941
    %v943 = vpack.c.bf16 %v931, %v931
    %v944 = vlog2.bf16.pop %v943
    %v946 = vmul.bf16 %v944, 1060192049
    %v947 = vmul.bf16 %v942, %v942
    %v948 = vmul.bf16 %v947, %v933
    %v949 = vadd.bf16 %v922, %v948
    %v950 = vadd.bf16 %v949, %v946
    %951 = vset.pattern.permute.xlu0 27
    %952 = vperm.xlu0 %951, %v120
    %v953 = vpop.permute.xlu0 %952
    %v955 = vlaneseq
    %v956 = vshrl.u32 %v955, 7
    %v957 = vsub.s32 3, %v956
    %v958 = vrot.slane %v144, %v957
    %v959 = vadd.f32 %v953, %v958
    %v960 = vrcp.pop %v959
    %v961 = vpack.c.bf16 %v960, %v960
    %962 = vset.pattern.permute.xlu0 27
    %963 = vperm.xlu0 %962, %v93
    %v964 = vpop.permute.xlu0 %963
    %v966 = vlaneseq
    %v967 = vshrl.u32 %v966, 7
    %v968 = vsub.s32 5, %v967
    %v969 = vrot.slane %v680, %v968
    %v970 = vsub.bf16 %v964, %v969
    %v971 = vpack.c.bf16 %v959, %v959
    %v972 = vlog2.bf16.pop %v971
    %v974 = vmul.bf16 %v972, 1060192049
    %v975 = vmul.bf16 %v970, %v970
    %v976 = vmul.bf16 %v975, %v961
    %v977 = vadd.bf16 %v950, %v976
    %v978 = vadd.bf16 %v977, %v974
    %979 = vset.pattern.permute.xlu0 28
    %980 = vperm.xlu0 %979, %v120
    %v981 = vpop.permute.xlu0 %980
    %v983 = vlaneseq
    %v984 = vshrl.u32 %v983, 7
    %v985 = vsub.s32 4, %v984
    %v986 = vrot.slane %v144, %v985
    %v987 = vadd.f32 %v981, %v986
    %v988 = vrcp.pop %v987
    %v989 = vpack.c.bf16 %v988, %v988
    %990 = vset.pattern.permute.xlu0 28
    %991 = vperm.xlu0 %990, %v93
    %v992 = vpop.permute.xlu0 %991
    %v994 = vlaneseq
    %v995 = vshrl.u32 %v994, 7
    %v996 = vsub.s32 6, %v995
    %v997 = vrot.slane %v649, %v996
    %v998 = vsub.bf16 %v992, %v997
    %v999 = vpack.c.bf16 %v987, %v987
    %v1000 = vlog2.bf16.pop %v999
    %v1002 = vmul.bf16 %v1000, 1060192049
    %v1003 = vmul.bf16 %v998, %v998
    %v1004 = vmul.bf16 %v1003, %v989
    %v1005 = vadd.bf16 %v978, %v1004
    %v1006 = vadd.bf16 %v1005, %v1002
    %1007 = vset.pattern.permute.xlu0 29
    %1008 = vperm.xlu0 %1007, %v120
    %v1009 = vpop.permute.xlu0 %1008
    %v1011 = vlaneseq
    %v1012 = vshrl.u32 %v1011, 7
    %v1013 = vsub.s32 5, %v1012
    %v1014 = vrot.slane %v144, %v1013
    %v1015 = vadd.f32 %v1009, %v1014
    %v1016 = vrcp.pop %v1015
    %v1017 = vpack.c.bf16 %v1016, %v1016
    %1018 = vset.pattern.permute.xlu0 29
    %1019 = vperm.xlu0 %1018, %v93
    %v1020 = vpop.permute.xlu0 %1019
    %v1022 = vlaneseq
    %v1023 = vshrl.u32 %v1022, 7
    %v1024 = vsub.s32 6, %v1023
    %v1025 = vrot.slane %v680, %v1024
    %v1026 = vsub.bf16 %v1020, %v1025
    %v1027 = vpack.c.bf16 %v1015, %v1015
    %v1028 = vlog2.bf16.pop %v1027
    %v1030 = vmul.bf16 %v1028, 1060192049
    %v1031 = vmul.bf16 %v1026, %v1026
    %v1032 = vmul.bf16 %v1031, %v1017
    %v1033 = vadd.bf16 %v1006, %v1032
    %v1034 = vadd.bf16 %v1033, %v1030
    %1035 = vset.pattern.permute.xlu0 30
    %1036 = vperm.xlu0 %1035, %v120
    %v1037 = vpop.permute.xlu0 %1036
    %v1039 = vlaneseq
    %v1040 = vshrl.u32 %v1039, 7
    %v1041 = vsub.s32 6, %v1040
    %v1042 = vrot.slane %v144, %v1041
    %v1043 = vadd.f32 %v1037, %v1042
    %v1044 = vrcp.pop %v1043
    %v1045 = vpack.c.bf16 %v1044, %v1044
    %1046 = vset.pattern.permute.xlu0 30
    %1047 = vperm.xlu0 %1046, %v93
    %v1048 = vpop.permute.xlu0 %1047
    %v1050 = vlaneseq
    %v1051 = vshrl.u32 %v1050, 7
    %v1052 = vsub.s32 7, %v1051
    %v1053 = vrot.slane %v649, %v1052
    %v1054 = vsub.bf16 %v1048, %v1053
    %v1055 = vpack.c.bf16 %v1043, %v1043
    %v1056 = vlog2.bf16.pop %v1055
    %v1058 = vmul.bf16 %v1056, 1060192049
    %v1059 = vmul.bf16 %v1054, %v1054
    %v1060 = vmul.bf16 %v1059, %v1045
    %v1061 = vadd.bf16 %v1034, %v1060
    %v1062 = vadd.bf16 %v1061, %v1058
    %1063 = vset.pattern.permute.xlu0 31
    %1064 = vperm.xlu0 %1063, %v120
    %v1065 = vpop.permute.xlu0 %1064
    %v1067 = vlaneseq
    %v1068 = vshrl.u32 %v1067, 7
    %v1069 = vsub.s32 7, %v1068
    %v1070 = vrot.slane %v144, %v1069
    %v1071 = vadd.f32 %v1065, %v1070
    %v1072 = vrcp.pop %v1071
    %v1073 = vpack.c.bf16 %v1072, %v1072
    %1074 = vset.pattern.permute.xlu0 31
    %1075 = vperm.xlu0 %1074, %v93
    %v1076 = vpop.permute.xlu0 %1075
    %v1078 = vlaneseq
    %v1079 = vshrl.u32 %v1078, 7
    %v1080 = vsub.s32 7, %v1079
    %v1081 = vrot.slane %v680, %v1080
    %v1082 = vsub.bf16 %v1076, %v1081
    %v1083 = vpack.c.bf16 %v1071, %v1071
    %v1084 = vlog2.bf16.pop %v1083
    %v1086 = vmul.bf16 %v1084, 1060192049
    %v1087 = vmul.bf16 %v1082, %v1082
    %v1088 = vmul.bf16 %v1087, %v1073
    %v1089 = vadd.bf16 %v1062, %v1088
    %v1090 = vadd.bf16 %v1089, %v1086
    %v1091 = vld [vmem:[#allocation10] sm:$0xff]
    %v1092 = vunpack.c.l.bf16 %v1090
    %v1093 = vadd.f32 %v1091, %v1092
    %1094 = vst [vmem:[#allocation10] sm:$0xff] %v1093
    %1095 = vset.pattern.permute.xlu0 32
    %1096 = vperm.xlu0 %1095, %v120
    %v1097 = vpop.permute.xlu0 %1096
    %v1099 = vlaneseq
    %v1100 = vshrl.u32 %v1099, 7
    %v1101 = vsub.s32 0, %v1100
    %v1102 = vrot.slane %v146, %v1101
    %v1103 = vadd.f32 %v1097, %v1102
    %v1104 = vrcp.pop %v1103
    %v1105 = vpack.c.bf16 %v1104, %v1104
    %1106 = vset.pattern.permute.xlu0 32
    %1107 = vperm.xlu0 %1106, %v93
    %v1108 = vpop.permute.xlu0 %1107
    %v1111 = vpack.i.b16 %v112, %v112
    %v1113 = vlaneseq
    %v1114 = vshrl.u32 %v1113, 7
    %v1115 = vsub.s32 0, %v1114
    %v1116 = vrot.slane %v1111, %v1115
    %v1117 = vsub.bf16 %v1108, %v1116
    %v1118 = vpack.c.bf16 %v1103, %v1103
    %v1119 = vlog2.bf16.pop %v1118
    %v1121 = vmul.bf16 %v1119, 1060192049
    %v1122 = vmul.bf16 %v1117, %v1117
    %v1123 = vmul.bf16 %v1122, %v1105
    %v1124 = vadd.bf16 %v1123, 0
    %v1125 = vadd.bf16 %v1124, %v1121
    %1126 = vset.pattern.permute.xlu0 33
    %1127 = vperm.xlu0 %1126, %v120
    %v1128 = vpop.permute.xlu0 %1127
    %v1130 = vlaneseq
    %v1131 = vshrl.u32 %v1130, 7
    %v1132 = vsub.s32 1, %v1131
    %v1133 = vrot.slane %v146, %v1132
    %v1134 = vadd.f32 %v1128, %v1133
    %v1135 = vrcp.pop %v1134
    %v1136 = vpack.c.bf16 %v1135, %v1135
    %1137 = vset.pattern.permute.xlu0 33
    %1138 = vperm.xlu0 %1137, %v93
    %v1139 = vpop.permute.xlu0 %1138
    %v1141 = vshrl.u32 %v112, 16
    %v1142 = vpack.i.b16 %v1141, %v1141
    %v1144 = vlaneseq
    %v1145 = vshrl.u32 %v1144, 7
    %v1146 = vsub.s32 0, %v1145
    %v1147 = vrot.slane %v1142, %v1146
    %v1148 = vsub.bf16 %v1139, %v1147
    %v1149 = vpack.c.bf16 %v1134, %v1134
    %v1150 = vlog2.bf16.pop %v1149
    %v1152 = vmul.bf16 %v1150, 1060192049
    %v1153 = vmul.bf16 %v1148, %v1148
    %v1154 = vmul.bf16 %v1153, %v1136
    %v1155 = vadd.bf16 %v1125, %v1154
    %v1156 = vadd.bf16 %v1155, %v1152
    %1157 = vset.pattern.permute.xlu0 34
    %1158 = vperm.xlu0 %1157, %v120
    %v1159 = vpop.permute.xlu0 %1158
    %v1161 = vlaneseq
    %v1162 = vshrl.u32 %v1161, 7
    %v1163 = vsub.s32 2, %v1162
    %v1164 = vrot.slane %v146, %v1163
    %v1165 = vadd.f32 %v1159, %v1164
    %v1166 = vrcp.pop %v1165
    %v1167 = vpack.c.bf16 %v1166, %v1166
    %1168 = vset.pattern.permute.xlu0 34
    %1169 = vperm.xlu0 %1168, %v93
    %v1170 = vpop.permute.xlu0 %1169
    %v1172 = vlaneseq
    %v1173 = vshrl.u32 %v1172, 7
    %v1174 = vsub.s32 1, %v1173
    %v1175 = vrot.slane %v1111, %v1174
    %v1176 = vsub.bf16 %v1170, %v1175
    %v1177 = vpack.c.bf16 %v1165, %v1165
    %v1178 = vlog2.bf16.pop %v1177
    %v1180 = vmul.bf16 %v1178, 1060192049
    %v1181 = vmul.bf16 %v1176, %v1176
    %v1182 = vmul.bf16 %v1181, %v1167
    %v1183 = vadd.bf16 %v1156, %v1182
    %v1184 = vadd.bf16 %v1183, %v1180
    %1185 = vset.pattern.permute.xlu0 35
    %1186 = vperm.xlu0 %1185, %v120
    %v1187 = vpop.permute.xlu0 %1186
    %v1189 = vlaneseq
    %v1190 = vshrl.u32 %v1189, 7
    %v1191 = vsub.s32 3, %v1190
    %v1192 = vrot.slane %v146, %v1191
    %v1193 = vadd.f32 %v1187, %v1192
    %v1194 = vrcp.pop %v1193
    %v1195 = vpack.c.bf16 %v1194, %v1194
    %1196 = vset.pattern.permute.xlu0 35
    %1197 = vperm.xlu0 %1196, %v93
    %v1198 = vpop.permute.xlu0 %1197
    %v1200 = vlaneseq
    %v1201 = vshrl.u32 %v1200, 7
    %v1202 = vsub.s32 1, %v1201
    %v1203 = vrot.slane %v1142, %v1202
    %v1204 = vsub.bf16 %v1198, %v1203
    %v1205 = vpack.c.bf16 %v1193, %v1193
    %v1206 = vlog2.bf16.pop %v1205
    %v1208 = vmul.bf16 %v1206, 1060192049
    %v1209 = vmul.bf16 %v1204, %v1204
    %v1210 = vmul.bf16 %v1209, %v1195
    %v1211 = vadd.bf16 %v1184, %v1210
    %v1212 = vadd.bf16 %v1211, %v1208
    %1213 = vset.pattern.permute.xlu0 36
    %1214 = vperm.xlu0 %1213, %v120
    %v1215 = vpop.permute.xlu0 %1214
    %v1217 = vlaneseq
    %v1218 = vshrl.u32 %v1217, 7
    %v1219 = vsub.s32 4, %v1218
    %v1220 = vrot.slane %v146, %v1219
    %v1221 = vadd.f32 %v1215, %v1220
    %v1222 = vrcp.pop %v1221
    %v1223 = vpack.c.bf16 %v1222, %v1222
    %1224 = vset.pattern.permute.xlu0 36
    %1225 = vperm.xlu0 %1224, %v93
    %v1226 = vpop.permute.xlu0 %1225
    %v1228 = vlaneseq
    %v1229 = vshrl.u32 %v1228, 7
    %v1230 = vsub.s32 2, %v1229
    %v1231 = vrot.slane %v1111, %v1230
    %v1232 = vsub.bf16 %v1226, %v1231
    %v1233 = vpack.c.bf16 %v1221, %v1221
    %v1234 = vlog2.bf16.pop %v1233
    %v1236 = vmul.bf16 %v1234, 1060192049
    %v1237 = vmul.bf16 %v1232, %v1232
    %v1238 = vmul.bf16 %v1237, %v1223
    %v1239 = vadd.bf16 %v1212, %v1238
    %v1240 = vadd.bf16 %v1239, %v1236
    %1241 = vset.pattern.permute.xlu0 37
    %1242 = vperm.xlu0 %1241, %v120
    %v1243 = vpop.permute.xlu0 %1242
    %v1245 = vlaneseq
    %v1246 = vshrl.u32 %v1245, 7
    %v1247 = vsub.s32 5, %v1246
    %v1248 = vrot.slane %v146, %v1247
    %v1249 = vadd.f32 %v1243, %v1248
    %v1250 = vrcp.pop %v1249
    %v1251 = vpack.c.bf16 %v1250, %v1250
    %1252 = vset.pattern.permute.xlu0 37
    %1253 = vperm.xlu0 %1252, %v93
    %v1254 = vpop.permute.xlu0 %1253
    %v1256 = vlaneseq
    %v1257 = vshrl.u32 %v1256, 7
    %v1258 = vsub.s32 2, %v1257
    %v1259 = vrot.slane %v1142, %v1258
    %v1260 = vsub.bf16 %v1254, %v1259
    %v1261 = vpack.c.bf16 %v1249, %v1249
    %v1262 = vlog2.bf16.pop %v1261
    %v1264 = vmul.bf16 %v1262, 1060192049
    %v1265 = vmul.bf16 %v1260, %v1260
    %v1266 = vmul.bf16 %v1265, %v1251
    %v1267 = vadd.bf16 %v1240, %v1266
    %v1268 = vadd.bf16 %v1267, %v1264
    %1269 = vset.pattern.permute.xlu0 38
    %1270 = vperm.xlu0 %1269, %v120
    %v1271 = vpop.permute.xlu0 %1270
    %v1273 = vlaneseq
    %v1274 = vshrl.u32 %v1273, 7
    %v1275 = vsub.s32 6, %v1274
    %v1276 = vrot.slane %v146, %v1275
    %v1277 = vadd.f32 %v1271, %v1276
    %v1278 = vrcp.pop %v1277
    %v1279 = vpack.c.bf16 %v1278, %v1278
    %1280 = vset.pattern.permute.xlu0 38
    %1281 = vperm.xlu0 %1280, %v93
    %v1282 = vpop.permute.xlu0 %1281
    %v1284 = vlaneseq
    %v1285 = vshrl.u32 %v1284, 7
    %v1286 = vsub.s32 3, %v1285
    %v1287 = vrot.slane %v1111, %v1286
    %v1288 = vsub.bf16 %v1282, %v1287
    %v1289 = vpack.c.bf16 %v1277, %v1277
    %v1290 = vlog2.bf16.pop %v1289
    %v1292 = vmul.bf16 %v1290, 1060192049
    %v1293 = vmul.bf16 %v1288, %v1288
    %v1294 = vmul.bf16 %v1293, %v1279
    %v1295 = vadd.bf16 %v1268, %v1294
    %v1296 = vadd.bf16 %v1295, %v1292
    %1297 = vset.pattern.permute.xlu0 39
    %1298 = vperm.xlu0 %1297, %v120
    %v1299 = vpop.permute.xlu0 %1298
    %v1301 = vlaneseq
    %v1302 = vshrl.u32 %v1301, 7
    %v1303 = vsub.s32 7, %v1302
    %v1304 = vrot.slane %v146, %v1303
    %v1305 = vadd.f32 %v1299, %v1304
    %v1306 = vrcp.pop %v1305
    %v1307 = vpack.c.bf16 %v1306, %v1306
    %1308 = vset.pattern.permute.xlu0 39
    %1309 = vperm.xlu0 %1308, %v93
    %v1310 = vpop.permute.xlu0 %1309
    %v1312 = vlaneseq
    %v1313 = vshrl.u32 %v1312, 7
    %v1314 = vsub.s32 3, %v1313
    %v1315 = vrot.slane %v1142, %v1314
    %v1316 = vsub.bf16 %v1310, %v1315
    %v1317 = vpack.c.bf16 %v1305, %v1305
    %v1318 = vlog2.bf16.pop %v1317
    %v1320 = vmul.bf16 %v1318, 1060192049
    %v1321 = vmul.bf16 %v1316, %v1316
    %v1322 = vmul.bf16 %v1321, %v1307
    %v1323 = vadd.bf16 %v1296, %v1322
    %v1324 = vadd.bf16 %v1323, %v1320
    %v1325 = vld [vmem:[#allocation10] sm:$0xff]
    %v1326 = vunpack.c.l.bf16 %v1324
    %v1327 = vadd.f32 %v1325, %v1326
    %1328 = vst [vmem:[#allocation10] sm:$0xff] %v1327
    %1329 = vset.pattern.permute.xlu0 40
    %1330 = vperm.xlu0 %1329, %v120
    %v1331 = vpop.permute.xlu0 %1330
    %v1333 = vlaneseq
    %v1334 = vshrl.u32 %v1333, 7
    %v1335 = vsub.s32 0, %v1334
    %v1336 = vrot.slane %v148, %v1335
    %v1337 = vadd.f32 %v1331, %v1336
    %v1338 = vrcp.pop %v1337
    %v1339 = vpack.c.bf16 %v1338, %v1338
    %1340 = vset.pattern.permute.xlu0 40
    %1341 = vperm.xlu0 %1340, %v93
    %v1342 = vpop.permute.xlu0 %1341
    %v1344 = vlaneseq
    %v1345 = vshrl.u32 %v1344, 7
    %v1346 = vsub.s32 4, %v1345
    %v1347 = vrot.slane %v1111, %v1346
    %v1348 = vsub.bf16 %v1342, %v1347
    %v1349 = vpack.c.bf16 %v1337, %v1337
    %v1350 = vlog2.bf16.pop %v1349
    %v1352 = vmul.bf16 %v1350, 1060192049
    %v1353 = vmul.bf16 %v1348, %v1348
    %v1354 = vmul.bf16 %v1353, %v1339
    %v1355 = vadd.bf16 %v1354, 0
    %v1356 = vadd.bf16 %v1355, %v1352
    %1357 = vset.pattern.permute.xlu0 41
    %1358 = vperm.xlu0 %1357, %v120
    %v1359 = vpop.permute.xlu0 %1358
    %v1361 = vlaneseq
    %v1362 = vshrl.u32 %v1361, 7
    %v1363 = vsub.s32 1, %v1362
    %v1364 = vrot.slane %v148, %v1363
    %v1365 = vadd.f32 %v1359, %v1364
    %v1366 = vrcp.pop %v1365
    %v1367 = vpack.c.bf16 %v1366, %v1366
    %1368 = vset.pattern.permute.xlu0 41
    %1369 = vperm.xlu0 %1368, %v93
    %v1370 = vpop.permute.xlu0 %1369
    %v1372 = vlaneseq
    %v1373 = vshrl.u32 %v1372, 7
    %v1374 = vsub.s32 4, %v1373
    %v1375 = vrot.slane %v1142, %v1374
    %v1376 = vsub.bf16 %v1370, %v1375
    %v1377 = vpack.c.bf16 %v1365, %v1365
    %v1378 = vlog2.bf16.pop %v1377
    %v1380 = vmul.bf16 %v1378, 1060192049
    %v1381 = vmul.bf16 %v1376, %v1376
    %v1382 = vmul.bf16 %v1381, %v1367
    %v1383 = vadd.bf16 %v1356, %v1382
    %v1384 = vadd.bf16 %v1383, %v1380
    %1385 = vset.pattern.permute.xlu0 42
    %1386 = vperm.xlu0 %1385, %v120
    %v1387 = vpop.permute.xlu0 %1386
    %v1389 = vlaneseq
    %v1390 = vshrl.u32 %v1389, 7
    %v1391 = vsub.s32 2, %v1390
    %v1392 = vrot.slane %v148, %v1391
    %v1393 = vadd.f32 %v1387, %v1392
    %v1394 = vrcp.pop %v1393
    %v1395 = vpack.c.bf16 %v1394, %v1394
    %1396 = vset.pattern.permute.xlu0 42
    %1397 = vperm.xlu0 %1396, %v93
    %v1398 = vpop.permute.xlu0 %1397
    %v1400 = vlaneseq
    %v1401 = vshrl.u32 %v1400, 7
    %v1402 = vsub.s32 5, %v1401
    %v1403 = vrot.slane %v1111, %v1402
    %v1404 = vsub.bf16 %v1398, %v1403
    %v1405 = vpack.c.bf16 %v1393, %v1393
    %v1406 = vlog2.bf16.pop %v1405
    %v1408 = vmul.bf16 %v1406, 1060192049
    %v1409 = vmul.bf16 %v1404, %v1404
    %v1410 = vmul.bf16 %v1409, %v1395
    %v1411 = vadd.bf16 %v1384, %v1410
    %v1412 = vadd.bf16 %v1411, %v1408
    %1413 = vset.pattern.permute.xlu0 43
    %1414 = vperm.xlu0 %1413, %v120
    %v1415 = vpop.permute.xlu0 %1414
    %v1417 = vlaneseq
    %v1418 = vshrl.u32 %v1417, 7
    %v1419 = vsub.s32 3, %v1418
    %v1420 = vrot.slane %v148, %v1419
    %v1421 = vadd.f32 %v1415, %v1420
    %v1422 = vrcp.pop %v1421
    %v1423 = vpack.c.bf16 %v1422, %v1422
    %1424 = vset.pattern.permute.xlu0 43
    %1425 = vperm.xlu0 %1424, %v93
    %v1426 = vpop.permute.xlu0 %1425
    %v1428 = vlaneseq
    %v1429 = vshrl.u32 %v1428, 7
    %v1430 = vsub.s32 5, %v1429
    %v1431 = vrot.slane %v1142, %v1430
    %v1432 = vsub.bf16 %v1426, %v1431
    %v1433 = vpack.c.bf16 %v1421, %v1421
    %v1434 = vlog2.bf16.pop %v1433
    %v1436 = vmul.bf16 %v1434, 1060192049
    %v1437 = vmul.bf16 %v1432, %v1432
    %v1438 = vmul.bf16 %v1437, %v1423
    %v1439 = vadd.bf16 %v1412, %v1438
    %v1440 = vadd.bf16 %v1439, %v1436
    %1441 = vset.pattern.permute.xlu0 44
    %1442 = vperm.xlu0 %1441, %v120
    %v1443 = vpop.permute.xlu0 %1442
    %v1445 = vlaneseq
    %v1446 = vshrl.u32 %v1445, 7
    %v1447 = vsub.s32 4, %v1446
    %v1448 = vrot.slane %v148, %v1447
    %v1449 = vadd.f32 %v1443, %v1448
    %v1450 = vrcp.pop %v1449
    %v1451 = vpack.c.bf16 %v1450, %v1450
    %1452 = vset.pattern.permute.xlu0 44
    %1453 = vperm.xlu0 %1452, %v93
    %v1454 = vpop.permute.xlu0 %1453
    %v1456 = vlaneseq
    %v1457 = vshrl.u32 %v1456, 7
    %v1458 = vsub.s32 6, %v1457
    %v1459 = vrot.slane %v1111, %v1458
    %v1460 = vsub.bf16 %v1454, %v1459
    %v1461 = vpack.c.bf16 %v1449, %v1449
    %v1462 = vlog2.bf16.pop %v1461
    %v1464 = vmul.bf16 %v1462, 1060192049
    %v1465 = vmul.bf16 %v1460, %v1460
    %v1466 = vmul.bf16 %v1465, %v1451
    %v1467 = vadd.bf16 %v1440, %v1466
    %v1468 = vadd.bf16 %v1467, %v1464
    %1469 = vset.pattern.permute.xlu0 45
    %1470 = vperm.xlu0 %1469, %v120
    %v1471 = vpop.permute.xlu0 %1470
    %v1473 = vlaneseq
    %v1474 = vshrl.u32 %v1473, 7
    %v1475 = vsub.s32 5, %v1474
    %v1476 = vrot.slane %v148, %v1475
    %v1477 = vadd.f32 %v1471, %v1476
    %v1478 = vrcp.pop %v1477
    %v1479 = vpack.c.bf16 %v1478, %v1478
    %1480 = vset.pattern.permute.xlu0 45
    %1481 = vperm.xlu0 %1480, %v93
    %v1482 = vpop.permute.xlu0 %1481
    %v1484 = vlaneseq
    %v1485 = vshrl.u32 %v1484, 7
    %v1486 = vsub.s32 6, %v1485
    %v1487 = vrot.slane %v1142, %v1486
    %v1488 = vsub.bf16 %v1482, %v1487
    %v1489 = vpack.c.bf16 %v1477, %v1477
    %v1490 = vlog2.bf16.pop %v1489
    %v1492 = vmul.bf16 %v1490, 1060192049
    %v1493 = vmul.bf16 %v1488, %v1488
    %v1494 = vmul.bf16 %v1493, %v1479
    %v1495 = vadd.bf16 %v1468, %v1494
    %v1496 = vadd.bf16 %v1495, %v1492
    %1497 = vset.pattern.permute.xlu0 46
    %1498 = vperm.xlu0 %1497, %v120
    %v1499 = vpop.permute.xlu0 %1498
    %v1501 = vlaneseq
    %v1502 = vshrl.u32 %v1501, 7
    %v1503 = vsub.s32 6, %v1502
    %v1504 = vrot.slane %v148, %v1503
    %v1505 = vadd.f32 %v1499, %v1504
    %v1506 = vrcp.pop %v1505
    %v1507 = vpack.c.bf16 %v1506, %v1506
    %1508 = vset.pattern.permute.xlu0 46
    %1509 = vperm.xlu0 %1508, %v93
    %v1510 = vpop.permute.xlu0 %1509
    %v1512 = vlaneseq
    %v1513 = vshrl.u32 %v1512, 7
    %v1514 = vsub.s32 7, %v1513
    %v1515 = vrot.slane %v1111, %v1514
    %v1516 = vsub.bf16 %v1510, %v1515
    %v1517 = vpack.c.bf16 %v1505, %v1505
    %v1518 = vlog2.bf16.pop %v1517
    %v1520 = vmul.bf16 %v1518, 1060192049
    %v1521 = vmul.bf16 %v1516, %v1516
    %v1522 = vmul.bf16 %v1521, %v1507
    %v1523 = vadd.bf16 %v1496, %v1522
    %v1524 = vadd.bf16 %v1523, %v1520
    %1525 = vset.pattern.permute.xlu0 47
    %1526 = vperm.xlu0 %1525, %v120
    %v1527 = vpop.permute.xlu0 %1526
    %v1529 = vlaneseq
    %v1530 = vshrl.u32 %v1529, 7
    %v1531 = vsub.s32 7, %v1530
    %v1532 = vrot.slane %v148, %v1531
    %v1533 = vadd.f32 %v1527, %v1532
    %v1534 = vrcp.pop %v1533
    %v1535 = vpack.c.bf16 %v1534, %v1534
    %1536 = vset.pattern.permute.xlu0 47
    %1537 = vperm.xlu0 %1536, %v93
    %v1538 = vpop.permute.xlu0 %1537
    %v1540 = vlaneseq
    %v1541 = vshrl.u32 %v1540, 7
    %v1542 = vsub.s32 7, %v1541
    %v1543 = vrot.slane %v1142, %v1542
    %v1544 = vsub.bf16 %v1538, %v1543
    %v1545 = vpack.c.bf16 %v1533, %v1533
    %v1546 = vlog2.bf16.pop %v1545
    %v1548 = vmul.bf16 %v1546, 1060192049
    %v1549 = vmul.bf16 %v1544, %v1544
    %v1550 = vmul.bf16 %v1549, %v1535
    %v1551 = vadd.bf16 %v1524, %v1550
    %v1552 = vadd.bf16 %v1551, %v1548
    %v1553 = vld [vmem:[#allocation10] sm:$0xff]
    %v1554 = vunpack.c.l.bf16 %v1552
    %v1555 = vadd.f32 %v1553, %v1554
    %1556 = vst [vmem:[#allocation10] sm:$0xff] %v1555
    %1557 = vset.pattern.permute.xlu0 48
    %1558 = vperm.xlu0 %1557, %v120
    %v1559 = vpop.permute.xlu0 %1558
    %v1561 = vlaneseq
    %v1562 = vshrl.u32 %v1561, 7
    %v1563 = vsub.s32 0, %v1562
    %v1564 = vrot.slane %v150, %v1563
    %v1565 = vadd.f32 %v1559, %v1564
    %v1566 = vrcp.pop %v1565
    %v1567 = vpack.c.bf16 %v1566, %v1566
    %1568 = vset.pattern.permute.xlu0 48
    %1569 = vperm.xlu0 %1568, %v93
    %v1570 = vpop.permute.xlu0 %1569
    %v1573 = vpack.i.b16 %v113, %v113
    %v1575 = vlaneseq
    %v1576 = vshrl.u32 %v1575, 7
    %v1577 = vsub.s32 0, %v1576
    %v1578 = vrot.slane %v1573, %v1577
    %v1579 = vsub.bf16 %v1570, %v1578
    %v1580 = vpack.c.bf16 %v1565, %v1565
    %v1581 = vlog2.bf16.pop %v1580
    %v1583 = vmul.bf16 %v1581, 1060192049
    %v1584 = vmul.bf16 %v1579, %v1579
    %v1585 = vmul.bf16 %v1584, %v1567
    %v1586 = vadd.bf16 %v1585, 0
    %v1587 = vadd.bf16 %v1586, %v1583
    %1588 = vset.pattern.permute.xlu0 49
    %1589 = vperm.xlu0 %1588, %v120
    %v1590 = vpop.permute.xlu0 %1589
    %v1592 = vlaneseq
    %v1593 = vshrl.u32 %v1592, 7
    %v1594 = vsub.s32 1, %v1593
    %v1595 = vrot.slane %v150, %v1594
    %v1596 = vadd.f32 %v1590, %v1595
    %v1597 = vrcp.pop %v1596
    %v1598 = vpack.c.bf16 %v1597, %v1597
    %1599 = vset.pattern.permute.xlu0 49
    %1600 = vperm.xlu0 %1599, %v93
    %v1601 = vpop.permute.xlu0 %1600
    %v1603 = vshrl.u32 %v113, 16
    %v1604 = vpack.i.b16 %v1603, %v1603
    %v1606 = vlaneseq
    %v1607 = vshrl.u32 %v1606, 7
    %v1608 = vsub.s32 0, %v1607
    %v1609 = vrot.slane %v1604, %v1608
    %v1610 = vsub.bf16 %v1601, %v1609
    %v1611 = vpack.c.bf16 %v1596, %v1596
    %v1612 = vlog2.bf16.pop %v1611
    %v1614 = vmul.bf16 %v1612, 1060192049
    %v1615 = vmul.bf16 %v1610, %v1610
    %v1616 = vmul.bf16 %v1615, %v1598
    %v1617 = vadd.bf16 %v1587, %v1616
    %v1618 = vadd.bf16 %v1617, %v1614
    %1619 = vset.pattern.permute.xlu0 50
    %1620 = vperm.xlu0 %1619, %v120
    %v1621 = vpop.permute.xlu0 %1620
    %v1623 = vlaneseq
    %v1624 = vshrl.u32 %v1623, 7
    %v1625 = vsub.s32 2, %v1624
    %v1626 = vrot.slane %v150, %v1625
    %v1627 = vadd.f32 %v1621, %v1626
    %v1628 = vrcp.pop %v1627
    %v1629 = vpack.c.bf16 %v1628, %v1628
    %1630 = vset.pattern.permute.xlu0 50
    %1631 = vperm.xlu0 %1630, %v93
    %v1632 = vpop.permute.xlu0 %1631
    %v1634 = vlaneseq
    %v1635 = vshrl.u32 %v1634, 7
    %v1636 = vsub.s32 1, %v1635
    %v1637 = vrot.slane %v1573, %v1636
    %v1638 = vsub.bf16 %v1632, %v1637
    %v1639 = vpack.c.bf16 %v1627, %v1627
    %v1640 = vlog2.bf16.pop %v1639
    %v1642 = vmul.bf16 %v1640, 1060192049
    %v1643 = vmul.bf16 %v1638, %v1638
    %v1644 = vmul.bf16 %v1643, %v1629
    %v1645 = vadd.bf16 %v1618, %v1644
    %v1646 = vadd.bf16 %v1645, %v1642
    %1647 = vset.pattern.permute.xlu0 51
    %1648 = vperm.xlu0 %1647, %v120
    %v1649 = vpop.permute.xlu0 %1648
    %v1651 = vlaneseq
    %v1652 = vshrl.u32 %v1651, 7
    %v1653 = vsub.s32 3, %v1652
    %v1654 = vrot.slane %v150, %v1653
    %v1655 = vadd.f32 %v1649, %v1654
    %v1656 = vrcp.pop %v1655
    %v1657 = vpack.c.bf16 %v1656, %v1656
    %1658 = vset.pattern.permute.xlu0 51
    %1659 = vperm.xlu0 %1658, %v93
    %v1660 = vpop.permute.xlu0 %1659
    %v1662 = vlaneseq
    %v1663 = vshrl.u32 %v1662, 7
    %v1664 = vsub.s32 1, %v1663
    %v1665 = vrot.slane %v1604, %v1664
    %v1666 = vsub.bf16 %v1660, %v1665
    %v1667 = vpack.c.bf16 %v1655, %v1655
    %v1668 = vlog2.bf16.pop %v1667
    %v1670 = vmul.bf16 %v1668, 1060192049
    %v1671 = vmul.bf16 %v1666, %v1666
    %v1672 = vmul.bf16 %v1671, %v1657
    %v1673 = vadd.bf16 %v1646, %v1672
    %v1674 = vadd.bf16 %v1673, %v1670
    %1675 = vset.pattern.permute.xlu0 52
    %1676 = vperm.xlu0 %1675, %v120
    %v1677 = vpop.permute.xlu0 %1676
    %v1679 = vlaneseq
    %v1680 = vshrl.u32 %v1679, 7
    %v1681 = vsub.s32 4, %v1680
    %v1682 = vrot.slane %v150, %v1681
    %v1683 = vadd.f32 %v1677, %v1682
    %v1684 = vrcp.pop %v1683
    %v1685 = vpack.c.bf16 %v1684, %v1684
    %1686 = vset.pattern.permute.xlu0 52
    %1687 = vperm.xlu0 %1686, %v93
    %v1688 = vpop.permute.xlu0 %1687
    %v1690 = vlaneseq
    %v1691 = vshrl.u32 %v1690, 7
    %v1692 = vsub.s32 2, %v1691
    %v1693 = vrot.slane %v1573, %v1692
    %v1694 = vsub.bf16 %v1688, %v1693
    %v1695 = vpack.c.bf16 %v1683, %v1683
    %v1696 = vlog2.bf16.pop %v1695
    %v1698 = vmul.bf16 %v1696, 1060192049
    %v1699 = vmul.bf16 %v1694, %v1694
    %v1700 = vmul.bf16 %v1699, %v1685
    %v1701 = vadd.bf16 %v1674, %v1700
    %v1702 = vadd.bf16 %v1701, %v1698
    %1703 = vset.pattern.permute.xlu0 53
    %1704 = vperm.xlu0 %1703, %v120
    %v1705 = vpop.permute.xlu0 %1704
    %v1707 = vlaneseq
    %v1708 = vshrl.u32 %v1707, 7
    %v1709 = vsub.s32 5, %v1708
    %v1710 = vrot.slane %v150, %v1709
    %v1711 = vadd.f32 %v1705, %v1710
    %v1712 = vrcp.pop %v1711
    %v1713 = vpack.c.bf16 %v1712, %v1712
    %1714 = vset.pattern.permute.xlu0 53
    %1715 = vperm.xlu0 %1714, %v93
    %v1716 = vpop.permute.xlu0 %1715
    %v1718 = vlaneseq
    %v1719 = vshrl.u32 %v1718, 7
    %v1720 = vsub.s32 2, %v1719
    %v1721 = vrot.slane %v1604, %v1720
    %v1722 = vsub.bf16 %v1716, %v1721
    %v1723 = vpack.c.bf16 %v1711, %v1711
    %v1724 = vlog2.bf16.pop %v1723
    %v1726 = vmul.bf16 %v1724, 1060192049
    %v1727 = vmul.bf16 %v1722, %v1722
    %v1728 = vmul.bf16 %v1727, %v1713
    %v1729 = vadd.bf16 %v1702, %v1728
    %v1730 = vadd.bf16 %v1729, %v1726
    %1731 = vset.pattern.permute.xlu0 54
    %1732 = vperm.xlu0 %1731, %v120
    %v1733 = vpop.permute.xlu0 %1732
    %v1735 = vlaneseq
    %v1736 = vshrl.u32 %v1735, 7
    %v1737 = vsub.s32 6, %v1736
    %v1738 = vrot.slane %v150, %v1737
    %v1739 = vadd.f32 %v1733, %v1738
    %v1740 = vrcp.pop %v1739
    %v1741 = vpack.c.bf16 %v1740, %v1740
    %1742 = vset.pattern.permute.xlu0 54
    %1743 = vperm.xlu0 %1742, %v93
    %v1744 = vpop.permute.xlu0 %1743
    %v1746 = vlaneseq
    %v1747 = vshrl.u32 %v1746, 7
    %v1748 = vsub.s32 3, %v1747
    %v1749 = vrot.slane %v1573, %v1748
    %v1750 = vsub.bf16 %v1744, %v1749
    %v1751 = vpack.c.bf16 %v1739, %v1739
    %v1752 = vlog2.bf16.pop %v1751
    %v1754 = vmul.bf16 %v1752, 1060192049
    %v1755 = vmul.bf16 %v1750, %v1750
    %v1756 = vmul.bf16 %v1755, %v1741
    %v1757 = vadd.bf16 %v1730, %v1756
    %v1758 = vadd.bf16 %v1757, %v1754
    %1759 = vset.pattern.permute.xlu0 55
    %1760 = vperm.xlu0 %1759, %v120
    %v1761 = vpop.permute.xlu0 %1760
    %v1763 = vlaneseq
    %v1764 = vshrl.u32 %v1763, 7
    %v1765 = vsub.s32 7, %v1764
    %v1766 = vrot.slane %v150, %v1765
    %v1767 = vadd.f32 %v1761, %v1766
    %v1768 = vrcp.pop %v1767
    %v1769 = vpack.c.bf16 %v1768, %v1768
    %1770 = vset.pattern.permute.xlu0 55
    %1771 = vperm.xlu0 %1770, %v93
    %v1772 = vpop.permute.xlu0 %1771
    %v1774 = vlaneseq
    %v1775 = vshrl.u32 %v1774, 7
    %v1776 = vsub.s32 3, %v1775
    %v1777 = vrot.slane %v1604, %v1776
    %v1778 = vsub.bf16 %v1772, %v1777
    %v1779 = vpack.c.bf16 %v1767, %v1767
    %v1780 = vlog2.bf16.pop %v1779
    %v1782 = vmul.bf16 %v1780, 1060192049
    %v1783 = vmul.bf16 %v1778, %v1778
    %v1784 = vmul.bf16 %v1783, %v1769
    %v1785 = vadd.bf16 %v1758, %v1784
    %v1786 = vadd.bf16 %v1785, %v1782
    %v1787 = vld [vmem:[#allocation10] sm:$0xff]
    %v1788 = vunpack.c.l.bf16 %v1786
    %v1789 = vadd.f32 %v1787, %v1788
    %1790 = vst [vmem:[#allocation10] sm:$0xff] %v1789
    %1791 = vset.pattern.permute.xlu0 56
    %1792 = vperm.xlu0 %1791, %v120
    %v1793 = vpop.permute.xlu0 %1792
    %v1795 = vlaneseq
    %v1796 = vshrl.u32 %v1795, 7
    %v1797 = vsub.s32 0, %v1796
    %v1798 = vrot.slane %v152, %v1797
    %v1799 = vadd.f32 %v1793, %v1798
    %v1800 = vrcp.pop %v1799
    %v1801 = vpack.c.bf16 %v1800, %v1800
    %1802 = vset.pattern.permute.xlu0 56
    %1803 = vperm.xlu0 %1802, %v93
    %v1804 = vpop.permute.xlu0 %1803
    %v1806 = vlaneseq
    %v1807 = vshrl.u32 %v1806, 7
    %v1808 = vsub.s32 4, %v1807
    %v1809 = vrot.slane %v1573, %v1808
    %v1810 = vsub.bf16 %v1804, %v1809
    %v1811 = vpack.c.bf16 %v1799, %v1799
    %v1812 = vlog2.bf16.pop %v1811
    %v1814 = vmul.bf16 %v1812, 1060192049
    %v1815 = vmul.bf16 %v1810, %v1810
    %v1816 = vmul.bf16 %v1815, %v1801
    %v1817 = vadd.bf16 %v1816, 0
    %v1818 = vadd.bf16 %v1817, %v1814
    %1819 = vset.pattern.permute.xlu0 57
    %1820 = vperm.xlu0 %1819, %v120
    %v1821 = vpop.permute.xlu0 %1820
    %v1823 = vlaneseq
    %v1824 = vshrl.u32 %v1823, 7
    %v1825 = vsub.s32 1, %v1824
    %v1826 = vrot.slane %v152, %v1825
    %v1827 = vadd.f32 %v1821, %v1826
    %v1828 = vrcp.pop %v1827
    %v1829 = vpack.c.bf16 %v1828, %v1828
    %1830 = vset.pattern.permute.xlu0 57
    %1831 = vperm.xlu0 %1830, %v93
    %v1832 = vpop.permute.xlu0 %1831
    %v1834 = vlaneseq
    %v1835 = vshrl.u32 %v1834, 7
    %v1836 = vsub.s32 4, %v1835
    %v1837 = vrot.slane %v1604, %v1836
    %v1838 = vsub.bf16 %v1832, %v1837
    %v1839 = vpack.c.bf16 %v1827, %v1827
    %v1840 = vlog2.bf16.pop %v1839
    %v1842 = vmul.bf16 %v1840, 1060192049
    %v1843 = vmul.bf16 %v1838, %v1838
    %v1844 = vmul.bf16 %v1843, %v1829
    %v1845 = vadd.bf16 %v1818, %v1844
    %v1846 = vadd.bf16 %v1845, %v1842
    %1847 = vset.pattern.permute.xlu0 58
    %1848 = vperm.xlu0 %1847, %v120
    %v1849 = vpop.permute.xlu0 %1848
    %v1851 = vlaneseq
    %v1852 = vshrl.u32 %v1851, 7
    %v1853 = vsub.s32 2, %v1852
    %v1854 = vrot.slane %v152, %v1853
    %v1855 = vadd.f32 %v1849, %v1854
    %v1856 = vrcp.pop %v1855
    %v1857 = vpack.c.bf16 %v1856, %v1856
    %1858 = vset.pattern.permute.xlu0 58
    %1859 = vperm.xlu0 %1858, %v93
    %v1860 = vpop.permute.xlu0 %1859
    %v1862 = vlaneseq
    %v1863 = vshrl.u32 %v1862, 7
    %v1864 = vsub.s32 5, %v1863
    %v1865 = vrot.slane %v1573, %v1864
    %v1866 = vsub.bf16 %v1860, %v1865
    %v1867 = vpack.c.bf16 %v1855, %v1855
    %v1868 = vlog2.bf16.pop %v1867
    %v1870 = vmul.bf16 %v1868, 1060192049
    %v1871 = vmul.bf16 %v1866, %v1866
    %v1872 = vmul.bf16 %v1871, %v1857
    %v1873 = vadd.bf16 %v1846, %v1872
    %v1874 = vadd.bf16 %v1873, %v1870
    %1875 = vset.pattern.permute.xlu0 59
    %1876 = vperm.xlu0 %1875, %v120
    %v1877 = vpop.permute.xlu0 %1876
    %v1879 = vlaneseq
    %v1880 = vshrl.u32 %v1879, 7
    %v1881 = vsub.s32 3, %v1880
    %v1882 = vrot.slane %v152, %v1881
    %v1883 = vadd.f32 %v1877, %v1882
    %v1884 = vrcp.pop %v1883
    %v1885 = vpack.c.bf16 %v1884, %v1884
    %1886 = vset.pattern.permute.xlu0 59
    %1887 = vperm.xlu0 %1886, %v93
    %v1888 = vpop.permute.xlu0 %1887
    %v1890 = vlaneseq
    %v1891 = vshrl.u32 %v1890, 7
    %v1892 = vsub.s32 5, %v1891
    %v1893 = vrot.slane %v1604, %v1892
    %v1894 = vsub.bf16 %v1888, %v1893
    %v1895 = vpack.c.bf16 %v1883, %v1883
    %v1896 = vlog2.bf16.pop %v1895
    %v1898 = vmul.bf16 %v1896, 1060192049
    %v1899 = vmul.bf16 %v1894, %v1894
    %v1900 = vmul.bf16 %v1899, %v1885
    %v1901 = vadd.bf16 %v1874, %v1900
    %v1902 = vadd.bf16 %v1901, %v1898
    %1903 = vset.pattern.permute.xlu0 60
    %1904 = vperm.xlu0 %1903, %v120
    %v1905 = vpop.permute.xlu0 %1904
    %v1907 = vlaneseq
    %v1908 = vshrl.u32 %v1907, 7
    %v1909 = vsub.s32 4, %v1908
    %v1910 = vrot.slane %v152, %v1909
    %v1911 = vadd.f32 %v1905, %v1910
    %v1912 = vrcp.pop %v1911
    %v1913 = vpack.c.bf16 %v1912, %v1912
    %1914 = vset.pattern.permute.xlu0 60
    %1915 = vperm.xlu0 %1914, %v93
    %v1916 = vpop.permute.xlu0 %1915
    %v1918 = vlaneseq
    %v1919 = vshrl.u32 %v1918, 7
    %v1920 = vsub.s32 6, %v1919
    %v1921 = vrot.slane %v1573, %v1920
    %v1922 = vsub.bf16 %v1916, %v1921
    %v1923 = vpack.c.bf16 %v1911, %v1911
    %v1924 = vlog2.bf16.pop %v1923
    %v1926 = vmul.bf16 %v1924, 1060192049
    %v1927 = vmul.bf16 %v1922, %v1922
    %v1928 = vmul.bf16 %v1927, %v1913
    %v1929 = vadd.bf16 %v1902, %v1928
    %v1930 = vadd.bf16 %v1929, %v1926
    %1931 = vset.pattern.permute.xlu0 61
    %1932 = vperm.xlu0 %1931, %v120
    %v1933 = vpop.permute.xlu0 %1932
    %v1935 = vlaneseq
    %v1936 = vshrl.u32 %v1935, 7
    %v1937 = vsub.s32 5, %v1936
    %v1938 = vrot.slane %v152, %v1937
    %v1939 = vadd.f32 %v1933, %v1938
    %v1940 = vrcp.pop %v1939
    %v1941 = vpack.c.bf16 %v1940, %v1940
    %1942 = vset.pattern.permute.xlu0 61
    %1943 = vperm.xlu0 %1942, %v93
    %v1944 = vpop.permute.xlu0 %1943
    %v1946 = vlaneseq
    %v1947 = vshrl.u32 %v1946, 7
    %v1948 = vsub.s32 6, %v1947
    %v1949 = vrot.slane %v1604, %v1948
    %v1950 = vsub.bf16 %v1944, %v1949
    %v1951 = vpack.c.bf16 %v1939, %v1939
    %v1952 = vlog2.bf16.pop %v1951
    %v1954 = vmul.bf16 %v1952, 1060192049
    %v1955 = vmul.bf16 %v1950, %v1950
    %v1956 = vmul.bf16 %v1955, %v1941
    %v1957 = vadd.bf16 %v1930, %v1956
    %v1958 = vadd.bf16 %v1957, %v1954
    %1959 = vset.pattern.permute.xlu0 62
    %1960 = vperm.xlu0 %1959, %v120
    %v1961 = vpop.permute.xlu0 %1960
    %v1963 = vlaneseq
    %v1964 = vshrl.u32 %v1963, 7
    %v1965 = vsub.s32 6, %v1964
    %v1966 = vrot.slane %v152, %v1965
    %v1967 = vadd.f32 %v1961, %v1966
    %v1968 = vrcp.pop %v1967
    %v1969 = vpack.c.bf16 %v1968, %v1968
    %1970 = vset.pattern.permute.xlu0 62
    %1971 = vperm.xlu0 %1970, %v93
    %v1972 = vpop.permute.xlu0 %1971
    %v1974 = vlaneseq
    %v1975 = vshrl.u32 %v1974, 7
    %v1976 = vsub.s32 7, %v1975
    %v1977 = vrot.slane %v1573, %v1976
    %v1978 = vsub.bf16 %v1972, %v1977
    %v1979 = vpack.c.bf16 %v1967, %v1967
    %v1980 = vlog2.bf16.pop %v1979
    %v1982 = vmul.bf16 %v1980, 1060192049
    %v1983 = vmul.bf16 %v1978, %v1978
    %v1984 = vmul.bf16 %v1983, %v1969
    %v1985 = vadd.bf16 %v1958, %v1984
    %v1986 = vadd.bf16 %v1985, %v1982
    %1987 = vset.pattern.permute.xlu0 63
    %1988 = vperm.xlu0 %1987, %v120
    %v1989 = vpop.permute.xlu0 %1988
    %v1991 = vlaneseq
    %v1992 = vshrl.u32 %v1991, 7
    %v1993 = vsub.s32 7, %v1992
    %v1994 = vrot.slane %v152, %v1993
    %v1995 = vadd.f32 %v1989, %v1994
    %v1996 = vrcp.pop %v1995
    %v1997 = vpack.c.bf16 %v1996, %v1996
    %1998 = vset.pattern.permute.xlu0 63
    %1999 = vperm.xlu0 %1998, %v93
    %v2000 = vpop.permute.xlu0 %1999
    %v2002 = vlaneseq
    %v2003 = vshrl.u32 %v2002, 7
    %v2004 = vsub.s32 7, %v2003
    %v2005 = vrot.slane %v1604, %v2004
    %v2006 = vsub.bf16 %v2000, %v2005
    %v2007 = vpack.c.bf16 %v1995, %v1995
    %v2008 = vlog2.bf16.pop %v2007
    %v2010 = vmul.bf16 %v2008, 1060192049
    %v2011 = vmul.bf16 %v2006, %v2006
    %v2012 = vmul.bf16 %v2011, %v1997
    %v2013 = vadd.bf16 %v1986, %v2012
    %v2014 = vadd.bf16 %v2013, %v2010
    %v2015 = vld [vmem:[#allocation10] sm:$0xff]
    %v2016 = vunpack.c.l.bf16 %v2014
    %v2017 = vadd.f32 %v2015, %v2016
    %2018 = vst [vmem:[#allocation10] sm:$0xff] %v2017
    %2019 = vset.pattern.permute.xlu0 64
    %2020 = vperm.xlu0 %2019, %v120
    %v2021 = vpop.permute.xlu0 %2020
    %v2023 = vlaneseq
    %v2024 = vshrl.u32 %v2023, 7
    %v2025 = vsub.s32 0, %v2024
    %v2026 = vrot.slane %v154, %v2025
    %v2027 = vadd.f32 %v2021, %v2026
    %v2028 = vrcp.pop %v2027
    %v2029 = vpack.c.bf16 %v2028, %v2028
    %2030 = vset.pattern.permute.xlu0 64
    %2031 = vperm.xlu0 %2030, %v93
    %v2032 = vpop.permute.xlu0 %2031
    %v2035 = vpack.i.b16 %v114, %v114
    %v2037 = vlaneseq
    %v2038 = vshrl.u32 %v2037, 7
    %v2039 = vsub.s32 0, %v2038
    %v2040 = vrot.slane %v2035, %v2039
    %v2041 = vsub.bf16 %v2032, %v2040
    %v2042 = vpack.c.bf16 %v2027, %v2027
    %v2043 = vlog2.bf16.pop %v2042
    %v2045 = vmul.bf16 %v2043, 1060192049
    %v2046 = vmul.bf16 %v2041, %v2041
    %v2047 = vmul.bf16 %v2046, %v2029
    %v2048 = vadd.bf16 %v2047, 0
    %v2049 = vadd.bf16 %v2048, %v2045
    %2050 = vset.pattern.permute.xlu0 65
    %2051 = vperm.xlu0 %2050, %v120
    %v2052 = vpop.permute.xlu0 %2051
    %v2054 = vlaneseq
    %v2055 = vshrl.u32 %v2054, 7
    %v2056 = vsub.s32 1, %v2055
    %v2057 = vrot.slane %v154, %v2056
    %v2058 = vadd.f32 %v2052, %v2057
    %v2059 = vrcp.pop %v2058
    %v2060 = vpack.c.bf16 %v2059, %v2059
    %2061 = vset.pattern.permute.xlu0 65
    %2062 = vperm.xlu0 %2061, %v93
    %v2063 = vpop.permute.xlu0 %2062
    %v2065 = vshrl.u32 %v114, 16
    %v2066 = vpack.i.b16 %v2065, %v2065
    %v2068 = vlaneseq
    %v2069 = vshrl.u32 %v2068, 7
    %v2070 = vsub.s32 0, %v2069
    %v2071 = vrot.slane %v2066, %v2070
    %v2072 = vsub.bf16 %v2063, %v2071
    %v2073 = vpack.c.bf16 %v2058, %v2058
    %v2074 = vlog2.bf16.pop %v2073
    %v2076 = vmul.bf16 %v2074, 1060192049
    %v2077 = vmul.bf16 %v2072, %v2072
    %v2078 = vmul.bf16 %v2077, %v2060
    %v2079 = vadd.bf16 %v2049, %v2078
    %v2080 = vadd.bf16 %v2079, %v2076
    %2081 = vset.pattern.permute.xlu0 66
    %2082 = vperm.xlu0 %2081, %v120
    %v2083 = vpop.permute.xlu0 %2082
    %v2085 = vlaneseq
    %v2086 = vshrl.u32 %v2085, 7
    %v2087 = vsub.s32 2, %v2086
    %v2088 = vrot.slane %v154, %v2087
    %v2089 = vadd.f32 %v2083, %v2088
    %v2090 = vrcp.pop %v2089
    %v2091 = vpack.c.bf16 %v2090, %v2090
    %2092 = vset.pattern.permute.xlu0 66
    %2093 = vperm.xlu0 %2092, %v93
    %v2094 = vpop.permute.xlu0 %2093
    %v2096 = vlaneseq
    %v2097 = vshrl.u32 %v2096, 7
    %v2098 = vsub.s32 1, %v2097
    %v2099 = vrot.slane %v2035, %v2098
    %v2100 = vsub.bf16 %v2094, %v2099
    %v2101 = vpack.c.bf16 %v2089, %v2089
    %v2102 = vlog2.bf16.pop %v2101
    %v2104 = vmul.bf16 %v2102, 1060192049
    %v2105 = vmul.bf16 %v2100, %v2100
    %v2106 = vmul.bf16 %v2105, %v2091
    %v2107 = vadd.bf16 %v2080, %v2106
    %v2108 = vadd.bf16 %v2107, %v2104
    %2109 = vset.pattern.permute.xlu0 67
    %2110 = vperm.xlu0 %2109, %v120
    %v2111 = vpop.permute.xlu0 %2110
    %v2113 = vlaneseq
    %v2114 = vshrl.u32 %v2113, 7
    %v2115 = vsub.s32 3, %v2114
    %v2116 = vrot.slane %v154, %v2115
    %v2117 = vadd.f32 %v2111, %v2116
    %v2118 = vrcp.pop %v2117
    %v2119 = vpack.c.bf16 %v2118, %v2118
    %2120 = vset.pattern.permute.xlu0 67
    %2121 = vperm.xlu0 %2120, %v93
    %v2122 = vpop.permute.xlu0 %2121
    %v2124 = vlaneseq
    %v2125 = vshrl.u32 %v2124, 7
    %v2126 = vsub.s32 1, %v2125
    %v2127 = vrot.slane %v2066, %v2126
    %v2128 = vsub.bf16 %v2122, %v2127
    %v2129 = vpack.c.bf16 %v2117, %v2117
    %v2130 = vlog2.bf16.pop %v2129
    %v2132 = vmul.bf16 %v2130, 1060192049
    %v2133 = vmul.bf16 %v2128, %v2128
    %v2134 = vmul.bf16 %v2133, %v2119
    %v2135 = vadd.bf16 %v2108, %v2134
    %v2136 = vadd.bf16 %v2135, %v2132
    %2137 = vset.pattern.permute.xlu0 68
    %2138 = vperm.xlu0 %2137, %v120
    %v2139 = vpop.permute.xlu0 %2138
    %v2141 = vlaneseq
    %v2142 = vshrl.u32 %v2141, 7
    %v2143 = vsub.s32 4, %v2142
    %v2144 = vrot.slane %v154, %v2143
    %v2145 = vadd.f32 %v2139, %v2144
    %v2146 = vrcp.pop %v2145
    %v2147 = vpack.c.bf16 %v2146, %v2146
    %2148 = vset.pattern.permute.xlu0 68
    %2149 = vperm.xlu0 %2148, %v93
    %v2150 = vpop.permute.xlu0 %2149
    %v2152 = vlaneseq
    %v2153 = vshrl.u32 %v2152, 7
    %v2154 = vsub.s32 2, %v2153
    %v2155 = vrot.slane %v2035, %v2154
    %v2156 = vsub.bf16 %v2150, %v2155
    %v2157 = vpack.c.bf16 %v2145, %v2145
    %v2158 = vlog2.bf16.pop %v2157
    %v2160 = vmul.bf16 %v2158, 1060192049
    %v2161 = vmul.bf16 %v2156, %v2156
    %v2162 = vmul.bf16 %v2161, %v2147
    %v2163 = vadd.bf16 %v2136, %v2162
    %v2164 = vadd.bf16 %v2163, %v2160
    %2165 = vset.pattern.permute.xlu0 69
    %2166 = vperm.xlu0 %2165, %v120
    %v2167 = vpop.permute.xlu0 %2166
    %v2169 = vlaneseq
    %v2170 = vshrl.u32 %v2169, 7
    %v2171 = vsub.s32 5, %v2170
    %v2172 = vrot.slane %v154, %v2171
    %v2173 = vadd.f32 %v2167, %v2172
    %v2174 = vrcp.pop %v2173
    %v2175 = vpack.c.bf16 %v2174, %v2174
    %2176 = vset.pattern.permute.xlu0 69
    %2177 = vperm.xlu0 %2176, %v93
    %v2178 = vpop.permute.xlu0 %2177
    %v2180 = vlaneseq
    %v2181 = vshrl.u32 %v2180, 7
    %v2182 = vsub.s32 2, %v2181
    %v2183 = vrot.slane %v2066, %v2182
    %v2184 = vsub.bf16 %v2178, %v2183
    %v2185 = vpack.c.bf16 %v2173, %v2173
    %v2186 = vlog2.bf16.pop %v2185
    %v2188 = vmul.bf16 %v2186, 1060192049
    %v2189 = vmul.bf16 %v2184, %v2184
    %v2190 = vmul.bf16 %v2189, %v2175
    %v2191 = vadd.bf16 %v2164, %v2190
    %v2192 = vadd.bf16 %v2191, %v2188
    %2193 = vset.pattern.permute.xlu0 70
    %2194 = vperm.xlu0 %2193, %v120
    %v2195 = vpop.permute.xlu0 %2194
    %v2197 = vlaneseq
    %v2198 = vshrl.u32 %v2197, 7
    %v2199 = vsub.s32 6, %v2198
    %v2200 = vrot.slane %v154, %v2199
    %v2201 = vadd.f32 %v2195, %v2200
    %v2202 = vrcp.pop %v2201
    %v2203 = vpack.c.bf16 %v2202, %v2202
    %2204 = vset.pattern.permute.xlu0 70
    %2205 = vperm.xlu0 %2204, %v93
    %v2206 = vpop.permute.xlu0 %2205
    %v2208 = vlaneseq
    %v2209 = vshrl.u32 %v2208, 7
    %v2210 = vsub.s32 3, %v2209
    %v2211 = vrot.slane %v2035, %v2210
    %v2212 = vsub.bf16 %v2206, %v2211
    %v2213 = vpack.c.bf16 %v2201, %v2201
    %v2214 = vlog2.bf16.pop %v2213
    %v2216 = vmul.bf16 %v2214, 1060192049
    %v2217 = vmul.bf16 %v2212, %v2212
    %v2218 = vmul.bf16 %v2217, %v2203
    %v2219 = vadd.bf16 %v2192, %v2218
    %v2220 = vadd.bf16 %v2219, %v2216
    %2221 = vset.pattern.permute.xlu0 71
    %2222 = vperm.xlu0 %2221, %v120
    %v2223 = vpop.permute.xlu0 %2222
    %v2225 = vlaneseq
    %v2226 = vshrl.u32 %v2225, 7
    %v2227 = vsub.s32 7, %v2226
    %v2228 = vrot.slane %v154, %v2227
    %v2229 = vadd.f32 %v2223, %v2228
    %v2230 = vrcp.pop %v2229
    %v2231 = vpack.c.bf16 %v2230, %v2230
    %2232 = vset.pattern.permute.xlu0 71
    %2233 = vperm.xlu0 %2232, %v93
    %v2234 = vpop.permute.xlu0 %2233
    %v2236 = vlaneseq
    %v2237 = vshrl.u32 %v2236, 7
    %v2238 = vsub.s32 3, %v2237
    %v2239 = vrot.slane %v2066, %v2238
    %v2240 = vsub.bf16 %v2234, %v2239
    %v2241 = vpack.c.bf16 %v2229, %v2229
    %v2242 = vlog2.bf16.pop %v2241
    %v2244 = vmul.bf16 %v2242, 1060192049
    %v2245 = vmul.bf16 %v2240, %v2240
    %v2246 = vmul.bf16 %v2245, %v2231
    %v2247 = vadd.bf16 %v2220, %v2246
    %v2248 = vadd.bf16 %v2247, %v2244
    %v2249 = vld [vmem:[#allocation10] sm:$0xff]
    %v2250 = vunpack.c.l.bf16 %v2248
    %v2251 = vadd.f32 %v2249, %v2250
    %2252 = vst [vmem:[#allocation10] sm:$0xff] %v2251
    %2253 = vset.pattern.permute.xlu0 72
    %2254 = vperm.xlu0 %2253, %v120
    %v2255 = vpop.permute.xlu0 %2254
    %v2257 = vlaneseq
    %v2258 = vshrl.u32 %v2257, 7
    %v2259 = vsub.s32 0, %v2258
    %v2260 = vrot.slane %v156, %v2259
    %v2261 = vadd.f32 %v2255, %v2260
    %v2262 = vrcp.pop %v2261
    %v2263 = vpack.c.bf16 %v2262, %v2262
    %2264 = vset.pattern.permute.xlu0 72
    %2265 = vperm.xlu0 %2264, %v93
    %v2266 = vpop.permute.xlu0 %2265
    %v2268 = vlaneseq
    %v2269 = vshrl.u32 %v2268, 7
    %v2270 = vsub.s32 4, %v2269
    %v2271 = vrot.slane %v2035, %v2270
    %v2272 = vsub.bf16 %v2266, %v2271
    %v2273 = vpack.c.bf16 %v2261, %v2261
    %v2274 = vlog2.bf16.pop %v2273
    %v2276 = vmul.bf16 %v2274, 1060192049
    %v2277 = vmul.bf16 %v2272, %v2272
    %v2278 = vmul.bf16 %v2277, %v2263
    %v2279 = vadd.bf16 %v2278, 0
    %v2280 = vadd.bf16 %v2279, %v2276
    %2281 = vset.pattern.permute.xlu0 73
    %2282 = vperm.xlu0 %2281, %v120
    %v2283 = vpop.permute.xlu0 %2282
    %v2285 = vlaneseq
    %v2286 = vshrl.u32 %v2285, 7
    %v2287 = vsub.s32 1, %v2286
    %v2288 = vrot.slane %v156, %v2287
    %v2289 = vadd.f32 %v2283, %v2288
    %v2290 = vrcp.pop %v2289
    %v2291 = vpack.c.bf16 %v2290, %v2290
    %2292 = vset.pattern.permute.xlu0 73
    %2293 = vperm.xlu0 %2292, %v93
    %v2294 = vpop.permute.xlu0 %2293
    %v2296 = vlaneseq
    %v2297 = vshrl.u32 %v2296, 7
    %v2298 = vsub.s32 4, %v2297
    %v2299 = vrot.slane %v2066, %v2298
    %v2300 = vsub.bf16 %v2294, %v2299
    %v2301 = vpack.c.bf16 %v2289, %v2289
    %v2302 = vlog2.bf16.pop %v2301
    %v2304 = vmul.bf16 %v2302, 1060192049
    %v2305 = vmul.bf16 %v2300, %v2300
    %v2306 = vmul.bf16 %v2305, %v2291
    %v2307 = vadd.bf16 %v2280, %v2306
    %v2308 = vadd.bf16 %v2307, %v2304
    %2309 = vset.pattern.permute.xlu0 74
    %2310 = vperm.xlu0 %2309, %v120
    %v2311 = vpop.permute.xlu0 %2310
    %v2313 = vlaneseq
    %v2314 = vshrl.u32 %v2313, 7
    %v2315 = vsub.s32 2, %v2314
    %v2316 = vrot.slane %v156, %v2315
    %v2317 = vadd.f32 %v2311, %v2316
    %v2318 = vrcp.pop %v2317
    %v2319 = vpack.c.bf16 %v2318, %v2318
    %2320 = vset.pattern.permute.xlu0 74
    %2321 = vperm.xlu0 %2320, %v93
    %v2322 = vpop.permute.xlu0 %2321
    %v2324 = vlaneseq
    %v2325 = vshrl.u32 %v2324, 7
    %v2326 = vsub.s32 5, %v2325
    %v2327 = vrot.slane %v2035, %v2326
    %v2328 = vsub.bf16 %v2322, %v2327
    %v2329 = vpack.c.bf16 %v2317, %v2317
    %v2330 = vlog2.bf16.pop %v2329
    %v2332 = vmul.bf16 %v2330, 1060192049
    %v2333 = vmul.bf16 %v2328, %v2328
    %v2334 = vmul.bf16 %v2333, %v2319
    %v2335 = vadd.bf16 %v2308, %v2334
    %v2336 = vadd.bf16 %v2335, %v2332
    %2337 = vset.pattern.permute.xlu0 75
    %2338 = vperm.xlu0 %2337, %v120
    %v2339 = vpop.permute.xlu0 %2338
    %v2341 = vlaneseq
    %v2342 = vshrl.u32 %v2341, 7
    %v2343 = vsub.s32 3, %v2342
    %v2344 = vrot.slane %v156, %v2343
    %v2345 = vadd.f32 %v2339, %v2344
    %v2346 = vrcp.pop %v2345
    %v2347 = vpack.c.bf16 %v2346, %v2346
    %2348 = vset.pattern.permute.xlu0 75
    %2349 = vperm.xlu0 %2348, %v93
    %v2350 = vpop.permute.xlu0 %2349
    %v2352 = vlaneseq
    %v2353 = vshrl.u32 %v2352, 7
    %v2354 = vsub.s32 5, %v2353
    %v2355 = vrot.slane %v2066, %v2354
    %v2356 = vsub.bf16 %v2350, %v2355
    %v2357 = vpack.c.bf16 %v2345, %v2345
    %v2358 = vlog2.bf16.pop %v2357
    %v2360 = vmul.bf16 %v2358, 1060192049
    %v2361 = vmul.bf16 %v2356, %v2356
    %v2362 = vmul.bf16 %v2361, %v2347
    %v2363 = vadd.bf16 %v2336, %v2362
    %v2364 = vadd.bf16 %v2363, %v2360
    %2365 = vset.pattern.permute.xlu0 76
    %2366 = vperm.xlu0 %2365, %v120
    %v2367 = vpop.permute.xlu0 %2366
    %v2369 = vlaneseq
    %v2370 = vshrl.u32 %v2369, 7
    %v2371 = vsub.s32 4, %v2370
    %v2372 = vrot.slane %v156, %v2371
    %v2373 = vadd.f32 %v2367, %v2372
    %v2374 = vrcp.pop %v2373
    %v2375 = vpack.c.bf16 %v2374, %v2374
    %2376 = vset.pattern.permute.xlu0 76
    %2377 = vperm.xlu0 %2376, %v93
    %v2378 = vpop.permute.xlu0 %2377
    %v2380 = vlaneseq
    %v2381 = vshrl.u32 %v2380, 7
    %v2382 = vsub.s32 6, %v2381
    %v2383 = vrot.slane %v2035, %v2382
    %v2384 = vsub.bf16 %v2378, %v2383
    %v2385 = vpack.c.bf16 %v2373, %v2373
    %v2386 = vlog2.bf16.pop %v2385
    %v2388 = vmul.bf16 %v2386, 1060192049
    %v2389 = vmul.bf16 %v2384, %v2384
    %v2390 = vmul.bf16 %v2389, %v2375
    %v2391 = vadd.bf16 %v2364, %v2390
    %v2392 = vadd.bf16 %v2391, %v2388
    %2393 = vset.pattern.permute.xlu0 77
    %2394 = vperm.xlu0 %2393, %v120
    %v2395 = vpop.permute.xlu0 %2394
    %v2397 = vlaneseq
    %v2398 = vshrl.u32 %v2397, 7
    %v2399 = vsub.s32 5, %v2398
    %v2400 = vrot.slane %v156, %v2399
    %v2401 = vadd.f32 %v2395, %v2400
    %v2402 = vrcp.pop %v2401
    %v2403 = vpack.c.bf16 %v2402, %v2402
    %2404 = vset.pattern.permute.xlu0 77
    %2405 = vperm.xlu0 %2404, %v93
    %v2406 = vpop.permute.xlu0 %2405
    %v2408 = vlaneseq
    %v2409 = vshrl.u32 %v2408, 7
    %v2410 = vsub.s32 6, %v2409
    %v2411 = vrot.slane %v2066, %v2410
    %v2412 = vsub.bf16 %v2406, %v2411
    %v2413 = vpack.c.bf16 %v2401, %v2401
    %v2414 = vlog2.bf16.pop %v2413
    %v2416 = vmul.bf16 %v2414, 1060192049
    %v2417 = vmul.bf16 %v2412, %v2412
    %v2418 = vmul.bf16 %v2417, %v2403
    %v2419 = vadd.bf16 %v2392, %v2418
    %v2420 = vadd.bf16 %v2419, %v2416
    %2421 = vset.pattern.permute.xlu0 78
    %2422 = vperm.xlu0 %2421, %v120
    %v2423 = vpop.permute.xlu0 %2422
    %v2425 = vlaneseq
    %v2426 = vshrl.u32 %v2425, 7
    %v2427 = vsub.s32 6, %v2426
    %v2428 = vrot.slane %v156, %v2427
    %v2429 = vadd.f32 %v2423, %v2428
    %v2430 = vrcp.pop %v2429
    %v2431 = vpack.c.bf16 %v2430, %v2430
    %2432 = vset.pattern.permute.xlu0 78
    %2433 = vperm.xlu0 %2432, %v93
    %v2434 = vpop.permute.xlu0 %2433
    %v2436 = vlaneseq
    %v2437 = vshrl.u32 %v2436, 7
    %v2438 = vsub.s32 7, %v2437
    %v2439 = vrot.slane %v2035, %v2438
    %v2440 = vsub.bf16 %v2434, %v2439
    %v2441 = vpack.c.bf16 %v2429, %v2429
    %v2442 = vlog2.bf16.pop %v2441
    %v2444 = vmul.bf16 %v2442, 1060192049
    %v2445 = vmul.bf16 %v2440, %v2440
    %v2446 = vmul.bf16 %v2445, %v2431
    %v2447 = vadd.bf16 %v2420, %v2446
    %v2448 = vadd.bf16 %v2447, %v2444
    %2449 = vset.pattern.permute.xlu0 79
    %2450 = vperm.xlu0 %2449, %v120
    %v2451 = vpop.permute.xlu0 %2450
    %v2453 = vlaneseq
    %v2454 = vshrl.u32 %v2453, 7
    %v2455 = vsub.s32 7, %v2454
    %v2456 = vrot.slane %v156, %v2455
    %v2457 = vadd.f32 %v2451, %v2456
    %v2458 = vrcp.pop %v2457
    %v2459 = vpack.c.bf16 %v2458, %v2458
    %2460 = vset.pattern.permute.xlu0 79
    %2461 = vperm.xlu0 %2460, %v93
    %v2462 = vpop.permute.xlu0 %2461
    %v2464 = vlaneseq
    %v2465 = vshrl.u32 %v2464, 7
    %v2466 = vsub.s32 7, %v2465
    %v2467 = vrot.slane %v2066, %v2466
    %v2468 = vsub.bf16 %v2462, %v2467
    %v2469 = vpack.c.bf16 %v2457, %v2457
    %v2470 = vlog2.bf16.pop %v2469
    %v2472 = vmul.bf16 %v2470, 1060192049
    %v2473 = vmul.bf16 %v2468, %v2468
    %v2474 = vmul.bf16 %v2473, %v2459
    %v2475 = vadd.bf16 %v2448, %v2474
    %v2476 = vadd.bf16 %v2475, %v2472
    %v2477 = vld [vmem:[#allocation10] sm:$0xff]
    %v2478 = vunpack.c.l.bf16 %v2476
    %v2479 = vadd.f32 %v2477, %v2478
    %2480 = vst [vmem:[#allocation10] sm:$0xff] %v2479
    %2481 = vset.pattern.permute.xlu0 80
    %2482 = vperm.xlu0 %2481, %v120
    %v2483 = vpop.permute.xlu0 %2482
    %v2485 = vlaneseq
    %v2486 = vshrl.u32 %v2485, 7
    %v2487 = vsub.s32 0, %v2486
    %v2488 = vrot.slane %v158, %v2487
    %v2489 = vadd.f32 %v2483, %v2488
    %v2490 = vrcp.pop %v2489
    %v2491 = vpack.c.bf16 %v2490, %v2490
    %2492 = vset.pattern.permute.xlu0 80
    %2493 = vperm.xlu0 %2492, %v93
    %v2494 = vpop.permute.xlu0 %2493
    %v2497 = vpack.i.b16 %v115, %v115
    %v2499 = vlaneseq
    %v2500 = vshrl.u32 %v2499, 7
    %v2501 = vsub.s32 0, %v2500
    %v2502 = vrot.slane %v2497, %v2501
    %v2503 = vsub.bf16 %v2494, %v2502
    %v2504 = vpack.c.bf16 %v2489, %v2489
    %v2505 = vlog2.bf16.pop %v2504
    %v2507 = vmul.bf16 %v2505, 1060192049
    %v2508 = vmul.bf16 %v2503, %v2503
    %v2509 = vmul.bf16 %v2508, %v2491
    %v2510 = vadd.bf16 %v2509, 0
    %v2511 = vadd.bf16 %v2510, %v2507
    %2512 = vset.pattern.permute.xlu0 81
    %2513 = vperm.xlu0 %2512, %v120
    %v2514 = vpop.permute.xlu0 %2513
    %v2516 = vlaneseq
    %v2517 = vshrl.u32 %v2516, 7
    %v2518 = vsub.s32 1, %v2517
    %v2519 = vrot.slane %v158, %v2518
    %v2520 = vadd.f32 %v2514, %v2519
    %v2521 = vrcp.pop %v2520
    %v2522 = vpack.c.bf16 %v2521, %v2521
    %2523 = vset.pattern.permute.xlu0 81
    %2524 = vperm.xlu0 %2523, %v93
    %v2525 = vpop.permute.xlu0 %2524
    %v2527 = vshrl.u32 %v115, 16
    %v2528 = vpack.i.b16 %v2527, %v2527
    %v2530 = vlaneseq
    %v2531 = vshrl.u32 %v2530, 7
    %v2532 = vsub.s32 0, %v2531
    %v2533 = vrot.slane %v2528, %v2532
    %v2534 = vsub.bf16 %v2525, %v2533
    %v2535 = vpack.c.bf16 %v2520, %v2520
    %v2536 = vlog2.bf16.pop %v2535
    %v2538 = vmul.bf16 %v2536, 1060192049
    %v2539 = vmul.bf16 %v2534, %v2534
    %v2540 = vmul.bf16 %v2539, %v2522
    %v2541 = vadd.bf16 %v2511, %v2540
    %v2542 = vadd.bf16 %v2541, %v2538
    %2543 = vset.pattern.permute.xlu0 82
    %2544 = vperm.xlu0 %2543, %v120
    %v2545 = vpop.permute.xlu0 %2544
    %v2547 = vlaneseq
    %v2548 = vshrl.u32 %v2547, 7
    %v2549 = vsub.s32 2, %v2548
    %v2550 = vrot.slane %v158, %v2549
    %v2551 = vadd.f32 %v2545, %v2550
    %v2552 = vrcp.pop %v2551
    %v2553 = vpack.c.bf16 %v2552, %v2552
    %2554 = vset.pattern.permute.xlu0 82
    %2555 = vperm.xlu0 %2554, %v93
    %v2556 = vpop.permute.xlu0 %2555
    %v2558 = vlaneseq
    %v2559 = vshrl.u32 %v2558, 7
    %v2560 = vsub.s32 1, %v2559
    %v2561 = vrot.slane %v2497, %v2560
    %v2562 = vsub.bf16 %v2556, %v2561
    %v2563 = vpack.c.bf16 %v2551, %v2551
    %v2564 = vlog2.bf16.pop %v2563
    %v2566 = vmul.bf16 %v2564, 1060192049
    %v2567 = vmul.bf16 %v2562, %v2562
    %v2568 = vmul.bf16 %v2567, %v2553
    %v2569 = vadd.bf16 %v2542, %v2568
    %v2570 = vadd.bf16 %v2569, %v2566
    %2571 = vset.pattern.permute.xlu0 83
    %2572 = vperm.xlu0 %2571, %v120
    %v2573 = vpop.permute.xlu0 %2572
    %v2575 = vlaneseq
    %v2576 = vshrl.u32 %v2575, 7
    %v2577 = vsub.s32 3, %v2576
    %v2578 = vrot.slane %v158, %v2577
    %v2579 = vadd.f32 %v2573, %v2578
    %v2580 = vrcp.pop %v2579
    %v2581 = vpack.c.bf16 %v2580, %v2580
    %2582 = vset.pattern.permute.xlu0 83
    %2583 = vperm.xlu0 %2582, %v93
    %v2584 = vpop.permute.xlu0 %2583
    %v2586 = vlaneseq
    %v2587 = vshrl.u32 %v2586, 7
    %v2588 = vsub.s32 1, %v2587
    %v2589 = vrot.slane %v2528, %v2588
    %v2590 = vsub.bf16 %v2584, %v2589
    %v2591 = vpack.c.bf16 %v2579, %v2579
    %v2592 = vlog2.bf16.pop %v2591
    %v2594 = vmul.bf16 %v2592, 1060192049
    %v2595 = vmul.bf16 %v2590, %v2590
    %v2596 = vmul.bf16 %v2595, %v2581
    %v2597 = vadd.bf16 %v2570, %v2596
    %v2598 = vadd.bf16 %v2597, %v2594
    %2599 = vset.pattern.permute.xlu0 84
    %2600 = vperm.xlu0 %2599, %v120
    %v2601 = vpop.permute.xlu0 %2600
    %v2603 = vlaneseq
    %v2604 = vshrl.u32 %v2603, 7
    %v2605 = vsub.s32 4, %v2604
    %v2606 = vrot.slane %v158, %v2605
    %v2607 = vadd.f32 %v2601, %v2606
    %v2608 = vrcp.pop %v2607
    %v2609 = vpack.c.bf16 %v2608, %v2608
    %2610 = vset.pattern.permute.xlu0 84
    %2611 = vperm.xlu0 %2610, %v93
    %v2612 = vpop.permute.xlu0 %2611
    %v2614 = vlaneseq
    %v2615 = vshrl.u32 %v2614, 7
    %v2616 = vsub.s32 2, %v2615
    %v2617 = vrot.slane %v2497, %v2616
    %v2618 = vsub.bf16 %v2612, %v2617
    %v2619 = vpack.c.bf16 %v2607, %v2607
    %v2620 = vlog2.bf16.pop %v2619
    %v2622 = vmul.bf16 %v2620, 1060192049
    %v2623 = vmul.bf16 %v2618, %v2618
    %v2624 = vmul.bf16 %v2623, %v2609
    %v2625 = vadd.bf16 %v2598, %v2624
    %v2626 = vadd.bf16 %v2625, %v2622
    %2627 = vset.pattern.permute.xlu0 85
    %2628 = vperm.xlu0 %2627, %v120
    %v2629 = vpop.permute.xlu0 %2628
    %v2631 = vlaneseq
    %v2632 = vshrl.u32 %v2631, 7
    %v2633 = vsub.s32 5, %v2632
    %v2634 = vrot.slane %v158, %v2633
    %v2635 = vadd.f32 %v2629, %v2634
    %v2636 = vrcp.pop %v2635
    %v2637 = vpack.c.bf16 %v2636, %v2636
    %2638 = vset.pattern.permute.xlu0 85
    %2639 = vperm.xlu0 %2638, %v93
    %v2640 = vpop.permute.xlu0 %2639
    %v2642 = vlaneseq
    %v2643 = vshrl.u32 %v2642, 7
    %v2644 = vsub.s32 2, %v2643
    %v2645 = vrot.slane %v2528, %v2644
    %v2646 = vsub.bf16 %v2640, %v2645
    %v2647 = vpack.c.bf16 %v2635, %v2635
    %v2648 = vlog2.bf16.pop %v2647
    %v2650 = vmul.bf16 %v2648, 1060192049
    %v2651 = vmul.bf16 %v2646, %v2646
    %v2652 = vmul.bf16 %v2651, %v2637
    %v2653 = vadd.bf16 %v2626, %v2652
    %v2654 = vadd.bf16 %v2653, %v2650
    %2655 = vset.pattern.permute.xlu0 86
    %2656 = vperm.xlu0 %2655, %v120
    %v2657 = vpop.permute.xlu0 %2656
    %v2659 = vlaneseq
    %v2660 = vshrl.u32 %v2659, 7
    %v2661 = vsub.s32 6, %v2660
    %v2662 = vrot.slane %v158, %v2661
    %v2663 = vadd.f32 %v2657, %v2662
    %v2664 = vrcp.pop %v2663
    %v2665 = vpack.c.bf16 %v2664, %v2664
    %2666 = vset.pattern.permute.xlu0 86
    %2667 = vperm.xlu0 %2666, %v93
    %v2668 = vpop.permute.xlu0 %2667
    %v2670 = vlaneseq
    %v2671 = vshrl.u32 %v2670, 7
    %v2672 = vsub.s32 3, %v2671
    %v2673 = vrot.slane %v2497, %v2672
    %v2674 = vsub.bf16 %v2668, %v2673
    %v2675 = vpack.c.bf16 %v2663, %v2663
    %v2676 = vlog2.bf16.pop %v2675
    %v2678 = vmul.bf16 %v2676, 1060192049
    %v2679 = vmul.bf16 %v2674, %v2674
    %v2680 = vmul.bf16 %v2679, %v2665
    %v2681 = vadd.bf16 %v2654, %v2680
    %v2682 = vadd.bf16 %v2681, %v2678
    %2683 = vset.pattern.permute.xlu0 87
    %2684 = vperm.xlu0 %2683, %v120
    %v2685 = vpop.permute.xlu0 %2684
    %v2687 = vlaneseq
    %v2688 = vshrl.u32 %v2687, 7
    %v2689 = vsub.s32 7, %v2688
    %v2690 = vrot.slane %v158, %v2689
    %v2691 = vadd.f32 %v2685, %v2690
    %v2692 = vrcp.pop %v2691
    %v2693 = vpack.c.bf16 %v2692, %v2692
    %2694 = vset.pattern.permute.xlu0 87
    %2695 = vperm.xlu0 %2694, %v93
    %v2696 = vpop.permute.xlu0 %2695
    %v2698 = vlaneseq
    %v2699 = vshrl.u32 %v2698, 7
    %v2700 = vsub.s32 3, %v2699
    %v2701 = vrot.slane %v2528, %v2700
    %v2702 = vsub.bf16 %v2696, %v2701
    %v2703 = vpack.c.bf16 %v2691, %v2691
    %v2704 = vlog2.bf16.pop %v2703
    %v2706 = vmul.bf16 %v2704, 1060192049
    %v2707 = vmul.bf16 %v2702, %v2702
    %v2708 = vmul.bf16 %v2707, %v2693
    %v2709 = vadd.bf16 %v2682, %v2708
    %v2710 = vadd.bf16 %v2709, %v2706
    %v2711 = vld [vmem:[#allocation10] sm:$0xff]
    %v2712 = vunpack.c.l.bf16 %v2710
    %v2713 = vadd.f32 %v2711, %v2712
    %2714 = vst [vmem:[#allocation10] sm:$0xff] %v2713
    %2715 = vset.pattern.permute.xlu0 88
    %2716 = vperm.xlu0 %2715, %v120
    %v2717 = vpop.permute.xlu0 %2716
    %v2719 = vlaneseq
    %v2720 = vshrl.u32 %v2719, 7
    %v2721 = vsub.s32 0, %v2720
    %v2722 = vrot.slane %v160, %v2721
    %v2723 = vadd.f32 %v2717, %v2722
    %v2724 = vrcp.pop %v2723
    %v2725 = vpack.c.bf16 %v2724, %v2724
    %2726 = vset.pattern.permute.xlu0 88
    %2727 = vperm.xlu0 %2726, %v93
    %v2728 = vpop.permute.xlu0 %2727
    %v2730 = vlaneseq
    %v2731 = vshrl.u32 %v2730, 7
    %v2732 = vsub.s32 4, %v2731
    %v2733 = vrot.slane %v2497, %v2732
    %v2734 = vsub.bf16 %v2728, %v2733
    %v2735 = vpack.c.bf16 %v2723, %v2723
    %v2736 = vlog2.bf16.pop %v2735
    %v2738 = vmul.bf16 %v2736, 1060192049
    %v2739 = vmul.bf16 %v2734, %v2734
    %v2740 = vmul.bf16 %v2739, %v2725
    %v2741 = vadd.bf16 %v2740, 0
    %v2742 = vadd.bf16 %v2741, %v2738
    %2743 = vset.pattern.permute.xlu0 89
    %2744 = vperm.xlu0 %2743, %v120
    %v2745 = vpop.permute.xlu0 %2744
    %v2747 = vlaneseq
    %v2748 = vshrl.u32 %v2747, 7
    %v2749 = vsub.s32 1, %v2748
    %v2750 = vrot.slane %v160, %v2749
    %v2751 = vadd.f32 %v2745, %v2750
    %v2752 = vrcp.pop %v2751
    %v2753 = vpack.c.bf16 %v2752, %v2752
    %2754 = vset.pattern.permute.xlu0 89
    %2755 = vperm.xlu0 %2754, %v93
    %v2756 = vpop.permute.xlu0 %2755
    %v2758 = vlaneseq
    %v2759 = vshrl.u32 %v2758, 7
    %v2760 = vsub.s32 4, %v2759
    %v2761 = vrot.slane %v2528, %v2760
    %v2762 = vsub.bf16 %v2756, %v2761
    %v2763 = vpack.c.bf16 %v2751, %v2751
    %v2764 = vlog2.bf16.pop %v2763
    %v2766 = vmul.bf16 %v2764, 1060192049
    %v2767 = vmul.bf16 %v2762, %v2762
    %v2768 = vmul.bf16 %v2767, %v2753
    %v2769 = vadd.bf16 %v2742, %v2768
    %v2770 = vadd.bf16 %v2769, %v2766
    %2771 = vset.pattern.permute.xlu0 90
    %2772 = vperm.xlu0 %2771, %v120
    %v2773 = vpop.permute.xlu0 %2772
    %v2775 = vlaneseq
    %v2776 = vshrl.u32 %v2775, 7
    %v2777 = vsub.s32 2, %v2776
    %v2778 = vrot.slane %v160, %v2777
    %v2779 = vadd.f32 %v2773, %v2778
    %v2780 = vrcp.pop %v2779
    %v2781 = vpack.c.bf16 %v2780, %v2780
    %2782 = vset.pattern.permute.xlu0 90
    %2783 = vperm.xlu0 %2782, %v93
    %v2784 = vpop.permute.xlu0 %2783
    %v2786 = vlaneseq
    %v2787 = vshrl.u32 %v2786, 7
    %v2788 = vsub.s32 5, %v2787
    %v2789 = vrot.slane %v2497, %v2788
    %v2790 = vsub.bf16 %v2784, %v2789
    %v2791 = vpack.c.bf16 %v2779, %v2779
    %v2792 = vlog2.bf16.pop %v2791
    %v2794 = vmul.bf16 %v2792, 1060192049
    %v2795 = vmul.bf16 %v2790, %v2790
    %v2796 = vmul.bf16 %v2795, %v2781
    %v2797 = vadd.bf16 %v2770, %v2796
    %v2798 = vadd.bf16 %v2797, %v2794
    %2799 = vset.pattern.permute.xlu0 91
    %2800 = vperm.xlu0 %2799, %v120
    %v2801 = vpop.permute.xlu0 %2800
    %v2803 = vlaneseq
    %v2804 = vshrl.u32 %v2803, 7
    %v2805 = vsub.s32 3, %v2804
    %v2806 = vrot.slane %v160, %v2805
    %v2807 = vadd.f32 %v2801, %v2806
    %v2808 = vrcp.pop %v2807
    %v2809 = vpack.c.bf16 %v2808, %v2808
    %2810 = vset.pattern.permute.xlu0 91
    %2811 = vperm.xlu0 %2810, %v93
    %v2812 = vpop.permute.xlu0 %2811
    %v2814 = vlaneseq
    %v2815 = vshrl.u32 %v2814, 7
    %v2816 = vsub.s32 5, %v2815
    %v2817 = vrot.slane %v2528, %v2816
    %v2818 = vsub.bf16 %v2812, %v2817
    %v2819 = vpack.c.bf16 %v2807, %v2807
    %v2820 = vlog2.bf16.pop %v2819
    %v2822 = vmul.bf16 %v2820, 1060192049
    %v2823 = vmul.bf16 %v2818, %v2818
    %v2824 = vmul.bf16 %v2823, %v2809
    %v2825 = vadd.bf16 %v2798, %v2824
    %v2826 = vadd.bf16 %v2825, %v2822
    %2827 = vset.pattern.permute.xlu0 92
    %2828 = vperm.xlu0 %2827, %v120
    %v2829 = vpop.permute.xlu0 %2828
    %v2831 = vlaneseq
    %v2832 = vshrl.u32 %v2831, 7
    %v2833 = vsub.s32 4, %v2832
    %v2834 = vrot.slane %v160, %v2833
    %v2835 = vadd.f32 %v2829, %v2834
    %v2836 = vrcp.pop %v2835
    %v2837 = vpack.c.bf16 %v2836, %v2836
    %2838 = vset.pattern.permute.xlu0 92
    %2839 = vperm.xlu0 %2838, %v93
    %v2840 = vpop.permute.xlu0 %2839
    %v2842 = vlaneseq
    %v2843 = vshrl.u32 %v2842, 7
    %v2844 = vsub.s32 6, %v2843
    %v2845 = vrot.slane %v2497, %v2844
    %v2846 = vsub.bf16 %v2840, %v2845
    %v2847 = vpack.c.bf16 %v2835, %v2835
    %v2848 = vlog2.bf16.pop %v2847
    %v2850 = vmul.bf16 %v2848, 1060192049
    %v2851 = vmul.bf16 %v2846, %v2846
    %v2852 = vmul.bf16 %v2851, %v2837
    %v2853 = vadd.bf16 %v2826, %v2852
    %v2854 = vadd.bf16 %v2853, %v2850
    %2855 = vset.pattern.permute.xlu0 93
    %2856 = vperm.xlu0 %2855, %v120
    %v2857 = vpop.permute.xlu0 %2856
    %v2859 = vlaneseq
    %v2860 = vshrl.u32 %v2859, 7
    %v2861 = vsub.s32 5, %v2860
    %v2862 = vrot.slane %v160, %v2861
    %v2863 = vadd.f32 %v2857, %v2862
    %v2864 = vrcp.pop %v2863
    %v2865 = vpack.c.bf16 %v2864, %v2864
    %2866 = vset.pattern.permute.xlu0 93
    %2867 = vperm.xlu0 %2866, %v93
    %v2868 = vpop.permute.xlu0 %2867
    %v2870 = vlaneseq
    %v2871 = vshrl.u32 %v2870, 7
    %v2872 = vsub.s32 6, %v2871
    %v2873 = vrot.slane %v2528, %v2872
    %v2874 = vsub.bf16 %v2868, %v2873
    %v2875 = vpack.c.bf16 %v2863, %v2863
    %v2876 = vlog2.bf16.pop %v2875
    %v2878 = vmul.bf16 %v2876, 1060192049
    %v2879 = vmul.bf16 %v2874, %v2874
    %v2880 = vmul.bf16 %v2879, %v2865
    %v2881 = vadd.bf16 %v2854, %v2880
    %v2882 = vadd.bf16 %v2881, %v2878
    %2883 = vset.pattern.permute.xlu0 94
    %2884 = vperm.xlu0 %2883, %v120
    %v2885 = vpop.permute.xlu0 %2884
    %v2887 = vlaneseq
    %v2888 = vshrl.u32 %v2887, 7
    %v2889 = vsub.s32 6, %v2888
    %v2890 = vrot.slane %v160, %v2889
    %v2891 = vadd.f32 %v2885, %v2890
    %v2892 = vrcp.pop %v2891
    %v2893 = vpack.c.bf16 %v2892, %v2892
    %2894 = vset.pattern.permute.xlu0 94
    %2895 = vperm.xlu0 %2894, %v93
    %v2896 = vpop.permute.xlu0 %2895
    %v2898 = vlaneseq
    %v2899 = vshrl.u32 %v2898, 7
    %v2900 = vsub.s32 7, %v2899
    %v2901 = vrot.slane %v2497, %v2900
    %v2902 = vsub.bf16 %v2896, %v2901
    %v2903 = vpack.c.bf16 %v2891, %v2891
    %v2904 = vlog2.bf16.pop %v2903
    %v2906 = vmul.bf16 %v2904, 1060192049
    %v2907 = vmul.bf16 %v2902, %v2902
    %v2908 = vmul.bf16 %v2907, %v2893
    %v2909 = vadd.bf16 %v2882, %v2908
    %v2910 = vadd.bf16 %v2909, %v2906
    %2911 = vset.pattern.permute.xlu0 95
    %2912 = vperm.xlu0 %2911, %v120
    %v2913 = vpop.permute.xlu0 %2912
    %v2915 = vlaneseq
    %v2916 = vshrl.u32 %v2915, 7
    %v2917 = vsub.s32 7, %v2916
    %v2918 = vrot.slane %v160, %v2917
    %v2919 = vadd.f32 %v2913, %v2918
    %v2920 = vrcp.pop %v2919
    %v2921 = vpack.c.bf16 %v2920, %v2920
    %2922 = vset.pattern.permute.xlu0 95
    %2923 = vperm.xlu0 %2922, %v93
    %v2924 = vpop.permute.xlu0 %2923
    %v2926 = vlaneseq
    %v2927 = vshrl.u32 %v2926, 7
    %v2928 = vsub.s32 7, %v2927
    %v2929 = vrot.slane %v2528, %v2928
    %v2930 = vsub.bf16 %v2924, %v2929
    %v2931 = vpack.c.bf16 %v2919, %v2919
    %v2932 = vlog2.bf16.pop %v2931
    %v2934 = vmul.bf16 %v2932, 1060192049
    %v2935 = vmul.bf16 %v2930, %v2930
    %v2936 = vmul.bf16 %v2935, %v2921
    %v2937 = vadd.bf16 %v2910, %v2936
    %v2938 = vadd.bf16 %v2937, %v2934
    %v2939 = vld [vmem:[#allocation10] sm:$0xff]
    %v2940 = vunpack.c.l.bf16 %v2938
    %v2941 = vadd.f32 %v2939, %v2940
    %2942 = vst [vmem:[#allocation10] sm:$0xff] %v2941
    %2943 = vset.pattern.permute.xlu0 96
    %2944 = vperm.xlu0 %2943, %v120
    %v2945 = vpop.permute.xlu0 %2944
    %v2947 = vlaneseq
    %v2948 = vshrl.u32 %v2947, 7
    %v2949 = vsub.s32 0, %v2948
    %v2950 = vrot.slane %v162, %v2949
    %v2951 = vadd.f32 %v2945, %v2950
    %v2952 = vrcp.pop %v2951
    %v2953 = vpack.c.bf16 %v2952, %v2952
    %2954 = vset.pattern.permute.xlu0 96
    %2955 = vperm.xlu0 %2954, %v93
    %v2956 = vpop.permute.xlu0 %2955
    %v2959 = vpack.i.b16 %v116, %v116
    %v2961 = vlaneseq
    %v2962 = vshrl.u32 %v2961, 7
    %v2963 = vsub.s32 0, %v2962
    %v2964 = vrot.slane %v2959, %v2963
    %v2965 = vsub.bf16 %v2956, %v2964
    %v2966 = vpack.c.bf16 %v2951, %v2951
    %v2967 = vlog2.bf16.pop %v2966
    %v2969 = vmul.bf16 %v2967, 1060192049
    %v2970 = vmul.bf16 %v2965, %v2965
    %v2971 = vmul.bf16 %v2970, %v2953
    %v2972 = vadd.bf16 %v2971, 0
    %v2973 = vadd.bf16 %v2972, %v2969
    %2974 = vset.pattern.permute.xlu0 97
    %2975 = vperm.xlu0 %2974, %v120
    %v2976 = vpop.permute.xlu0 %2975
    %v2978 = vlaneseq
    %v2979 = vshrl.u32 %v2978, 7
    %v2980 = vsub.s32 1, %v2979
    %v2981 = vrot.slane %v162, %v2980
    %v2982 = vadd.f32 %v2976, %v2981
    %v2983 = vrcp.pop %v2982
    %v2984 = vpack.c.bf16 %v2983, %v2983
    %2985 = vset.pattern.permute.xlu0 97
    %2986 = vperm.xlu0 %2985, %v93
    %v2987 = vpop.permute.xlu0 %2986
    %v2989 = vshrl.u32 %v116, 16
    %v2990 = vpack.i.b16 %v2989, %v2989
    %v2992 = vlaneseq
    %v2993 = vshrl.u32 %v2992, 7
    %v2994 = vsub.s32 0, %v2993
    %v2995 = vrot.slane %v2990, %v2994
    %v2996 = vsub.bf16 %v2987, %v2995
    %v2997 = vpack.c.bf16 %v2982, %v2982
    %v2998 = vlog2.bf16.pop %v2997
    %v3000 = vmul.bf16 %v2998, 1060192049
    %v3001 = vmul.bf16 %v2996, %v2996
    %v3002 = vmul.bf16 %v3001, %v2984
    %v3003 = vadd.bf16 %v2973, %v3002
    %v3004 = vadd.bf16 %v3003, %v3000
    %3005 = vset.pattern.permute.xlu0 98
    %3006 = vperm.xlu0 %3005, %v120
    %v3007 = vpop.permute.xlu0 %3006
    %v3009 = vlaneseq
    %v3010 = vshrl.u32 %v3009, 7
    %v3011 = vsub.s32 2, %v3010
    %v3012 = vrot.slane %v162, %v3011
    %v3013 = vadd.f32 %v3007, %v3012
    %v3014 = vrcp.pop %v3013
    %v3015 = vpack.c.bf16 %v3014, %v3014
    %3016 = vset.pattern.permute.xlu0 98
    %3017 = vperm.xlu0 %3016, %v93
    %v3018 = vpop.permute.xlu0 %3017
    %v3020 = vlaneseq
    %v3021 = vshrl.u32 %v3020, 7
    %v3022 = vsub.s32 1, %v3021
    %v3023 = vrot.slane %v2959, %v3022
    %v3024 = vsub.bf16 %v3018, %v3023
    %v3025 = vpack.c.bf16 %v3013, %v3013
    %v3026 = vlog2.bf16.pop %v3025
    %v3028 = vmul.bf16 %v3026, 1060192049
    %v3029 = vmul.bf16 %v3024, %v3024
    %v3030 = vmul.bf16 %v3029, %v3015
    %v3031 = vadd.bf16 %v3004, %v3030
    %v3032 = vadd.bf16 %v3031, %v3028
    %3033 = vset.pattern.permute.xlu0 99
    %3034 = vperm.xlu0 %3033, %v120
    %v3035 = vpop.permute.xlu0 %3034
    %v3037 = vlaneseq
    %v3038 = vshrl.u32 %v3037, 7
    %v3039 = vsub.s32 3, %v3038
    %v3040 = vrot.slane %v162, %v3039
    %v3041 = vadd.f32 %v3035, %v3040
    %v3042 = vrcp.pop %v3041
    %v3043 = vpack.c.bf16 %v3042, %v3042
    %3044 = vset.pattern.permute.xlu0 99
    %3045 = vperm.xlu0 %3044, %v93
    %v3046 = vpop.permute.xlu0 %3045
    %v3048 = vlaneseq
    %v3049 = vshrl.u32 %v3048, 7
    %v3050 = vsub.s32 1, %v3049
    %v3051 = vrot.slane %v2990, %v3050
    %v3052 = vsub.bf16 %v3046, %v3051
    %v3053 = vpack.c.bf16 %v3041, %v3041
    %v3054 = vlog2.bf16.pop %v3053
    %v3056 = vmul.bf16 %v3054, 1060192049
    %v3057 = vmul.bf16 %v3052, %v3052
    %v3058 = vmul.bf16 %v3057, %v3043
    %v3059 = vadd.bf16 %v3032, %v3058
    %v3060 = vadd.bf16 %v3059, %v3056
    %3061 = vset.pattern.permute.xlu0 100
    %3062 = vperm.xlu0 %3061, %v120
    %v3063 = vpop.permute.xlu0 %3062
    %v3065 = vlaneseq
    %v3066 = vshrl.u32 %v3065, 7
    %v3067 = vsub.s32 4, %v3066
    %v3068 = vrot.slane %v162, %v3067
    %v3069 = vadd.f32 %v3063, %v3068
    %v3070 = vrcp.pop %v3069
    %v3071 = vpack.c.bf16 %v3070, %v3070
    %3072 = vset.pattern.permute.xlu0 100
    %3073 = vperm.xlu0 %3072, %v93
    %v3074 = vpop.permute.xlu0 %3073
    %v3076 = vlaneseq
    %v3077 = vshrl.u32 %v3076, 7
    %v3078 = vsub.s32 2, %v3077
    %v3079 = vrot.slane %v2959, %v3078
    %v3080 = vsub.bf16 %v3074, %v3079
    %v3081 = vpack.c.bf16 %v3069, %v3069
    %v3082 = vlog2.bf16.pop %v3081
    %v3084 = vmul.bf16 %v3082, 1060192049
    %v3085 = vmul.bf16 %v3080, %v3080
    %v3086 = vmul.bf16 %v3085, %v3071
    %v3087 = vadd.bf16 %v3060, %v3086
    %v3088 = vadd.bf16 %v3087, %v3084
    %3089 = vset.pattern.permute.xlu0 101
    %3090 = vperm.xlu0 %3089, %v120
    %v3091 = vpop.permute.xlu0 %3090
    %v3093 = vlaneseq
    %v3094 = vshrl.u32 %v3093, 7
    %v3095 = vsub.s32 5, %v3094
    %v3096 = vrot.slane %v162, %v3095
    %v3097 = vadd.f32 %v3091, %v3096
    %v3098 = vrcp.pop %v3097
    %v3099 = vpack.c.bf16 %v3098, %v3098
    %3100 = vset.pattern.permute.xlu0 101
    %3101 = vperm.xlu0 %3100, %v93
    %v3102 = vpop.permute.xlu0 %3101
    %v3104 = vlaneseq
    %v3105 = vshrl.u32 %v3104, 7
    %v3106 = vsub.s32 2, %v3105
    %v3107 = vrot.slane %v2990, %v3106
    %v3108 = vsub.bf16 %v3102, %v3107
    %v3109 = vpack.c.bf16 %v3097, %v3097
    %v3110 = vlog2.bf16.pop %v3109
    %v3112 = vmul.bf16 %v3110, 1060192049
    %v3113 = vmul.bf16 %v3108, %v3108
    %v3114 = vmul.bf16 %v3113, %v3099
    %v3115 = vadd.bf16 %v3088, %v3114
    %v3116 = vadd.bf16 %v3115, %v3112
    %3117 = vset.pattern.permute.xlu0 102
    %3118 = vperm.xlu0 %3117, %v120
    %v3119 = vpop.permute.xlu0 %3118
    %v3121 = vlaneseq
    %v3122 = vshrl.u32 %v3121, 7
    %v3123 = vsub.s32 6, %v3122
    %v3124 = vrot.slane %v162, %v3123
    %v3125 = vadd.f32 %v3119, %v3124
    %v3126 = vrcp.pop %v3125
    %v3127 = vpack.c.bf16 %v3126, %v3126
    %3128 = vset.pattern.permute.xlu0 102
    %3129 = vperm.xlu0 %3128, %v93
    %v3130 = vpop.permute.xlu0 %3129
    %v3132 = vlaneseq
    %v3133 = vshrl.u32 %v3132, 7
    %v3134 = vsub.s32 3, %v3133
    %v3135 = vrot.slane %v2959, %v3134
    %v3136 = vsub.bf16 %v3130, %v3135
    %v3137 = vpack.c.bf16 %v3125, %v3125
    %v3138 = vlog2.bf16.pop %v3137
    %v3140 = vmul.bf16 %v3138, 1060192049
    %v3141 = vmul.bf16 %v3136, %v3136
    %v3142 = vmul.bf16 %v3141, %v3127
    %v3143 = vadd.bf16 %v3116, %v3142
    %v3144 = vadd.bf16 %v3143, %v3140
    %3145 = vset.pattern.permute.xlu0 103
    %3146 = vperm.xlu0 %3145, %v120
    %v3147 = vpop.permute.xlu0 %3146
    %v3149 = vlaneseq
    %v3150 = vshrl.u32 %v3149, 7
    %v3151 = vsub.s32 7, %v3150
    %v3152 = vrot.slane %v162, %v3151
    %v3153 = vadd.f32 %v3147, %v3152
    %v3154 = vrcp.pop %v3153
    %v3155 = vpack.c.bf16 %v3154, %v3154
    %3156 = vset.pattern.permute.xlu0 103
    %3157 = vperm.xlu0 %3156, %v93
    %v3158 = vpop.permute.xlu0 %3157
    %v3160 = vlaneseq
    %v3161 = vshrl.u32 %v3160, 7
    %v3162 = vsub.s32 3, %v3161
    %v3163 = vrot.slane %v2990, %v3162
    %v3164 = vsub.bf16 %v3158, %v3163
    %v3165 = vpack.c.bf16 %v3153, %v3153
    %v3166 = vlog2.bf16.pop %v3165
    %v3168 = vmul.bf16 %v3166, 1060192049
    %v3169 = vmul.bf16 %v3164, %v3164
    %v3170 = vmul.bf16 %v3169, %v3155
    %v3171 = vadd.bf16 %v3144, %v3170
    %v3172 = vadd.bf16 %v3171, %v3168
    %v3173 = vld [vmem:[#allocation10] sm:$0xff]
    %v3174 = vunpack.c.l.bf16 %v3172
    %v3175 = vadd.f32 %v3173, %v3174
    %3176 = vst [vmem:[#allocation10] sm:$0xff] %v3175
    %3177 = vset.pattern.permute.xlu0 104
    %3178 = vperm.xlu0 %3177, %v120
    %v3179 = vpop.permute.xlu0 %3178
    %v3181 = vlaneseq
    %v3182 = vshrl.u32 %v3181, 7
    %v3183 = vsub.s32 0, %v3182
    %v3184 = vrot.slane %v164, %v3183
    %v3185 = vadd.f32 %v3179, %v3184
    %v3186 = vrcp.pop %v3185
    %v3187 = vpack.c.bf16 %v3186, %v3186
    %3188 = vset.pattern.permute.xlu0 104
    %3189 = vperm.xlu0 %3188, %v93
    %v3190 = vpop.permute.xlu0 %3189
    %v3192 = vlaneseq
    %v3193 = vshrl.u32 %v3192, 7
    %v3194 = vsub.s32 4, %v3193
    %v3195 = vrot.slane %v2959, %v3194
    %v3196 = vsub.bf16 %v3190, %v3195
    %v3197 = vpack.c.bf16 %v3185, %v3185
    %v3198 = vlog2.bf16.pop %v3197
    %v3200 = vmul.bf16 %v3198, 1060192049
    %v3201 = vmul.bf16 %v3196, %v3196
    %v3202 = vmul.bf16 %v3201, %v3187
    %v3203 = vadd.bf16 %v3202, 0
    %v3204 = vadd.bf16 %v3203, %v3200
    %3205 = vset.pattern.permute.xlu0 105
    %3206 = vperm.xlu0 %3205, %v120
    %v3207 = vpop.permute.xlu0 %3206
    %v3209 = vlaneseq
    %v3210 = vshrl.u32 %v3209, 7
    %v3211 = vsub.s32 1, %v3210
    %v3212 = vrot.slane %v164, %v3211
    %v3213 = vadd.f32 %v3207, %v3212
    %v3214 = vrcp.pop %v3213
    %v3215 = vpack.c.bf16 %v3214, %v3214
    %3216 = vset.pattern.permute.xlu0 105
    %3217 = vperm.xlu0 %3216, %v93
    %v3218 = vpop.permute.xlu0 %3217
    %v3220 = vlaneseq
    %v3221 = vshrl.u32 %v3220, 7
    %v3222 = vsub.s32 4, %v3221
    %v3223 = vrot.slane %v2990, %v3222
    %v3224 = vsub.bf16 %v3218, %v3223
    %v3225 = vpack.c.bf16 %v3213, %v3213
    %v3226 = vlog2.bf16.pop %v3225
    %v3228 = vmul.bf16 %v3226, 1060192049
    %v3229 = vmul.bf16 %v3224, %v3224
    %v3230 = vmul.bf16 %v3229, %v3215
    %v3231 = vadd.bf16 %v3204, %v3230
    %v3232 = vadd.bf16 %v3231, %v3228
    %3233 = vset.pattern.permute.xlu0 106
    %3234 = vperm.xlu0 %3233, %v120
    %v3235 = vpop.permute.xlu0 %3234
    %v3237 = vlaneseq
    %v3238 = vshrl.u32 %v3237, 7
    %v3239 = vsub.s32 2, %v3238
    %v3240 = vrot.slane %v164, %v3239
    %v3241 = vadd.f32 %v3235, %v3240
    %v3242 = vrcp.pop %v3241
    %v3243 = vpack.c.bf16 %v3242, %v3242
    %3244 = vset.pattern.permute.xlu0 106
    %3245 = vperm.xlu0 %3244, %v93
    %v3246 = vpop.permute.xlu0 %3245
    %v3248 = vlaneseq
    %v3249 = vshrl.u32 %v3248, 7
    %v3250 = vsub.s32 5, %v3249
    %v3251 = vrot.slane %v2959, %v3250
    %v3252 = vsub.bf16 %v3246, %v3251
    %v3253 = vpack.c.bf16 %v3241, %v3241
    %v3254 = vlog2.bf16.pop %v3253
    %v3256 = vmul.bf16 %v3254, 1060192049
    %v3257 = vmul.bf16 %v3252, %v3252
    %v3258 = vmul.bf16 %v3257, %v3243
    %v3259 = vadd.bf16 %v3232, %v3258
    %v3260 = vadd.bf16 %v3259, %v3256
    %3261 = vset.pattern.permute.xlu0 107
    %3262 = vperm.xlu0 %3261, %v120
    %v3263 = vpop.permute.xlu0 %3262
    %v3265 = vlaneseq
    %v3266 = vshrl.u32 %v3265, 7
    %v3267 = vsub.s32 3, %v3266
    %v3268 = vrot.slane %v164, %v3267
    %v3269 = vadd.f32 %v3263, %v3268
    %v3270 = vrcp.pop %v3269
    %v3271 = vpack.c.bf16 %v3270, %v3270
    %3272 = vset.pattern.permute.xlu0 107
    %3273 = vperm.xlu0 %3272, %v93
    %v3274 = vpop.permute.xlu0 %3273
    %v3276 = vlaneseq
    %v3277 = vshrl.u32 %v3276, 7
    %v3278 = vsub.s32 5, %v3277
    %v3279 = vrot.slane %v2990, %v3278
    %v3280 = vsub.bf16 %v3274, %v3279
    %v3281 = vpack.c.bf16 %v3269, %v3269
    %v3282 = vlog2.bf16.pop %v3281
    %v3284 = vmul.bf16 %v3282, 1060192049
    %v3285 = vmul.bf16 %v3280, %v3280
    %v3286 = vmul.bf16 %v3285, %v3271
    %v3287 = vadd.bf16 %v3260, %v3286
    %v3288 = vadd.bf16 %v3287, %v3284
    %3289 = vset.pattern.permute.xlu0 108
    %3290 = vperm.xlu0 %3289, %v120
    %v3291 = vpop.permute.xlu0 %3290
    %v3293 = vlaneseq
    %v3294 = vshrl.u32 %v3293, 7
    %v3295 = vsub.s32 4, %v3294
    %v3296 = vrot.slane %v164, %v3295
    %v3297 = vadd.f32 %v3291, %v3296
    %v3298 = vrcp.pop %v3297
    %v3299 = vpack.c.bf16 %v3298, %v3298
    %3300 = vset.pattern.permute.xlu0 108
    %3301 = vperm.xlu0 %3300, %v93
    %v3302 = vpop.permute.xlu0 %3301
    %v3304 = vlaneseq
    %v3305 = vshrl.u32 %v3304, 7
    %v3306 = vsub.s32 6, %v3305
    %v3307 = vrot.slane %v2959, %v3306
    %v3308 = vsub.bf16 %v3302, %v3307
    %v3309 = vpack.c.bf16 %v3297, %v3297
    %v3310 = vlog2.bf16.pop %v3309
    %v3312 = vmul.bf16 %v3310, 1060192049
    %v3313 = vmul.bf16 %v3308, %v3308
    %v3314 = vmul.bf16 %v3313, %v3299
    %v3315 = vadd.bf16 %v3288, %v3314
    %v3316 = vadd.bf16 %v3315, %v3312
    %3317 = vset.pattern.permute.xlu0 109
    %3318 = vperm.xlu0 %3317, %v120
    %v3319 = vpop.permute.xlu0 %3318
    %v3321 = vlaneseq
    %v3322 = vshrl.u32 %v3321, 7
    %v3323 = vsub.s32 5, %v3322
    %v3324 = vrot.slane %v164, %v3323
    %v3325 = vadd.f32 %v3319, %v3324
    %v3326 = vrcp.pop %v3325
    %v3327 = vpack.c.bf16 %v3326, %v3326
    %3328 = vset.pattern.permute.xlu0 109
    %3329 = vperm.xlu0 %3328, %v93
    %v3330 = vpop.permute.xlu0 %3329
    %v3332 = vlaneseq
    %v3333 = vshrl.u32 %v3332, 7
    %v3334 = vsub.s32 6, %v3333
    %v3335 = vrot.slane %v2990, %v3334
    %v3336 = vsub.bf16 %v3330, %v3335
    %v3337 = vpack.c.bf16 %v3325, %v3325
    %v3338 = vlog2.bf16.pop %v3337
    %v3340 = vmul.bf16 %v3338, 1060192049
    %v3341 = vmul.bf16 %v3336, %v3336
    %v3342 = vmul.bf16 %v3341, %v3327
    %v3343 = vadd.bf16 %v3316, %v3342
    %v3344 = vadd.bf16 %v3343, %v3340
    %3345 = vset.pattern.permute.xlu0 110
    %3346 = vperm.xlu0 %3345, %v120
    %v3347 = vpop.permute.xlu0 %3346
    %v3349 = vlaneseq
    %v3350 = vshrl.u32 %v3349, 7
    %v3351 = vsub.s32 6, %v3350
    %v3352 = vrot.slane %v164, %v3351
    %v3353 = vadd.f32 %v3347, %v3352
    %v3354 = vrcp.pop %v3353
    %v3355 = vpack.c.bf16 %v3354, %v3354
    %3356 = vset.pattern.permute.xlu0 110
    %3357 = vperm.xlu0 %3356, %v93
    %v3358 = vpop.permute.xlu0 %3357
    %v3360 = vlaneseq
    %v3361 = vshrl.u32 %v3360, 7
    %v3362 = vsub.s32 7, %v3361
    %v3363 = vrot.slane %v2959, %v3362
    %v3364 = vsub.bf16 %v3358, %v3363
    %v3365 = vpack.c.bf16 %v3353, %v3353
    %v3366 = vlog2.bf16.pop %v3365
    %v3368 = vmul.bf16 %v3366, 1060192049
    %v3369 = vmul.bf16 %v3364, %v3364
    %v3370 = vmul.bf16 %v3369, %v3355
    %v3371 = vadd.bf16 %v3344, %v3370
    %v3372 = vadd.bf16 %v3371, %v3368
    %3373 = vset.pattern.permute.xlu0 111
    %3374 = vperm.xlu0 %3373, %v120
    %v3375 = vpop.permute.xlu0 %3374
    %v3377 = vlaneseq
    %v3378 = vshrl.u32 %v3377, 7
    %v3379 = vsub.s32 7, %v3378
    %v3380 = vrot.slane %v164, %v3379
    %v3381 = vadd.f32 %v3375, %v3380
    %v3382 = vrcp.pop %v3381
    %v3383 = vpack.c.bf16 %v3382, %v3382
    %3384 = vset.pattern.permute.xlu0 111
    %3385 = vperm.xlu0 %3384, %v93
    %v3386 = vpop.permute.xlu0 %3385
    %v3388 = vlaneseq
    %v3389 = vshrl.u32 %v3388, 7
    %v3390 = vsub.s32 7, %v3389
    %v3391 = vrot.slane %v2990, %v3390
    %v3392 = vsub.bf16 %v3386, %v3391
    %v3393 = vpack.c.bf16 %v3381, %v3381
    %v3394 = vlog2.bf16.pop %v3393
    %v3396 = vmul.bf16 %v3394, 1060192049
    %v3397 = vmul.bf16 %v3392, %v3392
    %v3398 = vmul.bf16 %v3397, %v3383
    %v3399 = vadd.bf16 %v3372, %v3398
    %v3400 = vadd.bf16 %v3399, %v3396
    %v3401 = vld [vmem:[#allocation10] sm:$0xff]
    %v3402 = vunpack.c.l.bf16 %v3400
    %v3403 = vadd.f32 %v3401, %v3402
    %3404 = vst [vmem:[#allocation10] sm:$0xff] %v3403
    %3405 = vset.pattern.permute.xlu0 112
    %3406 = vperm.xlu0 %3405, %v120
    %v3407 = vpop.permute.xlu0 %3406
    %v3409 = vlaneseq
    %v3410 = vshrl.u32 %v3409, 7
    %v3411 = vsub.s32 0, %v3410
    %v3412 = vrot.slane %v166, %v3411
    %v3413 = vadd.f32 %v3407, %v3412
    %v3414 = vrcp.pop %v3413
    %v3415 = vpack.c.bf16 %v3414, %v3414
    %3416 = vset.pattern.permute.xlu0 112
    %3417 = vperm.xlu0 %3416, %v93
    %v3418 = vpop.permute.xlu0 %3417
    %v3421 = vpack.i.b16 %v117, %v117
    %v3423 = vlaneseq
    %v3424 = vshrl.u32 %v3423, 7
    %v3425 = vsub.s32 0, %v3424
    %v3426 = vrot.slane %v3421, %v3425
    %v3427 = vsub.bf16 %v3418, %v3426
    %v3428 = vpack.c.bf16 %v3413, %v3413
    %v3429 = vlog2.bf16.pop %v3428
    %v3431 = vmul.bf16 %v3429, 1060192049
    %v3432 = vmul.bf16 %v3427, %v3427
    %v3433 = vmul.bf16 %v3432, %v3415
    %v3434 = vadd.bf16 %v3433, 0
    %v3435 = vadd.bf16 %v3434, %v3431
    %3436 = vset.pattern.permute.xlu0 113
    %3437 = vperm.xlu0 %3436, %v120
    %v3438 = vpop.permute.xlu0 %3437
    %v3440 = vlaneseq
    %v3441 = vshrl.u32 %v3440, 7
    %v3442 = vsub.s32 1, %v3441
    %v3443 = vrot.slane %v166, %v3442
    %v3444 = vadd.f32 %v3438, %v3443
    %v3445 = vrcp.pop %v3444
    %v3446 = vpack.c.bf16 %v3445, %v3445
    %3447 = vset.pattern.permute.xlu0 113
    %3448 = vperm.xlu0 %3447, %v93
    %v3449 = vpop.permute.xlu0 %3448
    %v3451 = vshrl.u32 %v117, 16
    %v3452 = vpack.i.b16 %v3451, %v3451
    %v3454 = vlaneseq
    %v3455 = vshrl.u32 %v3454, 7
    %v3456 = vsub.s32 0, %v3455
    %v3457 = vrot.slane %v3452, %v3456
    %v3458 = vsub.bf16 %v3449, %v3457
    %v3459 = vpack.c.bf16 %v3444, %v3444
    %v3460 = vlog2.bf16.pop %v3459
    %v3462 = vmul.bf16 %v3460, 1060192049
    %v3463 = vmul.bf16 %v3458, %v3458
    %v3464 = vmul.bf16 %v3463, %v3446
    %v3465 = vadd.bf16 %v3435, %v3464
    %v3466 = vadd.bf16 %v3465, %v3462
    %3467 = vset.pattern.permute.xlu0 114
    %3468 = vperm.xlu0 %3467, %v120
    %v3469 = vpop.permute.xlu0 %3468
    %v3471 = vlaneseq
    %v3472 = vshrl.u32 %v3471, 7
    %v3473 = vsub.s32 2, %v3472
    %v3474 = vrot.slane %v166, %v3473
    %v3475 = vadd.f32 %v3469, %v3474
    %v3476 = vrcp.pop %v3475
    %v3477 = vpack.c.bf16 %v3476, %v3476
    %3478 = vset.pattern.permute.xlu0 114
    %3479 = vperm.xlu0 %3478, %v93
    %v3480 = vpop.permute.xlu0 %3479
    %v3482 = vlaneseq
    %v3483 = vshrl.u32 %v3482, 7
    %v3484 = vsub.s32 1, %v3483
    %v3485 = vrot.slane %v3421, %v3484
    %v3486 = vsub.bf16 %v3480, %v3485
    %v3487 = vpack.c.bf16 %v3475, %v3475
    %v3488 = vlog2.bf16.pop %v3487
    %v3490 = vmul.bf16 %v3488, 1060192049
    %v3491 = vmul.bf16 %v3486, %v3486
    %v3492 = vmul.bf16 %v3491, %v3477
    %v3493 = vadd.bf16 %v3466, %v3492
    %v3494 = vadd.bf16 %v3493, %v3490
    %3495 = vset.pattern.permute.xlu0 115
    %3496 = vperm.xlu0 %3495, %v120
    %v3497 = vpop.permute.xlu0 %3496
    %v3499 = vlaneseq
    %v3500 = vshrl.u32 %v3499, 7
    %v3501 = vsub.s32 3, %v3500
    %v3502 = vrot.slane %v166, %v3501
    %v3503 = vadd.f32 %v3497, %v3502
    %v3504 = vrcp.pop %v3503
    %v3505 = vpack.c.bf16 %v3504, %v3504
    %3506 = vset.pattern.permute.xlu0 115
    %3507 = vperm.xlu0 %3506, %v93
    %v3508 = vpop.permute.xlu0 %3507
    %v3510 = vlaneseq
    %v3511 = vshrl.u32 %v3510, 7
    %v3512 = vsub.s32 1, %v3511
    %v3513 = vrot.slane %v3452, %v3512
    %v3514 = vsub.bf16 %v3508, %v3513
    %v3515 = vpack.c.bf16 %v3503, %v3503
    %v3516 = vlog2.bf16.pop %v3515
    %v3518 = vmul.bf16 %v3516, 1060192049
    %v3519 = vmul.bf16 %v3514, %v3514
    %v3520 = vmul.bf16 %v3519, %v3505
    %v3521 = vadd.bf16 %v3494, %v3520
    %v3522 = vadd.bf16 %v3521, %v3518
    %3523 = vset.pattern.permute.xlu0 116
    %3524 = vperm.xlu0 %3523, %v120
    %v3525 = vpop.permute.xlu0 %3524
    %v3527 = vlaneseq
    %v3528 = vshrl.u32 %v3527, 7
    %v3529 = vsub.s32 4, %v3528
    %v3530 = vrot.slane %v166, %v3529
    %v3531 = vadd.f32 %v3525, %v3530
    %v3532 = vrcp.pop %v3531
    %v3533 = vpack.c.bf16 %v3532, %v3532
    %3534 = vset.pattern.permute.xlu0 116
    %3535 = vperm.xlu0 %3534, %v93
    %v3536 = vpop.permute.xlu0 %3535
    %v3538 = vlaneseq
    %v3539 = vshrl.u32 %v3538, 7
    %v3540 = vsub.s32 2, %v3539
    %v3541 = vrot.slane %v3421, %v3540
    %v3542 = vsub.bf16 %v3536, %v3541
    %v3543 = vpack.c.bf16 %v3531, %v3531
    %v3544 = vlog2.bf16.pop %v3543
    %v3546 = vmul.bf16 %v3544, 1060192049
    %v3547 = vmul.bf16 %v3542, %v3542
    %v3548 = vmul.bf16 %v3547, %v3533
    %v3549 = vadd.bf16 %v3522, %v3548
    %v3550 = vadd.bf16 %v3549, %v3546
    %3551 = vset.pattern.permute.xlu0 117
    %3552 = vperm.xlu0 %3551, %v120
    %v3553 = vpop.permute.xlu0 %3552
    %v3555 = vlaneseq
    %v3556 = vshrl.u32 %v3555, 7
    %v3557 = vsub.s32 5, %v3556
    %v3558 = vrot.slane %v166, %v3557
    %v3559 = vadd.f32 %v3553, %v3558
    %v3560 = vrcp.pop %v3559
    %v3561 = vpack.c.bf16 %v3560, %v3560
    %3562 = vset.pattern.permute.xlu0 117
    %3563 = vperm.xlu0 %3562, %v93
    %v3564 = vpop.permute.xlu0 %3563
    %v3566 = vlaneseq
    %v3567 = vshrl.u32 %v3566, 7
    %v3568 = vsub.s32 2, %v3567
    %v3569 = vrot.slane %v3452, %v3568
    %v3570 = vsub.bf16 %v3564, %v3569
    %v3571 = vpack.c.bf16 %v3559, %v3559
    %v3572 = vlog2.bf16.pop %v3571
    %v3574 = vmul.bf16 %v3572, 1060192049
    %v3575 = vmul.bf16 %v3570, %v3570
    %v3576 = vmul.bf16 %v3575, %v3561
    %v3577 = vadd.bf16 %v3550, %v3576
    %v3578 = vadd.bf16 %v3577, %v3574
    %3579 = vset.pattern.permute.xlu0 118
    %3580 = vperm.xlu0 %3579, %v120
    %v3581 = vpop.permute.xlu0 %3580
    %v3583 = vlaneseq
    %v3584 = vshrl.u32 %v3583, 7
    %v3585 = vsub.s32 6, %v3584
    %v3586 = vrot.slane %v166, %v3585
    %v3587 = vadd.f32 %v3581, %v3586
    %v3588 = vrcp.pop %v3587
    %v3589 = vpack.c.bf16 %v3588, %v3588
    %3590 = vset.pattern.permute.xlu0 118
    %3591 = vperm.xlu0 %3590, %v93
    %v3592 = vpop.permute.xlu0 %3591
    %v3594 = vlaneseq
    %v3595 = vshrl.u32 %v3594, 7
    %v3596 = vsub.s32 3, %v3595
    %v3597 = vrot.slane %v3421, %v3596
    %v3598 = vsub.bf16 %v3592, %v3597
    %v3599 = vpack.c.bf16 %v3587, %v3587
    %v3600 = vlog2.bf16.pop %v3599
    %v3602 = vmul.bf16 %v3600, 1060192049
    %v3603 = vmul.bf16 %v3598, %v3598
    %v3604 = vmul.bf16 %v3603, %v3589
    %v3605 = vadd.bf16 %v3578, %v3604
    %v3606 = vadd.bf16 %v3605, %v3602
    %3607 = vset.pattern.permute.xlu0 119
    %3608 = vperm.xlu0 %3607, %v120
    %v3609 = vpop.permute.xlu0 %3608
    %v3611 = vlaneseq
    %v3612 = vshrl.u32 %v3611, 7
    %v3613 = vsub.s32 7, %v3612
    %v3614 = vrot.slane %v166, %v3613
    %v3615 = vadd.f32 %v3609, %v3614
    %v3616 = vrcp.pop %v3615
    %v3617 = vpack.c.bf16 %v3616, %v3616
    %3618 = vset.pattern.permute.xlu0 119
    %3619 = vperm.xlu0 %3618, %v93
    %v3620 = vpop.permute.xlu0 %3619
    %v3622 = vlaneseq
    %v3623 = vshrl.u32 %v3622, 7
    %v3624 = vsub.s32 3, %v3623
    %v3625 = vrot.slane %v3452, %v3624
    %v3626 = vsub.bf16 %v3620, %v3625
    %v3627 = vpack.c.bf16 %v3615, %v3615
    %v3628 = vlog2.bf16.pop %v3627
    %v3630 = vmul.bf16 %v3628, 1060192049
    %v3631 = vmul.bf16 %v3626, %v3626
    %v3632 = vmul.bf16 %v3631, %v3617
    %v3633 = vadd.bf16 %v3606, %v3632
    %v3634 = vadd.bf16 %v3633, %v3630
    %v3635 = vld [vmem:[#allocation10] sm:$0xff]
    %v3636 = vunpack.c.l.bf16 %v3634
    %v3637 = vadd.f32 %v3635, %v3636
    %3638 = vst [vmem:[#allocation10] sm:$0xff] %v3637
    %3639 = vset.pattern.permute.xlu0 120
    %3640 = vperm.xlu0 %3639, %v120
    %v3641 = vpop.permute.xlu0 %3640
    %v3643 = vlaneseq
    %v3644 = vshrl.u32 %v3643, 7
    %v3645 = vsub.s32 0, %v3644
    %v3646 = vrot.slane %v168, %v3645
    %v3647 = vadd.f32 %v3641, %v3646
    %v3648 = vrcp.pop %v3647
    %v3649 = vpack.c.bf16 %v3648, %v3648
    %3650 = vset.pattern.permute.xlu0 120
    %3651 = vperm.xlu0 %3650, %v93
    %v3652 = vpop.permute.xlu0 %3651
    %v3654 = vlaneseq
    %v3655 = vshrl.u32 %v3654, 7
    %v3656 = vsub.s32 4, %v3655
    %v3657 = vrot.slane %v3421, %v3656
    %v3658 = vsub.bf16 %v3652, %v3657
    %v3659 = vpack.c.bf16 %v3647, %v3647
    %v3660 = vlog2.bf16.pop %v3659
    %v3662 = vmul.bf16 %v3660, 1060192049
    %v3663 = vmul.bf16 %v3658, %v3658
    %v3664 = vmul.bf16 %v3663, %v3649
    %v3665 = vadd.bf16 %v3664, 0
    %v3666 = vadd.bf16 %v3665, %v3662
    %3667 = vset.pattern.permute.xlu0 121
    %3668 = vperm.xlu0 %3667, %v120
    %v3669 = vpop.permute.xlu0 %3668
    %v3671 = vlaneseq
    %v3672 = vshrl.u32 %v3671, 7
    %v3673 = vsub.s32 1, %v3672
    %v3674 = vrot.slane %v168, %v3673
    %v3675 = vadd.f32 %v3669, %v3674
    %v3676 = vrcp.pop %v3675
    %v3677 = vpack.c.bf16 %v3676, %v3676
    %3678 = vset.pattern.permute.xlu0 121
    %3679 = vperm.xlu0 %3678, %v93
    %v3680 = vpop.permute.xlu0 %3679
    %v3682 = vlaneseq
    %v3683 = vshrl.u32 %v3682, 7
    %v3684 = vsub.s32 4, %v3683
    %v3685 = vrot.slane %v3452, %v3684
    %v3686 = vsub.bf16 %v3680, %v3685
    %v3687 = vpack.c.bf16 %v3675, %v3675
    %v3688 = vlog2.bf16.pop %v3687
    %v3690 = vmul.bf16 %v3688, 1060192049
    %v3691 = vmul.bf16 %v3686, %v3686
    %v3692 = vmul.bf16 %v3691, %v3677
    %v3693 = vadd.bf16 %v3666, %v3692
    %v3694 = vadd.bf16 %v3693, %v3690
    %3695 = vset.pattern.permute.xlu0 122
    %3696 = vperm.xlu0 %3695, %v120
    %v3697 = vpop.permute.xlu0 %3696
    %v3699 = vlaneseq
    %v3700 = vshrl.u32 %v3699, 7
    %v3701 = vsub.s32 2, %v3700
    %v3702 = vrot.slane %v168, %v3701
    %v3703 = vadd.f32 %v3697, %v3702
    %v3704 = vrcp.pop %v3703
    %v3705 = vpack.c.bf16 %v3704, %v3704
    %3706 = vset.pattern.permute.xlu0 122
    %3707 = vperm.xlu0 %3706, %v93
    %v3708 = vpop.permute.xlu0 %3707
    %v3710 = vlaneseq
    %v3711 = vshrl.u32 %v3710, 7
    %v3712 = vsub.s32 5, %v3711
    %v3713 = vrot.slane %v3421, %v3712
    %v3714 = vsub.bf16 %v3708, %v3713
    %v3715 = vpack.c.bf16 %v3703, %v3703
    %v3716 = vlog2.bf16.pop %v3715
    %v3718 = vmul.bf16 %v3716, 1060192049
    %v3719 = vmul.bf16 %v3714, %v3714
    %v3720 = vmul.bf16 %v3719, %v3705
    %v3721 = vadd.bf16 %v3694, %v3720
    %v3722 = vadd.bf16 %v3721, %v3718
    %3723 = vset.pattern.permute.xlu0 123
    %3724 = vperm.xlu0 %3723, %v120
    %v3725 = vpop.permute.xlu0 %3724
    %v3727 = vlaneseq
    %v3728 = vshrl.u32 %v3727, 7
    %v3729 = vsub.s32 3, %v3728
    %v3730 = vrot.slane %v168, %v3729
    %v3731 = vadd.f32 %v3725, %v3730
    %v3732 = vrcp.pop %v3731
    %v3733 = vpack.c.bf16 %v3732, %v3732
    %3734 = vset.pattern.permute.xlu0 123
    %3735 = vperm.xlu0 %3734, %v93
    %v3736 = vpop.permute.xlu0 %3735
    %v3738 = vlaneseq
    %v3739 = vshrl.u32 %v3738, 7
    %v3740 = vsub.s32 5, %v3739
    %v3741 = vrot.slane %v3452, %v3740
    %v3742 = vsub.bf16 %v3736, %v3741
    %v3743 = vpack.c.bf16 %v3731, %v3731
    %v3744 = vlog2.bf16.pop %v3743
    %v3746 = vmul.bf16 %v3744, 1060192049
    %v3747 = vmul.bf16 %v3742, %v3742
    %v3748 = vmul.bf16 %v3747, %v3733
    %v3749 = vadd.bf16 %v3722, %v3748
    %v3750 = vadd.bf16 %v3749, %v3746
    %3751 = vset.pattern.permute.xlu0 124
    %3752 = vperm.xlu0 %3751, %v120
    %v3753 = vpop.permute.xlu0 %3752
    %v3755 = vlaneseq
    %v3756 = vshrl.u32 %v3755, 7
    %v3757 = vsub.s32 4, %v3756
    %v3758 = vrot.slane %v168, %v3757
    %v3759 = vadd.f32 %v3753, %v3758
    %v3760 = vrcp.pop %v3759
    %v3761 = vpack.c.bf16 %v3760, %v3760
    %3762 = vset.pattern.permute.xlu0 124
    %3763 = vperm.xlu0 %3762, %v93
    %v3764 = vpop.permute.xlu0 %3763
    %v3766 = vlaneseq
    %v3767 = vshrl.u32 %v3766, 7
    %v3768 = vsub.s32 6, %v3767
    %v3769 = vrot.slane %v3421, %v3768
    %v3770 = vsub.bf16 %v3764, %v3769
    %v3771 = vpack.c.bf16 %v3759, %v3759
    %v3772 = vlog2.bf16.pop %v3771
    %v3774 = vmul.bf16 %v3772, 1060192049
    %v3775 = vmul.bf16 %v3770, %v3770
    %v3776 = vmul.bf16 %v3775, %v3761
    %v3777 = vadd.bf16 %v3750, %v3776
    %v3778 = vadd.bf16 %v3777, %v3774
    %3779 = vset.pattern.permute.xlu0 125
    %3780 = vperm.xlu0 %3779, %v120
    %v3781 = vpop.permute.xlu0 %3780
    %v3783 = vlaneseq
    %v3784 = vshrl.u32 %v3783, 7
    %v3785 = vsub.s32 5, %v3784
    %v3786 = vrot.slane %v168, %v3785
    %v3787 = vadd.f32 %v3781, %v3786
    %v3788 = vrcp.pop %v3787
    %v3789 = vpack.c.bf16 %v3788, %v3788
    %3790 = vset.pattern.permute.xlu0 125
    %3791 = vperm.xlu0 %3790, %v93
    %v3792 = vpop.permute.xlu0 %3791
    %v3794 = vlaneseq
    %v3795 = vshrl.u32 %v3794, 7
    %v3796 = vsub.s32 6, %v3795
    %v3797 = vrot.slane %v3452, %v3796
    %v3798 = vsub.bf16 %v3792, %v3797
    %v3799 = vpack.c.bf16 %v3787, %v3787
    %v3800 = vlog2.bf16.pop %v3799
    %v3802 = vmul.bf16 %v3800, 1060192049
    %v3803 = vmul.bf16 %v3798, %v3798
    %v3804 = vmul.bf16 %v3803, %v3789
    %v3805 = vadd.bf16 %v3778, %v3804
    %v3806 = vadd.bf16 %v3805, %v3802
    %3807 = vset.pattern.permute.xlu0 126
    %3808 = vperm.xlu0 %3807, %v120
    %v3809 = vpop.permute.xlu0 %3808
    %v3811 = vlaneseq
    %v3812 = vshrl.u32 %v3811, 7
    %v3813 = vsub.s32 6, %v3812
    %v3814 = vrot.slane %v168, %v3813
    %v3815 = vadd.f32 %v3809, %v3814
    %v3816 = vrcp.pop %v3815
    %v3817 = vpack.c.bf16 %v3816, %v3816
    %3818 = vset.pattern.permute.xlu0 126
    %3819 = vperm.xlu0 %3818, %v93
    %v3820 = vpop.permute.xlu0 %3819
    %v3822 = vlaneseq
    %v3823 = vshrl.u32 %v3822, 7
    %v3824 = vsub.s32 7, %v3823
    %v3825 = vrot.slane %v3421, %v3824
    %v3826 = vsub.bf16 %v3820, %v3825
    %v3827 = vpack.c.bf16 %v3815, %v3815
    %v3828 = vlog2.bf16.pop %v3827
    %v3830 = vmul.bf16 %v3828, 1060192049
    %v3831 = vmul.bf16 %v3826, %v3826
    %v3832 = vmul.bf16 %v3831, %v3817
    %v3833 = vadd.bf16 %v3806, %v3832
    %v3834 = vadd.bf16 %v3833, %v3830
    %3835 = vset.pattern.permute.xlu0 127
    %3836 = vperm.xlu0 %3835, %v120
    %v3837 = vpop.permute.xlu0 %3836
    %v3839 = vlaneseq
    %v3840 = vshrl.u32 %v3839, 7
    %v3841 = vsub.s32 7, %v3840
    %v3842 = vrot.slane %v168, %v3841
    %v3843 = vadd.f32 %v3837, %v3842
    %v3844 = vrcp.pop %v3843
    %v3845 = vpack.c.bf16 %v3844, %v3844
    %3846 = vset.pattern.permute.xlu0 127
    %3847 = vperm.xlu0 %3846, %v93
    %v3848 = vpop.permute.xlu0 %3847
    %v3850 = vlaneseq
    %v3851 = vshrl.u32 %v3850, 7
    %v3852 = vsub.s32 7, %v3851
    %v3853 = vrot.slane %v3452, %v3852
    %v3854 = vsub.bf16 %v3848, %v3853
    %v3855 = vpack.c.bf16 %v3843, %v3843
    %v3856 = vlog2.bf16.pop %v3855
    %v3858 = vmul.bf16 %v3856, 1060192049
    %v3859 = vmul.bf16 %v3854, %v3854
    %v3860 = vmul.bf16 %v3859, %v3845
    %v3861 = vadd.bf16 %v3834, %v3860
    %v3862 = vadd.bf16 %v3861, %v3858
    %v3863 = vld [vmem:[#allocation10] sm:$0xff]
    %v3864 = vunpack.c.l.bf16 %v3862
    %v3865 = vadd.f32 %v3863, %v3864
    %3866 = vst [vmem:[#allocation10] sm:$0xff] %v3865
    // Predicated region
    $region38: #{_sims_padded.1} parent=1 // pred_check
      %p3867 = pneg %p70
    $region39: #{_sims_padded.1} parent=1 // pred_check_branch
      %3869 = sbr.rel (%p3867) target = $region41
    $region40: #{_sims_padded.1} parent=1 // pred_region
      %v3870 = vld [vmem:[#allocation10] sm:$0xff]
      %v3871 = vmul.f32 %v3870, -0.5
      %3872 = vst [vmem:[#allocation10] sm:$0xff] %v3871
    $region41: #{_sims_padded.1} parent=1 // pred_fallthru
      _
    // Predicated region
    $region42: #{_sims_padded.1} parent=1 // pred_check
      _
    $region43: #{_sims_padded.1} parent=1 // pred_check_branch
      %3874 = sbr.rel (0) target = $region45
    $region44: #{_sims_padded.1} parent=1 // pred_region
      %s3876 = ssub.s32 128, 128
      %3877 = vsyncadd [#allocation4], %s3876
      %s3879 = sshll.u32 [#allocation10], 4
      %s3880 = int_to_ptr.vmem [resolvable:$true] %s3879
      %3882 = dma.vmem_to_hbm [thread:$0]  %s3880, 128, %s4, [#allocation4]
    $region45: #{_sims_padded.1} parent=1 // pred_fallthru
      _
    // Predicated region
    $region46: #{_sims_padded.1} parent=1 // pred_check
      _
    $region47: #{_sims_padded.1} parent=1 // pred_check_branch
      %3884 = sbr.rel (0) target = $region49
    $region48: #{_sims_padded.1} parent=1 // pred_region
      %3885 = dma.done [#allocation4], 128
    $region49: #{_sims_padded.1} parent=1 // pred_fallthru
      _
    %3886 = vsyncpa [#allocation3], 1
    %3887 = vsyncpa [#allocation6], 1
    %3888 = vsyncpa [#allocation9], 1
    %3889 = vsyncpa [#allocation4], 1

</llo_original>
